<compile_context>
chip_gen: v7x
topology: tpu7x:2x2x1
jax: 0.10.0
libtpu: 0.0.40
codegen_flags: <defaults>
</compile_context>

<pallas_src>
import functools

import jax
import jax.numpy as jnp
from jax.experimental import pallas as pl
from jax.experimental.pallas import tpu as pltpu

# ---- toy tokenizer constants ------------------------------------------------
PAD_ID, CLS_ID, SEP_ID, MASK_ID = 0, 1, 2, 3

# 48 MiB scoped VMEM: headroom on v7x's 64 MiB physical, well under v5e/v6e's 128 MiB.
_VMEM_LIMIT = 48 * 1024 * 1024


def _pick_tile(dim, preferred):
    """Largest preferred tile that divides `dim`; full extent is always legal."""
    for t in preferred:
        if dim % t == 0:
            return t
    return dim


# =============================================================================
# Pallas kernels
# =============================================================================
def dense_kernel(x_ref, w_ref, b_ref, o_ref, acc_ref, *, activation):
    """Tiled o = act(x @ w + b): bf16 MXU matmul, f32 accumulator, f32 epilogue."""
    k = pl.program_id(2)

    @pl.when(k == 0)
    def _():
        acc_ref[...] = jnp.zeros_like(acc_ref)

    acc_ref[...] += jnp.dot(x_ref[...], w_ref[...],
                            preferred_element_type=jnp.float32)

    @pl.when(k == pl.num_programs(2) - 1)
    def _():
        y = acc_ref[...] + b_ref[...].astype(jnp.float32)
        if activation == "tanh":
            y = jnp.tanh(y)                     # f32 epilogue (v5e-friendly EUP)
        o_ref[...] = y.astype(o_ref.dtype)


def mlm_head_loss_kernel(x_ref, w_ref, b_ref, lab_ref, loss_ref,
                         m_sc, l_sc, p_sc):
    """Fused vocab projection + masked-LM cross-entropy.

    Grid = (M tiles, V tiles).  Online log-sum-exp + picked-logit accumulators
    live in VMEM scratch; the (B*L, V) logits never touch HBM.  Output is the
    per-token loss contribution (lse - picked) * valid, shape (tm, 1).
    """
    v = pl.program_id(1)

    @pl.when(v == 0)
    def _():
        m_sc[...] = jnp.full_like(m_sc, -jnp.inf)
        l_sc[...] = jnp.zeros_like(l_sc)
        p_sc[...] = jnp.zeros_like(p_sc)

    logits = jnp.dot(x_ref[...], w_ref[...],
                     preferred_element_type=jnp.float32)
    logits = logits + b_ref[...].astype(jnp.float32)          # (tm, tv) f32
    labels = lab_ref[...]                                     # (tm, 1) int32
    tv = logits.shape[1]
    vocab_idx = v * tv + jax.lax.broadcasted_iota(jnp.int32, logits.shape, 1)

    # picked logit via select — no materialized one-hot (VPU compare+select).
    p_sc[...] += jnp.sum(jnp.where(vocab_idx == labels, logits, 0.0),
                         axis=-1, keepdims=True)

    # online log-sum-exp over vocab tiles.
    t_max = jnp.max(logits, axis=-1, keepdims=True)
    m_new = jnp.maximum(m_sc[...], t_max)
    l_sc[...] = l_sc[...] * jnp.exp(m_sc[...] - m_new) + \
        jnp.sum(jnp.exp(logits - m_new), axis=-1, keepdims=True)
    m_sc[...] = m_new

    @pl.when(v == pl.num_programs(1) - 1)
    def _():
        lse = m_sc[...] + jnp.log(l_sc[...])
        valid = (labels != -100).astype(jnp.float32)
        loss_ref[...] = (lse - p_sc[...]) * valid


def span_pool_kernel(seq_ref, ph_ref, phl_ref, pt_ref, ptl_ref, out_ref):
    """Batched entity-span mean pooling: Bt rows per step -> (Bt, 2H) tile."""
    seq = seq_ref[...].astype(jnp.float32)                    # (Bt, L, H)
    Bt, L, H = seq.shape
    pos = jax.lax.broadcasted_iota(jnp.int32, (Bt, L), 1)
    ph, phl = ph_ref[...], phl_ref[...]                       # (Bt, 1) int32
    pt, ptl = pt_ref[...], ptl_ref[...]
    mh = jnp.logical_and(pos >= ph, pos < phl).astype(jnp.float32)
    mt = jnp.logical_and(pos >= pt, pos < ptl).astype(jnp.float32)
    h_sum = jnp.sum(seq * mh[..., None], axis=1)              # (Bt, H)
    t_sum = jnp.sum(seq * mt[..., None], axis=1)
    h_len = jnp.maximum((phl - ph).astype(jnp.float32), 1.0)  # guard len >= 1
    t_len = jnp.maximum((ptl - pt).astype(jnp.float32), 1.0)
    h_mean = h_sum * pl.reciprocal(h_len, approx=True)        # EUP reciprocal
    t_mean = t_sum * pl.reciprocal(t_len, approx=True)
    out_ref[:, :H] = h_mean.astype(out_ref.dtype)
    out_ref[:, H:] = t_mean.astype(out_ref.dtype)


# =============================================================================
# Pallas wrappers
# =============================================================================
def dense(x, w, b, activation=None, out_dtype=jnp.float32):
    M, K = x.shape
    _, N = w.shape
    tm = _pick_tile(M, (256, 128, 64, 32, 16, 8))
    tn = _pick_tile(N, (256, 128))
    tk = _pick_tile(K, (512, 256, 128))
    grid = (M // tm, N // tn, K // tk)
    return pl.pallas_call(
        functools.partial(dense_kernel, activation=activation),
        out_shape=jax.ShapeDtypeStruct((M, N), out_dtype),
        grid_spec=pltpu.PrefetchScalarGridSpec(
            num_scalar_prefetch=0,
            grid=grid,
            in_specs=[
                pl.BlockSpec((tm, tk), lambda i, j, k: (i, k)),
                pl.BlockSpec((tk, tn), lambda i, j, k: (k, j)),
                pl.BlockSpec((1, tn), lambda i, j, k: (0, j)),
            ],
            out_specs=pl.BlockSpec((tm, tn), lambda i, j, k: (i, j)),
            scratch_shapes=[pltpu.VMEM((tm, tn), jnp.float32)],
        ),
        compiler_params=pltpu.CompilerParams(
            dimension_semantics=("parallel", "parallel", "arbitrary"),
            vmem_limit_bytes=_VMEM_LIMIT,
        ),
    )(x.astype(jnp.bfloat16), w.astype(jnp.bfloat16),
      b.reshape(1, N).astype(jnp.float32))


def mlm_head_loss(hidden, w, b, labels_2d):
    """Returns per-token (lse - picked)*valid, shape (M, 1)."""
    M, H = hidden.shape
    _, V = w.shape
    tm = _pick_tile(M, (256, 128, 64, 32, 16, 8))
    tv = _pick_tile(V, (512, 256, 128))
    grid = (M // tm, V // tv)
    return pl.pallas_call(
        mlm_head_loss_kernel,
        out_shape=jax.ShapeDtypeStruct((M, 1), jnp.float32),
        grid_spec=pltpu.PrefetchScalarGridSpec(
            num_scalar_prefetch=0,
            grid=grid,
            in_specs=[
                pl.BlockSpec((tm, H), lambda i, v: (i, 0)),
                pl.BlockSpec((H, tv), lambda i, v: (0, v)),
                pl.BlockSpec((1, tv), lambda i, v: (0, v)),
                pl.BlockSpec((tm, 1), lambda i, v: (i, 0)),
            ],
            out_specs=pl.BlockSpec((tm, 1), lambda i, v: (i, 0)),
            scratch_shapes=[pltpu.VMEM((tm, 1), jnp.float32) for _ in range(3)],
        ),
        compiler_params=pltpu.CompilerParams(
            dimension_semantics=("parallel", "arbitrary"),
            vmem_limit_bytes=_VMEM_LIMIT,
        ),
    )(hidden.astype(jnp.bfloat16), w.astype(jnp.bfloat16),
      b.reshape(1, V).astype(jnp.float32), labels_2d.astype(jnp.int32))


def span_pool(seq, h_pos, h_pos_l, t_pos, t_pos_l):
    """Per-row mean over [h_pos, h_pos_l) and [t_pos, t_pos_l), concat -> (B, 2H)."""
    B, L, H = seq.shape
    Bt = 8 if B % 8 == 0 else B
    return pl.pallas_call(
        span_pool_kernel,
        out_shape=jax.ShapeDtypeStruct((B, 2 * H), jnp.float32),
        grid_spec=pltpu.PrefetchScalarGridSpec(
            num_scalar_prefetch=0,
            grid=(B // Bt,),
            in_specs=[
                pl.BlockSpec((Bt, L, H), lambda i: (i, 0, 0)),
                pl.BlockSpec((Bt, 1), lambda i: (i, 0)),
                pl.BlockSpec((Bt, 1), lambda i: (i, 0)),
                pl.BlockSpec((Bt, 1), lambda i: (i, 0)),
                pl.BlockSpec((Bt, 1), lambda i: (i, 0)),
            ],
            out_specs=pl.BlockSpec((Bt, 2 * H), lambda i: (i, 0)),
        ),
        compiler_params=pltpu.CompilerParams(
            dimension_semantics=("parallel",),   # sharded across v7x's 2 TCs
            vmem_limit_bytes=_VMEM_LIMIT,
        ),
    )(seq.astype(jnp.bfloat16),
      h_pos.reshape(B, 1).astype(jnp.int32), h_pos_l.reshape(B, 1).astype(jnp.int32),
      t_pos.reshape(B, 1).astype(jnp.int32), t_pos_l.reshape(B, 1).astype(jnp.int32))


# =============================================================================
# Glue: masking, tiny MLM encoder, NT-Xent loss, CP forward
# =============================================================================
def mask_tokens_jax(key, inputs, not_mask_pos, vocab_size):
    """JAX port of mask_tokens(): 80% [MASK], 10% random, 10% original."""
    k1, k2, k3, k4 = jax.random.split(key, 4)
    special = (inputs == CLS_ID) | (inputs == SEP_ID)
    padding = inputs == PAD_ID
    prob = jnp.where(special | padding, 0.0, 0.15)
    masked = jax.random.bernoulli(k1, prob) & (not_mask_pos == 0)
    labels = jnp.where(masked, inputs, -100)
    replaced = jax.random.bernoulli(k2, 0.8, inputs.shape) & masked
    out = jnp.where(replaced, MASK_ID, inputs)
    rand_sel = jax.random.bernoulli(k3, 0.5, inputs.shape) & masked & ~replaced
    random_words = jax.random.randint(k4, inputs.shape, 0, vocab_size,
                                      dtype=inputs.dtype)
    out = jnp.where(rand_sel, random_words, out)
    return out, labels


def tiny_mlm_model(params, input_ids, attention_mask, labels):
    """Stand-in for BertForMaskedLM: returns (sequence_output, masked_lm_loss)."""
    B, L = input_ids.shape
    H = params["E"].shape[1]
    # TODO(synk): real model is a 12-layer self-attention encoder; the embedding
    # gather stays in XLA and attention_mask is applied multiplicatively.
    emb = jnp.take(params["E"], input_ids, axis=0) + params["P"][None, :, :]
    emb = emb * attention_mask[..., None]
    x2d = emb.reshape(B * L, H)
    hidden = dense(x2d, params["W1"], params["b1"],
                   activation="tanh", out_dtype=jnp.bfloat16)          # Pallas
    # Fused vocab projection + masked-LM loss (logits never hit HBM).   Pallas
    per_tok = mlm_head_loss(hidden, params["W2"], params["b2"],
                            labels.reshape(B * L, 1))
    valid = (labels.reshape(-1) != -100).astype(jnp.float32)
    # NOTE: if no token is masked the loss is 0 (reference would be NaN).
    m_loss = jnp.sum(per_tok) / jnp.maximum(jnp.sum(valid), 1.0)
    return hidden.reshape(B, L, H), m_loss


def ntxent_loss(state, label, temperature):
    """NT-Xent contrastive loss on cosine similarity (pytorch-metric-learning
    semantics).  Tiny (B x B) — kept in plain XLA per perf review."""
    state = state.astype(jnp.float32)
    norm = jnp.sqrt(jnp.sum(state * state, axis=-1, keepdims=True))
    xn = state / jnp.maximum(norm, 1e-12)
    sim = (xn @ xn.T) / temperature                            # (B, B)
    same = label[:, None] == label[None, :]
    eye = jnp.eye(state.shape[0], dtype=bool)
    pos_mask = (same & ~eye).astype(jnp.float32)
    neg_mask = ~same
    neg_sims = jnp.where(neg_mask, sim, -1e30)
    neg_max = jnp.max(neg_sims, axis=1, keepdims=True)         # (B, 1)
    z = jnp.sum(jnp.where(neg_mask, jnp.exp(sim - neg_max), 0.0),
                axis=1, keepdims=True)                         # (B, 1)
    max_val = jnp.maximum(sim, neg_max)                        # per (anchor, pos)
    numer = jnp.exp(sim - max_val)
    denom = jnp.exp(neg_max - max_val) * z + numer
    log_exp = jnp.log(numer / denom + 1e-20)
    n_pos = jnp.sum(pos_mask)
    return jnp.sum(-log_exp * pos_mask) / jnp.maximum(n_pos, 1.0)


def cp_forward(params, key, input_ids, mask, label,
               h_pos, t_pos, h_pos_l, t_pos_l, temperature):
    B, L = input_ids.shape
    V = params["E"].shape[0]
    # not_mask_pos = 1 over the full entity spans (and start positions), as in
    # the reference loop over [h_pos, h_pos_l) / [t_pos, t_pos_l).
    pos = jnp.arange(L, dtype=jnp.int32)[None, :]
    not_mask_pos = (
        ((pos >= h_pos[:, None]) & (pos < h_pos_l[:, None]))
        | ((pos >= t_pos[:, None]) & (pos < t_pos_l[:, None]))
        | (pos == h_pos[:, None]) | (pos == t_pos[:, None])
    ).astype(jnp.int32)

    m_input, m_labels = mask_tokens_jax(key, input_ids, not_mask_pos, V)
    seq_out, m_loss = tiny_mlm_model(params, m_input, mask, m_labels)

    state = span_pool(seq_out, h_pos, h_pos_l, t_pos, t_pos_l)      # (B, 2H) Pallas
    r_loss = ntxent_loss(state, label, temperature)
    return m_loss, r_loss


def init_params(key, V, L, H):
    kE, kP, k1, k2 = jax.random.split(key, 4)
    return {
        "E": jax.random.normal(kE, (V, H), jnp.float32) * 0.02,
        "P": jax.random.normal(kP, (L, H), jnp.float32) * 0.02,
        "W1": jax.random.normal(k1, (H, H), jnp.float32) * 0.1,
        "b1": jnp.zeros((H,), jnp.float32),
        "W2": jax.random.normal(k2, (H, V), jnp.float32) * 0.1,
        "b2": jnp.zeros((V,), jnp.float32),
    }


if __name__ == "__main__":
    # Small but tile-friendly shapes: lane dims (H, V, 2H) are multiples of 128.
    B, L, H, V = 8, 128, 128, 512
    root = jax.random.PRNGKey(0)
    k_params, k_inp, k_mask = jax.random.split(root, 3)

    params = init_params(k_params, V, L, H)

    input_ids = jax.random.randint(k_inp, (B, L), 4, V, dtype=jnp.int32)
    input_ids = input_ids.at[:, 0].set(CLS_ID).at[:, L - 1].set(SEP_ID)
    mask = jnp.ones((B, L), jnp.float32)

    h_pos   = jnp.array([2, 3, 4, 5, 2, 3, 4, 5], jnp.int32)
    h_pos_l = jnp.array([4, 6, 6, 8, 5, 4, 7, 9], jnp.int32)
    t_pos   = jnp.array([10, 12, 11, 13, 10, 12, 11, 13], jnp.int32)
    t_pos_l = jnp.array([12, 14, 15, 16, 13, 14, 12, 18], jnp.int32)
    label   = jnp.array([0, 0, 1, 1, 2, 2, 3, 3], jnp.int32)   # relation ids
    temperature = 0.05

    fwd = jax.jit(cp_forward)
    m_loss, r_loss = fwd(params, k_mask, input_ids, mask, label,
                         h_pos, t_pos, h_pos_l, t_pos_l, temperature)
    jax.block_until_ready((m_loss, r_loss))
    print("KERNEL_OK")
</pallas_src>

<mosaic_0001>
module attributes {stable_mosaic.version = 11 : i64} {
  func.func @dense_kernel(%arg0: i32, %arg1: i32, %arg2: i32, %arg3: memref<256x128xbf16, #tpu.memory_space<vmem>>, %arg4: memref<128x128xbf16, #tpu.memory_space<vmem>>, %arg5: memref<1x128xf32, #tpu.memory_space<vmem>>, %arg6: memref<256x128xbf16, #tpu.memory_space<vmem>>, %arg7: memref<256x128xf32, #tpu.memory_space<vmem>>) attributes {dimension_semantics = [#tpu.dimension_semantics<parallel>, #tpu.dimension_semantics<parallel>, #tpu.dimension_semantics<arbitrary>], iteration_bounds = array<i64: 4, 1, 1>, scalar_prefetch = 0 : i64, scratch_operands = 1 : i64, tpu.core_type = #tpu.core_type<tc>, window_params = [{transform_indices = @transform_0, window_bounds = array<i64: 256, 128>}, {transform_indices = @transform_1, window_bounds = array<i64: 128, 128>}, {transform_indices = @transform_2, window_bounds = array<i64: 1, 128>}, {transform_indices = @transform_3, window_bounds = array<i64: 256, 128>}]} {
    %c0_i32 = arith.constant 0 : i32
    %0 = arith.cmpi eq, %arg2, %c0_i32 : i32
    %1 = arith.extui %0 : i1 to i32
    %c0_i32_0 = arith.constant 0 : i32
    %2 = arith.cmpi ne, %1, %c0_i32_0 : i32
    scf.if %2 {
      %cst_10 = arith.constant 0.000000e+00 : f32
      %12 = vector.broadcast %cst_10 : f32 to vector<256x128xf32>
      %c0_11 = arith.constant 0 : index
      %c0_12 = arith.constant 0 : index
      %13 = vector.load %arg7[%c0_11, %c0_12] : memref<256x128xf32, #tpu.memory_space<vmem>>, vector<256x128xf32>
      tpu.vector_store %arg7[%c0_11, %c0_12], %12 {strides = array<i32>} : memref<256x128xf32, #tpu.memory_space<vmem>>, vector<256x128xf32>,
    } else {
    }
    %c0 = arith.constant 0 : index
    %c0_1 = arith.constant 0 : index
    %3 = vector.load %arg7[%c0, %c0_1] : memref<256x128xf32, #tpu.memory_space<vmem>>, vector<256x128xf32>
    %c0_2 = arith.constant 0 : index
    %c0_3 = arith.constant 0 : index
    %4 = vector.load %arg3[%c0_2, %c0_3] : memref<256x128xbf16, #tpu.memory_space<vmem>>, vector<256x128xbf16>
    %c0_4 = arith.constant 0 : index
    %c0_5 = arith.constant 0 : index
    %5 = vector.load %arg4[%c0_4, %c0_5] : memref<128x128xbf16, #tpu.memory_space<vmem>>, vector<128x128xbf16>
    %cst = arith.constant dense<0.000000e+00> : vector<256x128xf32>
    %6 = tpu.matmul %4, %5, %cst {dimension_numbers = #tpu.dot_dimension_numbers<[1], [0], [0], [1], [0, 0, 1, 1], [], []>} : vector<256x128xbf16>, vector<128x128xbf16>, vector<256x128xf32> -> vector<256x128xf32>
    %7 = arith.addf %3, %6 : vector<256x128xf32>
    %c0_6 = arith.constant 0 : index
    %c0_7 = arith.constant 0 : index
    %8 = vector.load %arg7[%c0_6, %c0_7] : memref<256x128xf32, #tpu.memory_space<vmem>>, vector<256x128xf32>
    tpu.vector_store %arg7[%c0_6, %c0_7], %7 {strides = array<i32>} : memref<256x128xf32, #tpu.memory_space<vmem>>, vector<256x128xf32>,
    %c0_i32_8 = arith.constant 0 : i32
    %9 = arith.cmpi eq, %arg2, %c0_i32_8 : i32
    %10 = arith.extui %9 : i1 to i32
    %c0_i32_9 = arith.constant 0 : i32
    %11 = arith.cmpi ne, %10, %c0_i32_9 : i32
    scf.if %11 {
      %c0_10 = arith.constant 0 : index
      %c0_11 = arith.constant 0 : index
      %12 = vector.load %arg7[%c0_10, %c0_11] : memref<256x128xf32, #tpu.memory_space<vmem>>, vector<256x128xf32>
      %c0_12 = arith.constant 0 : index
      %c0_13 = arith.constant 0 : index
      %13 = vector.load %arg5[%c0_12, %c0_13] : memref<1x128xf32, #tpu.memory_space<vmem>>, vector<1x128xf32>
      %14 = vector.broadcast %13 : vector<1x128xf32> to vector<256x128xf32>
      %15 = arith.addf %12, %14 : vector<256x128xf32>
      %16 = math.tanh %15 : vector<256x128xf32>
      %17 = arith.truncf %16 : vector<256x128xf32> to vector<256x128xbf16>
      %c0_14 = arith.constant 0 : index
      %c0_15 = arith.constant 0 : index
      %18 = vector.load %arg6[%c0_14, %c0_15] : memref<256x128xbf16, #tpu.memory_space<vmem>>, vector<256x128xbf16>
      tpu.vector_store %arg6[%c0_14, %c0_15], %17 {strides = array<i32>} : memref<256x128xbf16, #tpu.memory_space<vmem>>, vector<256x128xbf16>,
    } else {
    }
    return
  }
  func.func @transform_0(%arg0: i32, %arg1: i32, %arg2: i32) -> (i32, i32) {
    %c0_i32 = arith.constant 0 : i32
    return %arg0, %arg2 : i32, i32
  }
  func.func @transform_1(%arg0: i32, %arg1: i32, %arg2: i32) -> (i32, i32) {
    %c0_i32 = arith.constant 0 : i32
    return %arg2, %arg1 : i32, i32
  }
  func.func @transform_2(%arg0: i32, %arg1: i32, %arg2: i32) -> (i32, i32) {
    %c0_i32 = arith.constant 0 : i32
    %c0_i32_0 = arith.constant 0 : i32
    return %c0_i32, %arg1 : i32, i32
  }
  func.func @transform_3(%arg0: i32, %arg1: i32, %arg2: i32) -> (i32, i32) {
    %c0_i32 = arith.constant 0 : i32
    return %arg0, %arg1 : i32, i32
  }
}

module attributes {stable_mosaic.version = 11 : i64} {
  func.func @mlm_head_loss_kernel(%arg0: i32, %arg1: i32, %arg2: memref<256x128xbf16, #tpu.memory_space<vmem>>, %arg3: memref<128x512xbf16, #tpu.memory_space<vmem>>, %arg4: memref<1x512xf32, #tpu.memory_space<vmem>>, %arg5: memref<256x1xi32, #tpu.memory_space<vmem>>, %arg6: memref<256x1xf32, #tpu.memory_space<vmem>>, %arg7: memref<256x1xf32, #tpu.memory_space<vmem>>, %arg8: memref<256x1xf32, #tpu.memory_space<vmem>>, %arg9: memref<256x1xf32, #tpu.memory_space<vmem>>) attributes {dimension_semantics = [#tpu.dimension_semantics<parallel>, #tpu.dimension_semantics<arbitrary>], iteration_bounds = array<i64: 4, 1>, scalar_prefetch = 0 : i64, scratch_operands = 3 : i64, tpu.core_type = #tpu.core_type<tc>, window_params = [{transform_indices = @transform_0, window_bounds = array<i64: 256, 128>}, {transform_indices = @transform_1, window_bounds = array<i64: 128, 512>}, {transform_indices = @transform_2, window_bounds = array<i64: 1, 512>}, {transform_indices = @transform_3, window_bounds = array<i64: 256, 1>}, {transform_indices = @transform_4, window_bounds = array<i64: 256, 1>}]} {
    %c0_i32 = arith.constant 0 : i32
    %0 = arith.cmpi eq, %arg1, %c0_i32 : i32
    %1 = arith.extui %0 : i1 to i32
    %c0_i32_0 = arith.constant 0 : i32
    %2 = arith.cmpi ne, %1, %c0_i32_0 : i32
    scf.if %2 {
      %cst_28 = arith.constant 0xFF800000 : f32
      %43 = vector.broadcast %cst_28 : f32 to vector<256x1xf32>
      %c0_29 = arith.constant 0 : index
      %c0_30 = arith.constant 0 : index
      %44 = vector.load %arg7[%c0_29, %c0_30] : memref<256x1xf32, #tpu.memory_space<vmem>>, vector<256x1xf32>
      tpu.vector_store %arg7[%c0_29, %c0_30], %43 {strides = array<i32>} : memref<256x1xf32, #tpu.memory_space<vmem>>, vector<256x1xf32>,
      %cst_31 = arith.constant 0.000000e+00 : f32
      %45 = vector.broadcast %cst_31 : f32 to vector<256x1xf32>
      %c0_32 = arith.constant 0 : index
      %c0_33 = arith.constant 0 : index
      %46 = vector.load %arg8[%c0_32, %c0_33] : memref<256x1xf32, #tpu.memory_space<vmem>>, vector<256x1xf32>
      tpu.vector_store %arg8[%c0_32, %c0_33], %45 {strides = array<i32>} : memref<256x1xf32, #tpu.memory_space<vmem>>, vector<256x1xf32>,
      %cst_34 = arith.constant 0.000000e+00 : f32
      %47 = vector.broadcast %cst_34 : f32 to vector<256x1xf32>
      %c0_35 = arith.constant 0 : index
      %c0_36 = arith.constant 0 : index
      %48 = vector.load %arg9[%c0_35, %c0_36] : memref<256x1xf32, #tpu.memory_space<vmem>>, vector<256x1xf32>
      tpu.vector_store %arg9[%c0_35, %c0_36], %47 {strides = array<i32>} : memref<256x1xf32, #tpu.memory_space<vmem>>, vector<256x1xf32>,
    } else {
    }
    %c0 = arith.constant 0 : index
    %c0_1 = arith.constant 0 : index
    %3 = vector.load %arg2[%c0, %c0_1] : memref<256x128xbf16, #tpu.memory_space<vmem>>, vector<256x128xbf16>
    %c0_2 = arith.constant 0 : index
    %c0_3 = arith.constant 0 : index
    %4 = vector.load %arg3[%c0_2, %c0_3] : memref<128x512xbf16, #tpu.memory_space<vmem>>, vector<128x512xbf16>
    %cst = arith.constant dense<0.000000e+00> : vector<256x512xf32>
    %5 = tpu.matmul %3, %4, %cst {dimension_numbers = #tpu.dot_dimension_numbers<[1], [0], [0], [1], [0, 0, 1, 1], [], []>} : vector<256x128xbf16>, vector<128x512xbf16>, vector<256x512xf32> -> vector<256x512xf32>
    %c0_4 = arith.constant 0 : index
    %c0_5 = arith.constant 0 : index
    %6 = vector.load %arg4[%c0_4, %c0_5] : memref<1x512xf32, #tpu.memory_space<vmem>>, vector<1x512xf32>
    %7 = vector.broadcast %6 : vector<1x512xf32> to vector<256x512xf32>
    %8 = arith.addf %5, %7 : vector<256x512xf32>
    %c0_6 = arith.constant 0 : index
    %c0_7 = arith.constant 0 : index
    %9 = vector.load %arg5[%c0_6, %c0_7] : memref<256x1xi32, #tpu.memory_space<vmem>>, vector<256x1xi32>
    %c512_i32 = arith.constant 512 : i32
    %10 = arith.muli %arg1, %c512_i32 : i32
    %11 = tpu.iota {dimensions = array<i32: 1>} : vector<256x512xi32>
    %12 = vector.broadcast %10 : i32 to vector<256x512xi32>
    %13 = arith.addi %12, %11 : vector<256x512xi32>
    %c0_8 = arith.constant 0 : index
    %c0_9 = arith.constant 0 : index
    %14 = vector.load %arg9[%c0_8, %c0_9] : memref<256x1xf32, #tpu.memory_space<vmem>>, vector<256x1xf32>
    %15 = vector.broadcast %9 : vector<256x1xi32> to vector<256x512xi32>
    %16 = arith.cmpi eq, %13, %15 : vector<256x512xi32>
    %cst_10 = arith.constant 0.000000e+00 : f32
    %17 = vector.broadcast %cst_10 : f32 to vector<256x512xf32>
    %18 = arith.select %16, %8, %17 : vector<256x512xi1>, vector<256x512xf32>
    %cst_11 = arith.constant dense<0.000000e+00> : vector<256xf32>
    %19 = vector.multi_reduction <add>, %18, %cst_11 [1] : vector<256x512xf32> to vector<256xf32>
    %20 = vector.shape_cast %19 : vector<256xf32> to vector<256x1xf32>
    %21 = arith.addf %14, %20 : vector<256x1xf32>
    %c0_12 = arith.constant 0 : index
    %c0_13 = arith.constant 0 : index
    %22 = vector.load %arg9[%c0_12, %c0_13] : memref<256x1xf32, #tpu.memory_space<vmem>>, vector<256x1xf32>
    tpu.vector_store %arg9[%c0_12, %c0_13], %21 {strides = array<i32>} : memref<256x1xf32, #tpu.memory_space<vmem>>, vector<256x1xf32>,
    %cst_14 = arith.constant dense<0xFF800000> : vector<256xf32>
    %23 = vector.multi_reduction <maximumf>, %8, %cst_14 [1] : vector<256x512xf32> to vector<256xf32>
    %24 = vector.shape_cast %23 : vector<256xf32> to vector<256x1xf32>
    %c0_15 = arith.constant 0 : index
    %c0_16 = arith.constant 0 : index
    %25 = vector.load %arg7[%c0_15, %c0_16] : memref<256x1xf32, #tpu.memory_space<vmem>>, vector<256x1xf32>
    %26 = arith.maximumf %25, %24 : vector<256x1xf32>
    %c0_17 = arith.constant 0 : index
    %c0_18 = arith.constant 0 : index
    %27 = vector.load %arg8[%c0_17, %c0_18] : memref<256x1xf32, #tpu.memory_space<vmem>>, vector<256x1xf32>
    %c0_19 = arith.constant 0 : index
    %c0_20 = arith.constant 0 : index
    %28 = vector.load %arg7[%c0_19, %c0_20] : memref<256x1xf32, #tpu.memory_space<vmem>>, vector<256x1xf32>
    %29 = arith.subf %28, %26 : vector<256x1xf32>
    %30 = math.exp %29 : vector<256x1xf32>
    %31 = arith.mulf %27, %30 : vector<256x1xf32>
    %32 = vector.broadcast %26 : vector<256x1xf32> to vector<256x512xf32>
    %33 = arith.subf %8, %32 : vector<256x512xf32>
    %34 = math.exp %33 : vector<256x512xf32>
    %cst_21 = arith.constant dense<0.000000e+00> : vector<256xf32>
    %35 = vector.multi_reduction <add>, %34, %cst_21 [1] : vector<256x512xf32> to vector<256xf32>
    %36 = vector.shape_cast %35 : vector<256xf32> to vector<256x1xf32>
    %37 = arith.addf %31, %36 : vector<256x1xf32>
    %c0_22 = arith.constant 0 : index
    %c0_23 = arith.constant 0 : index
    %38 = vector.load %arg8[%c0_22, %c0_23] : memref<256x1xf32, #tpu.memory_space<vmem>>, vector<256x1xf32>
    tpu.vector_store %arg8[%c0_22, %c0_23], %37 {strides = array<i32>} : memref<256x1xf32, #tpu.memory_space<vmem>>, vector<256x1xf32>,
    %c0_24 = arith.constant 0 : index
    %c0_25 = arith.constant 0 : index
    %39 = vector.load %arg7[%c0_24, %c0_25] : memref<256x1xf32, #tpu.memory_space<vmem>>, vector<256x1xf32>
    tpu.vector_store %arg7[%c0_24, %c0_25], %26 {strides = array<i32>} : memref<256x1xf32, #tpu.memory_space<vmem>>, vector<256x1xf32>,
    %c0_i32_26 = arith.constant 0 : i32
    %40 = arith.cmpi eq, %arg1, %c0_i32_26 : i32
    %41 = arith.extui %40 : i1 to i32
    %c0_i32_27 = arith.constant 0 : i32
    %42 = arith.cmpi ne, %41, %c0_i32_27 : i32
    scf.if %42 {
      %c0_28 = arith.constant 0 : index
      %c0_29 = arith.constant 0 : index
      %43 = vector.load %arg7[%c0_28, %c0_29] : memref<256x1xf32, #tpu.memory_space<vmem>>, vector<256x1xf32>
      %c0_30 = arith.constant 0 : index
      %c0_31 = arith.constant 0 : index
      %44 = vector.load %arg8[%c0_30, %c0_31] : memref<256x1xf32, #tpu.memory_space<vmem>>, vector<256x1xf32>
      %45 = math.log %44 : vector<256x1xf32>
      %46 = arith.addf %43, %45 : vector<256x1xf32>
      %c-100_i32 = arith.constant -100 : i32
      %47 = vector.broadcast %c-100_i32 : i32 to vector<256x1xi32>
      %48 = arith.cmpi ne, %9, %47 : vector<256x1xi32>
      %49 = arith.extui %48 : vector<256x1xi1> to vector<256x1xi32>
      %50 = arith.sitofp %49 : vector<256x1xi32> to vector<256x1xf32>
      %c0_32 = arith.constant 0 : index
      %c0_33 = arith.constant 0 : index
      %51 = vector.load %arg9[%c0_32, %c0_33] : memref<256x1xf32, #tpu.memory_space<vmem>>, vector<256x1xf32>
      %52 = arith.subf %46, %51 : vector<256x1xf32>
      %53 = arith.mulf %52, %50 : vector<256x1xf32>
      %c0_34 = arith.constant 0 : index
      %c0_35 = arith.constant 0 : index
      %54 = vector.load %arg6[%c0_34, %c0_35] : memref<256x1xf32, #tpu.memory_space<vmem>>, vector<256x1xf32>
      tpu.vector_store %arg6[%c0_34, %c0_35], %53 {strides = array<i32>} : memref<256x1xf32, #tpu.memory_space<vmem>>, vector<256x1xf32>,
    } else {
    }
    return
  }
  func.func @transform_0(%arg0: i32, %arg1: i32) -> (i32, i32) {
    %c0_i32 = arith.constant 0 : i32
    %c0_i32_0 = arith.constant 0 : i32
    return %arg0, %c0_i32 : i32, i32
  }
  func.func @transform_1(%arg0: i32, %arg1: i32) -> (i32, i32) {
    %c0_i32 = arith.constant 0 : i32
    %c0_i32_0 = arith.constant 0 : i32
    return %c0_i32, %arg1 : i32, i32
  }
  func.func @transform_2(%arg0: i32, %arg1: i32) -> (i32, i32) {
    %c0_i32 = arith.constant 0 : i32
    %c0_i32_0 = arith.constant 0 : i32
    return %c0_i32, %arg1 : i32, i32
  }
  func.func @transform_3(%arg0: i32, %arg1: i32) -> (i32, i32) {
    %c0_i32 = arith.constant 0 : i32
    %c0_i32_0 = arith.constant 0 : i32
    return %arg0, %c0_i32 : i32, i32
  }
  func.func @transform_4(%arg0: i32, %arg1: i32) -> (i32, i32) {
    %c0_i32 = arith.constant 0 : i32
    %c0_i32_0 = arith.constant 0 : i32
    return %arg0, %c0_i32 : i32, i32
  }
}

module attributes {stable_mosaic.version = 11 : i64} {
  func.func @span_pool_kernel(%arg0: i32, %arg1: memref<8x128x128xbf16, #tpu.memory_space<vmem>>, %arg2: memref<8x1xi32, #tpu.memory_space<vmem>>, %arg3: memref<8x1xi32, #tpu.memory_space<vmem>>, %arg4: memref<8x1xi32, #tpu.memory_space<vmem>>, %arg5: memref<8x1xi32, #tpu.memory_space<vmem>>, %arg6: memref<8x256xf32, #tpu.memory_space<vmem>>) attributes {dimension_semantics = [#tpu.dimension_semantics<parallel>], iteration_bounds = array<i64: 1>, scalar_prefetch = 0 : i64, scratch_operands = 0 : i64, tpu.core_type = #tpu.core_type<tc>, window_params = [{transform_indices = @transform_0, window_bounds = array<i64: 8, 128, 128>}, {transform_indices = @transform_1, window_bounds = array<i64: 8, 1>}, {transform_indices = @transform_2, window_bounds = array<i64: 8, 1>}, {transform_indices = @transform_3, window_bounds = array<i64: 8, 1>}, {transform_indices = @transform_4, window_bounds = array<i64: 8, 1>}, {transform_indices = @transform_5, window_bounds = array<i64: 8, 256>}]} {
    %c0 = arith.constant 0 : index
    %c0_0 = arith.constant 0 : index
    %c0_1 = arith.constant 0 : index
    %0 = vector.load %arg1[%c0, %c0_0, %c0_1] : memref<8x128x128xbf16, #tpu.memory_space<vmem>>, vector<8x128x128xbf16>
    %1 = arith.extf %0 : vector<8x128x128xbf16> to vector<8x128x128xf32>
    %2 = tpu.iota {dimensions = array<i32: 1>} : vector<8x128xi32>
    %c0_2 = arith.constant 0 : index
    %c0_3 = arith.constant 0 : index
    %3 = vector.load %arg2[%c0_2, %c0_3] : memref<8x1xi32, #tpu.memory_space<vmem>>, vector<8x1xi32>
    %c0_4 = arith.constant 0 : index
    %c0_5 = arith.constant 0 : index
    %4 = vector.load %arg3[%c0_4, %c0_5] : memref<8x1xi32, #tpu.memory_space<vmem>>, vector<8x1xi32>
    %c0_6 = arith.constant 0 : index
    %c0_7 = arith.constant 0 : index
    %5 = vector.load %arg4[%c0_6, %c0_7] : memref<8x1xi32, #tpu.memory_space<vmem>>, vector<8x1xi32>
    %c0_8 = arith.constant 0 : index
    %c0_9 = arith.constant 0 : index
    %6 = vector.load %arg5[%c0_8, %c0_9] : memref<8x1xi32, #tpu.memory_space<vmem>>, vector<8x1xi32>
    %7 = vector.broadcast %3 : vector<8x1xi32> to vector<8x128xi32>
    %8 = arith.cmpi sge, %2, %7 : vector<8x128xi32>
    %9 = vector.broadcast %4 : vector<8x1xi32> to vector<8x128xi32>
    %10 = arith.cmpi slt, %2, %9 : vector<8x128xi32>
    %11 = arith.andi %8, %10 : vector<8x128xi1>
    %12 = arith.extui %11 : vector<8x128xi1> to vector<8x128xi32>
    %13 = arith.sitofp %12 : vector<8x128xi32> to vector<8x128xf32>
    %14 = vector.broadcast %5 : vector<8x1xi32> to vector<8x128xi32>
    %15 = arith.cmpi sge, %2, %14 : vector<8x128xi32>
    %16 = vector.broadcast %6 : vector<8x1xi32> to vector<8x128xi32>
    %17 = arith.cmpi slt, %2, %16 : vector<8x128xi32>
    %18 = arith.andi %15, %17 : vector<8x128xi1>
    %19 = arith.extui %18 : vector<8x128xi1> to vector<8x128xi32>
    %20 = arith.sitofp %19 : vector<8x128xi32> to vector<8x128xf32>
    %21 = vector.shape_cast %13 : vector<8x128xf32> to vector<8x128x1xf32>
    %22 = vector.broadcast %21 : vector<8x128x1xf32> to vector<8x128x128xf32>
    %23 = arith.mulf %1, %22 : vector<8x128x128xf32>
    %cst = arith.constant dense<0.000000e+00> : vector<8x128xf32>
    %24 = vector.multi_reduction <add>, %23, %cst [1] : vector<8x128x128xf32> to vector<8x128xf32>
    %25 = vector.shape_cast %20 : vector<8x128xf32> to vector<8x128x1xf32>
    %26 = vector.broadcast %25 : vector<8x128x1xf32> to vector<8x128x128xf32>
    %27 = arith.mulf %1, %26 : vector<8x128x128xf32>
    %cst_10 = arith.constant dense<0.000000e+00> : vector<8x128xf32>
    %28 = vector.multi_reduction <add>, %27, %cst_10 [1] : vector<8x128x128xf32> to vector<8x128xf32>
    %29 = arith.subi %4, %3 : vector<8x1xi32>
    %30 = arith.sitofp %29 : vector<8x1xi32> to vector<8x1xf32>
    %cst_11 = arith.constant 1.000000e+00 : f32
    %31 = vector.broadcast %cst_11 : f32 to vector<8x1xf32>
    %32 = arith.maximumf %30, %31 : vector<8x1xf32>
    %33 = arith.subi %6, %5 : vector<8x1xi32>
    %34 = arith.sitofp %33 : vector<8x1xi32> to vector<8x1xf32>
    %cst_12 = arith.constant 1.000000e+00 : f32
    %35 = vector.broadcast %cst_12 : f32 to vector<8x1xf32>
    %36 = arith.maximumf %34, %35 : vector<8x1xf32>
    %37 = tpu.reciprocal %32 {approx = true} : vector<8x1xf32> -> vector<8x1xf32>
    %38 = vector.broadcast %37 : vector<8x1xf32> to vector<8x128xf32>
    %39 = arith.mulf %24, %38 : vector<8x128xf32>
    %40 = tpu.reciprocal %36 {approx = true} : vector<8x1xf32> -> vector<8x1xf32>
    %41 = vector.broadcast %40 : vector<8x1xf32> to vector<8x128xf32>
    %42 = arith.mulf %28, %41 : vector<8x128xf32>
    %c0_13 = arith.constant 0 : index
    %c0_14 = arith.constant 0 : index
    %43 = vector.load %arg6[%c0_13, %c0_14] : memref<8x256xf32, #tpu.memory_space<vmem>>, vector<8x128xf32>
    tpu.vector_store %arg6[%c0_13, %c0_14], %39 {strides = array<i32>} : memref<8x256xf32, #tpu.memory_space<vmem>>, vector<8x128xf32>,
    %c0_15 = arith.constant 0 : index
    %c128 = arith.constant 128 : index
    %44 = vector.load %arg6[%c0_15, %c128] : memref<8x256xf32, #tpu.memory_space<vmem>>, vector<8x128xf32>
    tpu.vector_store %arg6[%c0_15, %c128], %42 {strides = array<i32>} : memref<8x256xf32, #tpu.memory_space<vmem>>, vector<8x128xf32>,
    return
  }
  func.func @transform_0(%arg0: i32) -> (i32, i32, i32) {
    %c0_i32 = arith.constant 0 : i32
    %c0_i32_0 = arith.constant 0 : i32
    %c0_i32_1 = arith.constant 0 : i32
    return %arg0, %c0_i32, %c0_i32_0 : i32, i32, i32
  }
  func.func @transform_1(%arg0: i32) -> (i32, i32) {
    %c0_i32 = arith.constant 0 : i32
    %c0_i32_0 = arith.constant 0 : i32
    return %arg0, %c0_i32 : i32, i32
  }
  func.func @transform_2(%arg0: i32) -> (i32, i32) {
    %c0_i32 = arith.constant 0 : i32
    %c0_i32_0 = arith.constant 0 : i32
    return %arg0, %c0_i32 : i32, i32
  }
  func.func @transform_3(%arg0: i32) -> (i32, i32) {
    %c0_i32 = arith.constant 0 : i32
    %c0_i32_0 = arith.constant 0 : i32
    return %arg0, %c0_i32 : i32, i32
  }
  func.func @transform_4(%arg0: i32) -> (i32, i32) {
    %c0_i32 = arith.constant 0 : i32
    %c0_i32_0 = arith.constant 0 : i32
    return %arg0, %c0_i32 : i32, i32
  }
  func.func @transform_5(%arg0: i32) -> (i32, i32) {
    %c0_i32 = arith.constant 0 : i32
    %c0_i32_0 = arith.constant 0 : i32
    return %arg0, %c0_i32 : i32, i32
  }
}

</mosaic_0001>

<llo_original>
// kernel: cp_forward.3
$region0: #{cp_forward.3}
  #allocation0 [shape = 'u32[]', space=smem, size = 0x4, offset = 0x4, fixed_abs, tag = 'smem constant byte address 0x4 - core index']
  #allocation1 [shape = 'u32[144,128]{1,0:T(1,128)}', space=vmem, size = 0x12000, scoped, tag = 'internal scratch']
  #allocation2 [shape = 'f32[256,128]{1,0:T(8,128)}', space=vmem, size = 0x20000, scoped, tag = 'scratch operand']
  %s0 = inlined_call_operand.vmem [shape: bf16[1024,128], index: 0, kind: input, shape index: {}]
  %s1 = inlined_call_operand.vmem [shape: bf16[128,128], index: 1, kind: input, shape index: {}]
  %s2 = inlined_call_operand.vmem [shape: f32[1,128], index: 2, kind: input, shape index: {}]
  %s3 = inlined_call_operand.vmem [shape: bf16[1024,128], index: 3, kind: output, shape index: {}]
  %s4 = sld [smem:[#allocation0]]
  $region53: #{cp_forward.3} parent=0
    _
  %s6 = ssub.s32 1, %s4
  %s7 = scalar_select 0, %s6, %s4
  loop: start=0, step=1, limit=6
  $region2: #{cp_forward.3} parent=0 // loop_pre_header
    _
  $region3: #{cp_forward.3} parent=0 // loop_header
    %s9 = sphi 0, %s13
    %p10 = scmp.ge.s32.totalorder %s9, 6
    %s16 = sphi 0, %s35
    %s17 = sphi 0, %s31
    %s18 = sphi 0, %s27
    %s19 = sphi 0, %s16
    %s20 = sphi 0, %s17
    %s21 = sphi 0, %s18
    %s22 = sphi 0, %s19
    %s23 = sphi 0, %s20
    %s24 = sphi 0, %s21
    %s40 = sphi 0, %s42
    %s43 = sphi 0, %s40
    %s44 = sphi 0, %s43
    %s60 = sphi 0, %s44
    %s68 = sphi 0, %s70
    %s71 = sphi 0, %s68
    %s72 = sphi 0, %s71
    %s88 = sphi 0, %s72
    %s94 = sphi 0, %s96
    %s97 = sphi 0, %s94
    %s98 = sphi 0, %s97
    %s114 = sphi 0, %s98
    %s122 = sphi 0, %s124
    %s125 = sphi 0, %s122
    %s126 = sphi 0, %s125
    %s142 = sphi 0, %s126
  $region4: #{cp_forward.3} parent=0 // loop_header_branch
    %12 = sbr.rel (%p10) target = $region8
  $region5: #{cp_forward.3} parent=0 // loop_body
    %s14 = ssub.s32 %s9, 1
    %s15 = ssub.s32 %s9, 2
    %s25 = sadd.s32 1, %s18
    %p26 = scmp.ge.s32.totalorder %s25, 1
    %s27 = scalar_select %p26, 0, %s25
    %s28 = sadd.s32 1, %s17
    %s29 = scalar_select %p26, %s28, %s17
    %p30 = scmp.ge.s32.totalorder %s29, 1
    %s31 = scalar_select %p30, 0, %s29
    %s32 = sadd.s32 1, %s16
    %s33 = scalar_select %p30, %s32, %s16
    %p34 = scmp.ge.s32.totalorder %s33, 4
    %s35 = scalar_select %p34, 0, %s33
    %s36 = ssub.s32 %s16, %s35
    %s37 = ssub.s32 %s18, %s27
    %s38 = sor.u32 %s36, %s37
    %p39 = scmp.eq.s32.totalorder %s38, 0
    %s41 = sadd.s32 %s40, 1
    %s42 = scalar_select %p39, %s40, %s41
    %p45 = pneg %p39
    %p46 = scmp.eq.s32.totalorder %s9, 3
    %p47 = por %p45, %p46
    %p48 = scmp.ne.s32.totalorder %s40, %s43
    %p49 = scmp.eq.s32.totalorder %s9, 0
    %p50 = por %p48, %p49
    %p51 = scmp.ne.s32.totalorder %s40, %s43
    %p52 = scmp.eq.s32.totalorder %s14, 3
    %p53 = por %p51, %p52
    %p54 = scmp.ne.s32.totalorder %s43, %s44
    %p55 = scmp.eq.s32.totalorder %s14, 0
    %p56 = por %p54, %p55
    %p57 = scmp.ne.s32.totalorder %s43, %s44
    %p58 = scmp.eq.s32.totalorder %s15, 3
    %p59 = por %p57, %p58
    %p61 = scmp.ne.s32.totalorder %s44, %s60
    %p62 = scmp.eq.s32.totalorder %s15, 0
    %p63 = por %p61, %p62
    %s64 = ssub.s32 %s18, %s27
    %s65 = ssub.s32 %s17, %s31
    %s66 = sor.u32 %s64, %s65
    %p67 = scmp.eq.s32.totalorder %s66, 0
    %s69 = sadd.s32 %s68, 1
    %s70 = scalar_select %p67, %s68, %s69
    %p73 = pneg %p67
    %p74 = scmp.eq.s32.totalorder %s9, 3
    %p75 = por %p73, %p74
    %p76 = scmp.ne.s32.totalorder %s68, %s71
    %p77 = scmp.eq.s32.totalorder %s9, 0
    %p78 = por %p76, %p77
    %p79 = scmp.ne.s32.totalorder %s68, %s71
    %p80 = scmp.eq.s32.totalorder %s14, 3
    %p81 = por %p79, %p80
    %p82 = scmp.ne.s32.totalorder %s71, %s72
    %p83 = scmp.eq.s32.totalorder %s14, 0
    %p84 = por %p82, %p83
    %p85 = scmp.ne.s32.totalorder %s71, %s72
    %p86 = scmp.eq.s32.totalorder %s15, 3
    %p87 = por %p85, %p86
    %p89 = scmp.ne.s32.totalorder %s72, %s88
    %p90 = scmp.eq.s32.totalorder %s15, 0
    %p91 = por %p89, %p90
    %s92 = ssub.s32 %s17, %s31
    %p93 = scmp.eq.s32.totalorder %s92, 0
    %s95 = sadd.s32 %s94, 1
    %s96 = scalar_select %p93, %s94, %s95
    %p99 = pneg %p93
    %p100 = scmp.eq.s32.totalorder %s9, 3
    %p101 = por %p99, %p100
    %p102 = scmp.ne.s32.totalorder %s94, %s97
    %p103 = scmp.eq.s32.totalorder %s9, 0
    %p104 = por %p102, %p103
    %p105 = scmp.ne.s32.totalorder %s94, %s97
    %p106 = scmp.eq.s32.totalorder %s14, 3
    %p107 = por %p105, %p106
    %p108 = scmp.ne.s32.totalorder %s97, %s98
    %p109 = scmp.eq.s32.totalorder %s14, 0
    %p110 = por %p108, %p109
    %p111 = scmp.ne.s32.totalorder %s97, %s98
    %p112 = scmp.eq.s32.totalorder %s15, 3
    %p113 = por %p111, %p112
    %p115 = scmp.ne.s32.totalorder %s98, %s114
    %p116 = scmp.eq.s32.totalorder %s15, 0
    %p117 = por %p115, %p116
    %s118 = ssub.s32 %s16, %s35
    %s119 = ssub.s32 %s17, %s31
    %s120 = sor.u32 %s118, %s119
    %p121 = scmp.eq.s32.totalorder %s120, 0
    %s123 = sadd.s32 %s122, 1
    %s124 = scalar_select %p121, %s122, %s123
    %p127 = pneg %p121
    %p128 = scmp.eq.s32.totalorder %s9, 3
    %p129 = por %p127, %p128
    %p130 = scmp.ne.s32.totalorder %s122, %s125
    %p131 = scmp.eq.s32.totalorder %s9, 0
    %p132 = por %p130, %p131
    %p133 = scmp.ne.s32.totalorder %s122, %s125
    %p134 = scmp.eq.s32.totalorder %s14, 3
    %p135 = por %p133, %p134
    %p136 = scmp.ne.s32.totalorder %s125, %s126
    %p137 = scmp.eq.s32.totalorder %s14, 0
    %p138 = por %p136, %p137
    %p139 = scmp.ne.s32.totalorder %s125, %s126
    %p140 = scmp.eq.s32.totalorder %s15, 3
    %p141 = por %p139, %p140
    %p143 = scmp.ne.s32.totalorder %s126, %s142
    %p144 = scmp.eq.s32.totalorder %s15, 0
    %p145 = por %p143, %p144
    %p146 = scmp.le.s32.totalorder 1, %s9
    %p147 = scmp.lt.s32.totalorder %s9, 5
    %p148 = pnand %p146, %p147
    %p149 = pneg %p148
    // Predicated region
    $region9: #{cp_forward.3} parent=5 // pred_check
      _
    $region10: #{cp_forward.3} parent=5 // pred_check_branch
      %151 = sbr.rel (%p148) target = $region12
    $region11: #{cp_forward.3} parent=5 // pred_region
      %s152 = ssub.s32 %s9, 1
      // Predicated region
      $region13: #{cp_forward.3} parent=11 // pred_check
        %p153 = pneg %p84
      $region14: #{cp_forward.3} parent=11 // pred_check_branch
        %155 = sbr.rel (%p153) target = $region16
      $region15: #{cp_forward.3} parent=11 // pred_region
        %s156 = smul.u32 16, %s21
        %p157 = scmp.lt.s32.totalorder %s156, 15
        %s158 = scalar_select %p157, %s156, 15
        %p159 = scmp.lt.s32.totalorder %s20, 0
        %s160 = scalar_select %p159, %s20, 0
        %s161 = sadd.s32 %s160, %s158
        %s162 = smul.addr %s161, 4
        %s163 = scalar_lea.vmem %s1, %s162
        %s164 = smul.u32 16, %s21
      $region16: #{cp_forward.3} parent=11 // pred_fallthru
        _
      // Predicated region
      $region17: #{cp_forward.3} parent=11 // pred_check
        %p165 = pneg %p110
      $region18: #{cp_forward.3} parent=11 // pred_check_branch
        %167 = sbr.rel (%p165) target = $region20
      $region19: #{cp_forward.3} parent=11 // pred_region
        %p168 = scmp.lt.s32.totalorder %s20, 0
        %s169 = scalar_select %p168, %s20, 0
        %s170 = scalar_lea.vmem %s2, %s169
      $region20: #{cp_forward.3} parent=11 // pred_fallthru
        _
    $region12: #{cp_forward.3} parent=5 // pred_fallthru
      _
    %p171 = scmp.lt.s32.totalorder %s9, 4
    // Predicated region
    $region21: #{cp_forward.3} parent=5 // pred_check
      %p172 = pneg %p171
    $region22: #{cp_forward.3} parent=5 // pred_check_branch
      %174 = sbr.rel (%p172) target = $region24
    $region23: #{cp_forward.3} parent=5 // pred_region
      // Predicated region
      $region25: #{cp_forward.3} parent=23 // pred_check
        %p175 = pneg %p50
      $region26: #{cp_forward.3} parent=23 // pred_check_branch
        %177 = sbr.rel (%p175) target = $region28
      $region27: #{cp_forward.3} parent=23 // pred_region
        %s178 = smul.u32 32, %s16
        %p179 = scmp.lt.s32.totalorder %s178, 127
        %s180 = scalar_select %p179, %s178, 127
        %p181 = scmp.lt.s32.totalorder %s18, 0
        %s182 = scalar_select %p181, %s18, 0
        %s183 = sadd.s32 %s182, %s180
        %s184 = smul.addr %s183, 4
        %s185 = scalar_lea.vmem %s0, %s184
        %s186 = smul.u32 32, %s16
      $region28: #{cp_forward.3} parent=23 // pred_fallthru
        _
    $region24: #{cp_forward.3} parent=5 // pred_fallthru
      _
    %p187 = scmp.le.s32.totalorder 1, %s9
    %p188 = scmp.lt.s32.totalorder %s9, 5
    %p189 = pnand %p187, %p188
    %p190 = pneg %p189
    // Predicated region
    $region29: #{cp_forward.3} parent=5 // pred_check
      _
    $region30: #{cp_forward.3} parent=5 // pred_check_branch
      %192 = sbr.rel (%p189) target = $region32
    $region31: #{cp_forward.3} parent=5 // pred_region
      %s193 = ssub.s32 %s9, 1
      %s194 = smul.u32 32, %s19
      %p195 = scmp.lt.s32.totalorder %s194, 127
      %s196 = scalar_select %p195, %s194, 127
      %p197 = scmp.lt.s32.totalorder %s21, 0
      %s198 = scalar_select %p197, %s21, 0
      %s199 = sadd.s32 %s198, %s196
      %s200 = smul.addr %s199, 4
      %s201 = scalar_lea.vmem %s0, %s200
      %p202 = pneg %p56
      %p203 = pneg %p53
      %s204 = smul.u32 16, %s21
      %p205 = scmp.lt.s32.totalorder %s204, 15
      %s206 = scalar_select %p205, %s204, 15
      %p207 = scmp.lt.s32.totalorder %s20, 0
      %s208 = scalar_select %p207, %s20, 0
      %s209 = sadd.s32 %s208, %s206
      %s210 = smul.addr %s209, 4
      %s211 = scalar_lea.vmem %s1, %s210
      %p212 = pneg %p84
      %p213 = pneg %p81
      %p214 = scmp.lt.s32.totalorder %s20, 0
      %s215 = scalar_select %p214, %s20, 0
      %s216 = scalar_lea.vmem %s2, %s215
      %p217 = pneg %p110
      %p218 = pneg %p107
      %p219 = pneg %p138
      %p220 = pneg %p135
      %s221 = smul.u32 32, %s19
      %p222 = scmp.lt.s32.totalorder %s221, 127
      %s223 = scalar_select %p222, %s221, 127
      %p224 = scmp.lt.s32.totalorder %s20, 0
      %s225 = scalar_select %p224, %s20, 0
      %s226 = sadd.s32 %s225, %s223
      %s227 = smul.addr %s226, 4
      %s228 = scalar_lea.vmem %s3, %s227
      %s229 = smul.u32 32, %s19
      %p230 = scmp.lt.s32.totalorder %s229, 127
      %s231 = scalar_select %p230, %s229, 127
      %p232 = scmp.lt.s32.totalorder %s21, 0
      %s233 = scalar_select %p232, %s21, 0
      %s234 = sadd.s32 %s233, %s231
      %s235 = smul.addr %s234, 4
      %s236 = scalar_lea.vmem %s0, %s235
      %s237 = smul.u32 32, %s19
      %s238 = smul.u32 16, %s21
      %p239 = scmp.lt.s32.totalorder %s238, 15
      %s240 = scalar_select %p239, %s238, 15
      %p241 = scmp.lt.s32.totalorder %s20, 0
      %s242 = scalar_select %p241, %s20, 0
      %s243 = sadd.s32 %s242, %s240
      %s244 = smul.addr %s243, 4
      %s245 = scalar_lea.vmem %s1, %s244
      %s246 = smul.u32 16, %s21
      %p247 = scmp.lt.s32.totalorder %s20, 0
      %s248 = scalar_select %p247, %s20, 0
      %s249 = scalar_lea.vmem %s2, %s248
      %s250 = smul.u32 32, %s19
      %p251 = scmp.lt.s32.totalorder %s250, 127
      %s252 = scalar_select %p251, %s250, 127
      %p253 = scmp.lt.s32.totalorder %s20, 0
      %s254 = scalar_select %p253, %s20, 0
      %s255 = sadd.s32 %s254, %s252
      %s256 = smul.addr %s255, 4
      %s257 = scalar_lea.vmem %s3, %s256
      %s258 = smul.u32 32, %s19
      %p260 = scmp.eq.s32.totalorder %s21, 0
      // Predicated region
      $region33: #{cp_forward.3} parent=31 // pred_check
        %p261 = pneg %p260
      $region34: #{cp_forward.3} parent=31 // pred_check_branch
        %263 = sbr.rel (%p261) target = $region36
      $region35: #{cp_forward.3} parent=31 // pred_region
        %264 = vst [vmem:[#allocation2] sm:$0xff] 0.0
        %265 = vst [vmem:[#allocation2 + $0x8] sm:$0xff] 0.0
        %266 = vst [vmem:[#allocation2 + $0x10] sm:$0xff] 0.0
        %267 = vst [vmem:[#allocation2 + $0x18] sm:$0xff] 0.0
        %268 = vst [vmem:[#allocation2 + $0x20] sm:$0xff] 0.0
        %269 = vst [vmem:[#allocation2 + $0x28] sm:$0xff] 0.0
        %270 = vst [vmem:[#allocation2 + $0x30] sm:$0xff] 0.0
        %271 = vst [vmem:[#allocation2 + $0x38] sm:$0xff] 0.0
        %272 = vst [vmem:[#allocation2 + $0x40] sm:$0xff] 0.0
        %273 = vst [vmem:[#allocation2 + $0x48] sm:$0xff] 0.0
        %274 = vst [vmem:[#allocation2 + $0x50] sm:$0xff] 0.0
        %275 = vst [vmem:[#allocation2 + $0x58] sm:$0xff] 0.0
        %276 = vst [vmem:[#allocation2 + $0x60] sm:$0xff] 0.0
        %277 = vst [vmem:[#allocation2 + $0x68] sm:$0xff] 0.0
        %278 = vst [vmem:[#allocation2 + $0x70] sm:$0xff] 0.0
        %279 = vst [vmem:[#allocation2 + $0x78] sm:$0xff] 0.0
        %280 = vst [vmem:[#allocation2 + $0x80] sm:$0xff] 0.0
        %281 = vst [vmem:[#allocation2 + $0x88] sm:$0xff] 0.0
        %282 = vst [vmem:[#allocation2 + $0x90] sm:$0xff] 0.0
        %283 = vst [vmem:[#allocation2 + $0x98] sm:$0xff] 0.0
        %284 = vst [vmem:[#allocation2 + $0xa0] sm:$0xff] 0.0
        %285 = vst [vmem:[#allocation2 + $0xa8] sm:$0xff] 0.0
        %286 = vst [vmem:[#allocation2 + $0xb0] sm:$0xff] 0.0
        %287 = vst [vmem:[#allocation2 + $0xb8] sm:$0xff] 0.0
        %288 = vst [vmem:[#allocation2 + $0xc0] sm:$0xff] 0.0
        %289 = vst [vmem:[#allocation2 + $0xc8] sm:$0xff] 0.0
        %290 = vst [vmem:[#allocation2 + $0xd0] sm:$0xff] 0.0
        %291 = vst [vmem:[#allocation2 + $0xd8] sm:$0xff] 0.0
        %292 = vst [vmem:[#allocation2 + $0xe0] sm:$0xff] 0.0
        %293 = vst [vmem:[#allocation2 + $0xe8] sm:$0xff] 0.0
        %294 = vst [vmem:[#allocation2 + $0xf0] sm:$0xff] 0.0
        %295 = vst [vmem:[#allocation2 + $0xf8] sm:$0xff] 0.0
      $region36: #{cp_forward.3} parent=31 // pred_fallthru
        _
      %v296 = vld [vmem:[#allocation2] sm:$0xff]
      %v297 = vld [vmem:[#allocation2 + $0x8] sm:$0xff]
      %v298 = vld [vmem:[#allocation2 + $0x10] sm:$0xff]
      %v299 = vld [vmem:[#allocation2 + $0x18] sm:$0xff]
      %v300 = vld [vmem:[#allocation2 + $0x20] sm:$0xff]
      %v301 = vld [vmem:[#allocation2 + $0x28] sm:$0xff]
      %v302 = vld [vmem:[#allocation2 + $0x30] sm:$0xff]
      %v303 = vld [vmem:[#allocation2 + $0x38] sm:$0xff]
      %v304 = vld [vmem:[#allocation2 + $0x40] sm:$0xff]
      %v305 = vld [vmem:[#allocation2 + $0x48] sm:$0xff]
      %v306 = vld [vmem:[#allocation2 + $0x50] sm:$0xff]
      %v307 = vld [vmem:[#allocation2 + $0x58] sm:$0xff]
      %v308 = vld [vmem:[#allocation2 + $0x60] sm:$0xff]
      %v309 = vld [vmem:[#allocation2 + $0x68] sm:$0xff]
      %v310 = vld [vmem:[#allocation2 + $0x70] sm:$0xff]
      %v311 = vld [vmem:[#allocation2 + $0x78] sm:$0xff]
      %v312 = vld [vmem:[#allocation2 + $0x80] sm:$0xff]
      %v313 = vld [vmem:[#allocation2 + $0x88] sm:$0xff]
      %v314 = vld [vmem:[#allocation2 + $0x90] sm:$0xff]
      %v315 = vld [vmem:[#allocation2 + $0x98] sm:$0xff]
      %v316 = vld [vmem:[#allocation2 + $0xa0] sm:$0xff]
      %v317 = vld [vmem:[#allocation2 + $0xa8] sm:$0xff]
      %v318 = vld [vmem:[#allocation2 + $0xb0] sm:$0xff]
      %v319 = vld [vmem:[#allocation2 + $0xb8] sm:$0xff]
      %v320 = vld [vmem:[#allocation2 + $0xc0] sm:$0xff]
      %v321 = vld [vmem:[#allocation2 + $0xc8] sm:$0xff]
      %v322 = vld [vmem:[#allocation2 + $0xd0] sm:$0xff]
      %v323 = vld [vmem:[#allocation2 + $0xd8] sm:$0xff]
      %v324 = vld [vmem:[#allocation2 + $0xe0] sm:$0xff]
      %v325 = vld [vmem:[#allocation2 + $0xe8] sm:$0xff]
      %v326 = vld [vmem:[#allocation2 + $0xf0] sm:$0xff]
      %v327 = vld [vmem:[#allocation2 + $0xf8] sm:$0xff]
      %v328 = vld [vmem:[%s236] sm:$0xf]
      %v329 = vld [vmem:[%s236 + $0x4] sm:$0xf]
      %v330 = vld [vmem:[%s236 + $0x8] sm:$0xf]
      %v331 = vld [vmem:[%s236 + $0xc] sm:$0xf]
      %v332 = vld [vmem:[%s236 + $0x10] sm:$0xf]
      %v333 = vld [vmem:[%s236 + $0x14] sm:$0xf]
      %v334 = vld [vmem:[%s236 + $0x18] sm:$0xf]
      %v335 = vld [vmem:[%s236 + $0x1c] sm:$0xf]
      %v336 = vld [vmem:[%s236 + $0x20] sm:$0xf]
      %v337 = vld [vmem:[%s236 + $0x24] sm:$0xf]
      %v338 = vld [vmem:[%s236 + $0x28] sm:$0xf]
      %v339 = vld [vmem:[%s236 + $0x2c] sm:$0xf]
      %v340 = vld [vmem:[%s236 + $0x30] sm:$0xf]
      %v341 = vld [vmem:[%s236 + $0x34] sm:$0xf]
      %v342 = vld [vmem:[%s236 + $0x38] sm:$0xf]
      %v343 = vld [vmem:[%s236 + $0x3c] sm:$0xf]
      %v344 = vld [vmem:[%s236 + $0x40] sm:$0xf]
      %v345 = vld [vmem:[%s236 + $0x44] sm:$0xf]
      %v346 = vld [vmem:[%s236 + $0x48] sm:$0xf]
      %v347 = vld [vmem:[%s236 + $0x4c] sm:$0xf]
      %v348 = vld [vmem:[%s236 + $0x50] sm:$0xf]
      %v349 = vld [vmem:[%s236 + $0x54] sm:$0xf]
      %v350 = vld [vmem:[%s236 + $0x58] sm:$0xf]
      %v351 = vld [vmem:[%s236 + $0x5c] sm:$0xf]
      %v352 = vld [vmem:[%s236 + $0x60] sm:$0xf]
      %v353 = vld [vmem:[%s236 + $0x64] sm:$0xf]
      %v354 = vld [vmem:[%s236 + $0x68] sm:$0xf]
      %v355 = vld [vmem:[%s236 + $0x6c] sm:$0xf]
      %v356 = vld [vmem:[%s236 + $0x70] sm:$0xf]
      %v357 = vld [vmem:[%s236 + $0x74] sm:$0xf]
      %v358 = vld [vmem:[%s236 + $0x78] sm:$0xf]
      %v359 = vld [vmem:[%s236 + $0x7c] sm:$0xf]
      %v360 = vld [vmem:[%s245] sm:$0xf]
      %v361 = vld [vmem:[%s245 + $0x4] sm:$0xf]
      %v362 = vld [vmem:[%s245 + $0x8] sm:$0xf]
      %v363 = vld [vmem:[%s245 + $0xc] sm:$0xf]
      %v364 = vld [vmem:[%s245 + $0x10] sm:$0xf]
      %v365 = vld [vmem:[%s245 + $0x14] sm:$0xf]
      %v366 = vld [vmem:[%s245 + $0x18] sm:$0xf]
      %v367 = vld [vmem:[%s245 + $0x1c] sm:$0xf]
      %v368 = vld [vmem:[%s245 + $0x20] sm:$0xf]
      %v369 = vld [vmem:[%s245 + $0x24] sm:$0xf]
      %v370 = vld [vmem:[%s245 + $0x28] sm:$0xf]
      %v371 = vld [vmem:[%s245 + $0x2c] sm:$0xf]
      %v372 = vld [vmem:[%s245 + $0x30] sm:$0xf]
      %v373 = vld [vmem:[%s245 + $0x34] sm:$0xf]
      %v374 = vld [vmem:[%s245 + $0x38] sm:$0xf]
      %v375 = vld [vmem:[%s245 + $0x3c] sm:$0xf]
      %v408 = vunpack.c.l.b16 %v328
      %v409 = vunpack.c.l.b16 %v329
      %v410 = vunpack.c.l.b16 %v330
      %v411 = vunpack.c.l.b16 %v331
      %v412 = vunpack.c.l.b16 %v332
      %v413 = vunpack.c.l.b16 %v333
      %v414 = vunpack.c.l.b16 %v334
      %v415 = vunpack.c.l.b16 %v335
      %v416 = vunpack.c.l.b16 %v336
      %v417 = vunpack.c.l.b16 %v337
      %v418 = vunpack.c.l.b16 %v338
      %v419 = vunpack.c.l.b16 %v339
      %v420 = vunpack.c.l.b16 %v340
      %v421 = vunpack.c.l.b16 %v341
      %v422 = vunpack.c.l.b16 %v342
      %v423 = vunpack.c.l.b16 %v343
      %v424 = vunpack.c.l.b16 %v344
      %v425 = vunpack.c.l.b16 %v345
      %v426 = vunpack.c.l.b16 %v346
      %v427 = vunpack.c.l.b16 %v347
      %v428 = vunpack.c.l.b16 %v348
      %v429 = vunpack.c.l.b16 %v349
      %v430 = vunpack.c.l.b16 %v350
      %v431 = vunpack.c.l.b16 %v351
      %v432 = vunpack.c.l.b16 %v352
      %v433 = vunpack.c.l.b16 %v353
      %v434 = vunpack.c.l.b16 %v354
      %v435 = vunpack.c.l.b16 %v355
      %v436 = vunpack.c.l.b16 %v356
      %v437 = vunpack.c.l.b16 %v357
      %v438 = vunpack.c.l.b16 %v358
      %v439 = vunpack.c.l.b16 %v359
      %v440 = vpack.c.b16 %v409, %v408
      %v441 = vpack.c.b16 %v411, %v410
      %v442 = vpack.c.b16 %v413, %v412
      %v443 = vpack.c.b16 %v415, %v414
      %v444 = vpack.c.b16 %v417, %v416
      %v445 = vpack.c.b16 %v419, %v418
      %v446 = vpack.c.b16 %v421, %v420
      %v447 = vpack.c.b16 %v423, %v422
      %v448 = vpack.c.b16 %v425, %v424
      %v449 = vpack.c.b16 %v427, %v426
      %v450 = vpack.c.b16 %v429, %v428
      %v451 = vpack.c.b16 %v431, %v430
      %v452 = vpack.c.b16 %v433, %v432
      %v453 = vpack.c.b16 %v435, %v434
      %v454 = vpack.c.b16 %v437, %v436
      %v455 = vpack.c.b16 %v439, %v438
      %v488 = vunpack.c.l.b16 %v360
      %v489 = vunpack.c.l.b16 %v361
      %v490 = vunpack.c.l.b16 %v362
      %v491 = vunpack.c.l.b16 %v363
      %v492 = vunpack.c.l.b16 %v364
      %v493 = vunpack.c.l.b16 %v365
      %v494 = vunpack.c.l.b16 %v366
      %v495 = vunpack.c.l.b16 %v367
      %v496 = vunpack.c.l.b16 %v368
      %v497 = vunpack.c.l.b16 %v369
      %v498 = vunpack.c.l.b16 %v370
      %v499 = vunpack.c.l.b16 %v371
      %v500 = vunpack.c.l.b16 %v372
      %v501 = vunpack.c.l.b16 %v373
      %v502 = vunpack.c.l.b16 %v374
      %v503 = vunpack.c.l.b16 %v375
      %v504 = vpack.c.b16 %v489, %v488
      %v505 = vpack.c.b16 %v491, %v490
      %v506 = vpack.c.b16 %v493, %v492
      %v507 = vpack.c.b16 %v495, %v494
      %v508 = vpack.c.b16 %v497, %v496
      %v509 = vpack.c.b16 %v499, %v498
      %v510 = vpack.c.b16 %v501, %v500
      %v511 = vpack.c.b16 %v503, %v502
      %520 = vmatprep.subr.bf16.mxu0 0
      %521 = vmatpush1.bf16.msra.mxu0 %v504
      %522 = vmatprep.subr.bf16.mxu0 0
      %523 = vmatpush1.bf16.msra.mxu0 %v505
      %524 = vmatprep.subr.bf16.mxu0 0
      %525 = vmatpush1.bf16.msra.mxu0 %v506
      %526 = vmatprep.subr.bf16.mxu0 0
      %527 = vmatpush1.bf16.msra.mxu0 %v507
      %528 = vmatprep.subr.bf16.mxu0 0
      %529 = vmatpush1.bf16.msra.mxu0 %v508
      %530 = vmatprep.subr.bf16.mxu0 0
      %531 = vmatpush1.bf16.msra.mxu0 %v509
      %532 = vmatprep.subr.bf16.mxu0 0
      %533 = vmatpush1.bf16.msra.mxu0 %v510
      %534 = vmatprep.subr.bf16.mxu0 0
      %535 = vmatpush1.bf16.msra.mxu0 %v511
      %536 = vmatprep.subr.bf16.mxu0 0
      %537 = vmatpush1.bf16.msra.mxu0 0
      %538 = vmatprep.subr.bf16.mxu0 0
      %539 = vmatpush1.bf16.msra.mxu0 0
      %540 = vmatprep.subr.bf16.mxu0 0
      %541 = vmatpush1.bf16.msra.mxu0 0
      %542 = vmatprep.subr.bf16.mxu0 0
      %543 = vmatpush1.bf16.msra.mxu0 0
      %544 = vmatprep.subr.bf16.mxu0 0
      %545 = vmatpush1.bf16.msra.mxu0 0
      %546 = vmatprep.subr.bf16.mxu0 0
      %547 = vmatpush1.bf16.msra.mxu0 0
      %548 = vmatprep.subr.bf16.mxu0 0
      %549 = vmatpush1.bf16.msra.mxu0 0
      %550 = vmatprep.subr.bf16.mxu0 0
      %551 = vmatpush1.bf16.msra.mxu0 0
      %552 = vmatprep.mubr.bf16.mxu0 0
      %553 = vmatmul.mubr.bf16.gmra.mrb[0].mxu0 %v440
      %v554 = vpop.f32.mrb[0].mxu0
      %v555 = vadd.f32 0.0, %v554
      %v556 = vpop.f32.mrb[0].mxu0
      %v557 = vpop.f32.mrb[0].mxu0
      %v558 = vadd.f32 0.0, %v557
      %v559 = vpop.f32.mrb[0].mxu0
      %560 = vmatprep.mubr.bf16.mxu0 0
      %561 = vmatmul.mubr.bf16.gmra.mrb[0].mxu0 %v441
      %v562 = vpop.f32.mrb[0].mxu0
      %v563 = vadd.f32 0.0, %v562
      %v564 = vpop.f32.mrb[0].mxu0
      %v565 = vpop.f32.mrb[0].mxu0
      %v566 = vadd.f32 0.0, %v565
      %v567 = vpop.f32.mrb[0].mxu0
      %568 = vmatprep.mubr.bf16.mxu0 0
      %569 = vmatmul.mubr.bf16.gmra.mrb[0].mxu0 %v442
      %v570 = vpop.f32.mrb[0].mxu0
      %v571 = vadd.f32 0.0, %v570
      %v572 = vpop.f32.mrb[0].mxu0
      %v573 = vpop.f32.mrb[0].mxu0
      %v574 = vadd.f32 0.0, %v573
      %v575 = vpop.f32.mrb[0].mxu0
      %576 = vmatprep.mubr.bf16.mxu0 0
      %577 = vmatmul.mubr.bf16.gmra.mrb[0].mxu0 %v443
      %v578 = vpop.f32.mrb[0].mxu0
      %v579 = vadd.f32 0.0, %v578
      %v580 = vpop.f32.mrb[0].mxu0
      %v581 = vpop.f32.mrb[0].mxu0
      %v582 = vadd.f32 0.0, %v581
      %v583 = vpop.f32.mrb[0].mxu0
      %584 = vmatprep.mubr.bf16.mxu0 0
      %585 = vmatmul.mubr.bf16.gmra.mrb[0].mxu0 %v444
      %v586 = vpop.f32.mrb[0].mxu0
      %v587 = vadd.f32 0.0, %v586
      %v588 = vpop.f32.mrb[0].mxu0
      %v589 = vpop.f32.mrb[0].mxu0
      %v590 = vadd.f32 0.0, %v589
      %v591 = vpop.f32.mrb[0].mxu0
      %592 = vmatprep.mubr.bf16.mxu0 0
      %593 = vmatmul.mubr.bf16.gmra.mrb[0].mxu0 %v445
      %v594 = vpop.f32.mrb[0].mxu0
      %v595 = vadd.f32 0.0, %v594
      %v596 = vpop.f32.mrb[0].mxu0
      %v597 = vpop.f32.mrb[0].mxu0
      %v598 = vadd.f32 0.0, %v597
      %v599 = vpop.f32.mrb[0].mxu0
      %600 = vmatprep.mubr.bf16.mxu0 0
      %601 = vmatmul.mubr.bf16.gmra.mrb[0].mxu0 %v446
      %v602 = vpop.f32.mrb[0].mxu0
      %v603 = vadd.f32 0.0, %v602
      %v604 = vpop.f32.mrb[0].mxu0
      %v605 = vpop.f32.mrb[0].mxu0
      %v606 = vadd.f32 0.0, %v605
      %v607 = vpop.f32.mrb[0].mxu0
      %608 = vmatprep.mubr.bf16.mxu0 0
      %609 = vmatmul.mubr.bf16.gmra.mrb[0].mxu0 %v447
      %v610 = vpop.f32.mrb[0].mxu0
      %v611 = vadd.f32 0.0, %v610
      %v612 = vpop.f32.mrb[0].mxu0
      %v613 = vpop.f32.mrb[0].mxu0
      %v614 = vadd.f32 0.0, %v613
      %v615 = vpop.f32.mrb[0].mxu0
      %616 = vmatprep.mubr.bf16.mxu0 0
      %617 = vmatmul.mubr.bf16.gmra.mrb[0].mxu0 %v448
      %v618 = vpop.f32.mrb[0].mxu0
      %v619 = vadd.f32 0.0, %v618
      %v620 = vpop.f32.mrb[0].mxu0
      %v621 = vpop.f32.mrb[0].mxu0
      %v622 = vadd.f32 0.0, %v621
      %v623 = vpop.f32.mrb[0].mxu0
      %624 = vmatprep.mubr.bf16.mxu0 0
      %625 = vmatmul.mubr.bf16.gmra.mrb[0].mxu0 %v449
      %v626 = vpop.f32.mrb[0].mxu0
      %v627 = vadd.f32 0.0, %v626
      %v628 = vpop.f32.mrb[0].mxu0
      %v629 = vpop.f32.mrb[0].mxu0
      %v630 = vadd.f32 0.0, %v629
      %v631 = vpop.f32.mrb[0].mxu0
      %632 = vmatprep.mubr.bf16.mxu0 0
      %633 = vmatmul.mubr.bf16.gmra.mrb[0].mxu0 %v450
      %v634 = vpop.f32.mrb[0].mxu0
      %v635 = vadd.f32 0.0, %v634
      %v636 = vpop.f32.mrb[0].mxu0
      %v637 = vpop.f32.mrb[0].mxu0
      %v638 = vadd.f32 0.0, %v637
      %v639 = vpop.f32.mrb[0].mxu0
      %640 = vmatprep.mubr.bf16.mxu0 0
      %641 = vmatmul.mubr.bf16.gmra.mrb[0].mxu0 %v451
      %v642 = vpop.f32.mrb[0].mxu0
      %v643 = vadd.f32 0.0, %v642
      %v644 = vpop.f32.mrb[0].mxu0
      %v645 = vpop.f32.mrb[0].mxu0
      %v646 = vadd.f32 0.0, %v645
      %v647 = vpop.f32.mrb[0].mxu0
      %648 = vmatprep.mubr.bf16.mxu0 0
      %649 = vmatmul.mubr.bf16.gmra.mrb[0].mxu0 %v452
      %v650 = vpop.f32.mrb[0].mxu0
      %v651 = vadd.f32 0.0, %v650
      %v652 = vpop.f32.mrb[0].mxu0
      %v653 = vpop.f32.mrb[0].mxu0
      %v654 = vadd.f32 0.0, %v653
      %v655 = vpop.f32.mrb[0].mxu0
      %656 = vmatprep.mubr.bf16.mxu0 0
      %657 = vmatmul.mubr.bf16.gmra.mrb[0].mxu0 %v453
      %v658 = vpop.f32.mrb[0].mxu0
      %v659 = vadd.f32 0.0, %v658
      %v660 = vpop.f32.mrb[0].mxu0
      %v661 = vpop.f32.mrb[0].mxu0
      %v662 = vadd.f32 0.0, %v661
      %v663 = vpop.f32.mrb[0].mxu0
      %664 = vmatprep.mubr.bf16.mxu0 0
      %665 = vmatmul.mubr.bf16.gmra.mrb[0].mxu0 %v454
      %v666 = vpop.f32.mrb[0].mxu0
      %v667 = vadd.f32 0.0, %v666
      %v668 = vpop.f32.mrb[0].mxu0
      %v669 = vpop.f32.mrb[0].mxu0
      %v670 = vadd.f32 0.0, %v669
      %v671 = vpop.f32.mrb[0].mxu0
      %672 = vmatprep.mubr.bf16.mxu0 0
      %673 = vmatmul.mubr.bf16.gmra.mrb[0].mxu0 %v455
      %v674 = vpop.f32.mrb[0].mxu0
      %v675 = vadd.f32 0.0, %v674
      %v676 = vpop.f32.mrb[0].mxu0
      %v677 = vpop.f32.mrb[0].mxu0
      %v678 = vadd.f32 0.0, %v677
      %v679 = vpop.f32.mrb[0].mxu0
      %680 = vdwg.mxu0
      %v681 = vadd.f32 %v296, %v555
      %v682 = vadd.f32 %v297, %v558
      %v683 = vadd.f32 %v298, %v563
      %v684 = vadd.f32 %v299, %v566
      %v685 = vadd.f32 %v300, %v571
      %v686 = vadd.f32 %v301, %v574
      %v687 = vadd.f32 %v302, %v579
      %v688 = vadd.f32 %v303, %v582
      %v689 = vadd.f32 %v304, %v587
      %v690 = vadd.f32 %v305, %v590
      %v691 = vadd.f32 %v306, %v595
      %v692 = vadd.f32 %v307, %v598
      %v693 = vadd.f32 %v308, %v603
      %v694 = vadd.f32 %v309, %v606
      %v695 = vadd.f32 %v310, %v611
      %v696 = vadd.f32 %v311, %v614
      %v697 = vadd.f32 %v312, %v619
      %v698 = vadd.f32 %v313, %v622
      %v699 = vadd.f32 %v314, %v627
      %v700 = vadd.f32 %v315, %v630
      %v701 = vadd.f32 %v316, %v635
      %v702 = vadd.f32 %v317, %v638
      %v703 = vadd.f32 %v318, %v643
      %v704 = vadd.f32 %v319, %v646
      %v705 = vadd.f32 %v320, %v651
      %v706 = vadd.f32 %v321, %v654
      %v707 = vadd.f32 %v322, %v659
      %v708 = vadd.f32 %v323, %v662
      %v709 = vadd.f32 %v324, %v667
      %v710 = vadd.f32 %v325, %v670
      %v711 = vadd.f32 %v326, %v675
      %v712 = vadd.f32 %v327, %v678
      %713 = vst [vmem:[#allocation2] sm:$0xff] %v681
      %714 = vst [vmem:[#allocation2 + $0x8] sm:$0xff] %v682
      %715 = vst [vmem:[#allocation2 + $0x10] sm:$0xff] %v683
      %716 = vst [vmem:[#allocation2 + $0x18] sm:$0xff] %v684
      %717 = vst [vmem:[#allocation2 + $0x20] sm:$0xff] %v685
      %718 = vst [vmem:[#allocation2 + $0x28] sm:$0xff] %v686
      %719 = vst [vmem:[#allocation2 + $0x30] sm:$0xff] %v687
      %720 = vst [vmem:[#allocation2 + $0x38] sm:$0xff] %v688
      %721 = vst [vmem:[#allocation2 + $0x40] sm:$0xff] %v689
      %722 = vst [vmem:[#allocation2 + $0x48] sm:$0xff] %v690
      %723 = vst [vmem:[#allocation2 + $0x50] sm:$0xff] %v691
      %724 = vst [vmem:[#allocation2 + $0x58] sm:$0xff] %v692
      %725 = vst [vmem:[#allocation2 + $0x60] sm:$0xff] %v693
      %726 = vst [vmem:[#allocation2 + $0x68] sm:$0xff] %v694
      %727 = vst [vmem:[#allocation2 + $0x70] sm:$0xff] %v695
      %728 = vst [vmem:[#allocation2 + $0x78] sm:$0xff] %v696
      %729 = vst [vmem:[#allocation2 + $0x80] sm:$0xff] %v697
      %730 = vst [vmem:[#allocation2 + $0x88] sm:$0xff] %v698
      %731 = vst [vmem:[#allocation2 + $0x90] sm:$0xff] %v699
      %732 = vst [vmem:[#allocation2 + $0x98] sm:$0xff] %v700
      %733 = vst [vmem:[#allocation2 + $0xa0] sm:$0xff] %v701
      %734 = vst [vmem:[#allocation2 + $0xa8] sm:$0xff] %v702
      %735 = vst [vmem:[#allocation2 + $0xb0] sm:$0xff] %v703
      %736 = vst [vmem:[#allocation2 + $0xb8] sm:$0xff] %v704
      %737 = vst [vmem:[#allocation2 + $0xc0] sm:$0xff] %v705
      %738 = vst [vmem:[#allocation2 + $0xc8] sm:$0xff] %v706
      %739 = vst [vmem:[#allocation2 + $0xd0] sm:$0xff] %v707
      %740 = vst [vmem:[#allocation2 + $0xd8] sm:$0xff] %v708
      %741 = vst [vmem:[#allocation2 + $0xe0] sm:$0xff] %v709
      %742 = vst [vmem:[#allocation2 + $0xe8] sm:$0xff] %v710
      %743 = vst [vmem:[#allocation2 + $0xf0] sm:$0xff] %v711
      %744 = vst [vmem:[#allocation2 + $0xf8] sm:$0xff] %v712
      // Predicated region
      $region37: #{cp_forward.3} parent=31 // pred_check
        %p745 = pneg %p260
      $region38: #{cp_forward.3} parent=31 // pred_check_branch
        %747 = sbr.rel (%p745) target = $region40
      $region39: #{cp_forward.3} parent=31 // pred_region
        %v748 = vld [vmem:[#allocation2] sm:$0xff]
        %v749 = vld [vmem:[#allocation2 + $0x8] sm:$0xff]
        %v750 = vld [vmem:[#allocation2 + $0x10] sm:$0xff]
        %v751 = vld [vmem:[#allocation2 + $0x18] sm:$0xff]
        %v752 = vld [vmem:[#allocation2 + $0x20] sm:$0xff]
        %v753 = vld [vmem:[#allocation2 + $0x28] sm:$0xff]
        %v754 = vld [vmem:[#allocation2 + $0x30] sm:$0xff]
        %v755 = vld [vmem:[#allocation2 + $0x38] sm:$0xff]
        %v756 = vld [vmem:[#allocation2 + $0x40] sm:$0xff]
        %v757 = vld [vmem:[#allocation2 + $0x48] sm:$0xff]
        %v758 = vld [vmem:[#allocation2 + $0x50] sm:$0xff]
        %v759 = vld [vmem:[#allocation2 + $0x58] sm:$0xff]
        %v760 = vld [vmem:[#allocation2 + $0x60] sm:$0xff]
        %v761 = vld [vmem:[#allocation2 + $0x68] sm:$0xff]
        %v762 = vld [vmem:[#allocation2 + $0x70] sm:$0xff]
        %v763 = vld [vmem:[#allocation2 + $0x78] sm:$0xff]
        %v764 = vld [vmem:[#allocation2 + $0x80] sm:$0xff]
        %v765 = vld [vmem:[#allocation2 + $0x88] sm:$0xff]
        %v766 = vld [vmem:[#allocation2 + $0x90] sm:$0xff]
        %v767 = vld [vmem:[#allocation2 + $0x98] sm:$0xff]
        %v768 = vld [vmem:[#allocation2 + $0xa0] sm:$0xff]
        %v769 = vld [vmem:[#allocation2 + $0xa8] sm:$0xff]
        %v770 = vld [vmem:[#allocation2 + $0xb0] sm:$0xff]
        %v771 = vld [vmem:[#allocation2 + $0xb8] sm:$0xff]
        %v772 = vld [vmem:[#allocation2 + $0xc0] sm:$0xff]
        %v773 = vld [vmem:[#allocation2 + $0xc8] sm:$0xff]
        %v774 = vld [vmem:[#allocation2 + $0xd0] sm:$0xff]
        %v775 = vld [vmem:[#allocation2 + $0xd8] sm:$0xff]
        %v776 = vld [vmem:[#allocation2 + $0xe0] sm:$0xff]
        %v777 = vld [vmem:[#allocation2 + $0xe8] sm:$0xff]
        %v778 = vld [vmem:[#allocation2 + $0xf0] sm:$0xff]
        %v779 = vld [vmem:[#allocation2 + $0xf8] sm:$0xff]
        %v780 = vld [vmem:[%s249] sm:$0x1]
        %v782 = vlaneseq
        %v783 = vshrl.u32 %v782, 7
        %v784 = vsub.s32 0, %v783
        %v785 = vrot.slane %v780, %v784
        %v787 = vadd.f32 %v748, %v785
        %v788 = vadd.f32 %v749, %v785
        %v789 = vadd.f32 %v750, %v785
        %v790 = vadd.f32 %v751, %v785
        %v791 = vadd.f32 %v752, %v785
        %v792 = vadd.f32 %v753, %v785
        %v793 = vadd.f32 %v754, %v785
        %v794 = vadd.f32 %v755, %v785
        %v795 = vadd.f32 %v756, %v785
        %v796 = vadd.f32 %v757, %v785
        %v797 = vadd.f32 %v758, %v785
        %v798 = vadd.f32 %v759, %v785
        %v799 = vadd.f32 %v760, %v785
        %v800 = vadd.f32 %v761, %v785
        %v801 = vadd.f32 %v762, %v785
        %v802 = vadd.f32 %v763, %v785
        %v803 = vadd.f32 %v764, %v785
        %v804 = vadd.f32 %v765, %v785
        %v805 = vadd.f32 %v766, %v785
        %v806 = vadd.f32 %v767, %v785
        %v807 = vadd.f32 %v768, %v785
        %v808 = vadd.f32 %v769, %v785
        %v809 = vadd.f32 %v770, %v785
        %v810 = vadd.f32 %v771, %v785
        %v811 = vadd.f32 %v772, %v785
        %v812 = vadd.f32 %v773, %v785
        %v813 = vadd.f32 %v774, %v785
        %v814 = vadd.f32 %v775, %v785
        %v815 = vadd.f32 %v776, %v785
        %v816 = vadd.f32 %v777, %v785
        %v817 = vadd.f32 %v778, %v785
        %v818 = vadd.f32 %v779, %v785
        %v819 = vtanh.pop %v787
        %v820 = vtanh.pop %v788
        %v821 = vtanh.pop %v789
        %v822 = vtanh.pop %v790
        %v823 = vtanh.pop %v791
        %v824 = vtanh.pop %v792
        %v825 = vtanh.pop %v793
        %v826 = vtanh.pop %v794
        %v827 = vtanh.pop %v795
        %v828 = vtanh.pop %v796
        %v829 = vtanh.pop %v797
        %v830 = vtanh.pop %v798
        %v831 = vtanh.pop %v799
        %v832 = vtanh.pop %v800
        %v833 = vtanh.pop %v801
        %v834 = vtanh.pop %v802
        %v835 = vtanh.pop %v803
        %v836 = vtanh.pop %v804
        %v837 = vtanh.pop %v805
        %v838 = vtanh.pop %v806
        %v839 = vtanh.pop %v807
        %v840 = vtanh.pop %v808
        %v841 = vtanh.pop %v809
        %v842 = vtanh.pop %v810
        %v843 = vtanh.pop %v811
        %v844 = vtanh.pop %v812
        %v845 = vtanh.pop %v813
        %v846 = vtanh.pop %v814
        %v847 = vtanh.pop %v815
        %v848 = vtanh.pop %v816
        %v849 = vtanh.pop %v817
        %v850 = vtanh.pop %v818
        %v851 = vpack.c.bf16 %v820, %v819
        %v852 = vpack.c.bf16 %v822, %v821
        %v853 = vpack.c.bf16 %v824, %v823
        %v854 = vpack.c.bf16 %v826, %v825
        %v855 = vpack.c.bf16 %v828, %v827
        %v856 = vpack.c.bf16 %v830, %v829
        %v857 = vpack.c.bf16 %v832, %v831
        %v858 = vpack.c.bf16 %v834, %v833
        %v859 = vpack.c.bf16 %v836, %v835
        %v860 = vpack.c.bf16 %v838, %v837
        %v861 = vpack.c.bf16 %v840, %v839
        %v862 = vpack.c.bf16 %v842, %v841
        %v863 = vpack.c.bf16 %v844, %v843
        %v864 = vpack.c.bf16 %v846, %v845
        %v865 = vpack.c.bf16 %v848, %v847
        %v866 = vpack.c.bf16 %v850, %v849
        %v883 = vunpack.c.l.b16 %v851
        %v884 = vunpack.c.h.b16 %v851
        %v885 = vunpack.c.l.b16 %v852
        %v886 = vunpack.c.h.b16 %v852
        %v887 = vunpack.c.l.b16 %v853
        %v888 = vunpack.c.h.b16 %v853
        %v889 = vunpack.c.l.b16 %v854
        %v890 = vunpack.c.h.b16 %v854
        %v891 = vunpack.c.l.b16 %v855
        %v892 = vunpack.c.h.b16 %v855
        %v893 = vunpack.c.l.b16 %v856
        %v894 = vunpack.c.h.b16 %v856
        %v895 = vunpack.c.l.b16 %v857
        %v896 = vunpack.c.h.b16 %v857
        %v897 = vunpack.c.l.b16 %v858
        %v898 = vunpack.c.h.b16 %v858
        %v899 = vunpack.c.l.b16 %v859
        %v900 = vunpack.c.h.b16 %v859
        %v901 = vunpack.c.l.b16 %v860
        %v902 = vunpack.c.h.b16 %v860
        %v903 = vunpack.c.l.b16 %v861
        %v904 = vunpack.c.h.b16 %v861
        %v905 = vunpack.c.l.b16 %v862
        %v906 = vunpack.c.h.b16 %v862
        %v907 = vunpack.c.l.b16 %v863
        %v908 = vunpack.c.h.b16 %v863
        %v909 = vunpack.c.l.b16 %v864
        %v910 = vunpack.c.h.b16 %v864
        %v911 = vunpack.c.l.b16 %v865
        %v912 = vunpack.c.h.b16 %v865
        %v913 = vunpack.c.l.b16 %v866
        %v914 = vunpack.c.h.b16 %v866
        %v915 = vpack.c.b16 %v883, %v883
        %v916 = vpack.c.b16 %v884, %v884
        %v917 = vpack.c.b16 %v885, %v885
        %v918 = vpack.c.b16 %v886, %v886
        %v919 = vpack.c.b16 %v887, %v887
        %v920 = vpack.c.b16 %v888, %v888
        %v921 = vpack.c.b16 %v889, %v889
        %v922 = vpack.c.b16 %v890, %v890
        %v923 = vpack.c.b16 %v891, %v891
        %v924 = vpack.c.b16 %v892, %v892
        %v925 = vpack.c.b16 %v893, %v893
        %v926 = vpack.c.b16 %v894, %v894
        %v927 = vpack.c.b16 %v895, %v895
        %v928 = vpack.c.b16 %v896, %v896
        %v929 = vpack.c.b16 %v897, %v897
        %v930 = vpack.c.b16 %v898, %v898
        %v931 = vpack.c.b16 %v899, %v899
        %v932 = vpack.c.b16 %v900, %v900
        %v933 = vpack.c.b16 %v901, %v901
        %v934 = vpack.c.b16 %v902, %v902
        %v935 = vpack.c.b16 %v903, %v903
        %v936 = vpack.c.b16 %v904, %v904
        %v937 = vpack.c.b16 %v905, %v905
        %v938 = vpack.c.b16 %v906, %v906
        %v939 = vpack.c.b16 %v907, %v907
        %v940 = vpack.c.b16 %v908, %v908
        %v941 = vpack.c.b16 %v909, %v909
        %v942 = vpack.c.b16 %v910, %v910
        %v943 = vpack.c.b16 %v911, %v911
        %v944 = vpack.c.b16 %v912, %v912
        %v945 = vpack.c.b16 %v913, %v913
        %v946 = vpack.c.b16 %v914, %v914
        %979 = vst [vmem:[%s257] sm:$0xf] %v915
        %980 = vst [vmem:[%s257 + $0x4] sm:$0xf] %v916
        %981 = vst [vmem:[%s257 + $0x8] sm:$0xf] %v917
        %982 = vst [vmem:[%s257 + $0xc] sm:$0xf] %v918
        %983 = vst [vmem:[%s257 + $0x10] sm:$0xf] %v919
        %984 = vst [vmem:[%s257 + $0x14] sm:$0xf] %v920
        %985 = vst [vmem:[%s257 + $0x18] sm:$0xf] %v921
        %986 = vst [vmem:[%s257 + $0x1c] sm:$0xf] %v922
        %987 = vst [vmem:[%s257 + $0x20] sm:$0xf] %v923
        %988 = vst [vmem:[%s257 + $0x24] sm:$0xf] %v924
        %989 = vst [vmem:[%s257 + $0x28] sm:$0xf] %v925
        %990 = vst [vmem:[%s257 + $0x2c] sm:$0xf] %v926
        %991 = vst [vmem:[%s257 + $0x30] sm:$0xf] %v927
        %992 = vst [vmem:[%s257 + $0x34] sm:$0xf] %v928
        %993 = vst [vmem:[%s257 + $0x38] sm:$0xf] %v929
        %994 = vst [vmem:[%s257 + $0x3c] sm:$0xf] %v930
        %995 = vst [vmem:[%s257 + $0x40] sm:$0xf] %v931
        %996 = vst [vmem:[%s257 + $0x44] sm:$0xf] %v932
        %997 = vst [vmem:[%s257 + $0x48] sm:$0xf] %v933
        %998 = vst [vmem:[%s257 + $0x4c] sm:$0xf] %v934
        %999 = vst [vmem:[%s257 + $0x50] sm:$0xf] %v935
        %1000 = vst [vmem:[%s257 + $0x54] sm:$0xf] %v936
        %1001 = vst [vmem:[%s257 + $0x58] sm:$0xf] %v937
        %1002 = vst [vmem:[%s257 + $0x5c] sm:$0xf] %v938
        %1003 = vst [vmem:[%s257 + $0x60] sm:$0xf] %v939
        %1004 = vst [vmem:[%s257 + $0x64] sm:$0xf] %v940
        %1005 = vst [vmem:[%s257 + $0x68] sm:$0xf] %v941
        %1006 = vst [vmem:[%s257 + $0x6c] sm:$0xf] %v942
        %1007 = vst [vmem:[%s257 + $0x70] sm:$0xf] %v943
        %1008 = vst [vmem:[%s257 + $0x74] sm:$0xf] %v944
        %1009 = vst [vmem:[%s257 + $0x78] sm:$0xf] %v945
        %1010 = vst [vmem:[%s257 + $0x7c] sm:$0xf] %v946
      $region40: #{cp_forward.3} parent=31 // pred_fallthru
        _
      %s1011 = smul.u32 32, %s19
      %p1012 = scmp.lt.s32.totalorder %s1011, 127
      %s1013 = scalar_select %p1012, %s1011, 127
      %p1014 = scmp.lt.s32.totalorder %s20, 0
      %s1015 = scalar_select %p1014, %s20, 0
      %s1016 = sadd.s32 %s1015, %s1013
      %s1017 = smul.addr %s1016, 4
      %s1018 = scalar_lea.vmem %s3, %s1017
      // Predicated region
      $region41: #{cp_forward.3} parent=31 // pred_check
        %p1019 = pneg %p135
      $region42: #{cp_forward.3} parent=31 // pred_check_branch
        %1021 = sbr.rel (%p1019) target = $region44
      $region43: #{cp_forward.3} parent=31 // pred_region
        %s1022 = smul.u32 32, %s19
      $region44: #{cp_forward.3} parent=31 // pred_fallthru
        _
    $region32: #{cp_forward.3} parent=5 // pred_fallthru
      _
    %p1023 = scmp.le.s32.totalorder 2, %s9
    // Predicated region
    $region45: #{cp_forward.3} parent=5 // pred_check
      %p1024 = pneg %p1023
    $region46: #{cp_forward.3} parent=5 // pred_check_branch
      %1026 = sbr.rel (%p1024) target = $region48
    $region47: #{cp_forward.3} parent=5 // pred_region
      %s1027 = ssub.s32 %s9, 2
      // Predicated region
      $region49: #{cp_forward.3} parent=47 // pred_check
        %p1028 = pneg %p141
      $region50: #{cp_forward.3} parent=47 // pred_check_branch
        %1030 = sbr.rel (%p1028) target = $region52
      $region51: #{cp_forward.3} parent=47 // pred_region
        %s1031 = smul.u32 32, %s22
        %p1032 = scmp.lt.s32.totalorder %s1031, 127
        %s1033 = scalar_select %p1032, %s1031, 127
        %p1034 = scmp.lt.s32.totalorder %s23, 0
        %s1035 = scalar_select %p1034, %s23, 0
        %s1036 = sadd.s32 %s1035, %s1033
        %s1037 = smul.addr %s1036, 4
        %s1038 = scalar_lea.vmem %s3, %s1037
      $region52: #{cp_forward.3} parent=47 // pred_fallthru
        _
    $region48: #{cp_forward.3} parent=5 // pred_fallthru
      _
  $region6: #{cp_forward.3} parent=0 // loop_footer
    %s13 = sadd.s32 1, %s9
  $region7: #{cp_forward.3} parent=0 // loop_footer_branch
    %8 = sbr.rel target = $region3
  $region8: #{cp_forward.3} parent=0 // loop_exit
    _

// kernel: cp_forward.5
$region0: #{cp_forward.5}
  #allocation0 [shape = 'u32[]', space=smem, size = 0x4, offset = 0x4, fixed_abs, tag = 'smem constant byte address 0x4 - core index']
  #allocation1 [shape = 'u32[144,128]{1,0:T(1,128)}', space=vmem, size = 0x12000, scoped, tag = 'internal scratch']
  %s0 = inlined_call_operand.vmem [shape: bf16[8,128,128], index: 0, kind: input, shape index: {}]
  %s1 = inlined_call_operand.vmem [shape: s32[8,1], index: 1, kind: input, shape index: {}]
  %s2 = inlined_call_operand.vmem [shape: s32[8,1], index: 2, kind: input, shape index: {}]
  %s3 = inlined_call_operand.vmem [shape: s32[8,1], index: 3, kind: input, shape index: {}]
  %s4 = inlined_call_operand.vmem [shape: s32[8,1], index: 4, kind: input, shape index: {}]
  %s5 = inlined_call_operand.vmem [shape: f32[8,256], index: 5, kind: output, shape index: {}]
  %s6 = sld [smem:[#allocation0]]
  $region30: #{cp_forward.5} parent=0
    _
  %s8 = ssub.s32 1, %s6
  %s9 = scalar_select 0, %s8, %s6
  // Predicated region
  $region2: #{cp_forward.5} parent=0 // pred_check
    _
  $region3: #{cp_forward.5} parent=0 // pred_check_branch
    %11 = sbr.rel (0) target = $region5
  $region4: #{cp_forward.5} parent=0 // pred_region
    _
  $region5: #{cp_forward.5} parent=0 // pred_fallthru
    _
  // Predicated region
  $region6: #{cp_forward.5} parent=0 // pred_check
    _
  $region7: #{cp_forward.5} parent=0 // pred_check_branch
    %13 = sbr.rel (0) target = $region9
  $region8: #{cp_forward.5} parent=0 // pred_region
    _
  $region9: #{cp_forward.5} parent=0 // pred_fallthru
    _
  // Predicated region
  $region10: #{cp_forward.5} parent=0 // pred_check
    _
  $region11: #{cp_forward.5} parent=0 // pred_check_branch
    %15 = sbr.rel (0) target = $region13
  $region12: #{cp_forward.5} parent=0 // pred_region
    _
  $region13: #{cp_forward.5} parent=0 // pred_fallthru
    _
  // Predicated region
  $region14: #{cp_forward.5} parent=0 // pred_check
    _
  $region15: #{cp_forward.5} parent=0 // pred_check_branch
    %17 = sbr.rel (0) target = $region17
  $region16: #{cp_forward.5} parent=0 // pred_region
    _
  $region17: #{cp_forward.5} parent=0 // pred_fallthru
    _
  // Predicated region
  $region18: #{cp_forward.5} parent=0 // pred_check
    _
  $region19: #{cp_forward.5} parent=0 // pred_check_branch
    %19 = sbr.rel (0) target = $region21
  $region20: #{cp_forward.5} parent=0 // pred_region
    _
  $region21: #{cp_forward.5} parent=0 // pred_fallthru
    _
  %v20 = vld [vmem:[%s0] sm:$0xf]
  %v21 = vld [vmem:[%s0 + $0x4] sm:$0xf]
  %v22 = vld [vmem:[%s0 + $0x8] sm:$0xf]
  %v23 = vld [vmem:[%s0 + $0xc] sm:$0xf]
  %v24 = vld [vmem:[%s0 + $0x10] sm:$0xf]
  %v25 = vld [vmem:[%s0 + $0x14] sm:$0xf]
  %v26 = vld [vmem:[%s0 + $0x18] sm:$0xf]
  %v27 = vld [vmem:[%s0 + $0x1c] sm:$0xf]
  %v28 = vld [vmem:[%s0 + $0x20] sm:$0xf]
  %v29 = vld [vmem:[%s0 + $0x24] sm:$0xf]
  %v30 = vld [vmem:[%s0 + $0x28] sm:$0xf]
  %v31 = vld [vmem:[%s0 + $0x2c] sm:$0xf]
  %v32 = vld [vmem:[%s0 + $0x30] sm:$0xf]
  %v33 = vld [vmem:[%s0 + $0x34] sm:$0xf]
  %v34 = vld [vmem:[%s0 + $0x38] sm:$0xf]
  %v35 = vld [vmem:[%s0 + $0x3c] sm:$0xf]
  %v36 = vld [vmem:[%s0 + $0x40] sm:$0xf]
  %v37 = vld [vmem:[%s0 + $0x44] sm:$0xf]
  %v38 = vld [vmem:[%s0 + $0x48] sm:$0xf]
  %v39 = vld [vmem:[%s0 + $0x4c] sm:$0xf]
  %v40 = vld [vmem:[%s0 + $0x50] sm:$0xf]
  %v41 = vld [vmem:[%s0 + $0x54] sm:$0xf]
  %v42 = vld [vmem:[%s0 + $0x58] sm:$0xf]
  %v43 = vld [vmem:[%s0 + $0x5c] sm:$0xf]
  %v44 = vld [vmem:[%s0 + $0x60] sm:$0xf]
  %v45 = vld [vmem:[%s0 + $0x64] sm:$0xf]
  %v46 = vld [vmem:[%s0 + $0x68] sm:$0xf]
  %v47 = vld [vmem:[%s0 + $0x6c] sm:$0xf]
  %v48 = vld [vmem:[%s0 + $0x70] sm:$0xf]
  %v49 = vld [vmem:[%s0 + $0x74] sm:$0xf]
  %v50 = vld [vmem:[%s0 + $0x78] sm:$0xf]
  %v51 = vld [vmem:[%s0 + $0x7c] sm:$0xf]
  %v52 = vld [vmem:[%s0 + $0x80] sm:$0xf]
  %v53 = vld [vmem:[%s0 + $0x84] sm:$0xf]
  %v54 = vld [vmem:[%s0 + $0x88] sm:$0xf]
  %v55 = vld [vmem:[%s0 + $0x8c] sm:$0xf]
  %v56 = vld [vmem:[%s0 + $0x90] sm:$0xf]
  %v57 = vld [vmem:[%s0 + $0x94] sm:$0xf]
  %v58 = vld [vmem:[%s0 + $0x98] sm:$0xf]
  %v59 = vld [vmem:[%s0 + $0x9c] sm:$0xf]
  %v60 = vld [vmem:[%s0 + $0xa0] sm:$0xf]
  %v61 = vld [vmem:[%s0 + $0xa4] sm:$0xf]
  %v62 = vld [vmem:[%s0 + $0xa8] sm:$0xf]
  %v63 = vld [vmem:[%s0 + $0xac] sm:$0xf]
  %v64 = vld [vmem:[%s0 + $0xb0] sm:$0xf]
  %v65 = vld [vmem:[%s0 + $0xb4] sm:$0xf]
  %v66 = vld [vmem:[%s0 + $0xb8] sm:$0xf]
  %v67 = vld [vmem:[%s0 + $0xbc] sm:$0xf]
  %v68 = vld [vmem:[%s0 + $0xc0] sm:$0xf]
  %v69 = vld [vmem:[%s0 + $0xc4] sm:$0xf]
  %v70 = vld [vmem:[%s0 + $0xc8] sm:$0xf]
  %v71 = vld [vmem:[%s0 + $0xcc] sm:$0xf]
  %v72 = vld [vmem:[%s0 + $0xd0] sm:$0xf]
  %v73 = vld [vmem:[%s0 + $0xd4] sm:$0xf]
  %v74 = vld [vmem:[%s0 + $0xd8] sm:$0xf]
  %v75 = vld [vmem:[%s0 + $0xdc] sm:$0xf]
  %v76 = vld [vmem:[%s0 + $0xe0] sm:$0xf]
  %v77 = vld [vmem:[%s0 + $0xe4] sm:$0xf]
  %v78 = vld [vmem:[%s0 + $0xe8] sm:$0xf]
  %v79 = vld [vmem:[%s0 + $0xec] sm:$0xf]
  %v80 = vld [vmem:[%s0 + $0xf0] sm:$0xf]
  %v81 = vld [vmem:[%s0 + $0xf4] sm:$0xf]
  %v82 = vld [vmem:[%s0 + $0xf8] sm:$0xf]
  %v83 = vld [vmem:[%s0 + $0xfc] sm:$0xf]
  %v84 = vld [vmem:[%s0 + $0x100] sm:$0xf]
  %v85 = vld [vmem:[%s0 + $0x104] sm:$0xf]
  %v86 = vld [vmem:[%s0 + $0x108] sm:$0xf]
  %v87 = vld [vmem:[%s0 + $0x10c] sm:$0xf]
  %v88 = vld [vmem:[%s0 + $0x110] sm:$0xf]
  %v89 = vld [vmem:[%s0 + $0x114] sm:$0xf]
  %v90 = vld [vmem:[%s0 + $0x118] sm:$0xf]
  %v91 = vld [vmem:[%s0 + $0x11c] sm:$0xf]
  %v92 = vld [vmem:[%s0 + $0x120] sm:$0xf]
  %v93 = vld [vmem:[%s0 + $0x124] sm:$0xf]
  %v94 = vld [vmem:[%s0 + $0x128] sm:$0xf]
  %v95 = vld [vmem:[%s0 + $0x12c] sm:$0xf]
  %v96 = vld [vmem:[%s0 + $0x130] sm:$0xf]
  %v97 = vld [vmem:[%s0 + $0x134] sm:$0xf]
  %v98 = vld [vmem:[%s0 + $0x138] sm:$0xf]
  %v99 = vld [vmem:[%s0 + $0x13c] sm:$0xf]
  %v100 = vld [vmem:[%s0 + $0x140] sm:$0xf]
  %v101 = vld [vmem:[%s0 + $0x144] sm:$0xf]
  %v102 = vld [vmem:[%s0 + $0x148] sm:$0xf]
  %v103 = vld [vmem:[%s0 + $0x14c] sm:$0xf]
  %v104 = vld [vmem:[%s0 + $0x150] sm:$0xf]
  %v105 = vld [vmem:[%s0 + $0x154] sm:$0xf]
  %v106 = vld [vmem:[%s0 + $0x158] sm:$0xf]
  %v107 = vld [vmem:[%s0 + $0x15c] sm:$0xf]
  %v108 = vld [vmem:[%s0 + $0x160] sm:$0xf]
  %v109 = vld [vmem:[%s0 + $0x164] sm:$0xf]
  %v110 = vld [vmem:[%s0 + $0x168] sm:$0xf]
  %v111 = vld [vmem:[%s0 + $0x16c] sm:$0xf]
  %v112 = vld [vmem:[%s0 + $0x170] sm:$0xf]
  %v113 = vld [vmem:[%s0 + $0x174] sm:$0xf]
  %v114 = vld [vmem:[%s0 + $0x178] sm:$0xf]
  %v115 = vld [vmem:[%s0 + $0x17c] sm:$0xf]
  %v116 = vld [vmem:[%s0 + $0x180] sm:$0xf]
  %v117 = vld [vmem:[%s0 + $0x184] sm:$0xf]
  %v118 = vld [vmem:[%s0 + $0x188] sm:$0xf]
  %v119 = vld [vmem:[%s0 + $0x18c] sm:$0xf]
  %v120 = vld [vmem:[%s0 + $0x190] sm:$0xf]
  %v121 = vld [vmem:[%s0 + $0x194] sm:$0xf]
  %v122 = vld [vmem:[%s0 + $0x198] sm:$0xf]
  %v123 = vld [vmem:[%s0 + $0x19c] sm:$0xf]
  %v124 = vld [vmem:[%s0 + $0x1a0] sm:$0xf]
  %v125 = vld [vmem:[%s0 + $0x1a4] sm:$0xf]
  %v126 = vld [vmem:[%s0 + $0x1a8] sm:$0xf]
  %v127 = vld [vmem:[%s0 + $0x1ac] sm:$0xf]
  %v128 = vld [vmem:[%s0 + $0x1b0] sm:$0xf]
  %v129 = vld [vmem:[%s0 + $0x1b4] sm:$0xf]
  %v130 = vld [vmem:[%s0 + $0x1b8] sm:$0xf]
  %v131 = vld [vmem:[%s0 + $0x1bc] sm:$0xf]
  %v132 = vld [vmem:[%s0 + $0x1c0] sm:$0xf]
  %v133 = vld [vmem:[%s0 + $0x1c4] sm:$0xf]
  %v134 = vld [vmem:[%s0 + $0x1c8] sm:$0xf]
  %v135 = vld [vmem:[%s0 + $0x1cc] sm:$0xf]
  %v136 = vld [vmem:[%s0 + $0x1d0] sm:$0xf]
  %v137 = vld [vmem:[%s0 + $0x1d4] sm:$0xf]
  %v138 = vld [vmem:[%s0 + $0x1d8] sm:$0xf]
  %v139 = vld [vmem:[%s0 + $0x1dc] sm:$0xf]
  %v140 = vld [vmem:[%s0 + $0x1e0] sm:$0xf]
  %v141 = vld [vmem:[%s0 + $0x1e4] sm:$0xf]
  %v142 = vld [vmem:[%s0 + $0x1e8] sm:$0xf]
  %v143 = vld [vmem:[%s0 + $0x1ec] sm:$0xf]
  %v144 = vld [vmem:[%s0 + $0x1f0] sm:$0xf]
  %v145 = vld [vmem:[%s0 + $0x1f4] sm:$0xf]
  %v146 = vld [vmem:[%s0 + $0x1f8] sm:$0xf]
  %v147 = vld [vmem:[%s0 + $0x1fc] sm:$0xf]
  %v148 = vunpack.c.l.bf16 %v20
  %v149 = vunpack.c.l.bf16 %v21
  %v150 = vunpack.c.l.bf16 %v22
  %v151 = vunpack.c.l.bf16 %v23
  %v152 = vunpack.c.l.bf16 %v24
  %v153 = vunpack.c.l.bf16 %v25
  %v154 = vunpack.c.l.bf16 %v26
  %v155 = vunpack.c.l.bf16 %v27
  %v156 = vunpack.c.l.bf16 %v28
  %v157 = vunpack.c.l.bf16 %v29
  %v158 = vunpack.c.l.bf16 %v30
  %v159 = vunpack.c.l.bf16 %v31
  %v160 = vunpack.c.l.bf16 %v32
  %v161 = vunpack.c.l.bf16 %v33
  %v162 = vunpack.c.l.bf16 %v34
  %v163 = vunpack.c.l.bf16 %v35
  %v164 = vunpack.c.l.bf16 %v36
  %v165 = vunpack.c.l.bf16 %v37
  %v166 = vunpack.c.l.bf16 %v38
  %v167 = vunpack.c.l.bf16 %v39
  %v168 = vunpack.c.l.bf16 %v40
  %v169 = vunpack.c.l.bf16 %v41
  %v170 = vunpack.c.l.bf16 %v42
  %v171 = vunpack.c.l.bf16 %v43
  %v172 = vunpack.c.l.bf16 %v44
  %v173 = vunpack.c.l.bf16 %v45
  %v174 = vunpack.c.l.bf16 %v46
  %v175 = vunpack.c.l.bf16 %v47
  %v176 = vunpack.c.l.bf16 %v48
  %v177 = vunpack.c.l.bf16 %v49
  %v178 = vunpack.c.l.bf16 %v50
  %v179 = vunpack.c.l.bf16 %v51
  %v180 = vunpack.c.l.bf16 %v52
  %v181 = vunpack.c.l.bf16 %v53
  %v182 = vunpack.c.l.bf16 %v54
  %v183 = vunpack.c.l.bf16 %v55
  %v184 = vunpack.c.l.bf16 %v56
  %v185 = vunpack.c.l.bf16 %v57
  %v186 = vunpack.c.l.bf16 %v58
  %v187 = vunpack.c.l.bf16 %v59
  %v188 = vunpack.c.l.bf16 %v60
  %v189 = vunpack.c.l.bf16 %v61
  %v190 = vunpack.c.l.bf16 %v62
  %v191 = vunpack.c.l.bf16 %v63
  %v192 = vunpack.c.l.bf16 %v64
  %v193 = vunpack.c.l.bf16 %v65
  %v194 = vunpack.c.l.bf16 %v66
  %v195 = vunpack.c.l.bf16 %v67
  %v196 = vunpack.c.l.bf16 %v68
  %v197 = vunpack.c.l.bf16 %v69
  %v198 = vunpack.c.l.bf16 %v70
  %v199 = vunpack.c.l.bf16 %v71
  %v200 = vunpack.c.l.bf16 %v72
  %v201 = vunpack.c.l.bf16 %v73
  %v202 = vunpack.c.l.bf16 %v74
  %v203 = vunpack.c.l.bf16 %v75
  %v204 = vunpack.c.l.bf16 %v76
  %v205 = vunpack.c.l.bf16 %v77
  %v206 = vunpack.c.l.bf16 %v78
  %v207 = vunpack.c.l.bf16 %v79
  %v208 = vunpack.c.l.bf16 %v80
  %v209 = vunpack.c.l.bf16 %v81
  %v210 = vunpack.c.l.bf16 %v82
  %v211 = vunpack.c.l.bf16 %v83
  %v212 = vunpack.c.l.bf16 %v84
  %v213 = vunpack.c.l.bf16 %v85
  %v214 = vunpack.c.l.bf16 %v86
  %v215 = vunpack.c.l.bf16 %v87
  %v216 = vunpack.c.l.bf16 %v88
  %v217 = vunpack.c.l.bf16 %v89
  %v218 = vunpack.c.l.bf16 %v90
  %v219 = vunpack.c.l.bf16 %v91
  %v220 = vunpack.c.l.bf16 %v92
  %v221 = vunpack.c.l.bf16 %v93
  %v222 = vunpack.c.l.bf16 %v94
  %v223 = vunpack.c.l.bf16 %v95
  %v224 = vunpack.c.l.bf16 %v96
  %v225 = vunpack.c.l.bf16 %v97
  %v226 = vunpack.c.l.bf16 %v98
  %v227 = vunpack.c.l.bf16 %v99
  %v228 = vunpack.c.l.bf16 %v100
  %v229 = vunpack.c.l.bf16 %v101
  %v230 = vunpack.c.l.bf16 %v102
  %v231 = vunpack.c.l.bf16 %v103
  %v232 = vunpack.c.l.bf16 %v104
  %v233 = vunpack.c.l.bf16 %v105
  %v234 = vunpack.c.l.bf16 %v106
  %v235 = vunpack.c.l.bf16 %v107
  %v236 = vunpack.c.l.bf16 %v108
  %v237 = vunpack.c.l.bf16 %v109
  %v238 = vunpack.c.l.bf16 %v110
  %v239 = vunpack.c.l.bf16 %v111
  %v240 = vunpack.c.l.bf16 %v112
  %v241 = vunpack.c.l.bf16 %v113
  %v242 = vunpack.c.l.bf16 %v114
  %v243 = vunpack.c.l.bf16 %v115
  %v244 = vunpack.c.l.bf16 %v116
  %v245 = vunpack.c.l.bf16 %v117
  %v246 = vunpack.c.l.bf16 %v118
  %v247 = vunpack.c.l.bf16 %v119
  %v248 = vunpack.c.l.bf16 %v120
  %v249 = vunpack.c.l.bf16 %v121
  %v250 = vunpack.c.l.bf16 %v122
  %v251 = vunpack.c.l.bf16 %v123
  %v252 = vunpack.c.l.bf16 %v124
  %v253 = vunpack.c.l.bf16 %v125
  %v254 = vunpack.c.l.bf16 %v126
  %v255 = vunpack.c.l.bf16 %v127
  %v256 = vunpack.c.l.bf16 %v128
  %v257 = vunpack.c.l.bf16 %v129
  %v258 = vunpack.c.l.bf16 %v130
  %v259 = vunpack.c.l.bf16 %v131
  %v260 = vunpack.c.l.bf16 %v132
  %v261 = vunpack.c.l.bf16 %v133
  %v262 = vunpack.c.l.bf16 %v134
  %v263 = vunpack.c.l.bf16 %v135
  %v264 = vunpack.c.l.bf16 %v136
  %v265 = vunpack.c.l.bf16 %v137
  %v266 = vunpack.c.l.bf16 %v138
  %v267 = vunpack.c.l.bf16 %v139
  %v268 = vunpack.c.l.bf16 %v140
  %v269 = vunpack.c.l.bf16 %v141
  %v270 = vunpack.c.l.bf16 %v142
  %v271 = vunpack.c.l.bf16 %v143
  %v272 = vunpack.c.l.bf16 %v144
  %v273 = vunpack.c.l.bf16 %v145
  %v274 = vunpack.c.l.bf16 %v146
  %v275 = vunpack.c.l.bf16 %v147
  %v276 = vlaneseq
  %v277 = vand.u32 %v276, 127
  %v278 = vld [vmem:[%s1] sm:$0xff]
  %v279 = vld [vmem:[%s2] sm:$0xff]
  %v280 = vld [vmem:[%s3] sm:$0xff]
  %v281 = vld [vmem:[%s4] sm:$0xff]
  %282 = vset.pattern.permute.xlu0 0
  %283 = vperm.xlu0 %282, %v278
  %v284 = vpop.permute.xlu0 %283
  %vm285 = vcmp.ge.s32.totalorder %v277, %v284
  %286 = vset.pattern.permute.xlu0 0
  %287 = vperm.xlu0 %286, %v279
  %v288 = vpop.permute.xlu0 %287
  %vm289 = vcmp.lt.s32.totalorder %v277, %v288
  %vm290 = vmand %vm285, %vm289
  %v291 = vsel %vm290, 1, 0
  %v292 = vcvt.s32.f32 %v291
  %293 = vset.pattern.permute.xlu0 0
  %294 = vperm.xlu0 %293, %v280
  %v295 = vpop.permute.xlu0 %294
  %vm296 = vcmp.ge.s32.totalorder %v277, %v295
  %297 = vset.pattern.permute.xlu0 0
  %298 = vperm.xlu0 %297, %v281
  %v299 = vpop.permute.xlu0 %298
  %vm300 = vcmp.lt.s32.totalorder %v277, %v299
  %vm301 = vmand %vm296, %vm300
  %v302 = vsel %vm301, 1, 0
  %v303 = vcvt.s32.f32 %v302
  %v304 = vlaneseq
  %v305 = vshrl.u32 %v304, 7
  %v306 = vsub.s32 0, %v305
  %v307 = vrot.slane %v292, %v306
  %309 = vbcast.lane.b32.xlu0 %v307, 256
  %v310 = vpop.permute.xlu0 %309
  %s312 = sor.u32 256, 8
  %313 = vbcast.lane.b32.xlu0 %v307, %s312
  %v314 = vpop.permute.xlu0 %313
  %s316 = sor.u32 256, 16
  %317 = vbcast.lane.b32.xlu0 %v307, %s316
  %v318 = vpop.permute.xlu0 %317
  %s320 = sor.u32 256, 24
  %321 = vbcast.lane.b32.xlu0 %v307, %s320
  %v322 = vpop.permute.xlu0 %321
  %s324 = sor.u32 256, 32
  %325 = vbcast.lane.b32.xlu0 %v307, %s324
  %v326 = vpop.permute.xlu0 %325
  %s328 = sor.u32 256, 40
  %329 = vbcast.lane.b32.xlu0 %v307, %s328
  %v330 = vpop.permute.xlu0 %329
  %s332 = sor.u32 256, 48
  %333 = vbcast.lane.b32.xlu0 %v307, %s332
  %v334 = vpop.permute.xlu0 %333
  %s336 = sor.u32 256, 56
  %337 = vbcast.lane.b32.xlu0 %v307, %s336
  %v338 = vpop.permute.xlu0 %337
  %s340 = sor.u32 256, 64
  %341 = vbcast.lane.b32.xlu0 %v307, %s340
  %v342 = vpop.permute.xlu0 %341
  %s344 = sor.u32 256, 72
  %345 = vbcast.lane.b32.xlu0 %v307, %s344
  %v346 = vpop.permute.xlu0 %345
  %s348 = sor.u32 256, 80
  %349 = vbcast.lane.b32.xlu0 %v307, %s348
  %v350 = vpop.permute.xlu0 %349
  %s352 = sor.u32 256, 88
  %353 = vbcast.lane.b32.xlu0 %v307, %s352
  %v354 = vpop.permute.xlu0 %353
  %s356 = sor.u32 256, 96
  %357 = vbcast.lane.b32.xlu0 %v307, %s356
  %v358 = vpop.permute.xlu0 %357
  %s360 = sor.u32 256, 104
  %361 = vbcast.lane.b32.xlu0 %v307, %s360
  %v362 = vpop.permute.xlu0 %361
  %s364 = sor.u32 256, 112
  %365 = vbcast.lane.b32.xlu0 %v307, %s364
  %v366 = vpop.permute.xlu0 %365
  %s368 = sor.u32 256, 120
  %369 = vbcast.lane.b32.xlu0 %v307, %s368
  %v370 = vpop.permute.xlu0 %369
  %v371 = vlaneseq
  %v372 = vshrl.u32 %v371, 7
  %v373 = vsub.s32 1, %v372
  %v374 = vrot.slane %v292, %v373
  %376 = vbcast.lane.b32.xlu0 %v374, 256
  %v377 = vpop.permute.xlu0 %376
  %s379 = sor.u32 256, 8
  %380 = vbcast.lane.b32.xlu0 %v374, %s379
  %v381 = vpop.permute.xlu0 %380
  %s383 = sor.u32 256, 16
  %384 = vbcast.lane.b32.xlu0 %v374, %s383
  %v385 = vpop.permute.xlu0 %384
  %s387 = sor.u32 256, 24
  %388 = vbcast.lane.b32.xlu0 %v374, %s387
  %v389 = vpop.permute.xlu0 %388
  %s391 = sor.u32 256, 32
  %392 = vbcast.lane.b32.xlu0 %v374, %s391
  %v393 = vpop.permute.xlu0 %392
  %s395 = sor.u32 256, 40
  %396 = vbcast.lane.b32.xlu0 %v374, %s395
  %v397 = vpop.permute.xlu0 %396
  %s399 = sor.u32 256, 48
  %400 = vbcast.lane.b32.xlu0 %v374, %s399
  %v401 = vpop.permute.xlu0 %400
  %s403 = sor.u32 256, 56
  %404 = vbcast.lane.b32.xlu0 %v374, %s403
  %v405 = vpop.permute.xlu0 %404
  %s407 = sor.u32 256, 64
  %408 = vbcast.lane.b32.xlu0 %v374, %s407
  %v409 = vpop.permute.xlu0 %408
  %s411 = sor.u32 256, 72
  %412 = vbcast.lane.b32.xlu0 %v374, %s411
  %v413 = vpop.permute.xlu0 %412
  %s415 = sor.u32 256, 80
  %416 = vbcast.lane.b32.xlu0 %v374, %s415
  %v417 = vpop.permute.xlu0 %416
  %s419 = sor.u32 256, 88
  %420 = vbcast.lane.b32.xlu0 %v374, %s419
  %v421 = vpop.permute.xlu0 %420
  %s423 = sor.u32 256, 96
  %424 = vbcast.lane.b32.xlu0 %v374, %s423
  %v425 = vpop.permute.xlu0 %424
  %s427 = sor.u32 256, 104
  %428 = vbcast.lane.b32.xlu0 %v374, %s427
  %v429 = vpop.permute.xlu0 %428
  %s431 = sor.u32 256, 112
  %432 = vbcast.lane.b32.xlu0 %v374, %s431
  %v433 = vpop.permute.xlu0 %432
  %s435 = sor.u32 256, 120
  %436 = vbcast.lane.b32.xlu0 %v374, %s435
  %v437 = vpop.permute.xlu0 %436
  %v438 = vlaneseq
  %v439 = vshrl.u32 %v438, 7
  %v440 = vsub.s32 2, %v439
  %v441 = vrot.slane %v292, %v440
  %443 = vbcast.lane.b32.xlu0 %v441, 256
  %v444 = vpop.permute.xlu0 %443
  %s446 = sor.u32 256, 8
  %447 = vbcast.lane.b32.xlu0 %v441, %s446
  %v448 = vpop.permute.xlu0 %447
  %s450 = sor.u32 256, 16
  %451 = vbcast.lane.b32.xlu0 %v441, %s450
  %v452 = vpop.permute.xlu0 %451
  %s454 = sor.u32 256, 24
  %455 = vbcast.lane.b32.xlu0 %v441, %s454
  %v456 = vpop.permute.xlu0 %455
  %s458 = sor.u32 256, 32
  %459 = vbcast.lane.b32.xlu0 %v441, %s458
  %v460 = vpop.permute.xlu0 %459
  %s462 = sor.u32 256, 40
  %463 = vbcast.lane.b32.xlu0 %v441, %s462
  %v464 = vpop.permute.xlu0 %463
  %s466 = sor.u32 256, 48
  %467 = vbcast.lane.b32.xlu0 %v441, %s466
  %v468 = vpop.permute.xlu0 %467
  %s470 = sor.u32 256, 56
  %471 = vbcast.lane.b32.xlu0 %v441, %s470
  %v472 = vpop.permute.xlu0 %471
  %s474 = sor.u32 256, 64
  %475 = vbcast.lane.b32.xlu0 %v441, %s474
  %v476 = vpop.permute.xlu0 %475
  %s478 = sor.u32 256, 72
  %479 = vbcast.lane.b32.xlu0 %v441, %s478
  %v480 = vpop.permute.xlu0 %479
  %s482 = sor.u32 256, 80
  %483 = vbcast.lane.b32.xlu0 %v441, %s482
  %v484 = vpop.permute.xlu0 %483
  %s486 = sor.u32 256, 88
  %487 = vbcast.lane.b32.xlu0 %v441, %s486
  %v488 = vpop.permute.xlu0 %487
  %s490 = sor.u32 256, 96
  %491 = vbcast.lane.b32.xlu0 %v441, %s490
  %v492 = vpop.permute.xlu0 %491
  %s494 = sor.u32 256, 104
  %495 = vbcast.lane.b32.xlu0 %v441, %s494
  %v496 = vpop.permute.xlu0 %495
  %s498 = sor.u32 256, 112
  %499 = vbcast.lane.b32.xlu0 %v441, %s498
  %v500 = vpop.permute.xlu0 %499
  %s502 = sor.u32 256, 120
  %503 = vbcast.lane.b32.xlu0 %v441, %s502
  %v504 = vpop.permute.xlu0 %503
  %v505 = vlaneseq
  %v506 = vshrl.u32 %v505, 7
  %v507 = vsub.s32 3, %v506
  %v508 = vrot.slane %v292, %v507
  %510 = vbcast.lane.b32.xlu0 %v508, 256
  %v511 = vpop.permute.xlu0 %510
  %s513 = sor.u32 256, 8
  %514 = vbcast.lane.b32.xlu0 %v508, %s513
  %v515 = vpop.permute.xlu0 %514
  %s517 = sor.u32 256, 16
  %518 = vbcast.lane.b32.xlu0 %v508, %s517
  %v519 = vpop.permute.xlu0 %518
  %s521 = sor.u32 256, 24
  %522 = vbcast.lane.b32.xlu0 %v508, %s521
  %v523 = vpop.permute.xlu0 %522
  %s525 = sor.u32 256, 32
  %526 = vbcast.lane.b32.xlu0 %v508, %s525
  %v527 = vpop.permute.xlu0 %526
  %s529 = sor.u32 256, 40
  %530 = vbcast.lane.b32.xlu0 %v508, %s529
  %v531 = vpop.permute.xlu0 %530
  %s533 = sor.u32 256, 48
  %534 = vbcast.lane.b32.xlu0 %v508, %s533
  %v535 = vpop.permute.xlu0 %534
  %s537 = sor.u32 256, 56
  %538 = vbcast.lane.b32.xlu0 %v508, %s537
  %v539 = vpop.permute.xlu0 %538
  %s541 = sor.u32 256, 64
  %542 = vbcast.lane.b32.xlu0 %v508, %s541
  %v543 = vpop.permute.xlu0 %542
  %s545 = sor.u32 256, 72
  %546 = vbcast.lane.b32.xlu0 %v508, %s545
  %v547 = vpop.permute.xlu0 %546
  %s549 = sor.u32 256, 80
  %550 = vbcast.lane.b32.xlu0 %v508, %s549
  %v551 = vpop.permute.xlu0 %550
  %s553 = sor.u32 256, 88
  %554 = vbcast.lane.b32.xlu0 %v508, %s553
  %v555 = vpop.permute.xlu0 %554
  %s557 = sor.u32 256, 96
  %558 = vbcast.lane.b32.xlu0 %v508, %s557
  %v559 = vpop.permute.xlu0 %558
  %s561 = sor.u32 256, 104
  %562 = vbcast.lane.b32.xlu0 %v508, %s561
  %v563 = vpop.permute.xlu0 %562
  %s565 = sor.u32 256, 112
  %566 = vbcast.lane.b32.xlu0 %v508, %s565
  %v567 = vpop.permute.xlu0 %566
  %s569 = sor.u32 256, 120
  %570 = vbcast.lane.b32.xlu0 %v508, %s569
  %v571 = vpop.permute.xlu0 %570
  %v572 = vlaneseq
  %v573 = vshrl.u32 %v572, 7
  %v574 = vsub.s32 4, %v573
  %v575 = vrot.slane %v292, %v574
  %577 = vbcast.lane.b32.xlu0 %v575, 256
  %v578 = vpop.permute.xlu0 %577
  %s580 = sor.u32 256, 8
  %581 = vbcast.lane.b32.xlu0 %v575, %s580
  %v582 = vpop.permute.xlu0 %581
  %s584 = sor.u32 256, 16
  %585 = vbcast.lane.b32.xlu0 %v575, %s584
  %v586 = vpop.permute.xlu0 %585
  %s588 = sor.u32 256, 24
  %589 = vbcast.lane.b32.xlu0 %v575, %s588
  %v590 = vpop.permute.xlu0 %589
  %s592 = sor.u32 256, 32
  %593 = vbcast.lane.b32.xlu0 %v575, %s592
  %v594 = vpop.permute.xlu0 %593
  %s596 = sor.u32 256, 40
  %597 = vbcast.lane.b32.xlu0 %v575, %s596
  %v598 = vpop.permute.xlu0 %597
  %s600 = sor.u32 256, 48
  %601 = vbcast.lane.b32.xlu0 %v575, %s600
  %v602 = vpop.permute.xlu0 %601
  %s604 = sor.u32 256, 56
  %605 = vbcast.lane.b32.xlu0 %v575, %s604
  %v606 = vpop.permute.xlu0 %605
  %s608 = sor.u32 256, 64
  %609 = vbcast.lane.b32.xlu0 %v575, %s608
  %v610 = vpop.permute.xlu0 %609
  %s612 = sor.u32 256, 72
  %613 = vbcast.lane.b32.xlu0 %v575, %s612
  %v614 = vpop.permute.xlu0 %613
  %s616 = sor.u32 256, 80
  %617 = vbcast.lane.b32.xlu0 %v575, %s616
  %v618 = vpop.permute.xlu0 %617
  %s620 = sor.u32 256, 88
  %621 = vbcast.lane.b32.xlu0 %v575, %s620
  %v622 = vpop.permute.xlu0 %621
  %s624 = sor.u32 256, 96
  %625 = vbcast.lane.b32.xlu0 %v575, %s624
  %v626 = vpop.permute.xlu0 %625
  %s628 = sor.u32 256, 104
  %629 = vbcast.lane.b32.xlu0 %v575, %s628
  %v630 = vpop.permute.xlu0 %629
  %s632 = sor.u32 256, 112
  %633 = vbcast.lane.b32.xlu0 %v575, %s632
  %v634 = vpop.permute.xlu0 %633
  %s636 = sor.u32 256, 120
  %637 = vbcast.lane.b32.xlu0 %v575, %s636
  %v638 = vpop.permute.xlu0 %637
  %v639 = vlaneseq
  %v640 = vshrl.u32 %v639, 7
  %v641 = vsub.s32 5, %v640
  %v642 = vrot.slane %v292, %v641
  %644 = vbcast.lane.b32.xlu0 %v642, 256
  %v645 = vpop.permute.xlu0 %644
  %s647 = sor.u32 256, 8
  %648 = vbcast.lane.b32.xlu0 %v642, %s647
  %v649 = vpop.permute.xlu0 %648
  %s651 = sor.u32 256, 16
  %652 = vbcast.lane.b32.xlu0 %v642, %s651
  %v653 = vpop.permute.xlu0 %652
  %s655 = sor.u32 256, 24
  %656 = vbcast.lane.b32.xlu0 %v642, %s655
  %v657 = vpop.permute.xlu0 %656
  %s659 = sor.u32 256, 32
  %660 = vbcast.lane.b32.xlu0 %v642, %s659
  %v661 = vpop.permute.xlu0 %660
  %s663 = sor.u32 256, 40
  %664 = vbcast.lane.b32.xlu0 %v642, %s663
  %v665 = vpop.permute.xlu0 %664
  %s667 = sor.u32 256, 48
  %668 = vbcast.lane.b32.xlu0 %v642, %s667
  %v669 = vpop.permute.xlu0 %668
  %s671 = sor.u32 256, 56
  %672 = vbcast.lane.b32.xlu0 %v642, %s671
  %v673 = vpop.permute.xlu0 %672
  %s675 = sor.u32 256, 64
  %676 = vbcast.lane.b32.xlu0 %v642, %s675
  %v677 = vpop.permute.xlu0 %676
  %s679 = sor.u32 256, 72
  %680 = vbcast.lane.b32.xlu0 %v642, %s679
  %v681 = vpop.permute.xlu0 %680
  %s683 = sor.u32 256, 80
  %684 = vbcast.lane.b32.xlu0 %v642, %s683
  %v685 = vpop.permute.xlu0 %684
  %s687 = sor.u32 256, 88
  %688 = vbcast.lane.b32.xlu0 %v642, %s687
  %v689 = vpop.permute.xlu0 %688
  %s691 = sor.u32 256, 96
  %692 = vbcast.lane.b32.xlu0 %v642, %s691
  %v693 = vpop.permute.xlu0 %692
  %s695 = sor.u32 256, 104
  %696 = vbcast.lane.b32.xlu0 %v642, %s695
  %v697 = vpop.permute.xlu0 %696
  %s699 = sor.u32 256, 112
  %700 = vbcast.lane.b32.xlu0 %v642, %s699
  %v701 = vpop.permute.xlu0 %700
  %s703 = sor.u32 256, 120
  %704 = vbcast.lane.b32.xlu0 %v642, %s703
  %v705 = vpop.permute.xlu0 %704
  %v706 = vlaneseq
  %v707 = vshrl.u32 %v706, 7
  %v708 = vsub.s32 6, %v707
  %v709 = vrot.slane %v292, %v708
  %711 = vbcast.lane.b32.xlu0 %v709, 256
  %v712 = vpop.permute.xlu0 %711
  %s714 = sor.u32 256, 8
  %715 = vbcast.lane.b32.xlu0 %v709, %s714
  %v716 = vpop.permute.xlu0 %715
  %s718 = sor.u32 256, 16
  %719 = vbcast.lane.b32.xlu0 %v709, %s718
  %v720 = vpop.permute.xlu0 %719
  %s722 = sor.u32 256, 24
  %723 = vbcast.lane.b32.xlu0 %v709, %s722
  %v724 = vpop.permute.xlu0 %723
  %s726 = sor.u32 256, 32
  %727 = vbcast.lane.b32.xlu0 %v709, %s726
  %v728 = vpop.permute.xlu0 %727
  %s730 = sor.u32 256, 40
  %731 = vbcast.lane.b32.xlu0 %v709, %s730
  %v732 = vpop.permute.xlu0 %731
  %s734 = sor.u32 256, 48
  %735 = vbcast.lane.b32.xlu0 %v709, %s734
  %v736 = vpop.permute.xlu0 %735
  %s738 = sor.u32 256, 56
  %739 = vbcast.lane.b32.xlu0 %v709, %s738
  %v740 = vpop.permute.xlu0 %739
  %s742 = sor.u32 256, 64
  %743 = vbcast.lane.b32.xlu0 %v709, %s742
  %v744 = vpop.permute.xlu0 %743
  %s746 = sor.u32 256, 72
  %747 = vbcast.lane.b32.xlu0 %v709, %s746
  %v748 = vpop.permute.xlu0 %747
  %s750 = sor.u32 256, 80
  %751 = vbcast.lane.b32.xlu0 %v709, %s750
  %v752 = vpop.permute.xlu0 %751
  %s754 = sor.u32 256, 88
  %755 = vbcast.lane.b32.xlu0 %v709, %s754
  %v756 = vpop.permute.xlu0 %755
  %s758 = sor.u32 256, 96
  %759 = vbcast.lane.b32.xlu0 %v709, %s758
  %v760 = vpop.permute.xlu0 %759
  %s762 = sor.u32 256, 104
  %763 = vbcast.lane.b32.xlu0 %v709, %s762
  %v764 = vpop.permute.xlu0 %763
  %s766 = sor.u32 256, 112
  %767 = vbcast.lane.b32.xlu0 %v709, %s766
  %v768 = vpop.permute.xlu0 %767
  %s770 = sor.u32 256, 120
  %771 = vbcast.lane.b32.xlu0 %v709, %s770
  %v772 = vpop.permute.xlu0 %771
  %v773 = vlaneseq
  %v774 = vshrl.u32 %v773, 7
  %v775 = vsub.s32 7, %v774
  %v776 = vrot.slane %v292, %v775
  %778 = vbcast.lane.b32.xlu0 %v776, 256
  %v779 = vpop.permute.xlu0 %778
  %s781 = sor.u32 256, 8
  %782 = vbcast.lane.b32.xlu0 %v776, %s781
  %v783 = vpop.permute.xlu0 %782
  %s785 = sor.u32 256, 16
  %786 = vbcast.lane.b32.xlu0 %v776, %s785
  %v787 = vpop.permute.xlu0 %786
  %s789 = sor.u32 256, 24
  %790 = vbcast.lane.b32.xlu0 %v776, %s789
  %v791 = vpop.permute.xlu0 %790
  %s793 = sor.u32 256, 32
  %794 = vbcast.lane.b32.xlu0 %v776, %s793
  %v795 = vpop.permute.xlu0 %794
  %s797 = sor.u32 256, 40
  %798 = vbcast.lane.b32.xlu0 %v776, %s797
  %v799 = vpop.permute.xlu0 %798
  %s801 = sor.u32 256, 48
  %802 = vbcast.lane.b32.xlu0 %v776, %s801
  %v803 = vpop.permute.xlu0 %802
  %s805 = sor.u32 256, 56
  %806 = vbcast.lane.b32.xlu0 %v776, %s805
  %v807 = vpop.permute.xlu0 %806
  %s809 = sor.u32 256, 64
  %810 = vbcast.lane.b32.xlu0 %v776, %s809
  %v811 = vpop.permute.xlu0 %810
  %s813 = sor.u32 256, 72
  %814 = vbcast.lane.b32.xlu0 %v776, %s813
  %v815 = vpop.permute.xlu0 %814
  %s817 = sor.u32 256, 80
  %818 = vbcast.lane.b32.xlu0 %v776, %s817
  %v819 = vpop.permute.xlu0 %818
  %s821 = sor.u32 256, 88
  %822 = vbcast.lane.b32.xlu0 %v776, %s821
  %v823 = vpop.permute.xlu0 %822
  %s825 = sor.u32 256, 96
  %826 = vbcast.lane.b32.xlu0 %v776, %s825
  %v827 = vpop.permute.xlu0 %826
  %s829 = sor.u32 256, 104
  %830 = vbcast.lane.b32.xlu0 %v776, %s829
  %v831 = vpop.permute.xlu0 %830
  %s833 = sor.u32 256, 112
  %834 = vbcast.lane.b32.xlu0 %v776, %s833
  %v835 = vpop.permute.xlu0 %834
  %s837 = sor.u32 256, 120
  %838 = vbcast.lane.b32.xlu0 %v776, %s837
  %v839 = vpop.permute.xlu0 %838
  %v840 = vmul.f32 %v148, %v310
  %v841 = vmul.f32 %v149, %v314
  %v842 = vmul.f32 %v150, %v318
  %v843 = vmul.f32 %v151, %v322
  %v844 = vmul.f32 %v152, %v326
  %v845 = vmul.f32 %v153, %v330
  %v846 = vmul.f32 %v154, %v334
  %v847 = vmul.f32 %v155, %v338
  %v848 = vmul.f32 %v156, %v342
  %v849 = vmul.f32 %v157, %v346
  %v850 = vmul.f32 %v158, %v350
  %v851 = vmul.f32 %v159, %v354
  %v852 = vmul.f32 %v160, %v358
  %v853 = vmul.f32 %v161, %v362
  %v854 = vmul.f32 %v162, %v366
  %v855 = vmul.f32 %v163, %v370
  %v856 = vmul.f32 %v164, %v377
  %v857 = vmul.f32 %v165, %v381
  %v858 = vmul.f32 %v166, %v385
  %v859 = vmul.f32 %v167, %v389
  %v860 = vmul.f32 %v168, %v393
  %v861 = vmul.f32 %v169, %v397
  %v862 = vmul.f32 %v170, %v401
  %v863 = vmul.f32 %v171, %v405
  %v864 = vmul.f32 %v172, %v409
  %v865 = vmul.f32 %v173, %v413
  %v866 = vmul.f32 %v174, %v417
  %v867 = vmul.f32 %v175, %v421
  %v868 = vmul.f32 %v176, %v425
  %v869 = vmul.f32 %v177, %v429
  %v870 = vmul.f32 %v178, %v433
  %v871 = vmul.f32 %v179, %v437
  %v872 = vmul.f32 %v180, %v444
  %v873 = vmul.f32 %v181, %v448
  %v874 = vmul.f32 %v182, %v452
  %v875 = vmul.f32 %v183, %v456
  %v876 = vmul.f32 %v184, %v460
  %v877 = vmul.f32 %v185, %v464
  %v878 = vmul.f32 %v186, %v468
  %v879 = vmul.f32 %v187, %v472
  %v880 = vmul.f32 %v188, %v476
  %v881 = vmul.f32 %v189, %v480
  %v882 = vmul.f32 %v190, %v484
  %v883 = vmul.f32 %v191, %v488
  %v884 = vmul.f32 %v192, %v492
  %v885 = vmul.f32 %v193, %v496
  %v886 = vmul.f32 %v194, %v500
  %v887 = vmul.f32 %v195, %v504
  %v888 = vmul.f32 %v196, %v511
  %v889 = vmul.f32 %v197, %v515
  %v890 = vmul.f32 %v198, %v519
  %v891 = vmul.f32 %v199, %v523
  %v892 = vmul.f32 %v200, %v527
  %v893 = vmul.f32 %v201, %v531
  %v894 = vmul.f32 %v202, %v535
  %v895 = vmul.f32 %v203, %v539
  %v896 = vmul.f32 %v204, %v543
  %v897 = vmul.f32 %v205, %v547
  %v898 = vmul.f32 %v206, %v551
  %v899 = vmul.f32 %v207, %v555
  %v900 = vmul.f32 %v208, %v559
  %v901 = vmul.f32 %v209, %v563
  %v902 = vmul.f32 %v210, %v567
  %v903 = vmul.f32 %v211, %v571
  %v904 = vmul.f32 %v212, %v578
  %v905 = vmul.f32 %v213, %v582
  %v906 = vmul.f32 %v214, %v586
  %v907 = vmul.f32 %v215, %v590
  %v908 = vmul.f32 %v216, %v594
  %v909 = vmul.f32 %v217, %v598
  %v910 = vmul.f32 %v218, %v602
  %v911 = vmul.f32 %v219, %v606
  %v912 = vmul.f32 %v220, %v610
  %v913 = vmul.f32 %v221, %v614
  %v914 = vmul.f32 %v222, %v618
  %v915 = vmul.f32 %v223, %v622
  %v916 = vmul.f32 %v224, %v626
  %v917 = vmul.f32 %v225, %v630
  %v918 = vmul.f32 %v226, %v634
  %v919 = vmul.f32 %v227, %v638
  %v920 = vmul.f32 %v228, %v645
  %v921 = vmul.f32 %v229, %v649
  %v922 = vmul.f32 %v230, %v653
  %v923 = vmul.f32 %v231, %v657
  %v924 = vmul.f32 %v232, %v661
  %v925 = vmul.f32 %v233, %v665
  %v926 = vmul.f32 %v234, %v669
  %v927 = vmul.f32 %v235, %v673
  %v928 = vmul.f32 %v236, %v677
  %v929 = vmul.f32 %v237, %v681
  %v930 = vmul.f32 %v238, %v685
  %v931 = vmul.f32 %v239, %v689
  %v932 = vmul.f32 %v240, %v693
  %v933 = vmul.f32 %v241, %v697
  %v934 = vmul.f32 %v242, %v701
  %v935 = vmul.f32 %v243, %v705
  %v936 = vmul.f32 %v244, %v712
  %v937 = vmul.f32 %v245, %v716
  %v938 = vmul.f32 %v246, %v720
  %v939 = vmul.f32 %v247, %v724
  %v940 = vmul.f32 %v248, %v728
  %v941 = vmul.f32 %v249, %v732
  %v942 = vmul.f32 %v250, %v736
  %v943 = vmul.f32 %v251, %v740
  %v944 = vmul.f32 %v252, %v744
  %v945 = vmul.f32 %v253, %v748
  %v946 = vmul.f32 %v254, %v752
  %v947 = vmul.f32 %v255, %v756
  %v948 = vmul.f32 %v256, %v760
  %v949 = vmul.f32 %v257, %v764
  %v950 = vmul.f32 %v258, %v768
  %v951 = vmul.f32 %v259, %v772
  %v952 = vmul.f32 %v260, %v779
  %v953 = vmul.f32 %v261, %v783
  %v954 = vmul.f32 %v262, %v787
  %v955 = vmul.f32 %v263, %v791
  %v956 = vmul.f32 %v264, %v795
  %v957 = vmul.f32 %v265, %v799
  %v958 = vmul.f32 %v266, %v803
  %v959 = vmul.f32 %v267, %v807
  %v960 = vmul.f32 %v268, %v811
  %v961 = vmul.f32 %v269, %v815
  %v962 = vmul.f32 %v270, %v819
  %v963 = vmul.f32 %v271, %v823
  %v964 = vmul.f32 %v272, %v827
  %v965 = vmul.f32 %v273, %v831
  %v966 = vmul.f32 %v274, %v835
  %v967 = vmul.f32 %v275, %v839
  %v968 = vadd.f32 %v840, %v841
  %v969 = vadd.f32 %v968, %v842
  %v970 = vadd.f32 %v969, %v843
  %v971 = vadd.f32 %v970, %v844
  %v972 = vadd.f32 %v971, %v845
  %v973 = vadd.f32 %v972, %v846
  %v974 = vadd.f32 %v973, %v847
  %v975 = vadd.f32 %v974, %v848
  %v976 = vadd.f32 %v975, %v849
  %v977 = vadd.f32 %v976, %v850
  %v978 = vadd.f32 %v977, %v851
  %v979 = vadd.f32 %v978, %v852
  %v980 = vadd.f32 %v979, %v853
  %v981 = vadd.f32 %v980, %v854
  %v982 = vadd.f32 %v981, %v855
  %v983 = vrot.slane %v982, 4
  %v984 = vadd.f32 %v982, %v983
  %v985 = vrot.slane %v984, 2
  %v986 = vadd.f32 %v984, %v985
  %v987 = vrot.slane %v986, 1
  %v988 = vadd.f32 %v986, %v987
  %v989 = vadd.f32 %v856, %v857
  %v990 = vadd.f32 %v989, %v858
  %v991 = vadd.f32 %v990, %v859
  %v992 = vadd.f32 %v991, %v860
  %v993 = vadd.f32 %v992, %v861
  %v994 = vadd.f32 %v993, %v862
  %v995 = vadd.f32 %v994, %v863
  %v996 = vadd.f32 %v995, %v864
  %v997 = vadd.f32 %v996, %v865
  %v998 = vadd.f32 %v997, %v866
  %v999 = vadd.f32 %v998, %v867
  %v1000 = vadd.f32 %v999, %v868
  %v1001 = vadd.f32 %v1000, %v869
  %v1002 = vadd.f32 %v1001, %v870
  %v1003 = vadd.f32 %v1002, %v871
  %v1004 = vrot.slane %v1003, 4
  %v1005 = vadd.f32 %v1003, %v1004
  %v1006 = vrot.slane %v1005, 2
  %v1007 = vadd.f32 %v1005, %v1006
  %v1008 = vrot.slane %v1007, 1
  %v1009 = vadd.f32 %v1007, %v1008
  %v1010 = vadd.f32 %v872, %v873
  %v1011 = vadd.f32 %v1010, %v874
  %v1012 = vadd.f32 %v1011, %v875
  %v1013 = vadd.f32 %v1012, %v876
  %v1014 = vadd.f32 %v1013, %v877
  %v1015 = vadd.f32 %v1014, %v878
  %v1016 = vadd.f32 %v1015, %v879
  %v1017 = vadd.f32 %v1016, %v880
  %v1018 = vadd.f32 %v1017, %v881
  %v1019 = vadd.f32 %v1018, %v882
  %v1020 = vadd.f32 %v1019, %v883
  %v1021 = vadd.f32 %v1020, %v884
  %v1022 = vadd.f32 %v1021, %v885
  %v1023 = vadd.f32 %v1022, %v886
  %v1024 = vadd.f32 %v1023, %v887
  %v1025 = vrot.slane %v1024, 4
  %v1026 = vadd.f32 %v1024, %v1025
  %v1027 = vrot.slane %v1026, 2
  %v1028 = vadd.f32 %v1026, %v1027
  %v1029 = vrot.slane %v1028, 1
  %v1030 = vadd.f32 %v1028, %v1029
  %v1031 = vadd.f32 %v888, %v889
  %v1032 = vadd.f32 %v1031, %v890
  %v1033 = vadd.f32 %v1032, %v891
  %v1034 = vadd.f32 %v1033, %v892
  %v1035 = vadd.f32 %v1034, %v893
  %v1036 = vadd.f32 %v1035, %v894
  %v1037 = vadd.f32 %v1036, %v895
  %v1038 = vadd.f32 %v1037, %v896
  %v1039 = vadd.f32 %v1038, %v897
  %v1040 = vadd.f32 %v1039, %v898
  %v1041 = vadd.f32 %v1040, %v899
  %v1042 = vadd.f32 %v1041, %v900
  %v1043 = vadd.f32 %v1042, %v901
  %v1044 = vadd.f32 %v1043, %v902
  %v1045 = vadd.f32 %v1044, %v903
  %v1046 = vrot.slane %v1045, 4
  %v1047 = vadd.f32 %v1045, %v1046
  %v1048 = vrot.slane %v1047, 2
  %v1049 = vadd.f32 %v1047, %v1048
  %v1050 = vrot.slane %v1049, 1
  %v1051 = vadd.f32 %v1049, %v1050
  %v1052 = vadd.f32 %v904, %v905
  %v1053 = vadd.f32 %v1052, %v906
  %v1054 = vadd.f32 %v1053, %v907
  %v1055 = vadd.f32 %v1054, %v908
  %v1056 = vadd.f32 %v1055, %v909
  %v1057 = vadd.f32 %v1056, %v910
  %v1058 = vadd.f32 %v1057, %v911
  %v1059 = vadd.f32 %v1058, %v912
  %v1060 = vadd.f32 %v1059, %v913
  %v1061 = vadd.f32 %v1060, %v914
  %v1062 = vadd.f32 %v1061, %v915
  %v1063 = vadd.f32 %v1062, %v916
  %v1064 = vadd.f32 %v1063, %v917
  %v1065 = vadd.f32 %v1064, %v918
  %v1066 = vadd.f32 %v1065, %v919
  %v1067 = vrot.slane %v1066, 4
  %v1068 = vadd.f32 %v1066, %v1067
  %v1069 = vrot.slane %v1068, 2
  %v1070 = vadd.f32 %v1068, %v1069
  %v1071 = vrot.slane %v1070, 1
  %v1072 = vadd.f32 %v1070, %v1071
  %v1073 = vadd.f32 %v920, %v921
  %v1074 = vadd.f32 %v1073, %v922
  %v1075 = vadd.f32 %v1074, %v923
  %v1076 = vadd.f32 %v1075, %v924
  %v1077 = vadd.f32 %v1076, %v925
  %v1078 = vadd.f32 %v1077, %v926
  %v1079 = vadd.f32 %v1078, %v927
  %v1080 = vadd.f32 %v1079, %v928
  %v1081 = vadd.f32 %v1080, %v929
  %v1082 = vadd.f32 %v1081, %v930
  %v1083 = vadd.f32 %v1082, %v931
  %v1084 = vadd.f32 %v1083, %v932
  %v1085 = vadd.f32 %v1084, %v933
  %v1086 = vadd.f32 %v1085, %v934
  %v1087 = vadd.f32 %v1086, %v935
  %v1088 = vrot.slane %v1087, 4
  %v1089 = vadd.f32 %v1087, %v1088
  %v1090 = vrot.slane %v1089, 2
  %v1091 = vadd.f32 %v1089, %v1090
  %v1092 = vrot.slane %v1091, 1
  %v1093 = vadd.f32 %v1091, %v1092
  %v1094 = vadd.f32 %v936, %v937
  %v1095 = vadd.f32 %v1094, %v938
  %v1096 = vadd.f32 %v1095, %v939
  %v1097 = vadd.f32 %v1096, %v940
  %v1098 = vadd.f32 %v1097, %v941
  %v1099 = vadd.f32 %v1098, %v942
  %v1100 = vadd.f32 %v1099, %v943
  %v1101 = vadd.f32 %v1100, %v944
  %v1102 = vadd.f32 %v1101, %v945
  %v1103 = vadd.f32 %v1102, %v946
  %v1104 = vadd.f32 %v1103, %v947
  %v1105 = vadd.f32 %v1104, %v948
  %v1106 = vadd.f32 %v1105, %v949
  %v1107 = vadd.f32 %v1106, %v950
  %v1108 = vadd.f32 %v1107, %v951
  %v1109 = vrot.slane %v1108, 4
  %v1110 = vadd.f32 %v1108, %v1109
  %v1111 = vrot.slane %v1110, 2
  %v1112 = vadd.f32 %v1110, %v1111
  %v1113 = vrot.slane %v1112, 1
  %v1114 = vadd.f32 %v1112, %v1113
  %v1115 = vadd.f32 %v952, %v953
  %v1116 = vadd.f32 %v1115, %v954
  %v1117 = vadd.f32 %v1116, %v955
  %v1118 = vadd.f32 %v1117, %v956
  %v1119 = vadd.f32 %v1118, %v957
  %v1120 = vadd.f32 %v1119, %v958
  %v1121 = vadd.f32 %v1120, %v959
  %v1122 = vadd.f32 %v1121, %v960
  %v1123 = vadd.f32 %v1122, %v961
  %v1124 = vadd.f32 %v1123, %v962
  %v1125 = vadd.f32 %v1124, %v963
  %v1126 = vadd.f32 %v1125, %v964
  %v1127 = vadd.f32 %v1126, %v965
  %v1128 = vadd.f32 %v1127, %v966
  %v1129 = vadd.f32 %v1128, %v967
  %v1130 = vrot.slane %v1129, 4
  %v1131 = vadd.f32 %v1129, %v1130
  %v1132 = vrot.slane %v1131, 2
  %v1133 = vadd.f32 %v1131, %v1132
  %v1134 = vrot.slane %v1133, 1
  %v1135 = vadd.f32 %v1133, %v1134
  %v1136 = vlaneseq
  %v1137 = vshrl.u32 %v1136, 7
  %v1138 = vsub.s32 0, %v1137
  %v1139 = vrot.slane %v303, %v1138
  %1141 = vbcast.lane.b32.xlu0 %v1139, 256
  %v1142 = vpop.permute.xlu0 %1141
  %s1144 = sor.u32 256, 8
  %1145 = vbcast.lane.b32.xlu0 %v1139, %s1144
  %v1146 = vpop.permute.xlu0 %1145
  %s1148 = sor.u32 256, 16
  %1149 = vbcast.lane.b32.xlu0 %v1139, %s1148
  %v1150 = vpop.permute.xlu0 %1149
  %s1152 = sor.u32 256, 24
  %1153 = vbcast.lane.b32.xlu0 %v1139, %s1152
  %v1154 = vpop.permute.xlu0 %1153
  %s1156 = sor.u32 256, 32
  %1157 = vbcast.lane.b32.xlu0 %v1139, %s1156
  %v1158 = vpop.permute.xlu0 %1157
  %s1160 = sor.u32 256, 40
  %1161 = vbcast.lane.b32.xlu0 %v1139, %s1160
  %v1162 = vpop.permute.xlu0 %1161
  %s1164 = sor.u32 256, 48
  %1165 = vbcast.lane.b32.xlu0 %v1139, %s1164
  %v1166 = vpop.permute.xlu0 %1165
  %s1168 = sor.u32 256, 56
  %1169 = vbcast.lane.b32.xlu0 %v1139, %s1168
  %v1170 = vpop.permute.xlu0 %1169
  %s1172 = sor.u32 256, 64
  %1173 = vbcast.lane.b32.xlu0 %v1139, %s1172
  %v1174 = vpop.permute.xlu0 %1173
  %s1176 = sor.u32 256, 72
  %1177 = vbcast.lane.b32.xlu0 %v1139, %s1176
  %v1178 = vpop.permute.xlu0 %1177
  %s1180 = sor.u32 256, 80
  %1181 = vbcast.lane.b32.xlu0 %v1139, %s1180
  %v1182 = vpop.permute.xlu0 %1181
  %s1184 = sor.u32 256, 88
  %1185 = vbcast.lane.b32.xlu0 %v1139, %s1184
  %v1186 = vpop.permute.xlu0 %1185
  %s1188 = sor.u32 256, 96
  %1189 = vbcast.lane.b32.xlu0 %v1139, %s1188
  %v1190 = vpop.permute.xlu0 %1189
  %s1192 = sor.u32 256, 104
  %1193 = vbcast.lane.b32.xlu0 %v1139, %s1192
  %v1194 = vpop.permute.xlu0 %1193
  %s1196 = sor.u32 256, 112
  %1197 = vbcast.lane.b32.xlu0 %v1139, %s1196
  %v1198 = vpop.permute.xlu0 %1197
  %s1200 = sor.u32 256, 120
  %1201 = vbcast.lane.b32.xlu0 %v1139, %s1200
  %v1202 = vpop.permute.xlu0 %1201
  %v1203 = vlaneseq
  %v1204 = vshrl.u32 %v1203, 7
  %v1205 = vsub.s32 1, %v1204
  %v1206 = vrot.slane %v303, %v1205
  %1208 = vbcast.lane.b32.xlu0 %v1206, 256
  %v1209 = vpop.permute.xlu0 %1208
  %s1211 = sor.u32 256, 8
  %1212 = vbcast.lane.b32.xlu0 %v1206, %s1211
  %v1213 = vpop.permute.xlu0 %1212
  %s1215 = sor.u32 256, 16
  %1216 = vbcast.lane.b32.xlu0 %v1206, %s1215
  %v1217 = vpop.permute.xlu0 %1216
  %s1219 = sor.u32 256, 24
  %1220 = vbcast.lane.b32.xlu0 %v1206, %s1219
  %v1221 = vpop.permute.xlu0 %1220
  %s1223 = sor.u32 256, 32
  %1224 = vbcast.lane.b32.xlu0 %v1206, %s1223
  %v1225 = vpop.permute.xlu0 %1224
  %s1227 = sor.u32 256, 40
  %1228 = vbcast.lane.b32.xlu0 %v1206, %s1227
  %v1229 = vpop.permute.xlu0 %1228
  %s1231 = sor.u32 256, 48
  %1232 = vbcast.lane.b32.xlu0 %v1206, %s1231
  %v1233 = vpop.permute.xlu0 %1232
  %s1235 = sor.u32 256, 56
  %1236 = vbcast.lane.b32.xlu0 %v1206, %s1235
  %v1237 = vpop.permute.xlu0 %1236
  %s1239 = sor.u32 256, 64
  %1240 = vbcast.lane.b32.xlu0 %v1206, %s1239
  %v1241 = vpop.permute.xlu0 %1240
  %s1243 = sor.u32 256, 72
  %1244 = vbcast.lane.b32.xlu0 %v1206, %s1243
  %v1245 = vpop.permute.xlu0 %1244
  %s1247 = sor.u32 256, 80
  %1248 = vbcast.lane.b32.xlu0 %v1206, %s1247
  %v1249 = vpop.permute.xlu0 %1248
  %s1251 = sor.u32 256, 88
  %1252 = vbcast.lane.b32.xlu0 %v1206, %s1251
  %v1253 = vpop.permute.xlu0 %1252
  %s1255 = sor.u32 256, 96
  %1256 = vbcast.lane.b32.xlu0 %v1206, %s1255
  %v1257 = vpop.permute.xlu0 %1256
  %s1259 = sor.u32 256, 104
  %1260 = vbcast.lane.b32.xlu0 %v1206, %s1259
  %v1261 = vpop.permute.xlu0 %1260
  %s1263 = sor.u32 256, 112
  %1264 = vbcast.lane.b32.xlu0 %v1206, %s1263
  %v1265 = vpop.permute.xlu0 %1264
  %s1267 = sor.u32 256, 120
  %1268 = vbcast.lane.b32.xlu0 %v1206, %s1267
  %v1269 = vpop.permute.xlu0 %1268
  %v1270 = vlaneseq
  %v1271 = vshrl.u32 %v1270, 7
  %v1272 = vsub.s32 2, %v1271
  %v1273 = vrot.slane %v303, %v1272
  %1275 = vbcast.lane.b32.xlu0 %v1273, 256
  %v1276 = vpop.permute.xlu0 %1275
  %s1278 = sor.u32 256, 8
  %1279 = vbcast.lane.b32.xlu0 %v1273, %s1278
  %v1280 = vpop.permute.xlu0 %1279
  %s1282 = sor.u32 256, 16
  %1283 = vbcast.lane.b32.xlu0 %v1273, %s1282
  %v1284 = vpop.permute.xlu0 %1283
  %s1286 = sor.u32 256, 24
  %1287 = vbcast.lane.b32.xlu0 %v1273, %s1286
  %v1288 = vpop.permute.xlu0 %1287
  %s1290 = sor.u32 256, 32
  %1291 = vbcast.lane.b32.xlu0 %v1273, %s1290
  %v1292 = vpop.permute.xlu0 %1291
  %s1294 = sor.u32 256, 40
  %1295 = vbcast.lane.b32.xlu0 %v1273, %s1294
  %v1296 = vpop.permute.xlu0 %1295
  %s1298 = sor.u32 256, 48
  %1299 = vbcast.lane.b32.xlu0 %v1273, %s1298
  %v1300 = vpop.permute.xlu0 %1299
  %s1302 = sor.u32 256, 56
  %1303 = vbcast.lane.b32.xlu0 %v1273, %s1302
  %v1304 = vpop.permute.xlu0 %1303
  %s1306 = sor.u32 256, 64
  %1307 = vbcast.lane.b32.xlu0 %v1273, %s1306
  %v1308 = vpop.permute.xlu0 %1307
  %s1310 = sor.u32 256, 72
  %1311 = vbcast.lane.b32.xlu0 %v1273, %s1310
  %v1312 = vpop.permute.xlu0 %1311
  %s1314 = sor.u32 256, 80
  %1315 = vbcast.lane.b32.xlu0 %v1273, %s1314
  %v1316 = vpop.permute.xlu0 %1315
  %s1318 = sor.u32 256, 88
  %1319 = vbcast.lane.b32.xlu0 %v1273, %s1318
  %v1320 = vpop.permute.xlu0 %1319
  %s1322 = sor.u32 256, 96
  %1323 = vbcast.lane.b32.xlu0 %v1273, %s1322
  %v1324 = vpop.permute.xlu0 %1323
  %s1326 = sor.u32 256, 104
  %1327 = vbcast.lane.b32.xlu0 %v1273, %s1326
  %v1328 = vpop.permute.xlu0 %1327
  %s1330 = sor.u32 256, 112
  %1331 = vbcast.lane.b32.xlu0 %v1273, %s1330
  %v1332 = vpop.permute.xlu0 %1331
  %s1334 = sor.u32 256, 120
  %1335 = vbcast.lane.b32.xlu0 %v1273, %s1334
  %v1336 = vpop.permute.xlu0 %1335
  %v1337 = vlaneseq
  %v1338 = vshrl.u32 %v1337, 7
  %v1339 = vsub.s32 3, %v1338
  %v1340 = vrot.slane %v303, %v1339
  %1342 = vbcast.lane.b32.xlu0 %v1340, 256
  %v1343 = vpop.permute.xlu0 %1342
  %s1345 = sor.u32 256, 8
  %1346 = vbcast.lane.b32.xlu0 %v1340, %s1345
  %v1347 = vpop.permute.xlu0 %1346
  %s1349 = sor.u32 256, 16
  %1350 = vbcast.lane.b32.xlu0 %v1340, %s1349
  %v1351 = vpop.permute.xlu0 %1350
  %s1353 = sor.u32 256, 24
  %1354 = vbcast.lane.b32.xlu0 %v1340, %s1353
  %v1355 = vpop.permute.xlu0 %1354
  %s1357 = sor.u32 256, 32
  %1358 = vbcast.lane.b32.xlu0 %v1340, %s1357
  %v1359 = vpop.permute.xlu0 %1358
  %s1361 = sor.u32 256, 40
  %1362 = vbcast.lane.b32.xlu0 %v1340, %s1361
  %v1363 = vpop.permute.xlu0 %1362
  %s1365 = sor.u32 256, 48
  %1366 = vbcast.lane.b32.xlu0 %v1340, %s1365
  %v1367 = vpop.permute.xlu0 %1366
  %s1369 = sor.u32 256, 56
  %1370 = vbcast.lane.b32.xlu0 %v1340, %s1369
  %v1371 = vpop.permute.xlu0 %1370
  %s1373 = sor.u32 256, 64
  %1374 = vbcast.lane.b32.xlu0 %v1340, %s1373
  %v1375 = vpop.permute.xlu0 %1374
  %s1377 = sor.u32 256, 72
  %1378 = vbcast.lane.b32.xlu0 %v1340, %s1377
  %v1379 = vpop.permute.xlu0 %1378
  %s1381 = sor.u32 256, 80
  %1382 = vbcast.lane.b32.xlu0 %v1340, %s1381
  %v1383 = vpop.permute.xlu0 %1382
  %s1385 = sor.u32 256, 88
  %1386 = vbcast.lane.b32.xlu0 %v1340, %s1385
  %v1387 = vpop.permute.xlu0 %1386
  %s1389 = sor.u32 256, 96
  %1390 = vbcast.lane.b32.xlu0 %v1340, %s1389
  %v1391 = vpop.permute.xlu0 %1390
  %s1393 = sor.u32 256, 104
  %1394 = vbcast.lane.b32.xlu0 %v1340, %s1393
  %v1395 = vpop.permute.xlu0 %1394
  %s1397 = sor.u32 256, 112
  %1398 = vbcast.lane.b32.xlu0 %v1340, %s1397
  %v1399 = vpop.permute.xlu0 %1398
  %s1401 = sor.u32 256, 120
  %1402 = vbcast.lane.b32.xlu0 %v1340, %s1401
  %v1403 = vpop.permute.xlu0 %1402
  %v1404 = vlaneseq
  %v1405 = vshrl.u32 %v1404, 7
  %v1406 = vsub.s32 4, %v1405
  %v1407 = vrot.slane %v303, %v1406
  %1409 = vbcast.lane.b32.xlu0 %v1407, 256
  %v1410 = vpop.permute.xlu0 %1409
  %s1412 = sor.u32 256, 8
  %1413 = vbcast.lane.b32.xlu0 %v1407, %s1412
  %v1414 = vpop.permute.xlu0 %1413
  %s1416 = sor.u32 256, 16
  %1417 = vbcast.lane.b32.xlu0 %v1407, %s1416
  %v1418 = vpop.permute.xlu0 %1417
  %s1420 = sor.u32 256, 24
  %1421 = vbcast.lane.b32.xlu0 %v1407, %s1420
  %v1422 = vpop.permute.xlu0 %1421
  %s1424 = sor.u32 256, 32
  %1425 = vbcast.lane.b32.xlu0 %v1407, %s1424
  %v1426 = vpop.permute.xlu0 %1425
  %s1428 = sor.u32 256, 40
  %1429 = vbcast.lane.b32.xlu0 %v1407, %s1428
  %v1430 = vpop.permute.xlu0 %1429
  %s1432 = sor.u32 256, 48
  %1433 = vbcast.lane.b32.xlu0 %v1407, %s1432
  %v1434 = vpop.permute.xlu0 %1433
  %s1436 = sor.u32 256, 56
  %1437 = vbcast.lane.b32.xlu0 %v1407, %s1436
  %v1438 = vpop.permute.xlu0 %1437
  %s1440 = sor.u32 256, 64
  %1441 = vbcast.lane.b32.xlu0 %v1407, %s1440
  %v1442 = vpop.permute.xlu0 %1441
  %s1444 = sor.u32 256, 72
  %1445 = vbcast.lane.b32.xlu0 %v1407, %s1444
  %v1446 = vpop.permute.xlu0 %1445
  %s1448 = sor.u32 256, 80
  %1449 = vbcast.lane.b32.xlu0 %v1407, %s1448
  %v1450 = vpop.permute.xlu0 %1449
  %s1452 = sor.u32 256, 88
  %1453 = vbcast.lane.b32.xlu0 %v1407, %s1452
  %v1454 = vpop.permute.xlu0 %1453
  %s1456 = sor.u32 256, 96
  %1457 = vbcast.lane.b32.xlu0 %v1407, %s1456
  %v1458 = vpop.permute.xlu0 %1457
  %s1460 = sor.u32 256, 104
  %1461 = vbcast.lane.b32.xlu0 %v1407, %s1460
  %v1462 = vpop.permute.xlu0 %1461
  %s1464 = sor.u32 256, 112
  %1465 = vbcast.lane.b32.xlu0 %v1407, %s1464
  %v1466 = vpop.permute.xlu0 %1465
  %s1468 = sor.u32 256, 120
  %1469 = vbcast.lane.b32.xlu0 %v1407, %s1468
  %v1470 = vpop.permute.xlu0 %1469
  %v1471 = vlaneseq
  %v1472 = vshrl.u32 %v1471, 7
  %v1473 = vsub.s32 5, %v1472
  %v1474 = vrot.slane %v303, %v1473
  %1476 = vbcast.lane.b32.xlu0 %v1474, 256
  %v1477 = vpop.permute.xlu0 %1476
  %s1479 = sor.u32 256, 8
  %1480 = vbcast.lane.b32.xlu0 %v1474, %s1479
  %v1481 = vpop.permute.xlu0 %1480
  %s1483 = sor.u32 256, 16
  %1484 = vbcast.lane.b32.xlu0 %v1474, %s1483
  %v1485 = vpop.permute.xlu0 %1484
  %s1487 = sor.u32 256, 24
  %1488 = vbcast.lane.b32.xlu0 %v1474, %s1487
  %v1489 = vpop.permute.xlu0 %1488
  %s1491 = sor.u32 256, 32
  %1492 = vbcast.lane.b32.xlu0 %v1474, %s1491
  %v1493 = vpop.permute.xlu0 %1492
  %s1495 = sor.u32 256, 40
  %1496 = vbcast.lane.b32.xlu0 %v1474, %s1495
  %v1497 = vpop.permute.xlu0 %1496
  %s1499 = sor.u32 256, 48
  %1500 = vbcast.lane.b32.xlu0 %v1474, %s1499
  %v1501 = vpop.permute.xlu0 %1500
  %s1503 = sor.u32 256, 56
  %1504 = vbcast.lane.b32.xlu0 %v1474, %s1503
  %v1505 = vpop.permute.xlu0 %1504
  %s1507 = sor.u32 256, 64
  %1508 = vbcast.lane.b32.xlu0 %v1474, %s1507
  %v1509 = vpop.permute.xlu0 %1508
  %s1511 = sor.u32 256, 72
  %1512 = vbcast.lane.b32.xlu0 %v1474, %s1511
  %v1513 = vpop.permute.xlu0 %1512
  %s1515 = sor.u32 256, 80
  %1516 = vbcast.lane.b32.xlu0 %v1474, %s1515
  %v1517 = vpop.permute.xlu0 %1516
  %s1519 = sor.u32 256, 88
  %1520 = vbcast.lane.b32.xlu0 %v1474, %s1519
  %v1521 = vpop.permute.xlu0 %1520
  %s1523 = sor.u32 256, 96
  %1524 = vbcast.lane.b32.xlu0 %v1474, %s1523
  %v1525 = vpop.permute.xlu0 %1524
  %s1527 = sor.u32 256, 104
  %1528 = vbcast.lane.b32.xlu0 %v1474, %s1527
  %v1529 = vpop.permute.xlu0 %1528
  %s1531 = sor.u32 256, 112
  %1532 = vbcast.lane.b32.xlu0 %v1474, %s1531
  %v1533 = vpop.permute.xlu0 %1532
  %s1535 = sor.u32 256, 120
  %1536 = vbcast.lane.b32.xlu0 %v1474, %s1535
  %v1537 = vpop.permute.xlu0 %1536
  %v1538 = vlaneseq
  %v1539 = vshrl.u32 %v1538, 7
  %v1540 = vsub.s32 6, %v1539
  %v1541 = vrot.slane %v303, %v1540
  %1543 = vbcast.lane.b32.xlu0 %v1541, 256
  %v1544 = vpop.permute.xlu0 %1543
  %s1546 = sor.u32 256, 8
  %1547 = vbcast.lane.b32.xlu0 %v1541, %s1546
  %v1548 = vpop.permute.xlu0 %1547
  %s1550 = sor.u32 256, 16
  %1551 = vbcast.lane.b32.xlu0 %v1541, %s1550
  %v1552 = vpop.permute.xlu0 %1551
  %s1554 = sor.u32 256, 24
  %1555 = vbcast.lane.b32.xlu0 %v1541, %s1554
  %v1556 = vpop.permute.xlu0 %1555
  %s1558 = sor.u32 256, 32
  %1559 = vbcast.lane.b32.xlu0 %v1541, %s1558
  %v1560 = vpop.permute.xlu0 %1559
  %s1562 = sor.u32 256, 40
  %1563 = vbcast.lane.b32.xlu0 %v1541, %s1562
  %v1564 = vpop.permute.xlu0 %1563
  %s1566 = sor.u32 256, 48
  %1567 = vbcast.lane.b32.xlu0 %v1541, %s1566
  %v1568 = vpop.permute.xlu0 %1567
  %s1570 = sor.u32 256, 56
  %1571 = vbcast.lane.b32.xlu0 %v1541, %s1570
  %v1572 = vpop.permute.xlu0 %1571
  %s1574 = sor.u32 256, 64
  %1575 = vbcast.lane.b32.xlu0 %v1541, %s1574
  %v1576 = vpop.permute.xlu0 %1575
  %s1578 = sor.u32 256, 72
  %1579 = vbcast.lane.b32.xlu0 %v1541, %s1578
  %v1580 = vpop.permute.xlu0 %1579
  %s1582 = sor.u32 256, 80
  %1583 = vbcast.lane.b32.xlu0 %v1541, %s1582
  %v1584 = vpop.permute.xlu0 %1583
  %s1586 = sor.u32 256, 88
  %1587 = vbcast.lane.b32.xlu0 %v1541, %s1586
  %v1588 = vpop.permute.xlu0 %1587
  %s1590 = sor.u32 256, 96
  %1591 = vbcast.lane.b32.xlu0 %v1541, %s1590
  %v1592 = vpop.permute.xlu0 %1591
  %s1594 = sor.u32 256, 104
  %1595 = vbcast.lane.b32.xlu0 %v1541, %s1594
  %v1596 = vpop.permute.xlu0 %1595
  %s1598 = sor.u32 256, 112
  %1599 = vbcast.lane.b32.xlu0 %v1541, %s1598
  %v1600 = vpop.permute.xlu0 %1599
  %s1602 = sor.u32 256, 120
  %1603 = vbcast.lane.b32.xlu0 %v1541, %s1602
  %v1604 = vpop.permute.xlu0 %1603
  %v1605 = vlaneseq
  %v1606 = vshrl.u32 %v1605, 7
  %v1607 = vsub.s32 7, %v1606
  %v1608 = vrot.slane %v303, %v1607
  %1610 = vbcast.lane.b32.xlu0 %v1608, 256
  %v1611 = vpop.permute.xlu0 %1610
  %s1613 = sor.u32 256, 8
  %1614 = vbcast.lane.b32.xlu0 %v1608, %s1613
  %v1615 = vpop.permute.xlu0 %1614
  %s1617 = sor.u32 256, 16
  %1618 = vbcast.lane.b32.xlu0 %v1608, %s1617
  %v1619 = vpop.permute.xlu0 %1618
  %s1621 = sor.u32 256, 24
  %1622 = vbcast.lane.b32.xlu0 %v1608, %s1621
  %v1623 = vpop.permute.xlu0 %1622
  %s1625 = sor.u32 256, 32
  %1626 = vbcast.lane.b32.xlu0 %v1608, %s1625
  %v1627 = vpop.permute.xlu0 %1626
  %s1629 = sor.u32 256, 40
  %1630 = vbcast.lane.b32.xlu0 %v1608, %s1629
  %v1631 = vpop.permute.xlu0 %1630
  %s1633 = sor.u32 256, 48
  %1634 = vbcast.lane.b32.xlu0 %v1608, %s1633
  %v1635 = vpop.permute.xlu0 %1634
  %s1637 = sor.u32 256, 56
  %1638 = vbcast.lane.b32.xlu0 %v1608, %s1637
  %v1639 = vpop.permute.xlu0 %1638
  %s1641 = sor.u32 256, 64
  %1642 = vbcast.lane.b32.xlu0 %v1608, %s1641
  %v1643 = vpop.permute.xlu0 %1642
  %s1645 = sor.u32 256, 72
  %1646 = vbcast.lane.b32.xlu0 %v1608, %s1645
  %v1647 = vpop.permute.xlu0 %1646
  %s1649 = sor.u32 256, 80
  %1650 = vbcast.lane.b32.xlu0 %v1608, %s1649
  %v1651 = vpop.permute.xlu0 %1650
  %s1653 = sor.u32 256, 88
  %1654 = vbcast.lane.b32.xlu0 %v1608, %s1653
  %v1655 = vpop.permute.xlu0 %1654
  %s1657 = sor.u32 256, 96
  %1658 = vbcast.lane.b32.xlu0 %v1608, %s1657
  %v1659 = vpop.permute.xlu0 %1658
  %s1661 = sor.u32 256, 104
  %1662 = vbcast.lane.b32.xlu0 %v1608, %s1661
  %v1663 = vpop.permute.xlu0 %1662
  %s1665 = sor.u32 256, 112
  %1666 = vbcast.lane.b32.xlu0 %v1608, %s1665
  %v1667 = vpop.permute.xlu0 %1666
  %s1669 = sor.u32 256, 120
  %1670 = vbcast.lane.b32.xlu0 %v1608, %s1669
  %v1671 = vpop.permute.xlu0 %1670
  %v1672 = vmul.f32 %v148, %v1142
  %v1673 = vmul.f32 %v149, %v1146
  %v1674 = vmul.f32 %v150, %v1150
  %v1675 = vmul.f32 %v151, %v1154
  %v1676 = vmul.f32 %v152, %v1158
  %v1677 = vmul.f32 %v153, %v1162
  %v1678 = vmul.f32 %v154, %v1166
  %v1679 = vmul.f32 %v155, %v1170
  %v1680 = vmul.f32 %v156, %v1174
  %v1681 = vmul.f32 %v157, %v1178
  %v1682 = vmul.f32 %v158, %v1182
  %v1683 = vmul.f32 %v159, %v1186
  %v1684 = vmul.f32 %v160, %v1190
  %v1685 = vmul.f32 %v161, %v1194
  %v1686 = vmul.f32 %v162, %v1198
  %v1687 = vmul.f32 %v163, %v1202
  %v1688 = vmul.f32 %v164, %v1209
  %v1689 = vmul.f32 %v165, %v1213
  %v1690 = vmul.f32 %v166, %v1217
  %v1691 = vmul.f32 %v167, %v1221
  %v1692 = vmul.f32 %v168, %v1225
  %v1693 = vmul.f32 %v169, %v1229
  %v1694 = vmul.f32 %v170, %v1233
  %v1695 = vmul.f32 %v171, %v1237
  %v1696 = vmul.f32 %v172, %v1241
  %v1697 = vmul.f32 %v173, %v1245
  %v1698 = vmul.f32 %v174, %v1249
  %v1699 = vmul.f32 %v175, %v1253
  %v1700 = vmul.f32 %v176, %v1257
  %v1701 = vmul.f32 %v177, %v1261
  %v1702 = vmul.f32 %v178, %v1265
  %v1703 = vmul.f32 %v179, %v1269
  %v1704 = vmul.f32 %v180, %v1276
  %v1705 = vmul.f32 %v181, %v1280
  %v1706 = vmul.f32 %v182, %v1284
  %v1707 = vmul.f32 %v183, %v1288
  %v1708 = vmul.f32 %v184, %v1292
  %v1709 = vmul.f32 %v185, %v1296
  %v1710 = vmul.f32 %v186, %v1300
  %v1711 = vmul.f32 %v187, %v1304
  %v1712 = vmul.f32 %v188, %v1308
  %v1713 = vmul.f32 %v189, %v1312
  %v1714 = vmul.f32 %v190, %v1316
  %v1715 = vmul.f32 %v191, %v1320
  %v1716 = vmul.f32 %v192, %v1324
  %v1717 = vmul.f32 %v193, %v1328
  %v1718 = vmul.f32 %v194, %v1332
  %v1719 = vmul.f32 %v195, %v1336
  %v1720 = vmul.f32 %v196, %v1343
  %v1721 = vmul.f32 %v197, %v1347
  %v1722 = vmul.f32 %v198, %v1351
  %v1723 = vmul.f32 %v199, %v1355
  %v1724 = vmul.f32 %v200, %v1359
  %v1725 = vmul.f32 %v201, %v1363
  %v1726 = vmul.f32 %v202, %v1367
  %v1727 = vmul.f32 %v203, %v1371
  %v1728 = vmul.f32 %v204, %v1375
  %v1729 = vmul.f32 %v205, %v1379
  %v1730 = vmul.f32 %v206, %v1383
  %v1731 = vmul.f32 %v207, %v1387
  %v1732 = vmul.f32 %v208, %v1391
  %v1733 = vmul.f32 %v209, %v1395
  %v1734 = vmul.f32 %v210, %v1399
  %v1735 = vmul.f32 %v211, %v1403
  %v1736 = vmul.f32 %v212, %v1410
  %v1737 = vmul.f32 %v213, %v1414
  %v1738 = vmul.f32 %v214, %v1418
  %v1739 = vmul.f32 %v215, %v1422
  %v1740 = vmul.f32 %v216, %v1426
  %v1741 = vmul.f32 %v217, %v1430
  %v1742 = vmul.f32 %v218, %v1434
  %v1743 = vmul.f32 %v219, %v1438
  %v1744 = vmul.f32 %v220, %v1442
  %v1745 = vmul.f32 %v221, %v1446
  %v1746 = vmul.f32 %v222, %v1450
  %v1747 = vmul.f32 %v223, %v1454
  %v1748 = vmul.f32 %v224, %v1458
  %v1749 = vmul.f32 %v225, %v1462
  %v1750 = vmul.f32 %v226, %v1466
  %v1751 = vmul.f32 %v227, %v1470
  %v1752 = vmul.f32 %v228, %v1477
  %v1753 = vmul.f32 %v229, %v1481
  %v1754 = vmul.f32 %v230, %v1485
  %v1755 = vmul.f32 %v231, %v1489
  %v1756 = vmul.f32 %v232, %v1493
  %v1757 = vmul.f32 %v233, %v1497
  %v1758 = vmul.f32 %v234, %v1501
  %v1759 = vmul.f32 %v235, %v1505
  %v1760 = vmul.f32 %v236, %v1509
  %v1761 = vmul.f32 %v237, %v1513
  %v1762 = vmul.f32 %v238, %v1517
  %v1763 = vmul.f32 %v239, %v1521
  %v1764 = vmul.f32 %v240, %v1525
  %v1765 = vmul.f32 %v241, %v1529
  %v1766 = vmul.f32 %v242, %v1533
  %v1767 = vmul.f32 %v243, %v1537
  %v1768 = vmul.f32 %v244, %v1544
  %v1769 = vmul.f32 %v245, %v1548
  %v1770 = vmul.f32 %v246, %v1552
  %v1771 = vmul.f32 %v247, %v1556
  %v1772 = vmul.f32 %v248, %v1560
  %v1773 = vmul.f32 %v249, %v1564
  %v1774 = vmul.f32 %v250, %v1568
  %v1775 = vmul.f32 %v251, %v1572
  %v1776 = vmul.f32 %v252, %v1576
  %v1777 = vmul.f32 %v253, %v1580
  %v1778 = vmul.f32 %v254, %v1584
  %v1779 = vmul.f32 %v255, %v1588
  %v1780 = vmul.f32 %v256, %v1592
  %v1781 = vmul.f32 %v257, %v1596
  %v1782 = vmul.f32 %v258, %v1600
  %v1783 = vmul.f32 %v259, %v1604
  %v1784 = vmul.f32 %v260, %v1611
  %v1785 = vmul.f32 %v261, %v1615
  %v1786 = vmul.f32 %v262, %v1619
  %v1787 = vmul.f32 %v263, %v1623
  %v1788 = vmul.f32 %v264, %v1627
  %v1789 = vmul.f32 %v265, %v1631
  %v1790 = vmul.f32 %v266, %v1635
  %v1791 = vmul.f32 %v267, %v1639
  %v1792 = vmul.f32 %v268, %v1643
  %v1793 = vmul.f32 %v269, %v1647
  %v1794 = vmul.f32 %v270, %v1651
  %v1795 = vmul.f32 %v271, %v1655
  %v1796 = vmul.f32 %v272, %v1659
  %v1797 = vmul.f32 %v273, %v1663
  %v1798 = vmul.f32 %v274, %v1667
  %v1799 = vmul.f32 %v275, %v1671
  %v1800 = vadd.f32 %v1672, %v1673
  %v1801 = vadd.f32 %v1800, %v1674
  %v1802 = vadd.f32 %v1801, %v1675
  %v1803 = vadd.f32 %v1802, %v1676
  %v1804 = vadd.f32 %v1803, %v1677
  %v1805 = vadd.f32 %v1804, %v1678
  %v1806 = vadd.f32 %v1805, %v1679
  %v1807 = vadd.f32 %v1806, %v1680
  %v1808 = vadd.f32 %v1807, %v1681
  %v1809 = vadd.f32 %v1808, %v1682
  %v1810 = vadd.f32 %v1809, %v1683
  %v1811 = vadd.f32 %v1810, %v1684
  %v1812 = vadd.f32 %v1811, %v1685
  %v1813 = vadd.f32 %v1812, %v1686
  %v1814 = vadd.f32 %v1813, %v1687
  %v1815 = vrot.slane %v1814, 4
  %v1816 = vadd.f32 %v1814, %v1815
  %v1817 = vrot.slane %v1816, 2
  %v1818 = vadd.f32 %v1816, %v1817
  %v1819 = vrot.slane %v1818, 1
  %v1820 = vadd.f32 %v1818, %v1819
  %v1821 = vadd.f32 %v1688, %v1689
  %v1822 = vadd.f32 %v1821, %v1690
  %v1823 = vadd.f32 %v1822, %v1691
  %v1824 = vadd.f32 %v1823, %v1692
  %v1825 = vadd.f32 %v1824, %v1693
  %v1826 = vadd.f32 %v1825, %v1694
  %v1827 = vadd.f32 %v1826, %v1695
  %v1828 = vadd.f32 %v1827, %v1696
  %v1829 = vadd.f32 %v1828, %v1697
  %v1830 = vadd.f32 %v1829, %v1698
  %v1831 = vadd.f32 %v1830, %v1699
  %v1832 = vadd.f32 %v1831, %v1700
  %v1833 = vadd.f32 %v1832, %v1701
  %v1834 = vadd.f32 %v1833, %v1702
  %v1835 = vadd.f32 %v1834, %v1703
  %v1836 = vrot.slane %v1835, 4
  %v1837 = vadd.f32 %v1835, %v1836
  %v1838 = vrot.slane %v1837, 2
  %v1839 = vadd.f32 %v1837, %v1838
  %v1840 = vrot.slane %v1839, 1
  %v1841 = vadd.f32 %v1839, %v1840
  %v1842 = vadd.f32 %v1704, %v1705
  %v1843 = vadd.f32 %v1842, %v1706
  %v1844 = vadd.f32 %v1843, %v1707
  %v1845 = vadd.f32 %v1844, %v1708
  %v1846 = vadd.f32 %v1845, %v1709
  %v1847 = vadd.f32 %v1846, %v1710
  %v1848 = vadd.f32 %v1847, %v1711
  %v1849 = vadd.f32 %v1848, %v1712
  %v1850 = vadd.f32 %v1849, %v1713
  %v1851 = vadd.f32 %v1850, %v1714
  %v1852 = vadd.f32 %v1851, %v1715
  %v1853 = vadd.f32 %v1852, %v1716
  %v1854 = vadd.f32 %v1853, %v1717
  %v1855 = vadd.f32 %v1854, %v1718
  %v1856 = vadd.f32 %v1855, %v1719
  %v1857 = vrot.slane %v1856, 4
  %v1858 = vadd.f32 %v1856, %v1857
  %v1859 = vrot.slane %v1858, 2
  %v1860 = vadd.f32 %v1858, %v1859
  %v1861 = vrot.slane %v1860, 1
  %v1862 = vadd.f32 %v1860, %v1861
  %v1863 = vadd.f32 %v1720, %v1721
  %v1864 = vadd.f32 %v1863, %v1722
  %v1865 = vadd.f32 %v1864, %v1723
  %v1866 = vadd.f32 %v1865, %v1724
  %v1867 = vadd.f32 %v1866, %v1725
  %v1868 = vadd.f32 %v1867, %v1726
  %v1869 = vadd.f32 %v1868, %v1727
  %v1870 = vadd.f32 %v1869, %v1728
  %v1871 = vadd.f32 %v1870, %v1729
  %v1872 = vadd.f32 %v1871, %v1730
  %v1873 = vadd.f32 %v1872, %v1731
  %v1874 = vadd.f32 %v1873, %v1732
  %v1875 = vadd.f32 %v1874, %v1733
  %v1876 = vadd.f32 %v1875, %v1734
  %v1877 = vadd.f32 %v1876, %v1735
  %v1878 = vrot.slane %v1877, 4
  %v1879 = vadd.f32 %v1877, %v1878
  %v1880 = vrot.slane %v1879, 2
  %v1881 = vadd.f32 %v1879, %v1880
  %v1882 = vrot.slane %v1881, 1
  %v1883 = vadd.f32 %v1881, %v1882
  %v1884 = vadd.f32 %v1736, %v1737
  %v1885 = vadd.f32 %v1884, %v1738
  %v1886 = vadd.f32 %v1885, %v1739
  %v1887 = vadd.f32 %v1886, %v1740
  %v1888 = vadd.f32 %v1887, %v1741
  %v1889 = vadd.f32 %v1888, %v1742
  %v1890 = vadd.f32 %v1889, %v1743
  %v1891 = vadd.f32 %v1890, %v1744
  %v1892 = vadd.f32 %v1891, %v1745
  %v1893 = vadd.f32 %v1892, %v1746
  %v1894 = vadd.f32 %v1893, %v1747
  %v1895 = vadd.f32 %v1894, %v1748
  %v1896 = vadd.f32 %v1895, %v1749
  %v1897 = vadd.f32 %v1896, %v1750
  %v1898 = vadd.f32 %v1897, %v1751
  %v1899 = vrot.slane %v1898, 4
  %v1900 = vadd.f32 %v1898, %v1899
  %v1901 = vrot.slane %v1900, 2
  %v1902 = vadd.f32 %v1900, %v1901
  %v1903 = vrot.slane %v1902, 1
  %v1904 = vadd.f32 %v1902, %v1903
  %v1905 = vadd.f32 %v1752, %v1753
  %v1906 = vadd.f32 %v1905, %v1754
  %v1907 = vadd.f32 %v1906, %v1755
  %v1908 = vadd.f32 %v1907, %v1756
  %v1909 = vadd.f32 %v1908, %v1757
  %v1910 = vadd.f32 %v1909, %v1758
  %v1911 = vadd.f32 %v1910, %v1759
  %v1912 = vadd.f32 %v1911, %v1760
  %v1913 = vadd.f32 %v1912, %v1761
  %v1914 = vadd.f32 %v1913, %v1762
  %v1915 = vadd.f32 %v1914, %v1763
  %v1916 = vadd.f32 %v1915, %v1764
  %v1917 = vadd.f32 %v1916, %v1765
  %v1918 = vadd.f32 %v1917, %v1766
  %v1919 = vadd.f32 %v1918, %v1767
  %v1920 = vrot.slane %v1919, 4
  %v1921 = vadd.f32 %v1919, %v1920
  %v1922 = vrot.slane %v1921, 2
  %v1923 = vadd.f32 %v1921, %v1922
  %v1924 = vrot.slane %v1923, 1
  %v1925 = vadd.f32 %v1923, %v1924
  %v1926 = vadd.f32 %v1768, %v1769
  %v1927 = vadd.f32 %v1926, %v1770
  %v1928 = vadd.f32 %v1927, %v1771
  %v1929 = vadd.f32 %v1928, %v1772
  %v1930 = vadd.f32 %v1929, %v1773
  %v1931 = vadd.f32 %v1930, %v1774
  %v1932 = vadd.f32 %v1931, %v1775
  %v1933 = vadd.f32 %v1932, %v1776
  %v1934 = vadd.f32 %v1933, %v1777
  %v1935 = vadd.f32 %v1934, %v1778
  %v1936 = vadd.f32 %v1935, %v1779
  %v1937 = vadd.f32 %v1936, %v1780
  %v1938 = vadd.f32 %v1937, %v1781
  %v1939 = vadd.f32 %v1938, %v1782
  %v1940 = vadd.f32 %v1939, %v1783
  %v1941 = vrot.slane %v1940, 4
  %v1942 = vadd.f32 %v1940, %v1941
  %v1943 = vrot.slane %v1942, 2
  %v1944 = vadd.f32 %v1942, %v1943
  %v1945 = vrot.slane %v1944, 1
  %v1946 = vadd.f32 %v1944, %v1945
  %v1947 = vadd.f32 %v1784, %v1785
  %v1948 = vadd.f32 %v1947, %v1786
  %v1949 = vadd.f32 %v1948, %v1787
  %v1950 = vadd.f32 %v1949, %v1788
  %v1951 = vadd.f32 %v1950, %v1789
  %v1952 = vadd.f32 %v1951, %v1790
  %v1953 = vadd.f32 %v1952, %v1791
  %v1954 = vadd.f32 %v1953, %v1792
  %v1955 = vadd.f32 %v1954, %v1793
  %v1956 = vadd.f32 %v1955, %v1794
  %v1957 = vadd.f32 %v1956, %v1795
  %v1958 = vadd.f32 %v1957, %v1796
  %v1959 = vadd.f32 %v1958, %v1797
  %v1960 = vadd.f32 %v1959, %v1798
  %v1961 = vadd.f32 %v1960, %v1799
  %v1962 = vrot.slane %v1961, 4
  %v1963 = vadd.f32 %v1961, %v1962
  %v1964 = vrot.slane %v1963, 2
  %v1965 = vadd.f32 %v1963, %v1964
  %v1966 = vrot.slane %v1965, 1
  %v1967 = vadd.f32 %v1965, %v1966
  %v1968 = vsub.s32 %v279, %v278
  %v1969 = vcvt.s32.f32 %v1968
  %v1970 = vmax.f32 %v1969, 1.0
  %v1971 = vsub.s32 %v281, %v280
  %v1972 = vcvt.s32.f32 %v1971
  %v1973 = vmax.f32 %v1972, 1.0
  %v1974 = vrcp.pop %v1970
  %1976 = vset.pattern.permute.xlu0 0
  %1977 = vperm.xlu0 %1976, %v1974
  %v1978 = vpop.permute.xlu0 %1977
  %v1979 = vrot.slane %v1978, 1
  %v1980 = vrot.slane %v1978, 2
  %v1981 = vrot.slane %v1978, 3
  %v1982 = vrot.slane %v1978, 4
  %v1983 = vrot.slane %v1978, 5
  %v1984 = vrot.slane %v1978, 6
  %v1985 = vrot.slane %v1978, 7
  %v1994 = vmul.f32 %v988, %v1978
  %v1995 = vmul.f32 %v1009, %v1979
  %v1996 = vmul.f32 %v1030, %v1980
  %v1997 = vmul.f32 %v1051, %v1981
  %v1998 = vmul.f32 %v1072, %v1982
  %v1999 = vmul.f32 %v1093, %v1983
  %v2000 = vmul.f32 %v1114, %v1984
  %v2001 = vmul.f32 %v1135, %v1985
  %v2002 = vrcp.pop %v1973
  %2004 = vset.pattern.permute.xlu0 0
  %2005 = vperm.xlu0 %2004, %v2002
  %v2006 = vpop.permute.xlu0 %2005
  %v2007 = vrot.slane %v2006, 1
  %v2008 = vrot.slane %v2006, 2
  %v2009 = vrot.slane %v2006, 3
  %v2010 = vrot.slane %v2006, 4
  %v2011 = vrot.slane %v2006, 5
  %v2012 = vrot.slane %v2006, 6
  %v2013 = vrot.slane %v2006, 7
  %v2022 = vmul.f32 %v1820, %v2006
  %v2023 = vmul.f32 %v1841, %v2007
  %v2024 = vmul.f32 %v1862, %v2008
  %v2025 = vmul.f32 %v1883, %v2009
  %v2026 = vmul.f32 %v1904, %v2010
  %v2027 = vmul.f32 %v1925, %v2011
  %v2028 = vmul.f32 %v1946, %v2012
  %v2029 = vmul.f32 %v1967, %v2013
  %v2038 = vrot.slane %v1995, 7
  %vm2039 = vcmask 1041409
  %v2040 = vsel %vm2039, %v2038, %v1994
  %v2041 = vrot.slane %v1996, 6
  %vm2042 = vcmask 1042434
  %v2043 = vsel %vm2042, %v2041, %v2040
  %v2044 = vrot.slane %v1997, 5
  %vm2045 = vcmask 1043459
  %v2046 = vsel %vm2045, %v2044, %v2043
  %v2047 = vrot.slane %v1998, 4
  %vm2048 = vcmask 1044484
  %v2049 = vsel %vm2048, %v2047, %v2046
  %v2050 = vrot.slane %v1999, 3
  %vm2051 = vcmask 1045509
  %v2052 = vsel %vm2051, %v2050, %v2049
  %v2053 = vrot.slane %v2000, 2
  %vm2054 = vcmask 1046534
  %v2055 = vsel %vm2054, %v2053, %v2052
  %v2056 = vrot.slane %v2001, 1
  %vm2057 = vcmask 1047559
  %v2058 = vsel %vm2057, %v2056, %v2055
  %2060 = vst [vmem:[%s5] sm:$0xff] %v2058
  %v2069 = vrot.slane %v2023, 7
  %v2070 = vsel %vm2039, %v2069, %v2022
  %v2071 = vrot.slane %v2024, 6
  %v2072 = vsel %vm2042, %v2071, %v2070
  %v2073 = vrot.slane %v2025, 5
  %v2074 = vsel %vm2045, %v2073, %v2072
  %v2075 = vrot.slane %v2026, 4
  %v2076 = vsel %vm2048, %v2075, %v2074
  %v2077 = vrot.slane %v2027, 3
  %v2078 = vsel %vm2051, %v2077, %v2076
  %v2079 = vrot.slane %v2028, 2
  %v2080 = vsel %vm2054, %v2079, %v2078
  %v2081 = vrot.slane %v2029, 1
  %v2082 = vsel %vm2057, %v2081, %v2080
  %2084 = vst [vmem:[%s5 + $0x8] sm:$0xff] %v2082
  // Predicated region
  $region22: #{cp_forward.5} parent=0 // pred_check
    _
  $region23: #{cp_forward.5} parent=0 // pred_check_branch
    %2086 = sbr.rel (0) target = $region25
  $region24: #{cp_forward.5} parent=0 // pred_region
    _
  $region25: #{cp_forward.5} parent=0 // pred_fallthru
    _
  // Predicated region
  $region26: #{cp_forward.5} parent=0 // pred_check
    _
  $region27: #{cp_forward.5} parent=0 // pred_check_branch
    %2088 = sbr.rel (0) target = $region29
  $region28: #{cp_forward.5} parent=0 // pred_region
    _
  $region29: #{cp_forward.5} parent=0 // pred_fallthru
    _

// kernel: cp_forward.4
$region0: #{cp_forward.4}
  #allocation0 [shape = 'u32[]', space=smem, size = 0x4, offset = 0x4, fixed_abs, tag = 'smem constant byte address 0x4 - core index']
  #allocation1 [shape = 'u32[144,128]{1,0:T(1,128)}', space=vmem, size = 0x12000, scoped, tag = 'internal scratch']
  #allocation2 [shape = 'f32[256,1]{1,0:T(8,128)}', space=vmem, size = 0x20000, scoped, tag = 'scratch operand']
  #allocation3 [shape = 'f32[256,1]{1,0:T(8,128)}', space=vmem, size = 0x20000, scoped, tag = 'scratch operand']
  #allocation4 [shape = 'f32[256,1]{1,0:T(8,128)}', space=vmem, size = 0x20000, scoped, tag = 'scratch operand']
  %s0 = inlined_call_operand.vmem [shape: bf16[1024,128], index: 0, kind: input, shape index: {}]
  %s1 = inlined_call_operand.vmem [shape: bf16[128,512], index: 1, kind: input, shape index: {}]
  %s2 = inlined_call_operand.vmem [shape: f32[1,512], index: 2, kind: input, shape index: {}]
  %s3 = inlined_call_operand.vmem [shape: s32[1024,1], index: 3, kind: input, shape index: {}]
  %s4 = inlined_call_operand.vmem [shape: f32[1024,1], index: 4, kind: output, shape index: {}]
  %s5 = sld [smem:[#allocation0]]
  $region57: #{cp_forward.4} parent=0
    _
  %s7 = ssub.s32 1, %s5
  %s8 = scalar_select 0, %s7, %s5
  loop: start=0, step=1, limit=6
  $region2: #{cp_forward.4} parent=0 // loop_pre_header
    _
  $region3: #{cp_forward.4} parent=0 // loop_header
    %s10 = sphi 0, %s14
    %p11 = scmp.ge.s32.totalorder %s10, 6
    %s17 = sphi 0, %s29
    %s18 = sphi 0, %s25
    %s19 = sphi 0, %s17
    %s20 = sphi 0, %s18
    %s21 = sphi 0, %s19
    %s22 = sphi 0, %s20
    %s32 = sphi 0, %s34
    %s35 = sphi 0, %s32
    %s36 = sphi 0, %s35
    %s52 = sphi 0, %s36
    %s58 = sphi 0, %s60
    %s61 = sphi 0, %s58
    %s62 = sphi 0, %s61
    %s78 = sphi 0, %s62
    %s84 = sphi 0, %s86
    %s87 = sphi 0, %s84
    %s88 = sphi 0, %s87
    %s104 = sphi 0, %s88
    %s110 = sphi 0, %s112
    %s113 = sphi 0, %s110
    %s114 = sphi 0, %s113
    %s130 = sphi 0, %s114
    %s136 = sphi 0, %s138
    %s139 = sphi 0, %s136
    %s140 = sphi 0, %s139
    %s156 = sphi 0, %s140
  $region4: #{cp_forward.4} parent=0 // loop_header_branch
    %13 = sbr.rel (%p11) target = $region8
  $region5: #{cp_forward.4} parent=0 // loop_body
    %s15 = ssub.s32 %s10, 1
    %s16 = ssub.s32 %s10, 2
    %s23 = sadd.s32 1, %s18
    %p24 = scmp.ge.s32.totalorder %s23, 1
    %s25 = scalar_select %p24, 0, %s23
    %s26 = sadd.s32 1, %s17
    %s27 = scalar_select %p24, %s26, %s17
    %p28 = scmp.ge.s32.totalorder %s27, 4
    %s29 = scalar_select %p28, 0, %s27
    %s30 = ssub.s32 %s17, %s29
    %p31 = scmp.eq.s32.totalorder %s30, 0
    %s33 = sadd.s32 %s32, 1
    %s34 = scalar_select %p31, %s32, %s33
    %p37 = pneg %p31
    %p38 = scmp.eq.s32.totalorder %s10, 3
    %p39 = por %p37, %p38
    %p40 = scmp.ne.s32.totalorder %s32, %s35
    %p41 = scmp.eq.s32.totalorder %s10, 0
    %p42 = por %p40, %p41
    %p43 = scmp.ne.s32.totalorder %s32, %s35
    %p44 = scmp.eq.s32.totalorder %s15, 3
    %p45 = por %p43, %p44
    %p46 = scmp.ne.s32.totalorder %s35, %s36
    %p47 = scmp.eq.s32.totalorder %s15, 0
    %p48 = por %p46, %p47
    %p49 = scmp.ne.s32.totalorder %s35, %s36
    %p50 = scmp.eq.s32.totalorder %s16, 3
    %p51 = por %p49, %p50
    %p53 = scmp.ne.s32.totalorder %s36, %s52
    %p54 = scmp.eq.s32.totalorder %s16, 0
    %p55 = por %p53, %p54
    %s56 = ssub.s32 %s18, %s25
    %p57 = scmp.eq.s32.totalorder %s56, 0
    %s59 = sadd.s32 %s58, 1
    %s60 = scalar_select %p57, %s58, %s59
    %p63 = pneg %p57
    %p64 = scmp.eq.s32.totalorder %s10, 3
    %p65 = por %p63, %p64
    %p66 = scmp.ne.s32.totalorder %s58, %s61
    %p67 = scmp.eq.s32.totalorder %s10, 0
    %p68 = por %p66, %p67
    %p69 = scmp.ne.s32.totalorder %s58, %s61
    %p70 = scmp.eq.s32.totalorder %s15, 3
    %p71 = por %p69, %p70
    %p72 = scmp.ne.s32.totalorder %s61, %s62
    %p73 = scmp.eq.s32.totalorder %s15, 0
    %p74 = por %p72, %p73
    %p75 = scmp.ne.s32.totalorder %s61, %s62
    %p76 = scmp.eq.s32.totalorder %s16, 3
    %p77 = por %p75, %p76
    %p79 = scmp.ne.s32.totalorder %s62, %s78
    %p80 = scmp.eq.s32.totalorder %s16, 0
    %p81 = por %p79, %p80
    %s82 = ssub.s32 %s18, %s25
    %p83 = scmp.eq.s32.totalorder %s82, 0
    %s85 = sadd.s32 %s84, 1
    %s86 = scalar_select %p83, %s84, %s85
    %p89 = pneg %p83
    %p90 = scmp.eq.s32.totalorder %s10, 3
    %p91 = por %p89, %p90
    %p92 = scmp.ne.s32.totalorder %s84, %s87
    %p93 = scmp.eq.s32.totalorder %s10, 0
    %p94 = por %p92, %p93
    %p95 = scmp.ne.s32.totalorder %s84, %s87
    %p96 = scmp.eq.s32.totalorder %s15, 3
    %p97 = por %p95, %p96
    %p98 = scmp.ne.s32.totalorder %s87, %s88
    %p99 = scmp.eq.s32.totalorder %s15, 0
    %p100 = por %p98, %p99
    %p101 = scmp.ne.s32.totalorder %s87, %s88
    %p102 = scmp.eq.s32.totalorder %s16, 3
    %p103 = por %p101, %p102
    %p105 = scmp.ne.s32.totalorder %s88, %s104
    %p106 = scmp.eq.s32.totalorder %s16, 0
    %p107 = por %p105, %p106
    %s108 = ssub.s32 %s17, %s29
    %p109 = scmp.eq.s32.totalorder %s108, 0
    %s111 = sadd.s32 %s110, 1
    %s112 = scalar_select %p109, %s110, %s111
    %p115 = pneg %p109
    %p116 = scmp.eq.s32.totalorder %s10, 3
    %p117 = por %p115, %p116
    %p118 = scmp.ne.s32.totalorder %s110, %s113
    %p119 = scmp.eq.s32.totalorder %s10, 0
    %p120 = por %p118, %p119
    %p121 = scmp.ne.s32.totalorder %s110, %s113
    %p122 = scmp.eq.s32.totalorder %s15, 3
    %p123 = por %p121, %p122
    %p124 = scmp.ne.s32.totalorder %s113, %s114
    %p125 = scmp.eq.s32.totalorder %s15, 0
    %p126 = por %p124, %p125
    %p127 = scmp.ne.s32.totalorder %s113, %s114
    %p128 = scmp.eq.s32.totalorder %s16, 3
    %p129 = por %p127, %p128
    %p131 = scmp.ne.s32.totalorder %s114, %s130
    %p132 = scmp.eq.s32.totalorder %s16, 0
    %p133 = por %p131, %p132
    %s134 = ssub.s32 %s17, %s29
    %p135 = scmp.eq.s32.totalorder %s134, 0
    %s137 = sadd.s32 %s136, 1
    %s138 = scalar_select %p135, %s136, %s137
    %p141 = pneg %p135
    %p142 = scmp.eq.s32.totalorder %s10, 3
    %p143 = por %p141, %p142
    %p144 = scmp.ne.s32.totalorder %s136, %s139
    %p145 = scmp.eq.s32.totalorder %s10, 0
    %p146 = por %p144, %p145
    %p147 = scmp.ne.s32.totalorder %s136, %s139
    %p148 = scmp.eq.s32.totalorder %s15, 3
    %p149 = por %p147, %p148
    %p150 = scmp.ne.s32.totalorder %s139, %s140
    %p151 = scmp.eq.s32.totalorder %s15, 0
    %p152 = por %p150, %p151
    %p153 = scmp.ne.s32.totalorder %s139, %s140
    %p154 = scmp.eq.s32.totalorder %s16, 3
    %p155 = por %p153, %p154
    %p157 = scmp.ne.s32.totalorder %s140, %s156
    %p158 = scmp.eq.s32.totalorder %s16, 0
    %p159 = por %p157, %p158
    %p160 = scmp.le.s32.totalorder 1, %s10
    %p161 = scmp.lt.s32.totalorder %s10, 5
    %p162 = pnand %p160, %p161
    %p163 = pneg %p162
    // Predicated region
    $region9: #{cp_forward.4} parent=5 // pred_check
      _
    $region10: #{cp_forward.4} parent=5 // pred_check_branch
      %165 = sbr.rel (%p162) target = $region12
    $region11: #{cp_forward.4} parent=5 // pred_region
      %s166 = ssub.s32 %s10, 1
      // Predicated region
      $region13: #{cp_forward.4} parent=11 // pred_check
        %p167 = pneg %p74
      $region14: #{cp_forward.4} parent=11 // pred_check_branch
        %169 = sbr.rel (%p167) target = $region16
      $region15: #{cp_forward.4} parent=11 // pred_region
        %s170 = smul.u32 4, %s20
        %p171 = scmp.lt.s32.totalorder %s170, 3
        %s172 = scalar_select %p171, %s170, 3
        %s173 = smul.addr %s172, 4
        %s174 = scalar_lea.vmem %s1, %s173
        %s175 = smul.u32 4, %s20
      $region16: #{cp_forward.4} parent=11 // pred_fallthru
        _
      // Predicated region
      $region17: #{cp_forward.4} parent=11 // pred_check
        %p176 = pneg %p100
      $region18: #{cp_forward.4} parent=11 // pred_check_branch
        %178 = sbr.rel (%p176) target = $region20
      $region19: #{cp_forward.4} parent=11 // pred_region
        %s179 = smul.u32 4, %s20
        %p180 = scmp.lt.s32.totalorder %s179, 3
        %s181 = scalar_select %p180, %s179, 3
        %s182 = scalar_lea.vmem %s2, %s181
        %s183 = smul.u32 4, %s20
      $region20: #{cp_forward.4} parent=11 // pred_fallthru
        _
    $region12: #{cp_forward.4} parent=5 // pred_fallthru
      _
    %p184 = scmp.lt.s32.totalorder %s10, 4
    // Predicated region
    $region21: #{cp_forward.4} parent=5 // pred_check
      %p185 = pneg %p184
    $region22: #{cp_forward.4} parent=5 // pred_check_branch
      %187 = sbr.rel (%p185) target = $region24
    $region23: #{cp_forward.4} parent=5 // pred_region
      // Predicated region
      $region25: #{cp_forward.4} parent=23 // pred_check
        %p188 = pneg %p42
      $region26: #{cp_forward.4} parent=23 // pred_check_branch
        %190 = sbr.rel (%p188) target = $region28
      $region27: #{cp_forward.4} parent=23 // pred_region
        %s191 = smul.u32 32, %s17
        %p192 = scmp.lt.s32.totalorder %s191, 127
        %s193 = scalar_select %p192, %s191, 127
        %s194 = smul.addr %s193, 4
        %s195 = scalar_lea.vmem %s0, %s194
        %s196 = smul.u32 32, %s17
      $region28: #{cp_forward.4} parent=23 // pred_fallthru
        _
      // Predicated region
      $region29: #{cp_forward.4} parent=23 // pred_check
        %p197 = pneg %p120
      $region30: #{cp_forward.4} parent=23 // pred_check_branch
        %199 = sbr.rel (%p197) target = $region32
      $region31: #{cp_forward.4} parent=23 // pred_region
        %s200 = smul.u32 32, %s17
        %p201 = scmp.lt.s32.totalorder %s200, 127
        %s202 = scalar_select %p201, %s200, 127
        %s203 = smul.addr %s202, 8
        %s204 = scalar_lea.vmem %s3, %s203
        %s205 = smul.u32 32, %s17
      $region32: #{cp_forward.4} parent=23 // pred_fallthru
        _
    $region24: #{cp_forward.4} parent=5 // pred_fallthru
      _
    %p206 = scmp.le.s32.totalorder 1, %s10
    %p207 = scmp.lt.s32.totalorder %s10, 5
    %p208 = pnand %p206, %p207
    %p209 = pneg %p208
    // Predicated region
    $region33: #{cp_forward.4} parent=5 // pred_check
      _
    $region34: #{cp_forward.4} parent=5 // pred_check_branch
      %211 = sbr.rel (%p208) target = $region36
    $region35: #{cp_forward.4} parent=5 // pred_region
      %s212 = ssub.s32 %s10, 1
      %s213 = smul.u32 32, %s19
      %p214 = scmp.lt.s32.totalorder %s213, 127
      %s215 = scalar_select %p214, %s213, 127
      %s216 = smul.addr %s215, 4
      %s217 = scalar_lea.vmem %s0, %s216
      %p218 = pneg %p48
      %p219 = pneg %p45
      %s220 = smul.u32 4, %s20
      %p221 = scmp.lt.s32.totalorder %s220, 3
      %s222 = scalar_select %p221, %s220, 3
      %s223 = smul.addr %s222, 4
      %s224 = scalar_lea.vmem %s1, %s223
      %p225 = pneg %p74
      %p226 = pneg %p71
      %s227 = smul.u32 4, %s20
      %p228 = scmp.lt.s32.totalorder %s227, 3
      %s229 = scalar_select %p228, %s227, 3
      %s230 = scalar_lea.vmem %s2, %s229
      %p231 = pneg %p100
      %p232 = pneg %p97
      %s233 = smul.u32 32, %s19
      %p234 = scmp.lt.s32.totalorder %s233, 127
      %s235 = scalar_select %p234, %s233, 127
      %s236 = smul.addr %s235, 8
      %s237 = scalar_lea.vmem %s3, %s236
      %p238 = pneg %p126
      %p239 = pneg %p123
      %p240 = pneg %p152
      %p241 = pneg %p149
      %s242 = smul.u32 32, %s19
      %p243 = scmp.lt.s32.totalorder %s242, 127
      %s244 = scalar_select %p243, %s242, 127
      %s245 = smul.addr %s244, 8
      %s246 = scalar_lea.vmem %s4, %s245
      %s247 = smul.u32 32, %s19
      %p248 = scmp.lt.s32.totalorder %s247, 127
      %s249 = scalar_select %p248, %s247, 127
      %s250 = smul.addr %s249, 4
      %s251 = scalar_lea.vmem %s0, %s250
      %s252 = smul.u32 32, %s19
      %s253 = smul.u32 4, %s20
      %p254 = scmp.lt.s32.totalorder %s253, 3
      %s255 = scalar_select %p254, %s253, 3
      %s256 = smul.addr %s255, 4
      %s257 = scalar_lea.vmem %s1, %s256
      %s258 = smul.u32 4, %s20
      %s259 = smul.u32 4, %s20
      %p260 = scmp.lt.s32.totalorder %s259, 3
      %s261 = scalar_select %p260, %s259, 3
      %s262 = scalar_lea.vmem %s2, %s261
      %s263 = smul.u32 4, %s20
      %s264 = smul.u32 32, %s19
      %p265 = scmp.lt.s32.totalorder %s264, 127
      %s266 = scalar_select %p265, %s264, 127
      %s267 = smul.addr %s266, 8
      %s268 = scalar_lea.vmem %s3, %s267
      %s269 = smul.u32 32, %s19
      %s270 = smul.u32 32, %s19
      %p271 = scmp.lt.s32.totalorder %s270, 127
      %s272 = scalar_select %p271, %s270, 127
      %s273 = smul.addr %s272, 8
      %s274 = scalar_lea.vmem %s4, %s273
      %s275 = smul.u32 32, %s19
      %p277 = scmp.eq.s32.totalorder %s20, 0
      // Predicated region
      $region37: #{cp_forward.4} parent=35 // pred_check
        %p278 = pneg %p277
      $region38: #{cp_forward.4} parent=35 // pred_check_branch
        %280 = sbr.rel (%p278) target = $region40
      $region39: #{cp_forward.4} parent=35 // pred_region
        %vm281 = vcmask 7168
        %282 = vst.msk [vmem:[#allocation2] sm:$0xff] %vm281, -inf
        %283 = vst.msk [vmem:[#allocation2 + $0x8] sm:$0xff] %vm281, -inf
        %284 = vst.msk [vmem:[#allocation2 + $0x10] sm:$0xff] %vm281, -inf
        %285 = vst.msk [vmem:[#allocation2 + $0x18] sm:$0xff] %vm281, -inf
        %286 = vst.msk [vmem:[#allocation2 + $0x20] sm:$0xff] %vm281, -inf
        %287 = vst.msk [vmem:[#allocation2 + $0x28] sm:$0xff] %vm281, -inf
        %288 = vst.msk [vmem:[#allocation2 + $0x30] sm:$0xff] %vm281, -inf
        %289 = vst.msk [vmem:[#allocation2 + $0x38] sm:$0xff] %vm281, -inf
        %290 = vst.msk [vmem:[#allocation2 + $0x40] sm:$0xff] %vm281, -inf
        %291 = vst.msk [vmem:[#allocation2 + $0x48] sm:$0xff] %vm281, -inf
        %292 = vst.msk [vmem:[#allocation2 + $0x50] sm:$0xff] %vm281, -inf
        %293 = vst.msk [vmem:[#allocation2 + $0x58] sm:$0xff] %vm281, -inf
        %294 = vst.msk [vmem:[#allocation2 + $0x60] sm:$0xff] %vm281, -inf
        %295 = vst.msk [vmem:[#allocation2 + $0x68] sm:$0xff] %vm281, -inf
        %296 = vst.msk [vmem:[#allocation2 + $0x70] sm:$0xff] %vm281, -inf
        %297 = vst.msk [vmem:[#allocation2 + $0x78] sm:$0xff] %vm281, -inf
        %298 = vst.msk [vmem:[#allocation2 + $0x80] sm:$0xff] %vm281, -inf
        %299 = vst.msk [vmem:[#allocation2 + $0x88] sm:$0xff] %vm281, -inf
        %300 = vst.msk [vmem:[#allocation2 + $0x90] sm:$0xff] %vm281, -inf
        %301 = vst.msk [vmem:[#allocation2 + $0x98] sm:$0xff] %vm281, -inf
        %302 = vst.msk [vmem:[#allocation2 + $0xa0] sm:$0xff] %vm281, -inf
        %303 = vst.msk [vmem:[#allocation2 + $0xa8] sm:$0xff] %vm281, -inf
        %304 = vst.msk [vmem:[#allocation2 + $0xb0] sm:$0xff] %vm281, -inf
        %305 = vst.msk [vmem:[#allocation2 + $0xb8] sm:$0xff] %vm281, -inf
        %306 = vst.msk [vmem:[#allocation2 + $0xc0] sm:$0xff] %vm281, -inf
        %307 = vst.msk [vmem:[#allocation2 + $0xc8] sm:$0xff] %vm281, -inf
        %308 = vst.msk [vmem:[#allocation2 + $0xd0] sm:$0xff] %vm281, -inf
        %309 = vst.msk [vmem:[#allocation2 + $0xd8] sm:$0xff] %vm281, -inf
        %310 = vst.msk [vmem:[#allocation2 + $0xe0] sm:$0xff] %vm281, -inf
        %311 = vst.msk [vmem:[#allocation2 + $0xe8] sm:$0xff] %vm281, -inf
        %312 = vst.msk [vmem:[#allocation2 + $0xf0] sm:$0xff] %vm281, -inf
        %313 = vst.msk [vmem:[#allocation2 + $0xf8] sm:$0xff] %vm281, -inf
        %314 = vst.msk [vmem:[#allocation3] sm:$0xff] %vm281, 0.0
        %315 = vst.msk [vmem:[#allocation3 + $0x8] sm:$0xff] %vm281, 0.0
        %316 = vst.msk [vmem:[#allocation3 + $0x10] sm:$0xff] %vm281, 0.0
        %317 = vst.msk [vmem:[#allocation3 + $0x18] sm:$0xff] %vm281, 0.0
        %318 = vst.msk [vmem:[#allocation3 + $0x20] sm:$0xff] %vm281, 0.0
        %319 = vst.msk [vmem:[#allocation3 + $0x28] sm:$0xff] %vm281, 0.0
        %320 = vst.msk [vmem:[#allocation3 + $0x30] sm:$0xff] %vm281, 0.0
        %321 = vst.msk [vmem:[#allocation3 + $0x38] sm:$0xff] %vm281, 0.0
        %322 = vst.msk [vmem:[#allocation3 + $0x40] sm:$0xff] %vm281, 0.0
        %323 = vst.msk [vmem:[#allocation3 + $0x48] sm:$0xff] %vm281, 0.0
        %324 = vst.msk [vmem:[#allocation3 + $0x50] sm:$0xff] %vm281, 0.0
        %325 = vst.msk [vmem:[#allocation3 + $0x58] sm:$0xff] %vm281, 0.0
        %326 = vst.msk [vmem:[#allocation3 + $0x60] sm:$0xff] %vm281, 0.0
        %327 = vst.msk [vmem:[#allocation3 + $0x68] sm:$0xff] %vm281, 0.0
        %328 = vst.msk [vmem:[#allocation3 + $0x70] sm:$0xff] %vm281, 0.0
        %329 = vst.msk [vmem:[#allocation3 + $0x78] sm:$0xff] %vm281, 0.0
        %330 = vst.msk [vmem:[#allocation3 + $0x80] sm:$0xff] %vm281, 0.0
        %331 = vst.msk [vmem:[#allocation3 + $0x88] sm:$0xff] %vm281, 0.0
        %332 = vst.msk [vmem:[#allocation3 + $0x90] sm:$0xff] %vm281, 0.0
        %333 = vst.msk [vmem:[#allocation3 + $0x98] sm:$0xff] %vm281, 0.0
        %334 = vst.msk [vmem:[#allocation3 + $0xa0] sm:$0xff] %vm281, 0.0
        %335 = vst.msk [vmem:[#allocation3 + $0xa8] sm:$0xff] %vm281, 0.0
        %336 = vst.msk [vmem:[#allocation3 + $0xb0] sm:$0xff] %vm281, 0.0
        %337 = vst.msk [vmem:[#allocation3 + $0xb8] sm:$0xff] %vm281, 0.0
        %338 = vst.msk [vmem:[#allocation3 + $0xc0] sm:$0xff] %vm281, 0.0
        %339 = vst.msk [vmem:[#allocation3 + $0xc8] sm:$0xff] %vm281, 0.0
        %340 = vst.msk [vmem:[#allocation3 + $0xd0] sm:$0xff] %vm281, 0.0
        %341 = vst.msk [vmem:[#allocation3 + $0xd8] sm:$0xff] %vm281, 0.0
        %342 = vst.msk [vmem:[#allocation3 + $0xe0] sm:$0xff] %vm281, 0.0
        %343 = vst.msk [vmem:[#allocation3 + $0xe8] sm:$0xff] %vm281, 0.0
        %344 = vst.msk [vmem:[#allocation3 + $0xf0] sm:$0xff] %vm281, 0.0
        %345 = vst.msk [vmem:[#allocation3 + $0xf8] sm:$0xff] %vm281, 0.0
        %346 = vst.msk [vmem:[#allocation4] sm:$0xff] %vm281, 0.0
        %347 = vst.msk [vmem:[#allocation4 + $0x8] sm:$0xff] %vm281, 0.0
        %348 = vst.msk [vmem:[#allocation4 + $0x10] sm:$0xff] %vm281, 0.0
        %349 = vst.msk [vmem:[#allocation4 + $0x18] sm:$0xff] %vm281, 0.0
        %350 = vst.msk [vmem:[#allocation4 + $0x20] sm:$0xff] %vm281, 0.0
        %351 = vst.msk [vmem:[#allocation4 + $0x28] sm:$0xff] %vm281, 0.0
        %352 = vst.msk [vmem:[#allocation4 + $0x30] sm:$0xff] %vm281, 0.0
        %353 = vst.msk [vmem:[#allocation4 + $0x38] sm:$0xff] %vm281, 0.0
        %354 = vst.msk [vmem:[#allocation4 + $0x40] sm:$0xff] %vm281, 0.0
        %355 = vst.msk [vmem:[#allocation4 + $0x48] sm:$0xff] %vm281, 0.0
        %356 = vst.msk [vmem:[#allocation4 + $0x50] sm:$0xff] %vm281, 0.0
        %357 = vst.msk [vmem:[#allocation4 + $0x58] sm:$0xff] %vm281, 0.0
        %358 = vst.msk [vmem:[#allocation4 + $0x60] sm:$0xff] %vm281, 0.0
        %359 = vst.msk [vmem:[#allocation4 + $0x68] sm:$0xff] %vm281, 0.0
        %360 = vst.msk [vmem:[#allocation4 + $0x70] sm:$0xff] %vm281, 0.0
        %361 = vst.msk [vmem:[#allocation4 + $0x78] sm:$0xff] %vm281, 0.0
        %362 = vst.msk [vmem:[#allocation4 + $0x80] sm:$0xff] %vm281, 0.0
        %363 = vst.msk [vmem:[#allocation4 + $0x88] sm:$0xff] %vm281, 0.0
        %364 = vst.msk [vmem:[#allocation4 + $0x90] sm:$0xff] %vm281, 0.0
        %365 = vst.msk [vmem:[#allocation4 + $0x98] sm:$0xff] %vm281, 0.0
        %366 = vst.msk [vmem:[#allocation4 + $0xa0] sm:$0xff] %vm281, 0.0
        %367 = vst.msk [vmem:[#allocation4 + $0xa8] sm:$0xff] %vm281, 0.0
        %368 = vst.msk [vmem:[#allocation4 + $0xb0] sm:$0xff] %vm281, 0.0
        %369 = vst.msk [vmem:[#allocation4 + $0xb8] sm:$0xff] %vm281, 0.0
        %370 = vst.msk [vmem:[#allocation4 + $0xc0] sm:$0xff] %vm281, 0.0
        %371 = vst.msk [vmem:[#allocation4 + $0xc8] sm:$0xff] %vm281, 0.0
        %372 = vst.msk [vmem:[#allocation4 + $0xd0] sm:$0xff] %vm281, 0.0
        %373 = vst.msk [vmem:[#allocation4 + $0xd8] sm:$0xff] %vm281, 0.0
        %374 = vst.msk [vmem:[#allocation4 + $0xe0] sm:$0xff] %vm281, 0.0
        %375 = vst.msk [vmem:[#allocation4 + $0xe8] sm:$0xff] %vm281, 0.0
        %376 = vst.msk [vmem:[#allocation4 + $0xf0] sm:$0xff] %vm281, 0.0
        %377 = vst.msk [vmem:[#allocation4 + $0xf8] sm:$0xff] %vm281, 0.0
      $region40: #{cp_forward.4} parent=35 // pred_fallthru
        _
      %v378 = vld [vmem:[%s251] sm:$0xf]
      %v379 = vld [vmem:[%s251 + $0x4] sm:$0xf]
      %v380 = vld [vmem:[%s251 + $0x8] sm:$0xf]
      %v381 = vld [vmem:[%s251 + $0xc] sm:$0xf]
      %v382 = vld [vmem:[%s251 + $0x10] sm:$0xf]
      %v383 = vld [vmem:[%s251 + $0x14] sm:$0xf]
      %v384 = vld [vmem:[%s251 + $0x18] sm:$0xf]
      %v385 = vld [vmem:[%s251 + $0x1c] sm:$0xf]
      %v386 = vld [vmem:[%s251 + $0x20] sm:$0xf]
      %v387 = vld [vmem:[%s251 + $0x24] sm:$0xf]
      %v388 = vld [vmem:[%s251 + $0x28] sm:$0xf]
      %v389 = vld [vmem:[%s251 + $0x2c] sm:$0xf]
      %v390 = vld [vmem:[%s251 + $0x30] sm:$0xf]
      %v391 = vld [vmem:[%s251 + $0x34] sm:$0xf]
      %v392 = vld [vmem:[%s251 + $0x38] sm:$0xf]
      %v393 = vld [vmem:[%s251 + $0x3c] sm:$0xf]
      %v394 = vld [vmem:[%s251 + $0x40] sm:$0xf]
      %v395 = vld [vmem:[%s251 + $0x44] sm:$0xf]
      %v396 = vld [vmem:[%s251 + $0x48] sm:$0xf]
      %v397 = vld [vmem:[%s251 + $0x4c] sm:$0xf]
      %v398 = vld [vmem:[%s251 + $0x50] sm:$0xf]
      %v399 = vld [vmem:[%s251 + $0x54] sm:$0xf]
      %v400 = vld [vmem:[%s251 + $0x58] sm:$0xf]
      %v401 = vld [vmem:[%s251 + $0x5c] sm:$0xf]
      %v402 = vld [vmem:[%s251 + $0x60] sm:$0xf]
      %v403 = vld [vmem:[%s251 + $0x64] sm:$0xf]
      %v404 = vld [vmem:[%s251 + $0x68] sm:$0xf]
      %v405 = vld [vmem:[%s251 + $0x6c] sm:$0xf]
      %v406 = vld [vmem:[%s251 + $0x70] sm:$0xf]
      %v407 = vld [vmem:[%s251 + $0x74] sm:$0xf]
      %v408 = vld [vmem:[%s251 + $0x78] sm:$0xf]
      %v409 = vld [vmem:[%s251 + $0x7c] sm:$0xf]
      %v410 = vld [vmem:[%s257] sm:$0xff]
      %v411 = vld [vmem:[%s257 + $0x8] sm:$0xff]
      %v412 = vld [vmem:[%s257 + $0x10] sm:$0xff]
      %v413 = vld [vmem:[%s257 + $0x18] sm:$0xff]
      %v414 = vld [vmem:[%s257 + $0x20] sm:$0xff]
      %v415 = vld [vmem:[%s257 + $0x28] sm:$0xff]
      %v416 = vld [vmem:[%s257 + $0x30] sm:$0xff]
      %v417 = vld [vmem:[%s257 + $0x38] sm:$0xff]
      %v418 = vld [vmem:[%s257 + $0x40] sm:$0xff]
      %v419 = vld [vmem:[%s257 + $0x48] sm:$0xff]
      %v420 = vld [vmem:[%s257 + $0x50] sm:$0xff]
      %v421 = vld [vmem:[%s257 + $0x58] sm:$0xff]
      %v422 = vld [vmem:[%s257 + $0x60] sm:$0xff]
      %v423 = vld [vmem:[%s257 + $0x68] sm:$0xff]
      %v424 = vld [vmem:[%s257 + $0x70] sm:$0xff]
      %v425 = vld [vmem:[%s257 + $0x78] sm:$0xff]
      %v426 = vld [vmem:[%s257 + $0x80] sm:$0xff]
      %v427 = vld [vmem:[%s257 + $0x88] sm:$0xff]
      %v428 = vld [vmem:[%s257 + $0x90] sm:$0xff]
      %v429 = vld [vmem:[%s257 + $0x98] sm:$0xff]
      %v430 = vld [vmem:[%s257 + $0xa0] sm:$0xff]
      %v431 = vld [vmem:[%s257 + $0xa8] sm:$0xff]
      %v432 = vld [vmem:[%s257 + $0xb0] sm:$0xff]
      %v433 = vld [vmem:[%s257 + $0xb8] sm:$0xff]
      %v434 = vld [vmem:[%s257 + $0xc0] sm:$0xff]
      %v435 = vld [vmem:[%s257 + $0xc8] sm:$0xff]
      %v436 = vld [vmem:[%s257 + $0xd0] sm:$0xff]
      %v437 = vld [vmem:[%s257 + $0xd8] sm:$0xff]
      %v438 = vld [vmem:[%s257 + $0xe0] sm:$0xff]
      %v439 = vld [vmem:[%s257 + $0xe8] sm:$0xff]
      %v440 = vld [vmem:[%s257 + $0xf0] sm:$0xff]
      %v441 = vld [vmem:[%s257 + $0xf8] sm:$0xff]
      %v442 = vld [vmem:[%s262] sm:$0xf]
      %v444 = vlaneseq
      %v445 = vshrl.u32 %v444, 7
      %v446 = vsub.s32 0, %v445
      %v447 = vrot.slane %v442, %v446
      %v448 = vlaneseq
      %v449 = vshrl.u32 %v448, 7
      %v450 = vsub.s32 1, %v449
      %v451 = vrot.slane %v442, %v450
      %v452 = vlaneseq
      %v453 = vshrl.u32 %v452, 7
      %v454 = vsub.s32 2, %v453
      %v455 = vrot.slane %v442, %v454
      %v456 = vlaneseq
      %v457 = vshrl.u32 %v456, 7
      %v458 = vsub.s32 3, %v457
      %v459 = vrot.slane %v442, %v458
      %v496 = vunpack.c.l.b16 %v378
      %v497 = vunpack.c.l.b16 %v379
      %v498 = vunpack.c.l.b16 %v380
      %v499 = vunpack.c.l.b16 %v381
      %v500 = vunpack.c.l.b16 %v382
      %v501 = vunpack.c.l.b16 %v383
      %v502 = vunpack.c.l.b16 %v384
      %v503 = vunpack.c.l.b16 %v385
      %v504 = vunpack.c.l.b16 %v386
      %v505 = vunpack.c.l.b16 %v387
      %v506 = vunpack.c.l.b16 %v388
      %v507 = vunpack.c.l.b16 %v389
      %v508 = vunpack.c.l.b16 %v390
      %v509 = vunpack.c.l.b16 %v391
      %v510 = vunpack.c.l.b16 %v392
      %v511 = vunpack.c.l.b16 %v393
      %v512 = vunpack.c.l.b16 %v394
      %v513 = vunpack.c.l.b16 %v395
      %v514 = vunpack.c.l.b16 %v396
      %v515 = vunpack.c.l.b16 %v397
      %v516 = vunpack.c.l.b16 %v398
      %v517 = vunpack.c.l.b16 %v399
      %v518 = vunpack.c.l.b16 %v400
      %v519 = vunpack.c.l.b16 %v401
      %v520 = vunpack.c.l.b16 %v402
      %v521 = vunpack.c.l.b16 %v403
      %v522 = vunpack.c.l.b16 %v404
      %v523 = vunpack.c.l.b16 %v405
      %v524 = vunpack.c.l.b16 %v406
      %v525 = vunpack.c.l.b16 %v407
      %v526 = vunpack.c.l.b16 %v408
      %v527 = vunpack.c.l.b16 %v409
      %v528 = vpack.c.b16 %v497, %v496
      %v529 = vpack.c.b16 %v499, %v498
      %v530 = vpack.c.b16 %v501, %v500
      %v531 = vpack.c.b16 %v503, %v502
      %v532 = vpack.c.b16 %v505, %v504
      %v533 = vpack.c.b16 %v507, %v506
      %v534 = vpack.c.b16 %v509, %v508
      %v535 = vpack.c.b16 %v511, %v510
      %v536 = vpack.c.b16 %v513, %v512
      %v537 = vpack.c.b16 %v515, %v514
      %v538 = vpack.c.b16 %v517, %v516
      %v539 = vpack.c.b16 %v519, %v518
      %v540 = vpack.c.b16 %v521, %v520
      %v541 = vpack.c.b16 %v523, %v522
      %v542 = vpack.c.b16 %v525, %v524
      %v543 = vpack.c.b16 %v527, %v526
      %v592 = vunpack.c.l.b16 %v410
      %v593 = vunpack.c.h.b16 %v410
      %v594 = vunpack.c.l.b16 %v411
      %v595 = vunpack.c.h.b16 %v411
      %v596 = vunpack.c.l.b16 %v412
      %v597 = vunpack.c.h.b16 %v412
      %v598 = vunpack.c.l.b16 %v413
      %v599 = vunpack.c.h.b16 %v413
      %v600 = vunpack.c.l.b16 %v414
      %v601 = vunpack.c.h.b16 %v414
      %v602 = vunpack.c.l.b16 %v415
      %v603 = vunpack.c.h.b16 %v415
      %v604 = vunpack.c.l.b16 %v416
      %v605 = vunpack.c.h.b16 %v416
      %v606 = vunpack.c.l.b16 %v417
      %v607 = vunpack.c.h.b16 %v417
      %v608 = vunpack.c.l.b16 %v418
      %v609 = vunpack.c.h.b16 %v418
      %v610 = vunpack.c.l.b16 %v419
      %v611 = vunpack.c.h.b16 %v419
      %v612 = vunpack.c.l.b16 %v420
      %v613 = vunpack.c.h.b16 %v420
      %v614 = vunpack.c.l.b16 %v421
      %v615 = vunpack.c.h.b16 %v421
      %v616 = vunpack.c.l.b16 %v422
      %v617 = vunpack.c.h.b16 %v422
      %v618 = vunpack.c.l.b16 %v423
      %v619 = vunpack.c.h.b16 %v423
      %v620 = vunpack.c.l.b16 %v424
      %v621 = vunpack.c.h.b16 %v424
      %v622 = vunpack.c.l.b16 %v425
      %v623 = vunpack.c.h.b16 %v425
      %v624 = vunpack.c.l.b16 %v426
      %v625 = vunpack.c.h.b16 %v426
      %v626 = vunpack.c.l.b16 %v427
      %v627 = vunpack.c.h.b16 %v427
      %v628 = vunpack.c.l.b16 %v428
      %v629 = vunpack.c.h.b16 %v428
      %v630 = vunpack.c.l.b16 %v429
      %v631 = vunpack.c.h.b16 %v429
      %v632 = vunpack.c.l.b16 %v430
      %v633 = vunpack.c.h.b16 %v430
      %v634 = vunpack.c.l.b16 %v431
      %v635 = vunpack.c.h.b16 %v431
      %v636 = vunpack.c.l.b16 %v432
      %v637 = vunpack.c.h.b16 %v432
      %v638 = vunpack.c.l.b16 %v433
      %v639 = vunpack.c.h.b16 %v433
      %v640 = vunpack.c.l.b16 %v434
      %v641 = vunpack.c.h.b16 %v434
      %v642 = vunpack.c.l.b16 %v435
      %v643 = vunpack.c.h.b16 %v435
      %v644 = vunpack.c.l.b16 %v436
      %v645 = vunpack.c.h.b16 %v436
      %v646 = vunpack.c.l.b16 %v437
      %v647 = vunpack.c.h.b16 %v437
      %v648 = vunpack.c.l.b16 %v438
      %v649 = vunpack.c.h.b16 %v438
      %v650 = vunpack.c.l.b16 %v439
      %v651 = vunpack.c.h.b16 %v439
      %v652 = vunpack.c.l.b16 %v440
      %v653 = vunpack.c.h.b16 %v440
      %v654 = vunpack.c.l.b16 %v441
      %v655 = vunpack.c.h.b16 %v441
      %v656 = vpack.c.b16 %v596, %v592
      %v657 = vpack.c.b16 %v597, %v593
      %v658 = vpack.c.b16 %v598, %v594
      %v659 = vpack.c.b16 %v599, %v595
      %v660 = vpack.c.b16 %v604, %v600
      %v661 = vpack.c.b16 %v605, %v601
      %v662 = vpack.c.b16 %v606, %v602
      %v663 = vpack.c.b16 %v607, %v603
      %v664 = vpack.c.b16 %v612, %v608
      %v665 = vpack.c.b16 %v613, %v609
      %v666 = vpack.c.b16 %v614, %v610
      %v667 = vpack.c.b16 %v615, %v611
      %v668 = vpack.c.b16 %v620, %v616
      %v669 = vpack.c.b16 %v621, %v617
      %v670 = vpack.c.b16 %v622, %v618
      %v671 = vpack.c.b16 %v623, %v619
      %v672 = vpack.c.b16 %v628, %v624
      %v673 = vpack.c.b16 %v629, %v625
      %v674 = vpack.c.b16 %v630, %v626
      %v675 = vpack.c.b16 %v631, %v627
      %v676 = vpack.c.b16 %v636, %v632
      %v677 = vpack.c.b16 %v637, %v633
      %v678 = vpack.c.b16 %v638, %v634
      %v679 = vpack.c.b16 %v639, %v635
      %v680 = vpack.c.b16 %v644, %v640
      %v681 = vpack.c.b16 %v645, %v641
      %v682 = vpack.c.b16 %v646, %v642
      %v683 = vpack.c.b16 %v647, %v643
      %v684 = vpack.c.b16 %v652, %v648
      %v685 = vpack.c.b16 %v653, %v649
      %v686 = vpack.c.b16 %v654, %v650
      %v687 = vpack.c.b16 %v655, %v651
      %720 = vmatprep.subr.bf16.mxu0 %v657
      %721 = vmatpush1.bf16.msra.mxu0 %v656
      %722 = vmatprep.subr.bf16.mxu0 %v661
      %723 = vmatpush1.bf16.msra.mxu0 %v660
      %724 = vmatprep.subr.bf16.mxu0 %v665
      %725 = vmatpush1.bf16.msra.mxu0 %v664
      %726 = vmatprep.subr.bf16.mxu0 %v669
      %727 = vmatpush1.bf16.msra.mxu0 %v668
      %728 = vmatprep.subr.bf16.mxu0 %v673
      %729 = vmatpush1.bf16.msra.mxu0 %v672
      %730 = vmatprep.subr.bf16.mxu0 %v677
      %731 = vmatpush1.bf16.msra.mxu0 %v676
      %732 = vmatprep.subr.bf16.mxu0 %v681
      %733 = vmatpush1.bf16.msra.mxu0 %v680
      %734 = vmatprep.subr.bf16.mxu0 %v685
      %735 = vmatpush1.bf16.msra.mxu0 %v684
      %736 = vmatprep.subr.bf16.mxu0 0
      %737 = vmatpush1.bf16.msra.mxu0 0
      %738 = vmatprep.subr.bf16.mxu0 0
      %739 = vmatpush1.bf16.msra.mxu0 0
      %740 = vmatprep.subr.bf16.mxu0 0
      %741 = vmatpush1.bf16.msra.mxu0 0
      %742 = vmatprep.subr.bf16.mxu0 0
      %743 = vmatpush1.bf16.msra.mxu0 0
      %744 = vmatprep.subr.bf16.mxu0 0
      %745 = vmatpush1.bf16.msra.mxu0 0
      %746 = vmatprep.subr.bf16.mxu0 0
      %747 = vmatpush1.bf16.msra.mxu0 0
      %748 = vmatprep.subr.bf16.mxu0 0
      %749 = vmatpush1.bf16.msra.mxu0 0
      %750 = vmatprep.subr.bf16.mxu0 0
      %751 = vmatpush1.bf16.msra.mxu0 0
      %752 = vmatprep.mubr.bf16.mxu0 0
      %753 = vmatmul.mubr.bf16.gmra.mrb[0].mxu0 %v528
      %v754 = vpop.f32.mrb[0].mxu0
      %v755 = vadd.f32 %v447, %v754
      %v756 = vpop.f32.mrb[0].mxu0
      %v757 = vadd.f32 %v451, %v756
      %v758 = vpop.f32.mrb[0].mxu0
      %v759 = vadd.f32 %v447, %v758
      %v760 = vpop.f32.mrb[0].mxu0
      %v761 = vadd.f32 %v451, %v760
      %762 = vmatprep.mubr.bf16.mxu0 0
      %763 = vmatmul.mubr.bf16.gmra.mrb[0].mxu0 %v529
      %v764 = vpop.f32.mrb[0].mxu0
      %v765 = vadd.f32 %v447, %v764
      %v766 = vpop.f32.mrb[0].mxu0
      %v767 = vadd.f32 %v451, %v766
      %v768 = vpop.f32.mrb[0].mxu0
      %v769 = vadd.f32 %v447, %v768
      %v770 = vpop.f32.mrb[0].mxu0
      %v771 = vadd.f32 %v451, %v770
      %772 = vmatprep.mubr.bf16.mxu0 0
      %773 = vmatmul.mubr.bf16.gmra.mrb[0].mxu0 %v530
      %v774 = vpop.f32.mrb[0].mxu0
      %v775 = vadd.f32 %v447, %v774
      %v776 = vpop.f32.mrb[0].mxu0
      %v777 = vadd.f32 %v451, %v776
      %v778 = vpop.f32.mrb[0].mxu0
      %v779 = vadd.f32 %v447, %v778
      %v780 = vpop.f32.mrb[0].mxu0
      %v781 = vadd.f32 %v451, %v780
      %782 = vmatprep.mubr.bf16.mxu0 0
      %783 = vmatmul.mubr.bf16.gmra.mrb[0].mxu0 %v531
      %v784 = vpop.f32.mrb[0].mxu0
      %v785 = vadd.f32 %v447, %v784
      %v786 = vpop.f32.mrb[0].mxu0
      %v787 = vadd.f32 %v451, %v786
      %v788 = vpop.f32.mrb[0].mxu0
      %v789 = vadd.f32 %v447, %v788
      %v790 = vpop.f32.mrb[0].mxu0
      %v791 = vadd.f32 %v451, %v790
      %792 = vmatprep.mubr.bf16.mxu0 0
      %793 = vmatmul.mubr.bf16.gmra.mrb[0].mxu0 %v532
      %v794 = vpop.f32.mrb[0].mxu0
      %v795 = vadd.f32 %v447, %v794
      %v796 = vpop.f32.mrb[0].mxu0
      %v797 = vadd.f32 %v451, %v796
      %v798 = vpop.f32.mrb[0].mxu0
      %v799 = vadd.f32 %v447, %v798
      %v800 = vpop.f32.mrb[0].mxu0
      %v801 = vadd.f32 %v451, %v800
      %802 = vmatprep.mubr.bf16.mxu0 0
      %803 = vmatmul.mubr.bf16.gmra.mrb[0].mxu0 %v533
      %v804 = vpop.f32.mrb[0].mxu0
      %v805 = vadd.f32 %v447, %v804
      %v806 = vpop.f32.mrb[0].mxu0
      %v807 = vadd.f32 %v451, %v806
      %v808 = vpop.f32.mrb[0].mxu0
      %v809 = vadd.f32 %v447, %v808
      %v810 = vpop.f32.mrb[0].mxu0
      %v811 = vadd.f32 %v451, %v810
      %812 = vmatprep.mubr.bf16.mxu0 0
      %813 = vmatmul.mubr.bf16.gmra.mrb[0].mxu0 %v534
      %v814 = vpop.f32.mrb[0].mxu0
      %v815 = vadd.f32 %v447, %v814
      %v816 = vpop.f32.mrb[0].mxu0
      %v817 = vadd.f32 %v451, %v816
      %v818 = vpop.f32.mrb[0].mxu0
      %v819 = vadd.f32 %v447, %v818
      %v820 = vpop.f32.mrb[0].mxu0
      %v821 = vadd.f32 %v451, %v820
      %822 = vmatprep.mubr.bf16.mxu0 0
      %823 = vmatmul.mubr.bf16.gmra.mrb[0].mxu0 %v535
      %v824 = vpop.f32.mrb[0].mxu0
      %v825 = vadd.f32 %v447, %v824
      %v826 = vpop.f32.mrb[0].mxu0
      %v827 = vadd.f32 %v451, %v826
      %v828 = vpop.f32.mrb[0].mxu0
      %v829 = vadd.f32 %v447, %v828
      %v830 = vpop.f32.mrb[0].mxu0
      %v831 = vadd.f32 %v451, %v830
      %832 = vmatprep.mubr.bf16.mxu0 0
      %833 = vmatmul.mubr.bf16.gmra.mrb[0].mxu0 %v536
      %v834 = vpop.f32.mrb[0].mxu0
      %v835 = vadd.f32 %v447, %v834
      %v836 = vpop.f32.mrb[0].mxu0
      %v837 = vadd.f32 %v451, %v836
      %v838 = vpop.f32.mrb[0].mxu0
      %v839 = vadd.f32 %v447, %v838
      %v840 = vpop.f32.mrb[0].mxu0
      %v841 = vadd.f32 %v451, %v840
      %842 = vmatprep.mubr.bf16.mxu0 0
      %843 = vmatmul.mubr.bf16.gmra.mrb[0].mxu0 %v537
      %v844 = vpop.f32.mrb[0].mxu0
      %v845 = vadd.f32 %v447, %v844
      %v846 = vpop.f32.mrb[0].mxu0
      %v847 = vadd.f32 %v451, %v846
      %v848 = vpop.f32.mrb[0].mxu0
      %v849 = vadd.f32 %v447, %v848
      %v850 = vpop.f32.mrb[0].mxu0
      %v851 = vadd.f32 %v451, %v850
      %852 = vmatprep.mubr.bf16.mxu0 0
      %853 = vmatmul.mubr.bf16.gmra.mrb[0].mxu0 %v538
      %v854 = vpop.f32.mrb[0].mxu0
      %v855 = vadd.f32 %v447, %v854
      %v856 = vpop.f32.mrb[0].mxu0
      %v857 = vadd.f32 %v451, %v856
      %v858 = vpop.f32.mrb[0].mxu0
      %v859 = vadd.f32 %v447, %v858
      %v860 = vpop.f32.mrb[0].mxu0
      %v861 = vadd.f32 %v451, %v860
      %862 = vmatprep.mubr.bf16.mxu0 0
      %863 = vmatmul.mubr.bf16.gmra.mrb[0].mxu0 %v539
      %v864 = vpop.f32.mrb[0].mxu0
      %v865 = vadd.f32 %v447, %v864
      %v866 = vpop.f32.mrb[0].mxu0
      %v867 = vadd.f32 %v451, %v866
      %v868 = vpop.f32.mrb[0].mxu0
      %v869 = vadd.f32 %v447, %v868
      %v870 = vpop.f32.mrb[0].mxu0
      %v871 = vadd.f32 %v451, %v870
      %872 = vmatprep.mubr.bf16.mxu0 0
      %873 = vmatmul.mubr.bf16.gmra.mrb[0].mxu0 %v540
      %v874 = vpop.f32.mrb[0].mxu0
      %v875 = vadd.f32 %v447, %v874
      %v876 = vpop.f32.mrb[0].mxu0
      %v877 = vadd.f32 %v451, %v876
      %v878 = vpop.f32.mrb[0].mxu0
      %v879 = vadd.f32 %v447, %v878
      %v880 = vpop.f32.mrb[0].mxu0
      %v881 = vadd.f32 %v451, %v880
      %882 = vmatprep.mubr.bf16.mxu0 0
      %883 = vmatmul.mubr.bf16.gmra.mrb[0].mxu0 %v541
      %v884 = vpop.f32.mrb[0].mxu0
      %v885 = vadd.f32 %v447, %v884
      %v886 = vpop.f32.mrb[0].mxu0
      %v887 = vadd.f32 %v451, %v886
      %v888 = vpop.f32.mrb[0].mxu0
      %v889 = vadd.f32 %v447, %v888
      %v890 = vpop.f32.mrb[0].mxu0
      %v891 = vadd.f32 %v451, %v890
      %892 = vmatprep.mubr.bf16.mxu0 0
      %893 = vmatmul.mubr.bf16.gmra.mrb[0].mxu0 %v542
      %v894 = vpop.f32.mrb[0].mxu0
      %v895 = vadd.f32 %v447, %v894
      %v896 = vpop.f32.mrb[0].mxu0
      %v897 = vadd.f32 %v451, %v896
      %v898 = vpop.f32.mrb[0].mxu0
      %v899 = vadd.f32 %v447, %v898
      %v900 = vpop.f32.mrb[0].mxu0
      %v901 = vadd.f32 %v451, %v900
      %902 = vmatprep.mubr.bf16.mxu0 0
      %903 = vmatmul.mubr.bf16.gmra.mrb[0].mxu0 %v543
      %v904 = vpop.f32.mrb[0].mxu0
      %v905 = vadd.f32 %v447, %v904
      %v906 = vpop.f32.mrb[0].mxu0
      %v907 = vadd.f32 %v451, %v906
      %v908 = vpop.f32.mrb[0].mxu0
      %v909 = vadd.f32 %v447, %v908
      %v910 = vpop.f32.mrb[0].mxu0
      %v911 = vadd.f32 %v451, %v910
      %912 = vdwg.mxu0
      %913 = vmatprep.subr.bf16.mxu0 %v659
      %914 = vmatpush1.bf16.msra.mxu0 %v658
      %915 = vmatprep.subr.bf16.mxu0 %v663
      %916 = vmatpush1.bf16.msra.mxu0 %v662
      %917 = vmatprep.subr.bf16.mxu0 %v667
      %918 = vmatpush1.bf16.msra.mxu0 %v666
      %919 = vmatprep.subr.bf16.mxu0 %v671
      %920 = vmatpush1.bf16.msra.mxu0 %v670
      %921 = vmatprep.subr.bf16.mxu0 %v675
      %922 = vmatpush1.bf16.msra.mxu0 %v674
      %923 = vmatprep.subr.bf16.mxu0 %v679
      %924 = vmatpush1.bf16.msra.mxu0 %v678
      %925 = vmatprep.subr.bf16.mxu0 %v683
      %926 = vmatpush1.bf16.msra.mxu0 %v682
      %927 = vmatprep.subr.bf16.mxu0 %v687
      %928 = vmatpush1.bf16.msra.mxu0 %v686
      %929 = vmatprep.subr.bf16.mxu0 0
      %930 = vmatpush1.bf16.msra.mxu0 0
      %931 = vmatprep.subr.bf16.mxu0 0
      %932 = vmatpush1.bf16.msra.mxu0 0
      %933 = vmatprep.subr.bf16.mxu0 0
      %934 = vmatpush1.bf16.msra.mxu0 0
      %935 = vmatprep.subr.bf16.mxu0 0
      %936 = vmatpush1.bf16.msra.mxu0 0
      %937 = vmatprep.subr.bf16.mxu0 0
      %938 = vmatpush1.bf16.msra.mxu0 0
      %939 = vmatprep.subr.bf16.mxu0 0
      %940 = vmatpush1.bf16.msra.mxu0 0
      %941 = vmatprep.subr.bf16.mxu0 0
      %942 = vmatpush1.bf16.msra.mxu0 0
      %943 = vmatprep.subr.bf16.mxu0 0
      %944 = vmatpush1.bf16.msra.mxu0 0
      %945 = vmatprep.mubr.bf16.mxu0 0
      %946 = vmatmul.mubr.bf16.gmra.mrb[0].mxu0 %v528
      %v947 = vpop.f32.mrb[0].mxu0
      %v948 = vadd.f32 %v455, %v947
      %v949 = vpop.f32.mrb[0].mxu0
      %v950 = vadd.f32 %v459, %v949
      %v951 = vpop.f32.mrb[0].mxu0
      %v952 = vadd.f32 %v455, %v951
      %v953 = vpop.f32.mrb[0].mxu0
      %v954 = vadd.f32 %v459, %v953
      %955 = vmatprep.mubr.bf16.mxu0 0
      %956 = vmatmul.mubr.bf16.gmra.mrb[0].mxu0 %v529
      %v957 = vpop.f32.mrb[0].mxu0
      %v958 = vadd.f32 %v455, %v957
      %v959 = vpop.f32.mrb[0].mxu0
      %v960 = vadd.f32 %v459, %v959
      %v961 = vpop.f32.mrb[0].mxu0
      %v962 = vadd.f32 %v455, %v961
      %v963 = vpop.f32.mrb[0].mxu0
      %v964 = vadd.f32 %v459, %v963
      %965 = vmatprep.mubr.bf16.mxu0 0
      %966 = vmatmul.mubr.bf16.gmra.mrb[0].mxu0 %v530
      %v967 = vpop.f32.mrb[0].mxu0
      %v968 = vadd.f32 %v455, %v967
      %v969 = vpop.f32.mrb[0].mxu0
      %v970 = vadd.f32 %v459, %v969
      %v971 = vpop.f32.mrb[0].mxu0
      %v972 = vadd.f32 %v455, %v971
      %v973 = vpop.f32.mrb[0].mxu0
      %v974 = vadd.f32 %v459, %v973
      %975 = vmatprep.mubr.bf16.mxu0 0
      %976 = vmatmul.mubr.bf16.gmra.mrb[0].mxu0 %v531
      %v977 = vpop.f32.mrb[0].mxu0
      %v978 = vadd.f32 %v455, %v977
      %v979 = vpop.f32.mrb[0].mxu0
      %v980 = vadd.f32 %v459, %v979
      %v981 = vpop.f32.mrb[0].mxu0
      %v982 = vadd.f32 %v455, %v981
      %v983 = vpop.f32.mrb[0].mxu0
      %v984 = vadd.f32 %v459, %v983
      %985 = vmatprep.mubr.bf16.mxu0 0
      %986 = vmatmul.mubr.bf16.gmra.mrb[0].mxu0 %v532
      %v987 = vpop.f32.mrb[0].mxu0
      %v988 = vadd.f32 %v455, %v987
      %v989 = vpop.f32.mrb[0].mxu0
      %v990 = vadd.f32 %v459, %v989
      %v991 = vpop.f32.mrb[0].mxu0
      %v992 = vadd.f32 %v455, %v991
      %v993 = vpop.f32.mrb[0].mxu0
      %v994 = vadd.f32 %v459, %v993
      %995 = vmatprep.mubr.bf16.mxu0 0
      %996 = vmatmul.mubr.bf16.gmra.mrb[0].mxu0 %v533
      %v997 = vpop.f32.mrb[0].mxu0
      %v998 = vadd.f32 %v455, %v997
      %v999 = vpop.f32.mrb[0].mxu0
      %v1000 = vadd.f32 %v459, %v999
      %v1001 = vpop.f32.mrb[0].mxu0
      %v1002 = vadd.f32 %v455, %v1001
      %v1003 = vpop.f32.mrb[0].mxu0
      %v1004 = vadd.f32 %v459, %v1003
      %1005 = vmatprep.mubr.bf16.mxu0 0
      %1006 = vmatmul.mubr.bf16.gmra.mrb[0].mxu0 %v534
      %v1007 = vpop.f32.mrb[0].mxu0
      %v1008 = vadd.f32 %v455, %v1007
      %v1009 = vpop.f32.mrb[0].mxu0
      %v1010 = vadd.f32 %v459, %v1009
      %v1011 = vpop.f32.mrb[0].mxu0
      %v1012 = vadd.f32 %v455, %v1011
      %v1013 = vpop.f32.mrb[0].mxu0
      %v1014 = vadd.f32 %v459, %v1013
      %1015 = vmatprep.mubr.bf16.mxu0 0
      %1016 = vmatmul.mubr.bf16.gmra.mrb[0].mxu0 %v535
      %v1017 = vpop.f32.mrb[0].mxu0
      %v1018 = vadd.f32 %v455, %v1017
      %v1019 = vpop.f32.mrb[0].mxu0
      %v1020 = vadd.f32 %v459, %v1019
      %v1021 = vpop.f32.mrb[0].mxu0
      %v1022 = vadd.f32 %v455, %v1021
      %v1023 = vpop.f32.mrb[0].mxu0
      %v1024 = vadd.f32 %v459, %v1023
      %1025 = vmatprep.mubr.bf16.mxu0 0
      %1026 = vmatmul.mubr.bf16.gmra.mrb[0].mxu0 %v536
      %v1027 = vpop.f32.mrb[0].mxu0
      %v1028 = vadd.f32 %v455, %v1027
      %v1029 = vpop.f32.mrb[0].mxu0
      %v1030 = vadd.f32 %v459, %v1029
      %v1031 = vpop.f32.mrb[0].mxu0
      %v1032 = vadd.f32 %v455, %v1031
      %v1033 = vpop.f32.mrb[0].mxu0
      %v1034 = vadd.f32 %v459, %v1033
      %1035 = vmatprep.mubr.bf16.mxu0 0
      %1036 = vmatmul.mubr.bf16.gmra.mrb[0].mxu0 %v537
      %v1037 = vpop.f32.mrb[0].mxu0
      %v1038 = vadd.f32 %v455, %v1037
      %v1039 = vpop.f32.mrb[0].mxu0
      %v1040 = vadd.f32 %v459, %v1039
      %v1041 = vpop.f32.mrb[0].mxu0
      %v1042 = vadd.f32 %v455, %v1041
      %v1043 = vpop.f32.mrb[0].mxu0
      %v1044 = vadd.f32 %v459, %v1043
      %1045 = vmatprep.mubr.bf16.mxu0 0
      %1046 = vmatmul.mubr.bf16.gmra.mrb[0].mxu0 %v538
      %v1047 = vpop.f32.mrb[0].mxu0
      %v1048 = vadd.f32 %v455, %v1047
      %v1049 = vpop.f32.mrb[0].mxu0
      %v1050 = vadd.f32 %v459, %v1049
      %v1051 = vpop.f32.mrb[0].mxu0
      %v1052 = vadd.f32 %v455, %v1051
      %v1053 = vpop.f32.mrb[0].mxu0
      %v1054 = vadd.f32 %v459, %v1053
      %1055 = vmatprep.mubr.bf16.mxu0 0
      %1056 = vmatmul.mubr.bf16.gmra.mrb[0].mxu0 %v539
      %v1057 = vpop.f32.mrb[0].mxu0
      %v1058 = vadd.f32 %v455, %v1057
      %v1059 = vpop.f32.mrb[0].mxu0
      %v1060 = vadd.f32 %v459, %v1059
      %v1061 = vpop.f32.mrb[0].mxu0
      %v1062 = vadd.f32 %v455, %v1061
      %v1063 = vpop.f32.mrb[0].mxu0
      %v1064 = vadd.f32 %v459, %v1063
      %1065 = vmatprep.mubr.bf16.mxu0 0
      %1066 = vmatmul.mubr.bf16.gmra.mrb[0].mxu0 %v540
      %v1067 = vpop.f32.mrb[0].mxu0
      %v1068 = vadd.f32 %v455, %v1067
      %v1069 = vpop.f32.mrb[0].mxu0
      %v1070 = vadd.f32 %v459, %v1069
      %v1071 = vpop.f32.mrb[0].mxu0
      %v1072 = vadd.f32 %v455, %v1071
      %v1073 = vpop.f32.mrb[0].mxu0
      %v1074 = vadd.f32 %v459, %v1073
      %1075 = vmatprep.mubr.bf16.mxu0 0
      %1076 = vmatmul.mubr.bf16.gmra.mrb[0].mxu0 %v541
      %v1077 = vpop.f32.mrb[0].mxu0
      %v1078 = vadd.f32 %v455, %v1077
      %v1079 = vpop.f32.mrb[0].mxu0
      %v1080 = vadd.f32 %v459, %v1079
      %v1081 = vpop.f32.mrb[0].mxu0
      %v1082 = vadd.f32 %v455, %v1081
      %v1083 = vpop.f32.mrb[0].mxu0
      %v1084 = vadd.f32 %v459, %v1083
      %1085 = vmatprep.mubr.bf16.mxu0 0
      %1086 = vmatmul.mubr.bf16.gmra.mrb[0].mxu0 %v542
      %v1087 = vpop.f32.mrb[0].mxu0
      %v1088 = vadd.f32 %v455, %v1087
      %v1089 = vpop.f32.mrb[0].mxu0
      %v1090 = vadd.f32 %v459, %v1089
      %v1091 = vpop.f32.mrb[0].mxu0
      %v1092 = vadd.f32 %v455, %v1091
      %v1093 = vpop.f32.mrb[0].mxu0
      %v1094 = vadd.f32 %v459, %v1093
      %1095 = vmatprep.mubr.bf16.mxu0 0
      %1096 = vmatmul.mubr.bf16.gmra.mrb[0].mxu0 %v543
      %v1097 = vpop.f32.mrb[0].mxu0
      %v1098 = vadd.f32 %v455, %v1097
      %v1099 = vpop.f32.mrb[0].mxu0
      %v1100 = vadd.f32 %v459, %v1099
      %v1101 = vpop.f32.mrb[0].mxu0
      %v1102 = vadd.f32 %v455, %v1101
      %v1103 = vpop.f32.mrb[0].mxu0
      %v1104 = vadd.f32 %v459, %v1103
      %1105 = vdwg.mxu0
      %v1106 = vld [vmem:[%s268] sm:$0xff]
      %v1107 = vld [vmem:[%s268 + $0x8] sm:$0xff]
      %v1108 = vld [vmem:[%s268 + $0x10] sm:$0xff]
      %v1109 = vld [vmem:[%s268 + $0x18] sm:$0xff]
      %v1110 = vld [vmem:[%s268 + $0x20] sm:$0xff]
      %v1111 = vld [vmem:[%s268 + $0x28] sm:$0xff]
      %v1112 = vld [vmem:[%s268 + $0x30] sm:$0xff]
      %v1113 = vld [vmem:[%s268 + $0x38] sm:$0xff]
      %v1114 = vld [vmem:[%s268 + $0x40] sm:$0xff]
      %v1115 = vld [vmem:[%s268 + $0x48] sm:$0xff]
      %v1116 = vld [vmem:[%s268 + $0x50] sm:$0xff]
      %v1117 = vld [vmem:[%s268 + $0x58] sm:$0xff]
      %v1118 = vld [vmem:[%s268 + $0x60] sm:$0xff]
      %v1119 = vld [vmem:[%s268 + $0x68] sm:$0xff]
      %v1120 = vld [vmem:[%s268 + $0x70] sm:$0xff]
      %v1121 = vld [vmem:[%s268 + $0x78] sm:$0xff]
      %v1122 = vld [vmem:[%s268 + $0x80] sm:$0xff]
      %v1123 = vld [vmem:[%s268 + $0x88] sm:$0xff]
      %v1124 = vld [vmem:[%s268 + $0x90] sm:$0xff]
      %v1125 = vld [vmem:[%s268 + $0x98] sm:$0xff]
      %v1126 = vld [vmem:[%s268 + $0xa0] sm:$0xff]
      %v1127 = vld [vmem:[%s268 + $0xa8] sm:$0xff]
      %v1128 = vld [vmem:[%s268 + $0xb0] sm:$0xff]
      %v1129 = vld [vmem:[%s268 + $0xb8] sm:$0xff]
      %v1130 = vld [vmem:[%s268 + $0xc0] sm:$0xff]
      %v1131 = vld [vmem:[%s268 + $0xc8] sm:$0xff]
      %v1132 = vld [vmem:[%s268 + $0xd0] sm:$0xff]
      %v1133 = vld [vmem:[%s268 + $0xd8] sm:$0xff]
      %v1134 = vld [vmem:[%s268 + $0xe0] sm:$0xff]
      %v1135 = vld [vmem:[%s268 + $0xe8] sm:$0xff]
      %v1136 = vld [vmem:[%s268 + $0xf0] sm:$0xff]
      %v1137 = vld [vmem:[%s268 + $0xf8] sm:$0xff]
      %s1138 = smul.u32 %s20, 512
      %v1139 = vlaneseq
      %v1140 = vand.u32 %v1139, 127
      %v1141 = vadd.s32 %v1140, 128
      %v1142 = vadd.s32 %v1140, 256
      %v1143 = vadd.s32 %v1140, 384
      %v1144 = vstv %s1138
      %v1145 = vadd.s32 %v1144, %v1140
      %v1146 = vadd.s32 %v1144, %v1141
      %v1147 = vadd.s32 %v1144, %v1142
      %v1148 = vadd.s32 %v1144, %v1143
      %v1149 = vld [vmem:[#allocation4] sm:$0xff]
      %v1150 = vld [vmem:[#allocation4 + $0x8] sm:$0xff]
      %v1151 = vld [vmem:[#allocation4 + $0x10] sm:$0xff]
      %v1152 = vld [vmem:[#allocation4 + $0x18] sm:$0xff]
      %v1153 = vld [vmem:[#allocation4 + $0x20] sm:$0xff]
      %v1154 = vld [vmem:[#allocation4 + $0x28] sm:$0xff]
      %v1155 = vld [vmem:[#allocation4 + $0x30] sm:$0xff]
      %v1156 = vld [vmem:[#allocation4 + $0x38] sm:$0xff]
      %v1157 = vld [vmem:[#allocation4 + $0x40] sm:$0xff]
      %v1158 = vld [vmem:[#allocation4 + $0x48] sm:$0xff]
      %v1159 = vld [vmem:[#allocation4 + $0x50] sm:$0xff]
      %v1160 = vld [vmem:[#allocation4 + $0x58] sm:$0xff]
      %v1161 = vld [vmem:[#allocation4 + $0x60] sm:$0xff]
      %v1162 = vld [vmem:[#allocation4 + $0x68] sm:$0xff]
      %v1163 = vld [vmem:[#allocation4 + $0x70] sm:$0xff]
      %v1164 = vld [vmem:[#allocation4 + $0x78] sm:$0xff]
      %v1165 = vld [vmem:[#allocation4 + $0x80] sm:$0xff]
      %v1166 = vld [vmem:[#allocation4 + $0x88] sm:$0xff]
      %v1167 = vld [vmem:[#allocation4 + $0x90] sm:$0xff]
      %v1168 = vld [vmem:[#allocation4 + $0x98] sm:$0xff]
      %v1169 = vld [vmem:[#allocation4 + $0xa0] sm:$0xff]
      %v1170 = vld [vmem:[#allocation4 + $0xa8] sm:$0xff]
      %v1171 = vld [vmem:[#allocation4 + $0xb0] sm:$0xff]
      %v1172 = vld [vmem:[#allocation4 + $0xb8] sm:$0xff]
      %v1173 = vld [vmem:[#allocation4 + $0xc0] sm:$0xff]
      %v1174 = vld [vmem:[#allocation4 + $0xc8] sm:$0xff]
      %v1175 = vld [vmem:[#allocation4 + $0xd0] sm:$0xff]
      %v1176 = vld [vmem:[#allocation4 + $0xd8] sm:$0xff]
      %v1177 = vld [vmem:[#allocation4 + $0xe0] sm:$0xff]
      %v1178 = vld [vmem:[#allocation4 + $0xe8] sm:$0xff]
      %v1179 = vld [vmem:[#allocation4 + $0xf0] sm:$0xff]
      %v1180 = vld [vmem:[#allocation4 + $0xf8] sm:$0xff]
      %1181 = vset.pattern.permute.xlu0 0
      %1182 = vperm.xlu0 %1181, %v1106
      %v1183 = vpop.permute.xlu0 %1182
      %1184 = vset.pattern.permute.xlu0 0
      %1185 = vperm.xlu0 %1184, %v1107
      %v1186 = vpop.permute.xlu0 %1185
      %1187 = vset.pattern.permute.xlu0 0
      %1188 = vperm.xlu0 %1187, %v1108
      %v1189 = vpop.permute.xlu0 %1188
      %1190 = vset.pattern.permute.xlu0 0
      %1191 = vperm.xlu0 %1190, %v1109
      %v1192 = vpop.permute.xlu0 %1191
      %1193 = vset.pattern.permute.xlu0 0
      %1194 = vperm.xlu0 %1193, %v1110
      %v1195 = vpop.permute.xlu0 %1194
      %1196 = vset.pattern.permute.xlu0 0
      %1197 = vperm.xlu0 %1196, %v1111
      %v1198 = vpop.permute.xlu0 %1197
      %1199 = vset.pattern.permute.xlu0 0
      %1200 = vperm.xlu0 %1199, %v1112
      %v1201 = vpop.permute.xlu0 %1200
      %1202 = vset.pattern.permute.xlu0 0
      %1203 = vperm.xlu0 %1202, %v1113
      %v1204 = vpop.permute.xlu0 %1203
      %1205 = vset.pattern.permute.xlu0 0
      %1206 = vperm.xlu0 %1205, %v1114
      %v1207 = vpop.permute.xlu0 %1206
      %1208 = vset.pattern.permute.xlu0 0
      %1209 = vperm.xlu0 %1208, %v1115
      %v1210 = vpop.permute.xlu0 %1209
      %1211 = vset.pattern.permute.xlu0 0
      %1212 = vperm.xlu0 %1211, %v1116
      %v1213 = vpop.permute.xlu0 %1212
      %1214 = vset.pattern.permute.xlu0 0
      %1215 = vperm.xlu0 %1214, %v1117
      %v1216 = vpop.permute.xlu0 %1215
      %1217 = vset.pattern.permute.xlu0 0
      %1218 = vperm.xlu0 %1217, %v1118
      %v1219 = vpop.permute.xlu0 %1218
      %1220 = vset.pattern.permute.xlu0 0
      %1221 = vperm.xlu0 %1220, %v1119
      %v1222 = vpop.permute.xlu0 %1221
      %1223 = vset.pattern.permute.xlu0 0
      %1224 = vperm.xlu0 %1223, %v1120
      %v1225 = vpop.permute.xlu0 %1224
      %1226 = vset.pattern.permute.xlu0 0
      %1227 = vperm.xlu0 %1226, %v1121
      %v1228 = vpop.permute.xlu0 %1227
      %1229 = vset.pattern.permute.xlu0 0
      %1230 = vperm.xlu0 %1229, %v1122
      %v1231 = vpop.permute.xlu0 %1230
      %1232 = vset.pattern.permute.xlu0 0
      %1233 = vperm.xlu0 %1232, %v1123
      %v1234 = vpop.permute.xlu0 %1233
      %1235 = vset.pattern.permute.xlu0 0
      %1236 = vperm.xlu0 %1235, %v1124
      %v1237 = vpop.permute.xlu0 %1236
      %1238 = vset.pattern.permute.xlu0 0
      %1239 = vperm.xlu0 %1238, %v1125
      %v1240 = vpop.permute.xlu0 %1239
      %1241 = vset.pattern.permute.xlu0 0
      %1242 = vperm.xlu0 %1241, %v1126
      %v1243 = vpop.permute.xlu0 %1242
      %1244 = vset.pattern.permute.xlu0 0
      %1245 = vperm.xlu0 %1244, %v1127
      %v1246 = vpop.permute.xlu0 %1245
      %1247 = vset.pattern.permute.xlu0 0
      %1248 = vperm.xlu0 %1247, %v1128
      %v1249 = vpop.permute.xlu0 %1248
      %1250 = vset.pattern.permute.xlu0 0
      %1251 = vperm.xlu0 %1250, %v1129
      %v1252 = vpop.permute.xlu0 %1251
      %1253 = vset.pattern.permute.xlu0 0
      %1254 = vperm.xlu0 %1253, %v1130
      %v1255 = vpop.permute.xlu0 %1254
      %1256 = vset.pattern.permute.xlu0 0
      %1257 = vperm.xlu0 %1256, %v1131
      %v1258 = vpop.permute.xlu0 %1257
      %1259 = vset.pattern.permute.xlu0 0
      %1260 = vperm.xlu0 %1259, %v1132
      %v1261 = vpop.permute.xlu0 %1260
      %1262 = vset.pattern.permute.xlu0 0
      %1263 = vperm.xlu0 %1262, %v1133
      %v1264 = vpop.permute.xlu0 %1263
      %1265 = vset.pattern.permute.xlu0 0
      %1266 = vperm.xlu0 %1265, %v1134
      %v1267 = vpop.permute.xlu0 %1266
      %1268 = vset.pattern.permute.xlu0 0
      %1269 = vperm.xlu0 %1268, %v1135
      %v1270 = vpop.permute.xlu0 %1269
      %1271 = vset.pattern.permute.xlu0 0
      %1272 = vperm.xlu0 %1271, %v1136
      %v1273 = vpop.permute.xlu0 %1272
      %1274 = vset.pattern.permute.xlu0 0
      %1275 = vperm.xlu0 %1274, %v1137
      %v1276 = vpop.permute.xlu0 %1275
      %vm1277 = vcmp.eq.s32.totalorder %v1145, %v1183
      %vm1278 = vcmp.eq.s32.totalorder %v1146, %v1183
      %vm1279 = vcmp.eq.s32.totalorder %v1147, %v1183
      %vm1280 = vcmp.eq.s32.totalorder %v1148, %v1183
      %vm1281 = vcmp.eq.s32.totalorder %v1145, %v1186
      %vm1282 = vcmp.eq.s32.totalorder %v1146, %v1186
      %vm1283 = vcmp.eq.s32.totalorder %v1147, %v1186
      %vm1284 = vcmp.eq.s32.totalorder %v1148, %v1186
      %vm1285 = vcmp.eq.s32.totalorder %v1145, %v1189
      %vm1286 = vcmp.eq.s32.totalorder %v1146, %v1189
      %vm1287 = vcmp.eq.s32.totalorder %v1147, %v1189
      %vm1288 = vcmp.eq.s32.totalorder %v1148, %v1189
      %vm1289 = vcmp.eq.s32.totalorder %v1145, %v1192
      %vm1290 = vcmp.eq.s32.totalorder %v1146, %v1192
      %vm1291 = vcmp.eq.s32.totalorder %v1147, %v1192
      %vm1292 = vcmp.eq.s32.totalorder %v1148, %v1192
      %vm1293 = vcmp.eq.s32.totalorder %v1145, %v1195
      %vm1294 = vcmp.eq.s32.totalorder %v1146, %v1195
      %vm1295 = vcmp.eq.s32.totalorder %v1147, %v1195
      %vm1296 = vcmp.eq.s32.totalorder %v1148, %v1195
      %vm1297 = vcmp.eq.s32.totalorder %v1145, %v1198
      %vm1298 = vcmp.eq.s32.totalorder %v1146, %v1198
      %vm1299 = vcmp.eq.s32.totalorder %v1147, %v1198
      %vm1300 = vcmp.eq.s32.totalorder %v1148, %v1198
      %vm1301 = vcmp.eq.s32.totalorder %v1145, %v1201
      %vm1302 = vcmp.eq.s32.totalorder %v1146, %v1201
      %vm1303 = vcmp.eq.s32.totalorder %v1147, %v1201
      %vm1304 = vcmp.eq.s32.totalorder %v1148, %v1201
      %vm1305 = vcmp.eq.s32.totalorder %v1145, %v1204
      %vm1306 = vcmp.eq.s32.totalorder %v1146, %v1204
      %vm1307 = vcmp.eq.s32.totalorder %v1147, %v1204
      %vm1308 = vcmp.eq.s32.totalorder %v1148, %v1204
      %vm1309 = vcmp.eq.s32.totalorder %v1145, %v1207
      %vm1310 = vcmp.eq.s32.totalorder %v1146, %v1207
      %vm1311 = vcmp.eq.s32.totalorder %v1147, %v1207
      %vm1312 = vcmp.eq.s32.totalorder %v1148, %v1207
      %vm1313 = vcmp.eq.s32.totalorder %v1145, %v1210
      %vm1314 = vcmp.eq.s32.totalorder %v1146, %v1210
      %vm1315 = vcmp.eq.s32.totalorder %v1147, %v1210
      %vm1316 = vcmp.eq.s32.totalorder %v1148, %v1210
      %vm1317 = vcmp.eq.s32.totalorder %v1145, %v1213
      %vm1318 = vcmp.eq.s32.totalorder %v1146, %v1213
      %vm1319 = vcmp.eq.s32.totalorder %v1147, %v1213
      %vm1320 = vcmp.eq.s32.totalorder %v1148, %v1213
      %vm1321 = vcmp.eq.s32.totalorder %v1145, %v1216
      %vm1322 = vcmp.eq.s32.totalorder %v1146, %v1216
      %vm1323 = vcmp.eq.s32.totalorder %v1147, %v1216
      %vm1324 = vcmp.eq.s32.totalorder %v1148, %v1216
      %vm1325 = vcmp.eq.s32.totalorder %v1145, %v1219
      %vm1326 = vcmp.eq.s32.totalorder %v1146, %v1219
      %vm1327 = vcmp.eq.s32.totalorder %v1147, %v1219
      %vm1328 = vcmp.eq.s32.totalorder %v1148, %v1219
      %vm1329 = vcmp.eq.s32.totalorder %v1145, %v1222
      %vm1330 = vcmp.eq.s32.totalorder %v1146, %v1222
      %vm1331 = vcmp.eq.s32.totalorder %v1147, %v1222
      %vm1332 = vcmp.eq.s32.totalorder %v1148, %v1222
      %vm1333 = vcmp.eq.s32.totalorder %v1145, %v1225
      %vm1334 = vcmp.eq.s32.totalorder %v1146, %v1225
      %vm1335 = vcmp.eq.s32.totalorder %v1147, %v1225
      %vm1336 = vcmp.eq.s32.totalorder %v1148, %v1225
      %vm1337 = vcmp.eq.s32.totalorder %v1145, %v1228
      %vm1338 = vcmp.eq.s32.totalorder %v1146, %v1228
      %vm1339 = vcmp.eq.s32.totalorder %v1147, %v1228
      %vm1340 = vcmp.eq.s32.totalorder %v1148, %v1228
      %vm1341 = vcmp.eq.s32.totalorder %v1145, %v1231
      %vm1342 = vcmp.eq.s32.totalorder %v1146, %v1231
      %vm1343 = vcmp.eq.s32.totalorder %v1147, %v1231
      %vm1344 = vcmp.eq.s32.totalorder %v1148, %v1231
      %vm1345 = vcmp.eq.s32.totalorder %v1145, %v1234
      %vm1346 = vcmp.eq.s32.totalorder %v1146, %v1234
      %vm1347 = vcmp.eq.s32.totalorder %v1147, %v1234
      %vm1348 = vcmp.eq.s32.totalorder %v1148, %v1234
      %vm1349 = vcmp.eq.s32.totalorder %v1145, %v1237
      %vm1350 = vcmp.eq.s32.totalorder %v1146, %v1237
      %vm1351 = vcmp.eq.s32.totalorder %v1147, %v1237
      %vm1352 = vcmp.eq.s32.totalorder %v1148, %v1237
      %vm1353 = vcmp.eq.s32.totalorder %v1145, %v1240
      %vm1354 = vcmp.eq.s32.totalorder %v1146, %v1240
      %vm1355 = vcmp.eq.s32.totalorder %v1147, %v1240
      %vm1356 = vcmp.eq.s32.totalorder %v1148, %v1240
      %vm1357 = vcmp.eq.s32.totalorder %v1145, %v1243
      %vm1358 = vcmp.eq.s32.totalorder %v1146, %v1243
      %vm1359 = vcmp.eq.s32.totalorder %v1147, %v1243
      %vm1360 = vcmp.eq.s32.totalorder %v1148, %v1243
      %vm1361 = vcmp.eq.s32.totalorder %v1145, %v1246
      %vm1362 = vcmp.eq.s32.totalorder %v1146, %v1246
      %vm1363 = vcmp.eq.s32.totalorder %v1147, %v1246
      %vm1364 = vcmp.eq.s32.totalorder %v1148, %v1246
      %vm1365 = vcmp.eq.s32.totalorder %v1145, %v1249
      %vm1366 = vcmp.eq.s32.totalorder %v1146, %v1249
      %vm1367 = vcmp.eq.s32.totalorder %v1147, %v1249
      %vm1368 = vcmp.eq.s32.totalorder %v1148, %v1249
      %vm1369 = vcmp.eq.s32.totalorder %v1145, %v1252
      %vm1370 = vcmp.eq.s32.totalorder %v1146, %v1252
      %vm1371 = vcmp.eq.s32.totalorder %v1147, %v1252
      %vm1372 = vcmp.eq.s32.totalorder %v1148, %v1252
      %vm1373 = vcmp.eq.s32.totalorder %v1145, %v1255
      %vm1374 = vcmp.eq.s32.totalorder %v1146, %v1255
      %vm1375 = vcmp.eq.s32.totalorder %v1147, %v1255
      %vm1376 = vcmp.eq.s32.totalorder %v1148, %v1255
      %vm1377 = vcmp.eq.s32.totalorder %v1145, %v1258
      %vm1378 = vcmp.eq.s32.totalorder %v1146, %v1258
      %vm1379 = vcmp.eq.s32.totalorder %v1147, %v1258
      %vm1380 = vcmp.eq.s32.totalorder %v1148, %v1258
      %vm1381 = vcmp.eq.s32.totalorder %v1145, %v1261
      %vm1382 = vcmp.eq.s32.totalorder %v1146, %v1261
      %vm1383 = vcmp.eq.s32.totalorder %v1147, %v1261
      %vm1384 = vcmp.eq.s32.totalorder %v1148, %v1261
      %vm1385 = vcmp.eq.s32.totalorder %v1145, %v1264
      %vm1386 = vcmp.eq.s32.totalorder %v1146, %v1264
      %vm1387 = vcmp.eq.s32.totalorder %v1147, %v1264
      %vm1388 = vcmp.eq.s32.totalorder %v1148, %v1264
      %vm1389 = vcmp.eq.s32.totalorder %v1145, %v1267
      %vm1390 = vcmp.eq.s32.totalorder %v1146, %v1267
      %vm1391 = vcmp.eq.s32.totalorder %v1147, %v1267
      %vm1392 = vcmp.eq.s32.totalorder %v1148, %v1267
      %vm1393 = vcmp.eq.s32.totalorder %v1145, %v1270
      %vm1394 = vcmp.eq.s32.totalorder %v1146, %v1270
      %vm1395 = vcmp.eq.s32.totalorder %v1147, %v1270
      %vm1396 = vcmp.eq.s32.totalorder %v1148, %v1270
      %vm1397 = vcmp.eq.s32.totalorder %v1145, %v1273
      %vm1398 = vcmp.eq.s32.totalorder %v1146, %v1273
      %vm1399 = vcmp.eq.s32.totalorder %v1147, %v1273
      %vm1400 = vcmp.eq.s32.totalorder %v1148, %v1273
      %vm1401 = vcmp.eq.s32.totalorder %v1145, %v1276
      %vm1402 = vcmp.eq.s32.totalorder %v1146, %v1276
      %vm1403 = vcmp.eq.s32.totalorder %v1147, %v1276
      %vm1404 = vcmp.eq.s32.totalorder %v1148, %v1276
      %v1405 = vsel %vm1277, %v755, 0.0
      %v1406 = vsel %vm1278, %v757, 0.0
      %v1407 = vsel %vm1279, %v948, 0.0
      %v1408 = vsel %vm1280, %v950, 0.0
      %v1409 = vsel %vm1281, %v759, 0.0
      %v1410 = vsel %vm1282, %v761, 0.0
      %v1411 = vsel %vm1283, %v952, 0.0
      %v1412 = vsel %vm1284, %v954, 0.0
      %v1413 = vsel %vm1285, %v765, 0.0
      %v1414 = vsel %vm1286, %v767, 0.0
      %v1415 = vsel %vm1287, %v958, 0.0
      %v1416 = vsel %vm1288, %v960, 0.0
      %v1417 = vsel %vm1289, %v769, 0.0
      %v1418 = vsel %vm1290, %v771, 0.0
      %v1419 = vsel %vm1291, %v962, 0.0
      %v1420 = vsel %vm1292, %v964, 0.0
      %v1421 = vsel %vm1293, %v775, 0.0
      %v1422 = vsel %vm1294, %v777, 0.0
      %v1423 = vsel %vm1295, %v968, 0.0
      %v1424 = vsel %vm1296, %v970, 0.0
      %v1425 = vsel %vm1297, %v779, 0.0
      %v1426 = vsel %vm1298, %v781, 0.0
      %v1427 = vsel %vm1299, %v972, 0.0
      %v1428 = vsel %vm1300, %v974, 0.0
      %v1429 = vsel %vm1301, %v785, 0.0
      %v1430 = vsel %vm1302, %v787, 0.0
      %v1431 = vsel %vm1303, %v978, 0.0
      %v1432 = vsel %vm1304, %v980, 0.0
      %v1433 = vsel %vm1305, %v789, 0.0
      %v1434 = vsel %vm1306, %v791, 0.0
      %v1435 = vsel %vm1307, %v982, 0.0
      %v1436 = vsel %vm1308, %v984, 0.0
      %v1437 = vsel %vm1309, %v795, 0.0
      %v1438 = vsel %vm1310, %v797, 0.0
      %v1439 = vsel %vm1311, %v988, 0.0
      %v1440 = vsel %vm1312, %v990, 0.0
      %v1441 = vsel %vm1313, %v799, 0.0
      %v1442 = vsel %vm1314, %v801, 0.0
      %v1443 = vsel %vm1315, %v992, 0.0
      %v1444 = vsel %vm1316, %v994, 0.0
      %v1445 = vsel %vm1317, %v805, 0.0
      %v1446 = vsel %vm1318, %v807, 0.0
      %v1447 = vsel %vm1319, %v998, 0.0
      %v1448 = vsel %vm1320, %v1000, 0.0
      %v1449 = vsel %vm1321, %v809, 0.0
      %v1450 = vsel %vm1322, %v811, 0.0
      %v1451 = vsel %vm1323, %v1002, 0.0
      %v1452 = vsel %vm1324, %v1004, 0.0
      %v1453 = vsel %vm1325, %v815, 0.0
      %v1454 = vsel %vm1326, %v817, 0.0
      %v1455 = vsel %vm1327, %v1008, 0.0
      %v1456 = vsel %vm1328, %v1010, 0.0
      %v1457 = vsel %vm1329, %v819, 0.0
      %v1458 = vsel %vm1330, %v821, 0.0
      %v1459 = vsel %vm1331, %v1012, 0.0
      %v1460 = vsel %vm1332, %v1014, 0.0
      %v1461 = vsel %vm1333, %v825, 0.0
      %v1462 = vsel %vm1334, %v827, 0.0
      %v1463 = vsel %vm1335, %v1018, 0.0
      %v1464 = vsel %vm1336, %v1020, 0.0
      %v1465 = vsel %vm1337, %v829, 0.0
      %v1466 = vsel %vm1338, %v831, 0.0
      %v1467 = vsel %vm1339, %v1022, 0.0
      %v1468 = vsel %vm1340, %v1024, 0.0
      %v1469 = vsel %vm1341, %v835, 0.0
      %v1470 = vsel %vm1342, %v837, 0.0
      %v1471 = vsel %vm1343, %v1028, 0.0
      %v1472 = vsel %vm1344, %v1030, 0.0
      %v1473 = vsel %vm1345, %v839, 0.0
      %v1474 = vsel %vm1346, %v841, 0.0
      %v1475 = vsel %vm1347, %v1032, 0.0
      %v1476 = vsel %vm1348, %v1034, 0.0
      %v1477 = vsel %vm1349, %v845, 0.0
      %v1478 = vsel %vm1350, %v847, 0.0
      %v1479 = vsel %vm1351, %v1038, 0.0
      %v1480 = vsel %vm1352, %v1040, 0.0
      %v1481 = vsel %vm1353, %v849, 0.0
      %v1482 = vsel %vm1354, %v851, 0.0
      %v1483 = vsel %vm1355, %v1042, 0.0
      %v1484 = vsel %vm1356, %v1044, 0.0
      %v1485 = vsel %vm1357, %v855, 0.0
      %v1486 = vsel %vm1358, %v857, 0.0
      %v1487 = vsel %vm1359, %v1048, 0.0
      %v1488 = vsel %vm1360, %v1050, 0.0
      %v1489 = vsel %vm1361, %v859, 0.0
      %v1490 = vsel %vm1362, %v861, 0.0
      %v1491 = vsel %vm1363, %v1052, 0.0
      %v1492 = vsel %vm1364, %v1054, 0.0
      %v1493 = vsel %vm1365, %v865, 0.0
      %v1494 = vsel %vm1366, %v867, 0.0
      %v1495 = vsel %vm1367, %v1058, 0.0
      %v1496 = vsel %vm1368, %v1060, 0.0
      %v1497 = vsel %vm1369, %v869, 0.0
      %v1498 = vsel %vm1370, %v871, 0.0
      %v1499 = vsel %vm1371, %v1062, 0.0
      %v1500 = vsel %vm1372, %v1064, 0.0
      %v1501 = vsel %vm1373, %v875, 0.0
      %v1502 = vsel %vm1374, %v877, 0.0
      %v1503 = vsel %vm1375, %v1068, 0.0
      %v1504 = vsel %vm1376, %v1070, 0.0
      %v1505 = vsel %vm1377, %v879, 0.0
      %v1506 = vsel %vm1378, %v881, 0.0
      %v1507 = vsel %vm1379, %v1072, 0.0
      %v1508 = vsel %vm1380, %v1074, 0.0
      %v1509 = vsel %vm1381, %v885, 0.0
      %v1510 = vsel %vm1382, %v887, 0.0
      %v1511 = vsel %vm1383, %v1078, 0.0
      %v1512 = vsel %vm1384, %v1080, 0.0
      %v1513 = vsel %vm1385, %v889, 0.0
      %v1514 = vsel %vm1386, %v891, 0.0
      %v1515 = vsel %vm1387, %v1082, 0.0
      %v1516 = vsel %vm1388, %v1084, 0.0
      %v1517 = vsel %vm1389, %v895, 0.0
      %v1518 = vsel %vm1390, %v897, 0.0
      %v1519 = vsel %vm1391, %v1088, 0.0
      %v1520 = vsel %vm1392, %v1090, 0.0
      %v1521 = vsel %vm1393, %v899, 0.0
      %v1522 = vsel %vm1394, %v901, 0.0
      %v1523 = vsel %vm1395, %v1092, 0.0
      %v1524 = vsel %vm1396, %v1094, 0.0
      %v1525 = vsel %vm1397, %v905, 0.0
      %v1526 = vsel %vm1398, %v907, 0.0
      %v1527 = vsel %vm1399, %v1098, 0.0
      %v1528 = vsel %vm1400, %v1100, 0.0
      %v1529 = vsel %vm1401, %v909, 0.0
      %v1530 = vsel %vm1402, %v911, 0.0
      %v1531 = vsel %vm1403, %v1102, 0.0
      %v1532 = vsel %vm1404, %v1104, 0.0
      %v1533 = vadd.f32 %v1405, %v1406
      %v1534 = vadd.f32 %v1533, %v1407
      %v1535 = vadd.f32 %v1534, %v1408
      %1536 = vadd.xlane.f32.xlu0 %v1535
      %v1537 = vpop.xlane.xlu0 %1536
      %v1538 = vadd.f32 %v1409, %v1410
      %v1539 = vadd.f32 %v1538, %v1411
      %v1540 = vadd.f32 %v1539, %v1412
      %1541 = vadd.xlane.f32.xlu0 %v1540
      %v1542 = vpop.xlane.xlu0 %1541
      %v1543 = vadd.f32 %v1413, %v1414
      %v1544 = vadd.f32 %v1543, %v1415
      %v1545 = vadd.f32 %v1544, %v1416
      %1546 = vadd.xlane.f32.xlu0 %v1545
      %v1547 = vpop.xlane.xlu0 %1546
      %v1548 = vadd.f32 %v1417, %v1418
      %v1549 = vadd.f32 %v1548, %v1419
      %v1550 = vadd.f32 %v1549, %v1420
      %1551 = vadd.xlane.f32.xlu0 %v1550
      %v1552 = vpop.xlane.xlu0 %1551
      %v1553 = vadd.f32 %v1421, %v1422
      %v1554 = vadd.f32 %v1553, %v1423
      %v1555 = vadd.f32 %v1554, %v1424
      %1556 = vadd.xlane.f32.xlu0 %v1555
      %v1557 = vpop.xlane.xlu0 %1556
      %v1558 = vadd.f32 %v1425, %v1426
      %v1559 = vadd.f32 %v1558, %v1427
      %v1560 = vadd.f32 %v1559, %v1428
      %1561 = vadd.xlane.f32.xlu0 %v1560
      %v1562 = vpop.xlane.xlu0 %1561
      %v1563 = vadd.f32 %v1429, %v1430
      %v1564 = vadd.f32 %v1563, %v1431
      %v1565 = vadd.f32 %v1564, %v1432
      %1566 = vadd.xlane.f32.xlu0 %v1565
      %v1567 = vpop.xlane.xlu0 %1566
      %v1568 = vadd.f32 %v1433, %v1434
      %v1569 = vadd.f32 %v1568, %v1435
      %v1570 = vadd.f32 %v1569, %v1436
      %1571 = vadd.xlane.f32.xlu0 %v1570
      %v1572 = vpop.xlane.xlu0 %1571
      %v1573 = vadd.f32 %v1437, %v1438
      %v1574 = vadd.f32 %v1573, %v1439
      %v1575 = vadd.f32 %v1574, %v1440
      %1576 = vadd.xlane.f32.xlu0 %v1575
      %v1577 = vpop.xlane.xlu0 %1576
      %v1578 = vadd.f32 %v1441, %v1442
      %v1579 = vadd.f32 %v1578, %v1443
      %v1580 = vadd.f32 %v1579, %v1444
      %1581 = vadd.xlane.f32.xlu0 %v1580
      %v1582 = vpop.xlane.xlu0 %1581
      %v1583 = vadd.f32 %v1445, %v1446
      %v1584 = vadd.f32 %v1583, %v1447
      %v1585 = vadd.f32 %v1584, %v1448
      %1586 = vadd.xlane.f32.xlu0 %v1585
      %v1587 = vpop.xlane.xlu0 %1586
      %v1588 = vadd.f32 %v1449, %v1450
      %v1589 = vadd.f32 %v1588, %v1451
      %v1590 = vadd.f32 %v1589, %v1452
      %1591 = vadd.xlane.f32.xlu0 %v1590
      %v1592 = vpop.xlane.xlu0 %1591
      %v1593 = vadd.f32 %v1453, %v1454
      %v1594 = vadd.f32 %v1593, %v1455
      %v1595 = vadd.f32 %v1594, %v1456
      %1596 = vadd.xlane.f32.xlu0 %v1595
      %v1597 = vpop.xlane.xlu0 %1596
      %v1598 = vadd.f32 %v1457, %v1458
      %v1599 = vadd.f32 %v1598, %v1459
      %v1600 = vadd.f32 %v1599, %v1460
      %1601 = vadd.xlane.f32.xlu0 %v1600
      %v1602 = vpop.xlane.xlu0 %1601
      %v1603 = vadd.f32 %v1461, %v1462
      %v1604 = vadd.f32 %v1603, %v1463
      %v1605 = vadd.f32 %v1604, %v1464
      %1606 = vadd.xlane.f32.xlu0 %v1605
      %v1607 = vpop.xlane.xlu0 %1606
      %v1608 = vadd.f32 %v1465, %v1466
      %v1609 = vadd.f32 %v1608, %v1467
      %v1610 = vadd.f32 %v1609, %v1468
      %1611 = vadd.xlane.f32.xlu0 %v1610
      %v1612 = vpop.xlane.xlu0 %1611
      %v1613 = vadd.f32 %v1469, %v1470
      %v1614 = vadd.f32 %v1613, %v1471
      %v1615 = vadd.f32 %v1614, %v1472
      %1616 = vadd.xlane.f32.xlu0 %v1615
      %v1617 = vpop.xlane.xlu0 %1616
      %v1618 = vadd.f32 %v1473, %v1474
      %v1619 = vadd.f32 %v1618, %v1475
      %v1620 = vadd.f32 %v1619, %v1476
      %1621 = vadd.xlane.f32.xlu0 %v1620
      %v1622 = vpop.xlane.xlu0 %1621
      %v1623 = vadd.f32 %v1477, %v1478
      %v1624 = vadd.f32 %v1623, %v1479
      %v1625 = vadd.f32 %v1624, %v1480
      %1626 = vadd.xlane.f32.xlu0 %v1625
      %v1627 = vpop.xlane.xlu0 %1626
      %v1628 = vadd.f32 %v1481, %v1482
      %v1629 = vadd.f32 %v1628, %v1483
      %v1630 = vadd.f32 %v1629, %v1484
      %1631 = vadd.xlane.f32.xlu0 %v1630
      %v1632 = vpop.xlane.xlu0 %1631
      %v1633 = vadd.f32 %v1485, %v1486
      %v1634 = vadd.f32 %v1633, %v1487
      %v1635 = vadd.f32 %v1634, %v1488
      %1636 = vadd.xlane.f32.xlu0 %v1635
      %v1637 = vpop.xlane.xlu0 %1636
      %v1638 = vadd.f32 %v1489, %v1490
      %v1639 = vadd.f32 %v1638, %v1491
      %v1640 = vadd.f32 %v1639, %v1492
      %1641 = vadd.xlane.f32.xlu0 %v1640
      %v1642 = vpop.xlane.xlu0 %1641
      %v1643 = vadd.f32 %v1493, %v1494
      %v1644 = vadd.f32 %v1643, %v1495
      %v1645 = vadd.f32 %v1644, %v1496
      %1646 = vadd.xlane.f32.xlu0 %v1645
      %v1647 = vpop.xlane.xlu0 %1646
      %v1648 = vadd.f32 %v1497, %v1498
      %v1649 = vadd.f32 %v1648, %v1499
      %v1650 = vadd.f32 %v1649, %v1500
      %1651 = vadd.xlane.f32.xlu0 %v1650
      %v1652 = vpop.xlane.xlu0 %1651
      %v1653 = vadd.f32 %v1501, %v1502
      %v1654 = vadd.f32 %v1653, %v1503
      %v1655 = vadd.f32 %v1654, %v1504
      %1656 = vadd.xlane.f32.xlu0 %v1655
      %v1657 = vpop.xlane.xlu0 %1656
      %v1658 = vadd.f32 %v1505, %v1506
      %v1659 = vadd.f32 %v1658, %v1507
      %v1660 = vadd.f32 %v1659, %v1508
      %1661 = vadd.xlane.f32.xlu0 %v1660
      %v1662 = vpop.xlane.xlu0 %1661
      %v1663 = vadd.f32 %v1509, %v1510
      %v1664 = vadd.f32 %v1663, %v1511
      %v1665 = vadd.f32 %v1664, %v1512
      %1666 = vadd.xlane.f32.xlu0 %v1665
      %v1667 = vpop.xlane.xlu0 %1666
      %v1668 = vadd.f32 %v1513, %v1514
      %v1669 = vadd.f32 %v1668, %v1515
      %v1670 = vadd.f32 %v1669, %v1516
      %1671 = vadd.xlane.f32.xlu0 %v1670
      %v1672 = vpop.xlane.xlu0 %1671
      %v1673 = vadd.f32 %v1517, %v1518
      %v1674 = vadd.f32 %v1673, %v1519
      %v1675 = vadd.f32 %v1674, %v1520
      %1676 = vadd.xlane.f32.xlu0 %v1675
      %v1677 = vpop.xlane.xlu0 %1676
      %v1678 = vadd.f32 %v1521, %v1522
      %v1679 = vadd.f32 %v1678, %v1523
      %v1680 = vadd.f32 %v1679, %v1524
      %1681 = vadd.xlane.f32.xlu0 %v1680
      %v1682 = vpop.xlane.xlu0 %1681
      %v1683 = vadd.f32 %v1525, %v1526
      %v1684 = vadd.f32 %v1683, %v1527
      %v1685 = vadd.f32 %v1684, %v1528
      %1686 = vadd.xlane.f32.xlu0 %v1685
      %v1687 = vpop.xlane.xlu0 %1686
      %v1688 = vadd.f32 %v1529, %v1530
      %v1689 = vadd.f32 %v1688, %v1531
      %v1690 = vadd.f32 %v1689, %v1532
      %1691 = vadd.xlane.f32.xlu0 %v1690
      %v1692 = vpop.xlane.xlu0 %1691
      %v1693 = vadd.f32 %v1149, %v1537
      %v1694 = vadd.f32 %v1150, %v1542
      %v1695 = vadd.f32 %v1151, %v1547
      %v1696 = vadd.f32 %v1152, %v1552
      %v1697 = vadd.f32 %v1153, %v1557
      %v1698 = vadd.f32 %v1154, %v1562
      %v1699 = vadd.f32 %v1155, %v1567
      %v1700 = vadd.f32 %v1156, %v1572
      %v1701 = vadd.f32 %v1157, %v1577
      %v1702 = vadd.f32 %v1158, %v1582
      %v1703 = vadd.f32 %v1159, %v1587
      %v1704 = vadd.f32 %v1160, %v1592
      %v1705 = vadd.f32 %v1161, %v1597
      %v1706 = vadd.f32 %v1162, %v1602
      %v1707 = vadd.f32 %v1163, %v1607
      %v1708 = vadd.f32 %v1164, %v1612
      %v1709 = vadd.f32 %v1165, %v1617
      %v1710 = vadd.f32 %v1166, %v1622
      %v1711 = vadd.f32 %v1167, %v1627
      %v1712 = vadd.f32 %v1168, %v1632
      %v1713 = vadd.f32 %v1169, %v1637
      %v1714 = vadd.f32 %v1170, %v1642
      %v1715 = vadd.f32 %v1171, %v1647
      %v1716 = vadd.f32 %v1172, %v1652
      %v1717 = vadd.f32 %v1173, %v1657
      %v1718 = vadd.f32 %v1174, %v1662
      %v1719 = vadd.f32 %v1175, %v1667
      %v1720 = vadd.f32 %v1176, %v1672
      %v1721 = vadd.f32 %v1177, %v1677
      %v1722 = vadd.f32 %v1178, %v1682
      %v1723 = vadd.f32 %v1179, %v1687
      %v1724 = vadd.f32 %v1180, %v1692
      %vm1725 = vcmask 7168
      %1726 = vst.msk [vmem:[#allocation4] sm:$0xff] %vm1725, %v1693
      %1727 = vst.msk [vmem:[#allocation4 + $0x8] sm:$0xff] %vm1725, %v1694
      %1728 = vst.msk [vmem:[#allocation4 + $0x10] sm:$0xff] %vm1725, %v1695
      %1729 = vst.msk [vmem:[#allocation4 + $0x18] sm:$0xff] %vm1725, %v1696
      %1730 = vst.msk [vmem:[#allocation4 + $0x20] sm:$0xff] %vm1725, %v1697
      %1731 = vst.msk [vmem:[#allocation4 + $0x28] sm:$0xff] %vm1725, %v1698
      %1732 = vst.msk [vmem:[#allocation4 + $0x30] sm:$0xff] %vm1725, %v1699
      %1733 = vst.msk [vmem:[#allocation4 + $0x38] sm:$0xff] %vm1725, %v1700
      %1734 = vst.msk [vmem:[#allocation4 + $0x40] sm:$0xff] %vm1725, %v1701
      %1735 = vst.msk [vmem:[#allocation4 + $0x48] sm:$0xff] %vm1725, %v1702
      %1736 = vst.msk [vmem:[#allocation4 + $0x50] sm:$0xff] %vm1725, %v1703
      %1737 = vst.msk [vmem:[#allocation4 + $0x58] sm:$0xff] %vm1725, %v1704
      %1738 = vst.msk [vmem:[#allocation4 + $0x60] sm:$0xff] %vm1725, %v1705
      %1739 = vst.msk [vmem:[#allocation4 + $0x68] sm:$0xff] %vm1725, %v1706
      %1740 = vst.msk [vmem:[#allocation4 + $0x70] sm:$0xff] %vm1725, %v1707
      %1741 = vst.msk [vmem:[#allocation4 + $0x78] sm:$0xff] %vm1725, %v1708
      %1742 = vst.msk [vmem:[#allocation4 + $0x80] sm:$0xff] %vm1725, %v1709
      %1743 = vst.msk [vmem:[#allocation4 + $0x88] sm:$0xff] %vm1725, %v1710
      %1744 = vst.msk [vmem:[#allocation4 + $0x90] sm:$0xff] %vm1725, %v1711
      %1745 = vst.msk [vmem:[#allocation4 + $0x98] sm:$0xff] %vm1725, %v1712
      %1746 = vst.msk [vmem:[#allocation4 + $0xa0] sm:$0xff] %vm1725, %v1713
      %1747 = vst.msk [vmem:[#allocation4 + $0xa8] sm:$0xff] %vm1725, %v1714
      %1748 = vst.msk [vmem:[#allocation4 + $0xb0] sm:$0xff] %vm1725, %v1715
      %1749 = vst.msk [vmem:[#allocation4 + $0xb8] sm:$0xff] %vm1725, %v1716
      %1750 = vst.msk [vmem:[#allocation4 + $0xc0] sm:$0xff] %vm1725, %v1717
      %1751 = vst.msk [vmem:[#allocation4 + $0xc8] sm:$0xff] %vm1725, %v1718
      %1752 = vst.msk [vmem:[#allocation4 + $0xd0] sm:$0xff] %vm1725, %v1719
      %1753 = vst.msk [vmem:[#allocation4 + $0xd8] sm:$0xff] %vm1725, %v1720
      %1754 = vst.msk [vmem:[#allocation4 + $0xe0] sm:$0xff] %vm1725, %v1721
      %1755 = vst.msk [vmem:[#allocation4 + $0xe8] sm:$0xff] %vm1725, %v1722
      %1756 = vst.msk [vmem:[#allocation4 + $0xf0] sm:$0xff] %vm1725, %v1723
      %1757 = vst.msk [vmem:[#allocation4 + $0xf8] sm:$0xff] %vm1725, %v1724
      %v1758 = vmax.f32 %v755, %v757
      %v1759 = vmax.f32 %v1758, %v948
      %v1760 = vmax.f32 %v1759, %v950
      %1761 = vmax.xlane.f32.xlu0 %v1760
      %v1762 = vpop.xlane.xlu0 %1761
      %v1763 = vmax.f32 %v759, %v761
      %v1764 = vmax.f32 %v1763, %v952
      %v1765 = vmax.f32 %v1764, %v954
      %1766 = vmax.xlane.f32.xlu0 %v1765
      %v1767 = vpop.xlane.xlu0 %1766
      %v1768 = vmax.f32 %v765, %v767
      %v1769 = vmax.f32 %v1768, %v958
      %v1770 = vmax.f32 %v1769, %v960
      %1771 = vmax.xlane.f32.xlu0 %v1770
      %v1772 = vpop.xlane.xlu0 %1771
      %v1773 = vmax.f32 %v769, %v771
      %v1774 = vmax.f32 %v1773, %v962
      %v1775 = vmax.f32 %v1774, %v964
      %1776 = vmax.xlane.f32.xlu0 %v1775
      %v1777 = vpop.xlane.xlu0 %1776
      %v1778 = vmax.f32 %v775, %v777
      %v1779 = vmax.f32 %v1778, %v968
      %v1780 = vmax.f32 %v1779, %v970
      %1781 = vmax.xlane.f32.xlu0 %v1780
      %v1782 = vpop.xlane.xlu0 %1781
      %v1783 = vmax.f32 %v779, %v781
      %v1784 = vmax.f32 %v1783, %v972
      %v1785 = vmax.f32 %v1784, %v974
      %1786 = vmax.xlane.f32.xlu0 %v1785
      %v1787 = vpop.xlane.xlu0 %1786
      %v1788 = vmax.f32 %v785, %v787
      %v1789 = vmax.f32 %v1788, %v978
      %v1790 = vmax.f32 %v1789, %v980
      %1791 = vmax.xlane.f32.xlu0 %v1790
      %v1792 = vpop.xlane.xlu0 %1791
      %v1793 = vmax.f32 %v789, %v791
      %v1794 = vmax.f32 %v1793, %v982
      %v1795 = vmax.f32 %v1794, %v984
      %1796 = vmax.xlane.f32.xlu0 %v1795
      %v1797 = vpop.xlane.xlu0 %1796
      %v1798 = vmax.f32 %v795, %v797
      %v1799 = vmax.f32 %v1798, %v988
      %v1800 = vmax.f32 %v1799, %v990
      %1801 = vmax.xlane.f32.xlu0 %v1800
      %v1802 = vpop.xlane.xlu0 %1801
      %v1803 = vmax.f32 %v799, %v801
      %v1804 = vmax.f32 %v1803, %v992
      %v1805 = vmax.f32 %v1804, %v994
      %1806 = vmax.xlane.f32.xlu0 %v1805
      %v1807 = vpop.xlane.xlu0 %1806
      %v1808 = vmax.f32 %v805, %v807
      %v1809 = vmax.f32 %v1808, %v998
      %v1810 = vmax.f32 %v1809, %v1000
      %1811 = vmax.xlane.f32.xlu0 %v1810
      %v1812 = vpop.xlane.xlu0 %1811
      %v1813 = vmax.f32 %v809, %v811
      %v1814 = vmax.f32 %v1813, %v1002
      %v1815 = vmax.f32 %v1814, %v1004
      %1816 = vmax.xlane.f32.xlu0 %v1815
      %v1817 = vpop.xlane.xlu0 %1816
      %v1818 = vmax.f32 %v815, %v817
      %v1819 = vmax.f32 %v1818, %v1008
      %v1820 = vmax.f32 %v1819, %v1010
      %1821 = vmax.xlane.f32.xlu0 %v1820
      %v1822 = vpop.xlane.xlu0 %1821
      %v1823 = vmax.f32 %v819, %v821
      %v1824 = vmax.f32 %v1823, %v1012
      %v1825 = vmax.f32 %v1824, %v1014
      %1826 = vmax.xlane.f32.xlu0 %v1825
      %v1827 = vpop.xlane.xlu0 %1826
      %v1828 = vmax.f32 %v825, %v827
      %v1829 = vmax.f32 %v1828, %v1018
      %v1830 = vmax.f32 %v1829, %v1020
      %1831 = vmax.xlane.f32.xlu0 %v1830
      %v1832 = vpop.xlane.xlu0 %1831
      %v1833 = vmax.f32 %v829, %v831
      %v1834 = vmax.f32 %v1833, %v1022
      %v1835 = vmax.f32 %v1834, %v1024
      %1836 = vmax.xlane.f32.xlu0 %v1835
      %v1837 = vpop.xlane.xlu0 %1836
      %v1838 = vmax.f32 %v835, %v837
      %v1839 = vmax.f32 %v1838, %v1028
      %v1840 = vmax.f32 %v1839, %v1030
      %1841 = vmax.xlane.f32.xlu0 %v1840
      %v1842 = vpop.xlane.xlu0 %1841
      %v1843 = vmax.f32 %v839, %v841
      %v1844 = vmax.f32 %v1843, %v1032
      %v1845 = vmax.f32 %v1844, %v1034
      %1846 = vmax.xlane.f32.xlu0 %v1845
      %v1847 = vpop.xlane.xlu0 %1846
      %v1848 = vmax.f32 %v845, %v847
      %v1849 = vmax.f32 %v1848, %v1038
      %v1850 = vmax.f32 %v1849, %v1040
      %1851 = vmax.xlane.f32.xlu0 %v1850
      %v1852 = vpop.xlane.xlu0 %1851
      %v1853 = vmax.f32 %v849, %v851
      %v1854 = vmax.f32 %v1853, %v1042
      %v1855 = vmax.f32 %v1854, %v1044
      %1856 = vmax.xlane.f32.xlu0 %v1855
      %v1857 = vpop.xlane.xlu0 %1856
      %v1858 = vmax.f32 %v855, %v857
      %v1859 = vmax.f32 %v1858, %v1048
      %v1860 = vmax.f32 %v1859, %v1050
      %1861 = vmax.xlane.f32.xlu0 %v1860
      %v1862 = vpop.xlane.xlu0 %1861
      %v1863 = vmax.f32 %v859, %v861
      %v1864 = vmax.f32 %v1863, %v1052
      %v1865 = vmax.f32 %v1864, %v1054
      %1866 = vmax.xlane.f32.xlu0 %v1865
      %v1867 = vpop.xlane.xlu0 %1866
      %v1868 = vmax.f32 %v865, %v867
      %v1869 = vmax.f32 %v1868, %v1058
      %v1870 = vmax.f32 %v1869, %v1060
      %1871 = vmax.xlane.f32.xlu0 %v1870
      %v1872 = vpop.xlane.xlu0 %1871
      %v1873 = vmax.f32 %v869, %v871
      %v1874 = vmax.f32 %v1873, %v1062
      %v1875 = vmax.f32 %v1874, %v1064
      %1876 = vmax.xlane.f32.xlu0 %v1875
      %v1877 = vpop.xlane.xlu0 %1876
      %v1878 = vmax.f32 %v875, %v877
      %v1879 = vmax.f32 %v1878, %v1068
      %v1880 = vmax.f32 %v1879, %v1070
      %1881 = vmax.xlane.f32.xlu0 %v1880
      %v1882 = vpop.xlane.xlu0 %1881
      %v1883 = vmax.f32 %v879, %v881
      %v1884 = vmax.f32 %v1883, %v1072
      %v1885 = vmax.f32 %v1884, %v1074
      %1886 = vmax.xlane.f32.xlu0 %v1885
      %v1887 = vpop.xlane.xlu0 %1886
      %v1888 = vmax.f32 %v885, %v887
      %v1889 = vmax.f32 %v1888, %v1078
      %v1890 = vmax.f32 %v1889, %v1080
      %1891 = vmax.xlane.f32.xlu0 %v1890
      %v1892 = vpop.xlane.xlu0 %1891
      %v1893 = vmax.f32 %v889, %v891
      %v1894 = vmax.f32 %v1893, %v1082
      %v1895 = vmax.f32 %v1894, %v1084
      %1896 = vmax.xlane.f32.xlu0 %v1895
      %v1897 = vpop.xlane.xlu0 %1896
      %v1898 = vmax.f32 %v895, %v897
      %v1899 = vmax.f32 %v1898, %v1088
      %v1900 = vmax.f32 %v1899, %v1090
      %1901 = vmax.xlane.f32.xlu0 %v1900
      %v1902 = vpop.xlane.xlu0 %1901
      %v1903 = vmax.f32 %v899, %v901
      %v1904 = vmax.f32 %v1903, %v1092
      %v1905 = vmax.f32 %v1904, %v1094
      %1906 = vmax.xlane.f32.xlu0 %v1905
      %v1907 = vpop.xlane.xlu0 %1906
      %v1908 = vmax.f32 %v905, %v907
      %v1909 = vmax.f32 %v1908, %v1098
      %v1910 = vmax.f32 %v1909, %v1100
      %1911 = vmax.xlane.f32.xlu0 %v1910
      %v1912 = vpop.xlane.xlu0 %1911
      %v1913 = vmax.f32 %v909, %v911
      %v1914 = vmax.f32 %v1913, %v1102
      %v1915 = vmax.f32 %v1914, %v1104
      %1916 = vmax.xlane.f32.xlu0 %v1915
      %v1917 = vpop.xlane.xlu0 %1916
      %v1918 = vld [vmem:[#allocation2] sm:$0xff]
      %v1919 = vld [vmem:[#allocation2 + $0x8] sm:$0xff]
      %v1920 = vld [vmem:[#allocation2 + $0x10] sm:$0xff]
      %v1921 = vld [vmem:[#allocation2 + $0x18] sm:$0xff]
      %v1922 = vld [vmem:[#allocation2 + $0x20] sm:$0xff]
      %v1923 = vld [vmem:[#allocation2 + $0x28] sm:$0xff]
      %v1924 = vld [vmem:[#allocation2 + $0x30] sm:$0xff]
      %v1925 = vld [vmem:[#allocation2 + $0x38] sm:$0xff]
      %v1926 = vld [vmem:[#allocation2 + $0x40] sm:$0xff]
      %v1927 = vld [vmem:[#allocation2 + $0x48] sm:$0xff]
      %v1928 = vld [vmem:[#allocation2 + $0x50] sm:$0xff]
      %v1929 = vld [vmem:[#allocation2 + $0x58] sm:$0xff]
      %v1930 = vld [vmem:[#allocation2 + $0x60] sm:$0xff]
      %v1931 = vld [vmem:[#allocation2 + $0x68] sm:$0xff]
      %v1932 = vld [vmem:[#allocation2 + $0x70] sm:$0xff]
      %v1933 = vld [vmem:[#allocation2 + $0x78] sm:$0xff]
      %v1934 = vld [vmem:[#allocation2 + $0x80] sm:$0xff]
      %v1935 = vld [vmem:[#allocation2 + $0x88] sm:$0xff]
      %v1936 = vld [vmem:[#allocation2 + $0x90] sm:$0xff]
      %v1937 = vld [vmem:[#allocation2 + $0x98] sm:$0xff]
      %v1938 = vld [vmem:[#allocation2 + $0xa0] sm:$0xff]
      %v1939 = vld [vmem:[#allocation2 + $0xa8] sm:$0xff]
      %v1940 = vld [vmem:[#allocation2 + $0xb0] sm:$0xff]
      %v1941 = vld [vmem:[#allocation2 + $0xb8] sm:$0xff]
      %v1942 = vld [vmem:[#allocation2 + $0xc0] sm:$0xff]
      %v1943 = vld [vmem:[#allocation2 + $0xc8] sm:$0xff]
      %v1944 = vld [vmem:[#allocation2 + $0xd0] sm:$0xff]
      %v1945 = vld [vmem:[#allocation2 + $0xd8] sm:$0xff]
      %v1946 = vld [vmem:[#allocation2 + $0xe0] sm:$0xff]
      %v1947 = vld [vmem:[#allocation2 + $0xe8] sm:$0xff]
      %v1948 = vld [vmem:[#allocation2 + $0xf0] sm:$0xff]
      %v1949 = vld [vmem:[#allocation2 + $0xf8] sm:$0xff]
      %v1950 = vmax.f32 %v1918, %v1762
      %v1951 = vmax.f32 %v1919, %v1767
      %v1952 = vmax.f32 %v1920, %v1772
      %v1953 = vmax.f32 %v1921, %v1777
      %v1954 = vmax.f32 %v1922, %v1782
      %v1955 = vmax.f32 %v1923, %v1787
      %v1956 = vmax.f32 %v1924, %v1792
      %v1957 = vmax.f32 %v1925, %v1797
      %v1958 = vmax.f32 %v1926, %v1802
      %v1959 = vmax.f32 %v1927, %v1807
      %v1960 = vmax.f32 %v1928, %v1812
      %v1961 = vmax.f32 %v1929, %v1817
      %v1962 = vmax.f32 %v1930, %v1822
      %v1963 = vmax.f32 %v1931, %v1827
      %v1964 = vmax.f32 %v1932, %v1832
      %v1965 = vmax.f32 %v1933, %v1837
      %v1966 = vmax.f32 %v1934, %v1842
      %v1967 = vmax.f32 %v1935, %v1847
      %v1968 = vmax.f32 %v1936, %v1852
      %v1969 = vmax.f32 %v1937, %v1857
      %v1970 = vmax.f32 %v1938, %v1862
      %v1971 = vmax.f32 %v1939, %v1867
      %v1972 = vmax.f32 %v1940, %v1872
      %v1973 = vmax.f32 %v1941, %v1877
      %v1974 = vmax.f32 %v1942, %v1882
      %v1975 = vmax.f32 %v1943, %v1887
      %v1976 = vmax.f32 %v1944, %v1892
      %v1977 = vmax.f32 %v1945, %v1897
      %v1978 = vmax.f32 %v1946, %v1902
      %v1979 = vmax.f32 %v1947, %v1907
      %v1980 = vmax.f32 %v1948, %v1912
      %v1981 = vmax.f32 %v1949, %v1917
      %v1982 = vld [vmem:[#allocation3] sm:$0xff]
      %v1983 = vld [vmem:[#allocation3 + $0x8] sm:$0xff]
      %v1984 = vld [vmem:[#allocation3 + $0x10] sm:$0xff]
      %v1985 = vld [vmem:[#allocation3 + $0x18] sm:$0xff]
      %v1986 = vld [vmem:[#allocation3 + $0x20] sm:$0xff]
      %v1987 = vld [vmem:[#allocation3 + $0x28] sm:$0xff]
      %v1988 = vld [vmem:[#allocation3 + $0x30] sm:$0xff]
      %v1989 = vld [vmem:[#allocation3 + $0x38] sm:$0xff]
      %v1990 = vld [vmem:[#allocation3 + $0x40] sm:$0xff]
      %v1991 = vld [vmem:[#allocation3 + $0x48] sm:$0xff]
      %v1992 = vld [vmem:[#allocation3 + $0x50] sm:$0xff]
      %v1993 = vld [vmem:[#allocation3 + $0x58] sm:$0xff]
      %v1994 = vld [vmem:[#allocation3 + $0x60] sm:$0xff]
      %v1995 = vld [vmem:[#allocation3 + $0x68] sm:$0xff]
      %v1996 = vld [vmem:[#allocation3 + $0x70] sm:$0xff]
      %v1997 = vld [vmem:[#allocation3 + $0x78] sm:$0xff]
      %v1998 = vld [vmem:[#allocation3 + $0x80] sm:$0xff]
      %v1999 = vld [vmem:[#allocation3 + $0x88] sm:$0xff]
      %v2000 = vld [vmem:[#allocation3 + $0x90] sm:$0xff]
      %v2001 = vld [vmem:[#allocation3 + $0x98] sm:$0xff]
      %v2002 = vld [vmem:[#allocation3 + $0xa0] sm:$0xff]
      %v2003 = vld [vmem:[#allocation3 + $0xa8] sm:$0xff]
      %v2004 = vld [vmem:[#allocation3 + $0xb0] sm:$0xff]
      %v2005 = vld [vmem:[#allocation3 + $0xb8] sm:$0xff]
      %v2006 = vld [vmem:[#allocation3 + $0xc0] sm:$0xff]
      %v2007 = vld [vmem:[#allocation3 + $0xc8] sm:$0xff]
      %v2008 = vld [vmem:[#allocation3 + $0xd0] sm:$0xff]
      %v2009 = vld [vmem:[#allocation3 + $0xd8] sm:$0xff]
      %v2010 = vld [vmem:[#allocation3 + $0xe0] sm:$0xff]
      %v2011 = vld [vmem:[#allocation3 + $0xe8] sm:$0xff]
      %v2012 = vld [vmem:[#allocation3 + $0xf0] sm:$0xff]
      %v2013 = vld [vmem:[#allocation3 + $0xf8] sm:$0xff]
      %v2014 = vsub.f32 %v1918, %v1950
      %v2015 = vsub.f32 %v1919, %v1951
      %v2016 = vsub.f32 %v1920, %v1952
      %v2017 = vsub.f32 %v1921, %v1953
      %v2018 = vsub.f32 %v1922, %v1954
      %v2019 = vsub.f32 %v1923, %v1955
      %v2020 = vsub.f32 %v1924, %v1956
      %v2021 = vsub.f32 %v1925, %v1957
      %v2022 = vsub.f32 %v1926, %v1958
      %v2023 = vsub.f32 %v1927, %v1959
      %v2024 = vsub.f32 %v1928, %v1960
      %v2025 = vsub.f32 %v1929, %v1961
      %v2026 = vsub.f32 %v1930, %v1962
      %v2027 = vsub.f32 %v1931, %v1963
      %v2028 = vsub.f32 %v1932, %v1964
      %v2029 = vsub.f32 %v1933, %v1965
      %v2030 = vsub.f32 %v1934, %v1966
      %v2031 = vsub.f32 %v1935, %v1967
      %v2032 = vsub.f32 %v1936, %v1968
      %v2033 = vsub.f32 %v1937, %v1969
      %v2034 = vsub.f32 %v1938, %v1970
      %v2035 = vsub.f32 %v1939, %v1971
      %v2036 = vsub.f32 %v1940, %v1972
      %v2037 = vsub.f32 %v1941, %v1973
      %v2038 = vsub.f32 %v1942, %v1974
      %v2039 = vsub.f32 %v1943, %v1975
      %v2040 = vsub.f32 %v1944, %v1976
      %v2041 = vsub.f32 %v1945, %v1977
      %v2042 = vsub.f32 %v1946, %v1978
      %v2043 = vsub.f32 %v1947, %v1979
      %v2044 = vsub.f32 %v1948, %v1980
      %v2045 = vsub.f32 %v1949, %v1981
      %v2046 = vmul.f32 %v2014, 1.442695
      %v2047 = vpow.pop %v2046
      %v2048 = vmul.f32 %v2015, 1.442695
      %v2049 = vpow.pop %v2048
      %v2050 = vmul.f32 %v2016, 1.442695
      %v2051 = vpow.pop %v2050
      %v2052 = vmul.f32 %v2017, 1.442695
      %v2053 = vpow.pop %v2052
      %v2054 = vmul.f32 %v2018, 1.442695
      %v2055 = vpow.pop %v2054
      %v2056 = vmul.f32 %v2019, 1.442695
      %v2057 = vpow.pop %v2056
      %v2058 = vmul.f32 %v2020, 1.442695
      %v2059 = vpow.pop %v2058
      %v2060 = vmul.f32 %v2021, 1.442695
      %v2061 = vpow.pop %v2060
      %v2062 = vmul.f32 %v2022, 1.442695
      %v2063 = vpow.pop %v2062
      %v2064 = vmul.f32 %v2023, 1.442695
      %v2065 = vpow.pop %v2064
      %v2066 = vmul.f32 %v2024, 1.442695
      %v2067 = vpow.pop %v2066
      %v2068 = vmul.f32 %v2025, 1.442695
      %v2069 = vpow.pop %v2068
      %v2070 = vmul.f32 %v2026, 1.442695
      %v2071 = vpow.pop %v2070
      %v2072 = vmul.f32 %v2027, 1.442695
      %v2073 = vpow.pop %v2072
      %v2074 = vmul.f32 %v2028, 1.442695
      %v2075 = vpow.pop %v2074
      %v2076 = vmul.f32 %v2029, 1.442695
      %v2077 = vpow.pop %v2076
      %v2078 = vmul.f32 %v2030, 1.442695
      %v2079 = vpow.pop %v2078
      %v2080 = vmul.f32 %v2031, 1.442695
      %v2081 = vpow.pop %v2080
      %v2082 = vmul.f32 %v2032, 1.442695
      %v2083 = vpow.pop %v2082
      %v2084 = vmul.f32 %v2033, 1.442695
      %v2085 = vpow.pop %v2084
      %v2086 = vmul.f32 %v2034, 1.442695
      %v2087 = vpow.pop %v2086
      %v2088 = vmul.f32 %v2035, 1.442695
      %v2089 = vpow.pop %v2088
      %v2090 = vmul.f32 %v2036, 1.442695
      %v2091 = vpow.pop %v2090
      %v2092 = vmul.f32 %v2037, 1.442695
      %v2093 = vpow.pop %v2092
      %v2094 = vmul.f32 %v2038, 1.442695
      %v2095 = vpow.pop %v2094
      %v2096 = vmul.f32 %v2039, 1.442695
      %v2097 = vpow.pop %v2096
      %v2098 = vmul.f32 %v2040, 1.442695
      %v2099 = vpow.pop %v2098
      %v2100 = vmul.f32 %v2041, 1.442695
      %v2101 = vpow.pop %v2100
      %v2102 = vmul.f32 %v2042, 1.442695
      %v2103 = vpow.pop %v2102
      %v2104 = vmul.f32 %v2043, 1.442695
      %v2105 = vpow.pop %v2104
      %v2106 = vmul.f32 %v2044, 1.442695
      %v2107 = vpow.pop %v2106
      %v2108 = vmul.f32 %v2045, 1.442695
      %v2109 = vpow.pop %v2108
      %v2110 = vmul.f32 %v1982, %v2047
      %v2111 = vmul.f32 %v1983, %v2049
      %v2112 = vmul.f32 %v1984, %v2051
      %v2113 = vmul.f32 %v1985, %v2053
      %v2114 = vmul.f32 %v1986, %v2055
      %v2115 = vmul.f32 %v1987, %v2057
      %v2116 = vmul.f32 %v1988, %v2059
      %v2117 = vmul.f32 %v1989, %v2061
      %v2118 = vmul.f32 %v1990, %v2063
      %v2119 = vmul.f32 %v1991, %v2065
      %v2120 = vmul.f32 %v1992, %v2067
      %v2121 = vmul.f32 %v1993, %v2069
      %v2122 = vmul.f32 %v1994, %v2071
      %v2123 = vmul.f32 %v1995, %v2073
      %v2124 = vmul.f32 %v1996, %v2075
      %v2125 = vmul.f32 %v1997, %v2077
      %v2126 = vmul.f32 %v1998, %v2079
      %v2127 = vmul.f32 %v1999, %v2081
      %v2128 = vmul.f32 %v2000, %v2083
      %v2129 = vmul.f32 %v2001, %v2085
      %v2130 = vmul.f32 %v2002, %v2087
      %v2131 = vmul.f32 %v2003, %v2089
      %v2132 = vmul.f32 %v2004, %v2091
      %v2133 = vmul.f32 %v2005, %v2093
      %v2134 = vmul.f32 %v2006, %v2095
      %v2135 = vmul.f32 %v2007, %v2097
      %v2136 = vmul.f32 %v2008, %v2099
      %v2137 = vmul.f32 %v2009, %v2101
      %v2138 = vmul.f32 %v2010, %v2103
      %v2139 = vmul.f32 %v2011, %v2105
      %v2140 = vmul.f32 %v2012, %v2107
      %v2141 = vmul.f32 %v2013, %v2109
      %2143 = vset.pattern.permute.xlu0 0
      %2144 = vperm.xlu0 %2143, %v1950
      %v2145 = vpop.permute.xlu0 %2144
      %2148 = vset.pattern.permute.xlu0 0
      %2149 = vperm.xlu0 %2148, %v1951
      %v2150 = vpop.permute.xlu0 %2149
      %2153 = vset.pattern.permute.xlu0 0
      %2154 = vperm.xlu0 %2153, %v1952
      %v2155 = vpop.permute.xlu0 %2154
      %2158 = vset.pattern.permute.xlu0 0
      %2159 = vperm.xlu0 %2158, %v1953
      %v2160 = vpop.permute.xlu0 %2159
      %2163 = vset.pattern.permute.xlu0 0
      %2164 = vperm.xlu0 %2163, %v1954
      %v2165 = vpop.permute.xlu0 %2164
      %2168 = vset.pattern.permute.xlu0 0
      %2169 = vperm.xlu0 %2168, %v1955
      %v2170 = vpop.permute.xlu0 %2169
      %2173 = vset.pattern.permute.xlu0 0
      %2174 = vperm.xlu0 %2173, %v1956
      %v2175 = vpop.permute.xlu0 %2174
      %2178 = vset.pattern.permute.xlu0 0
      %2179 = vperm.xlu0 %2178, %v1957
      %v2180 = vpop.permute.xlu0 %2179
      %2183 = vset.pattern.permute.xlu0 0
      %2184 = vperm.xlu0 %2183, %v1958
      %v2185 = vpop.permute.xlu0 %2184
      %2188 = vset.pattern.permute.xlu0 0
      %2189 = vperm.xlu0 %2188, %v1959
      %v2190 = vpop.permute.xlu0 %2189
      %2193 = vset.pattern.permute.xlu0 0
      %2194 = vperm.xlu0 %2193, %v1960
      %v2195 = vpop.permute.xlu0 %2194
      %2198 = vset.pattern.permute.xlu0 0
      %2199 = vperm.xlu0 %2198, %v1961
      %v2200 = vpop.permute.xlu0 %2199
      %2203 = vset.pattern.permute.xlu0 0
      %2204 = vperm.xlu0 %2203, %v1962
      %v2205 = vpop.permute.xlu0 %2204
      %2208 = vset.pattern.permute.xlu0 0
      %2209 = vperm.xlu0 %2208, %v1963
      %v2210 = vpop.permute.xlu0 %2209
      %2213 = vset.pattern.permute.xlu0 0
      %2214 = vperm.xlu0 %2213, %v1964
      %v2215 = vpop.permute.xlu0 %2214
      %2218 = vset.pattern.permute.xlu0 0
      %2219 = vperm.xlu0 %2218, %v1965
      %v2220 = vpop.permute.xlu0 %2219
      %2223 = vset.pattern.permute.xlu0 0
      %2224 = vperm.xlu0 %2223, %v1966
      %v2225 = vpop.permute.xlu0 %2224
      %2228 = vset.pattern.permute.xlu0 0
      %2229 = vperm.xlu0 %2228, %v1967
      %v2230 = vpop.permute.xlu0 %2229
      %2233 = vset.pattern.permute.xlu0 0
      %2234 = vperm.xlu0 %2233, %v1968
      %v2235 = vpop.permute.xlu0 %2234
      %2238 = vset.pattern.permute.xlu0 0
      %2239 = vperm.xlu0 %2238, %v1969
      %v2240 = vpop.permute.xlu0 %2239
      %2243 = vset.pattern.permute.xlu0 0
      %2244 = vperm.xlu0 %2243, %v1970
      %v2245 = vpop.permute.xlu0 %2244
      %2248 = vset.pattern.permute.xlu0 0
      %2249 = vperm.xlu0 %2248, %v1971
      %v2250 = vpop.permute.xlu0 %2249
      %2253 = vset.pattern.permute.xlu0 0
      %2254 = vperm.xlu0 %2253, %v1972
      %v2255 = vpop.permute.xlu0 %2254
      %2258 = vset.pattern.permute.xlu0 0
      %2259 = vperm.xlu0 %2258, %v1973
      %v2260 = vpop.permute.xlu0 %2259
      %2263 = vset.pattern.permute.xlu0 0
      %2264 = vperm.xlu0 %2263, %v1974
      %v2265 = vpop.permute.xlu0 %2264
      %2268 = vset.pattern.permute.xlu0 0
      %2269 = vperm.xlu0 %2268, %v1975
      %v2270 = vpop.permute.xlu0 %2269
      %2273 = vset.pattern.permute.xlu0 0
      %2274 = vperm.xlu0 %2273, %v1976
      %v2275 = vpop.permute.xlu0 %2274
      %2278 = vset.pattern.permute.xlu0 0
      %2279 = vperm.xlu0 %2278, %v1977
      %v2280 = vpop.permute.xlu0 %2279
      %2283 = vset.pattern.permute.xlu0 0
      %2284 = vperm.xlu0 %2283, %v1978
      %v2285 = vpop.permute.xlu0 %2284
      %2288 = vset.pattern.permute.xlu0 0
      %2289 = vperm.xlu0 %2288, %v1979
      %v2290 = vpop.permute.xlu0 %2289
      %2293 = vset.pattern.permute.xlu0 0
      %2294 = vperm.xlu0 %2293, %v1980
      %v2295 = vpop.permute.xlu0 %2294
      %2298 = vset.pattern.permute.xlu0 0
      %2299 = vperm.xlu0 %2298, %v1981
      %v2300 = vpop.permute.xlu0 %2299
      %v2302 = vsub.f32 %v755, %v2145
      %v2303 = vsub.f32 %v757, %v2145
      %v2304 = vsub.f32 %v948, %v2145
      %v2305 = vsub.f32 %v950, %v2145
      %v2306 = vsub.f32 %v759, %v2150
      %v2307 = vsub.f32 %v761, %v2150
      %v2308 = vsub.f32 %v952, %v2150
      %v2309 = vsub.f32 %v954, %v2150
      %v2310 = vsub.f32 %v765, %v2155
      %v2311 = vsub.f32 %v767, %v2155
      %v2312 = vsub.f32 %v958, %v2155
      %v2313 = vsub.f32 %v960, %v2155
      %v2314 = vsub.f32 %v769, %v2160
      %v2315 = vsub.f32 %v771, %v2160
      %v2316 = vsub.f32 %v962, %v2160
      %v2317 = vsub.f32 %v964, %v2160
      %v2318 = vsub.f32 %v775, %v2165
      %v2319 = vsub.f32 %v777, %v2165
      %v2320 = vsub.f32 %v968, %v2165
      %v2321 = vsub.f32 %v970, %v2165
      %v2322 = vsub.f32 %v779, %v2170
      %v2323 = vsub.f32 %v781, %v2170
      %v2324 = vsub.f32 %v972, %v2170
      %v2325 = vsub.f32 %v974, %v2170
      %v2326 = vsub.f32 %v785, %v2175
      %v2327 = vsub.f32 %v787, %v2175
      %v2328 = vsub.f32 %v978, %v2175
      %v2329 = vsub.f32 %v980, %v2175
      %v2330 = vsub.f32 %v789, %v2180
      %v2331 = vsub.f32 %v791, %v2180
      %v2332 = vsub.f32 %v982, %v2180
      %v2333 = vsub.f32 %v984, %v2180
      %v2334 = vsub.f32 %v795, %v2185
      %v2335 = vsub.f32 %v797, %v2185
      %v2336 = vsub.f32 %v988, %v2185
      %v2337 = vsub.f32 %v990, %v2185
      %v2338 = vsub.f32 %v799, %v2190
      %v2339 = vsub.f32 %v801, %v2190
      %v2340 = vsub.f32 %v992, %v2190
      %v2341 = vsub.f32 %v994, %v2190
      %v2342 = vsub.f32 %v805, %v2195
      %v2343 = vsub.f32 %v807, %v2195
      %v2344 = vsub.f32 %v998, %v2195
      %v2345 = vsub.f32 %v1000, %v2195
      %v2346 = vsub.f32 %v809, %v2200
      %v2347 = vsub.f32 %v811, %v2200
      %v2348 = vsub.f32 %v1002, %v2200
      %v2349 = vsub.f32 %v1004, %v2200
      %v2350 = vsub.f32 %v815, %v2205
      %v2351 = vsub.f32 %v817, %v2205
      %v2352 = vsub.f32 %v1008, %v2205
      %v2353 = vsub.f32 %v1010, %v2205
      %v2354 = vsub.f32 %v819, %v2210
      %v2355 = vsub.f32 %v821, %v2210
      %v2356 = vsub.f32 %v1012, %v2210
      %v2357 = vsub.f32 %v1014, %v2210
      %v2358 = vsub.f32 %v825, %v2215
      %v2359 = vsub.f32 %v827, %v2215
      %v2360 = vsub.f32 %v1018, %v2215
      %v2361 = vsub.f32 %v1020, %v2215
      %v2362 = vsub.f32 %v829, %v2220
      %v2363 = vsub.f32 %v831, %v2220
      %v2364 = vsub.f32 %v1022, %v2220
      %v2365 = vsub.f32 %v1024, %v2220
      %v2366 = vsub.f32 %v835, %v2225
      %v2367 = vsub.f32 %v837, %v2225
      %v2368 = vsub.f32 %v1028, %v2225
      %v2369 = vsub.f32 %v1030, %v2225
      %v2370 = vsub.f32 %v839, %v2230
      %v2371 = vsub.f32 %v841, %v2230
      %v2372 = vsub.f32 %v1032, %v2230
      %v2373 = vsub.f32 %v1034, %v2230
      %v2374 = vsub.f32 %v845, %v2235
      %v2375 = vsub.f32 %v847, %v2235
      %v2376 = vsub.f32 %v1038, %v2235
      %v2377 = vsub.f32 %v1040, %v2235
      %v2378 = vsub.f32 %v849, %v2240
      %v2379 = vsub.f32 %v851, %v2240
      %v2380 = vsub.f32 %v1042, %v2240
      %v2381 = vsub.f32 %v1044, %v2240
      %v2382 = vsub.f32 %v855, %v2245
      %v2383 = vsub.f32 %v857, %v2245
      %v2384 = vsub.f32 %v1048, %v2245
      %v2385 = vsub.f32 %v1050, %v2245
      %v2386 = vsub.f32 %v859, %v2250
      %v2387 = vsub.f32 %v861, %v2250
      %v2388 = vsub.f32 %v1052, %v2250
      %v2389 = vsub.f32 %v1054, %v2250
      %v2390 = vsub.f32 %v865, %v2255
      %v2391 = vsub.f32 %v867, %v2255
      %v2392 = vsub.f32 %v1058, %v2255
      %v2393 = vsub.f32 %v1060, %v2255
      %v2394 = vsub.f32 %v869, %v2260
      %v2395 = vsub.f32 %v871, %v2260
      %v2396 = vsub.f32 %v1062, %v2260
      %v2397 = vsub.f32 %v1064, %v2260
      %v2398 = vsub.f32 %v875, %v2265
      %v2399 = vsub.f32 %v877, %v2265
      %v2400 = vsub.f32 %v1068, %v2265
      %v2401 = vsub.f32 %v1070, %v2265
      %v2402 = vsub.f32 %v879, %v2270
      %v2403 = vsub.f32 %v881, %v2270
      %v2404 = vsub.f32 %v1072, %v2270
      %v2405 = vsub.f32 %v1074, %v2270
      %v2406 = vsub.f32 %v885, %v2275
      %v2407 = vsub.f32 %v887, %v2275
      %v2408 = vsub.f32 %v1078, %v2275
      %v2409 = vsub.f32 %v1080, %v2275
      %v2410 = vsub.f32 %v889, %v2280
      %v2411 = vsub.f32 %v891, %v2280
      %v2412 = vsub.f32 %v1082, %v2280
      %v2413 = vsub.f32 %v1084, %v2280
      %v2414 = vsub.f32 %v895, %v2285
      %v2415 = vsub.f32 %v897, %v2285
      %v2416 = vsub.f32 %v1088, %v2285
      %v2417 = vsub.f32 %v1090, %v2285
      %v2418 = vsub.f32 %v899, %v2290
      %v2419 = vsub.f32 %v901, %v2290
      %v2420 = vsub.f32 %v1092, %v2290
      %v2421 = vsub.f32 %v1094, %v2290
      %v2422 = vsub.f32 %v905, %v2295
      %v2423 = vsub.f32 %v907, %v2295
      %v2424 = vsub.f32 %v1098, %v2295
      %v2425 = vsub.f32 %v1100, %v2295
      %v2426 = vsub.f32 %v909, %v2300
      %v2427 = vsub.f32 %v911, %v2300
      %v2428 = vsub.f32 %v1102, %v2300
      %v2429 = vsub.f32 %v1104, %v2300
      %v2430 = vmul.f32 %v2302, 1.442695
      %v2431 = vpow.pop %v2430
      %v2432 = vmul.f32 %v2303, 1.442695
      %v2433 = vpow.pop %v2432
      %v2434 = vmul.f32 %v2304, 1.442695
      %v2435 = vpow.pop %v2434
      %v2436 = vmul.f32 %v2305, 1.442695
      %v2437 = vpow.pop %v2436
      %v2438 = vmul.f32 %v2306, 1.442695
      %v2439 = vpow.pop %v2438
      %v2440 = vmul.f32 %v2307, 1.442695
      %v2441 = vpow.pop %v2440
      %v2442 = vmul.f32 %v2308, 1.442695
      %v2443 = vpow.pop %v2442
      %v2444 = vmul.f32 %v2309, 1.442695
      %v2445 = vpow.pop %v2444
      %v2446 = vmul.f32 %v2310, 1.442695
      %v2447 = vpow.pop %v2446
      %v2448 = vmul.f32 %v2311, 1.442695
      %v2449 = vpow.pop %v2448
      %v2450 = vmul.f32 %v2312, 1.442695
      %v2451 = vpow.pop %v2450
      %v2452 = vmul.f32 %v2313, 1.442695
      %v2453 = vpow.pop %v2452
      %v2454 = vmul.f32 %v2314, 1.442695
      %v2455 = vpow.pop %v2454
      %v2456 = vmul.f32 %v2315, 1.442695
      %v2457 = vpow.pop %v2456
      %v2458 = vmul.f32 %v2316, 1.442695
      %v2459 = vpow.pop %v2458
      %v2460 = vmul.f32 %v2317, 1.442695
      %v2461 = vpow.pop %v2460
      %v2462 = vmul.f32 %v2318, 1.442695
      %v2463 = vpow.pop %v2462
      %v2464 = vmul.f32 %v2319, 1.442695
      %v2465 = vpow.pop %v2464
      %v2466 = vmul.f32 %v2320, 1.442695
      %v2467 = vpow.pop %v2466
      %v2468 = vmul.f32 %v2321, 1.442695
      %v2469 = vpow.pop %v2468
      %v2470 = vmul.f32 %v2322, 1.442695
      %v2471 = vpow.pop %v2470
      %v2472 = vmul.f32 %v2323, 1.442695
      %v2473 = vpow.pop %v2472
      %v2474 = vmul.f32 %v2324, 1.442695
      %v2475 = vpow.pop %v2474
      %v2476 = vmul.f32 %v2325, 1.442695
      %v2477 = vpow.pop %v2476
      %v2478 = vmul.f32 %v2326, 1.442695
      %v2479 = vpow.pop %v2478
      %v2480 = vmul.f32 %v2327, 1.442695
      %v2481 = vpow.pop %v2480
      %v2482 = vmul.f32 %v2328, 1.442695
      %v2483 = vpow.pop %v2482
      %v2484 = vmul.f32 %v2329, 1.442695
      %v2485 = vpow.pop %v2484
      %v2486 = vmul.f32 %v2330, 1.442695
      %v2487 = vpow.pop %v2486
      %v2488 = vmul.f32 %v2331, 1.442695
      %v2489 = vpow.pop %v2488
      %v2490 = vmul.f32 %v2332, 1.442695
      %v2491 = vpow.pop %v2490
      %v2492 = vmul.f32 %v2333, 1.442695
      %v2493 = vpow.pop %v2492
      %v2494 = vmul.f32 %v2334, 1.442695
      %v2495 = vpow.pop %v2494
      %v2496 = vmul.f32 %v2335, 1.442695
      %v2497 = vpow.pop %v2496
      %v2498 = vmul.f32 %v2336, 1.442695
      %v2499 = vpow.pop %v2498
      %v2500 = vmul.f32 %v2337, 1.442695
      %v2501 = vpow.pop %v2500
      %v2502 = vmul.f32 %v2338, 1.442695
      %v2503 = vpow.pop %v2502
      %v2504 = vmul.f32 %v2339, 1.442695
      %v2505 = vpow.pop %v2504
      %v2506 = vmul.f32 %v2340, 1.442695
      %v2507 = vpow.pop %v2506
      %v2508 = vmul.f32 %v2341, 1.442695
      %v2509 = vpow.pop %v2508
      %v2510 = vmul.f32 %v2342, 1.442695
      %v2511 = vpow.pop %v2510
      %v2512 = vmul.f32 %v2343, 1.442695
      %v2513 = vpow.pop %v2512
      %v2514 = vmul.f32 %v2344, 1.442695
      %v2515 = vpow.pop %v2514
      %v2516 = vmul.f32 %v2345, 1.442695
      %v2517 = vpow.pop %v2516
      %v2518 = vmul.f32 %v2346, 1.442695
      %v2519 = vpow.pop %v2518
      %v2520 = vmul.f32 %v2347, 1.442695
      %v2521 = vpow.pop %v2520
      %v2522 = vmul.f32 %v2348, 1.442695
      %v2523 = vpow.pop %v2522
      %v2524 = vmul.f32 %v2349, 1.442695
      %v2525 = vpow.pop %v2524
      %v2526 = vmul.f32 %v2350, 1.442695
      %v2527 = vpow.pop %v2526
      %v2528 = vmul.f32 %v2351, 1.442695
      %v2529 = vpow.pop %v2528
      %v2530 = vmul.f32 %v2352, 1.442695
      %v2531 = vpow.pop %v2530
      %v2532 = vmul.f32 %v2353, 1.442695
      %v2533 = vpow.pop %v2532
      %v2534 = vmul.f32 %v2354, 1.442695
      %v2535 = vpow.pop %v2534
      %v2536 = vmul.f32 %v2355, 1.442695
      %v2537 = vpow.pop %v2536
      %v2538 = vmul.f32 %v2356, 1.442695
      %v2539 = vpow.pop %v2538
      %v2540 = vmul.f32 %v2357, 1.442695
      %v2541 = vpow.pop %v2540
      %v2542 = vmul.f32 %v2358, 1.442695
      %v2543 = vpow.pop %v2542
      %v2544 = vmul.f32 %v2359, 1.442695
      %v2545 = vpow.pop %v2544
      %v2546 = vmul.f32 %v2360, 1.442695
      %v2547 = vpow.pop %v2546
      %v2548 = vmul.f32 %v2361, 1.442695
      %v2549 = vpow.pop %v2548
      %v2550 = vmul.f32 %v2362, 1.442695
      %v2551 = vpow.pop %v2550
      %v2552 = vmul.f32 %v2363, 1.442695
      %v2553 = vpow.pop %v2552
      %v2554 = vmul.f32 %v2364, 1.442695
      %v2555 = vpow.pop %v2554
      %v2556 = vmul.f32 %v2365, 1.442695
      %v2557 = vpow.pop %v2556
      %v2558 = vmul.f32 %v2366, 1.442695
      %v2559 = vpow.pop %v2558
      %v2560 = vmul.f32 %v2367, 1.442695
      %v2561 = vpow.pop %v2560
      %v2562 = vmul.f32 %v2368, 1.442695
      %v2563 = vpow.pop %v2562
      %v2564 = vmul.f32 %v2369, 1.442695
      %v2565 = vpow.pop %v2564
      %v2566 = vmul.f32 %v2370, 1.442695
      %v2567 = vpow.pop %v2566
      %v2568 = vmul.f32 %v2371, 1.442695
      %v2569 = vpow.pop %v2568
      %v2570 = vmul.f32 %v2372, 1.442695
      %v2571 = vpow.pop %v2570
      %v2572 = vmul.f32 %v2373, 1.442695
      %v2573 = vpow.pop %v2572
      %v2574 = vmul.f32 %v2374, 1.442695
      %v2575 = vpow.pop %v2574
      %v2576 = vmul.f32 %v2375, 1.442695
      %v2577 = vpow.pop %v2576
      %v2578 = vmul.f32 %v2376, 1.442695
      %v2579 = vpow.pop %v2578
      %v2580 = vmul.f32 %v2377, 1.442695
      %v2581 = vpow.pop %v2580
      %v2582 = vmul.f32 %v2378, 1.442695
      %v2583 = vpow.pop %v2582
      %v2584 = vmul.f32 %v2379, 1.442695
      %v2585 = vpow.pop %v2584
      %v2586 = vmul.f32 %v2380, 1.442695
      %v2587 = vpow.pop %v2586
      %v2588 = vmul.f32 %v2381, 1.442695
      %v2589 = vpow.pop %v2588
      %v2590 = vmul.f32 %v2382, 1.442695
      %v2591 = vpow.pop %v2590
      %v2592 = vmul.f32 %v2383, 1.442695
      %v2593 = vpow.pop %v2592
      %v2594 = vmul.f32 %v2384, 1.442695
      %v2595 = vpow.pop %v2594
      %v2596 = vmul.f32 %v2385, 1.442695
      %v2597 = vpow.pop %v2596
      %v2598 = vmul.f32 %v2386, 1.442695
      %v2599 = vpow.pop %v2598
      %v2600 = vmul.f32 %v2387, 1.442695
      %v2601 = vpow.pop %v2600
      %v2602 = vmul.f32 %v2388, 1.442695
      %v2603 = vpow.pop %v2602
      %v2604 = vmul.f32 %v2389, 1.442695
      %v2605 = vpow.pop %v2604
      %v2606 = vmul.f32 %v2390, 1.442695
      %v2607 = vpow.pop %v2606
      %v2608 = vmul.f32 %v2391, 1.442695
      %v2609 = vpow.pop %v2608
      %v2610 = vmul.f32 %v2392, 1.442695
      %v2611 = vpow.pop %v2610
      %v2612 = vmul.f32 %v2393, 1.442695
      %v2613 = vpow.pop %v2612
      %v2614 = vmul.f32 %v2394, 1.442695
      %v2615 = vpow.pop %v2614
      %v2616 = vmul.f32 %v2395, 1.442695
      %v2617 = vpow.pop %v2616
      %v2618 = vmul.f32 %v2396, 1.442695
      %v2619 = vpow.pop %v2618
      %v2620 = vmul.f32 %v2397, 1.442695
      %v2621 = vpow.pop %v2620
      %v2622 = vmul.f32 %v2398, 1.442695
      %v2623 = vpow.pop %v2622
      %v2624 = vmul.f32 %v2399, 1.442695
      %v2625 = vpow.pop %v2624
      %v2626 = vmul.f32 %v2400, 1.442695
      %v2627 = vpow.pop %v2626
      %v2628 = vmul.f32 %v2401, 1.442695
      %v2629 = vpow.pop %v2628
      %v2630 = vmul.f32 %v2402, 1.442695
      %v2631 = vpow.pop %v2630
      %v2632 = vmul.f32 %v2403, 1.442695
      %v2633 = vpow.pop %v2632
      %v2634 = vmul.f32 %v2404, 1.442695
      %v2635 = vpow.pop %v2634
      %v2636 = vmul.f32 %v2405, 1.442695
      %v2637 = vpow.pop %v2636
      %v2638 = vmul.f32 %v2406, 1.442695
      %v2639 = vpow.pop %v2638
      %v2640 = vmul.f32 %v2407, 1.442695
      %v2641 = vpow.pop %v2640
      %v2642 = vmul.f32 %v2408, 1.442695
      %v2643 = vpow.pop %v2642
      %v2644 = vmul.f32 %v2409, 1.442695
      %v2645 = vpow.pop %v2644
      %v2646 = vmul.f32 %v2410, 1.442695
      %v2647 = vpow.pop %v2646
      %v2648 = vmul.f32 %v2411, 1.442695
      %v2649 = vpow.pop %v2648
      %v2650 = vmul.f32 %v2412, 1.442695
      %v2651 = vpow.pop %v2650
      %v2652 = vmul.f32 %v2413, 1.442695
      %v2653 = vpow.pop %v2652
      %v2654 = vmul.f32 %v2414, 1.442695
      %v2655 = vpow.pop %v2654
      %v2656 = vmul.f32 %v2415, 1.442695
      %v2657 = vpow.pop %v2656
      %v2658 = vmul.f32 %v2416, 1.442695
      %v2659 = vpow.pop %v2658
      %v2660 = vmul.f32 %v2417, 1.442695
      %v2661 = vpow.pop %v2660
      %v2662 = vmul.f32 %v2418, 1.442695
      %v2663 = vpow.pop %v2662
      %v2664 = vmul.f32 %v2419, 1.442695
      %v2665 = vpow.pop %v2664
      %v2666 = vmul.f32 %v2420, 1.442695
      %v2667 = vpow.pop %v2666
      %v2668 = vmul.f32 %v2421, 1.442695
      %v2669 = vpow.pop %v2668
      %v2670 = vmul.f32 %v2422, 1.442695
      %v2671 = vpow.pop %v2670
      %v2672 = vmul.f32 %v2423, 1.442695
      %v2673 = vpow.pop %v2672
      %v2674 = vmul.f32 %v2424, 1.442695
      %v2675 = vpow.pop %v2674
      %v2676 = vmul.f32 %v2425, 1.442695
      %v2677 = vpow.pop %v2676
      %v2678 = vmul.f32 %v2426, 1.442695
      %v2679 = vpow.pop %v2678
      %v2680 = vmul.f32 %v2427, 1.442695
      %v2681 = vpow.pop %v2680
      %v2682 = vmul.f32 %v2428, 1.442695
      %v2683 = vpow.pop %v2682
      %v2684 = vmul.f32 %v2429, 1.442695
      %v2685 = vpow.pop %v2684
      %v2686 = vadd.f32 %v2431, %v2433
      %v2687 = vadd.f32 %v2686, %v2435
      %v2688 = vadd.f32 %v2687, %v2437
      %2689 = vadd.xlane.f32.xlu0 %v2688
      %v2690 = vpop.xlane.xlu0 %2689
      %v2691 = vadd.f32 %v2439, %v2441
      %v2692 = vadd.f32 %v2691, %v2443
      %v2693 = vadd.f32 %v2692, %v2445
      %2694 = vadd.xlane.f32.xlu0 %v2693
      %v2695 = vpop.xlane.xlu0 %2694
      %v2696 = vadd.f32 %v2447, %v2449
      %v2697 = vadd.f32 %v2696, %v2451
      %v2698 = vadd.f32 %v2697, %v2453
      %2699 = vadd.xlane.f32.xlu0 %v2698
      %v2700 = vpop.xlane.xlu0 %2699
      %v2701 = vadd.f32 %v2455, %v2457
      %v2702 = vadd.f32 %v2701, %v2459
      %v2703 = vadd.f32 %v2702, %v2461
      %2704 = vadd.xlane.f32.xlu0 %v2703
      %v2705 = vpop.xlane.xlu0 %2704
      %v2706 = vadd.f32 %v2463, %v2465
      %v2707 = vadd.f32 %v2706, %v2467
      %v2708 = vadd.f32 %v2707, %v2469
      %2709 = vadd.xlane.f32.xlu0 %v2708
      %v2710 = vpop.xlane.xlu0 %2709
      %v2711 = vadd.f32 %v2471, %v2473
      %v2712 = vadd.f32 %v2711, %v2475
      %v2713 = vadd.f32 %v2712, %v2477
      %2714 = vadd.xlane.f32.xlu0 %v2713
      %v2715 = vpop.xlane.xlu0 %2714
      %v2716 = vadd.f32 %v2479, %v2481
      %v2717 = vadd.f32 %v2716, %v2483
      %v2718 = vadd.f32 %v2717, %v2485
      %2719 = vadd.xlane.f32.xlu0 %v2718
      %v2720 = vpop.xlane.xlu0 %2719
      %v2721 = vadd.f32 %v2487, %v2489
      %v2722 = vadd.f32 %v2721, %v2491
      %v2723 = vadd.f32 %v2722, %v2493
      %2724 = vadd.xlane.f32.xlu0 %v2723
      %v2725 = vpop.xlane.xlu0 %2724
      %v2726 = vadd.f32 %v2495, %v2497
      %v2727 = vadd.f32 %v2726, %v2499
      %v2728 = vadd.f32 %v2727, %v2501
      %2729 = vadd.xlane.f32.xlu0 %v2728
      %v2730 = vpop.xlane.xlu0 %2729
      %v2731 = vadd.f32 %v2503, %v2505
      %v2732 = vadd.f32 %v2731, %v2507
      %v2733 = vadd.f32 %v2732, %v2509
      %2734 = vadd.xlane.f32.xlu0 %v2733
      %v2735 = vpop.xlane.xlu0 %2734
      %v2736 = vadd.f32 %v2511, %v2513
      %v2737 = vadd.f32 %v2736, %v2515
      %v2738 = vadd.f32 %v2737, %v2517
      %2739 = vadd.xlane.f32.xlu0 %v2738
      %v2740 = vpop.xlane.xlu0 %2739
      %v2741 = vadd.f32 %v2519, %v2521
      %v2742 = vadd.f32 %v2741, %v2523
      %v2743 = vadd.f32 %v2742, %v2525
      %2744 = vadd.xlane.f32.xlu0 %v2743
      %v2745 = vpop.xlane.xlu0 %2744
      %v2746 = vadd.f32 %v2527, %v2529
      %v2747 = vadd.f32 %v2746, %v2531
      %v2748 = vadd.f32 %v2747, %v2533
      %2749 = vadd.xlane.f32.xlu0 %v2748
      %v2750 = vpop.xlane.xlu0 %2749
      %v2751 = vadd.f32 %v2535, %v2537
      %v2752 = vadd.f32 %v2751, %v2539
      %v2753 = vadd.f32 %v2752, %v2541
      %2754 = vadd.xlane.f32.xlu0 %v2753
      %v2755 = vpop.xlane.xlu0 %2754
      %v2756 = vadd.f32 %v2543, %v2545
      %v2757 = vadd.f32 %v2756, %v2547
      %v2758 = vadd.f32 %v2757, %v2549
      %2759 = vadd.xlane.f32.xlu0 %v2758
      %v2760 = vpop.xlane.xlu0 %2759
      %v2761 = vadd.f32 %v2551, %v2553
      %v2762 = vadd.f32 %v2761, %v2555
      %v2763 = vadd.f32 %v2762, %v2557
      %2764 = vadd.xlane.f32.xlu0 %v2763
      %v2765 = vpop.xlane.xlu0 %2764
      %v2766 = vadd.f32 %v2559, %v2561
      %v2767 = vadd.f32 %v2766, %v2563
      %v2768 = vadd.f32 %v2767, %v2565
      %2769 = vadd.xlane.f32.xlu0 %v2768
      %v2770 = vpop.xlane.xlu0 %2769
      %v2771 = vadd.f32 %v2567, %v2569
      %v2772 = vadd.f32 %v2771, %v2571
      %v2773 = vadd.f32 %v2772, %v2573
      %2774 = vadd.xlane.f32.xlu0 %v2773
      %v2775 = vpop.xlane.xlu0 %2774
      %v2776 = vadd.f32 %v2575, %v2577
      %v2777 = vadd.f32 %v2776, %v2579
      %v2778 = vadd.f32 %v2777, %v2581
      %2779 = vadd.xlane.f32.xlu0 %v2778
      %v2780 = vpop.xlane.xlu0 %2779
      %v2781 = vadd.f32 %v2583, %v2585
      %v2782 = vadd.f32 %v2781, %v2587
      %v2783 = vadd.f32 %v2782, %v2589
      %2784 = vadd.xlane.f32.xlu0 %v2783
      %v2785 = vpop.xlane.xlu0 %2784
      %v2786 = vadd.f32 %v2591, %v2593
      %v2787 = vadd.f32 %v2786, %v2595
      %v2788 = vadd.f32 %v2787, %v2597
      %2789 = vadd.xlane.f32.xlu0 %v2788
      %v2790 = vpop.xlane.xlu0 %2789
      %v2791 = vadd.f32 %v2599, %v2601
      %v2792 = vadd.f32 %v2791, %v2603
      %v2793 = vadd.f32 %v2792, %v2605
      %2794 = vadd.xlane.f32.xlu0 %v2793
      %v2795 = vpop.xlane.xlu0 %2794
      %v2796 = vadd.f32 %v2607, %v2609
      %v2797 = vadd.f32 %v2796, %v2611
      %v2798 = vadd.f32 %v2797, %v2613
      %2799 = vadd.xlane.f32.xlu0 %v2798
      %v2800 = vpop.xlane.xlu0 %2799
      %v2801 = vadd.f32 %v2615, %v2617
      %v2802 = vadd.f32 %v2801, %v2619
      %v2803 = vadd.f32 %v2802, %v2621
      %2804 = vadd.xlane.f32.xlu0 %v2803
      %v2805 = vpop.xlane.xlu0 %2804
      %v2806 = vadd.f32 %v2623, %v2625
      %v2807 = vadd.f32 %v2806, %v2627
      %v2808 = vadd.f32 %v2807, %v2629
      %2809 = vadd.xlane.f32.xlu0 %v2808
      %v2810 = vpop.xlane.xlu0 %2809
      %v2811 = vadd.f32 %v2631, %v2633
      %v2812 = vadd.f32 %v2811, %v2635
      %v2813 = vadd.f32 %v2812, %v2637
      %2814 = vadd.xlane.f32.xlu0 %v2813
      %v2815 = vpop.xlane.xlu0 %2814
      %v2816 = vadd.f32 %v2639, %v2641
      %v2817 = vadd.f32 %v2816, %v2643
      %v2818 = vadd.f32 %v2817, %v2645
      %2819 = vadd.xlane.f32.xlu0 %v2818
      %v2820 = vpop.xlane.xlu0 %2819
      %v2821 = vadd.f32 %v2647, %v2649
      %v2822 = vadd.f32 %v2821, %v2651
      %v2823 = vadd.f32 %v2822, %v2653
      %2824 = vadd.xlane.f32.xlu0 %v2823
      %v2825 = vpop.xlane.xlu0 %2824
      %v2826 = vadd.f32 %v2655, %v2657
      %v2827 = vadd.f32 %v2826, %v2659
      %v2828 = vadd.f32 %v2827, %v2661
      %2829 = vadd.xlane.f32.xlu0 %v2828
      %v2830 = vpop.xlane.xlu0 %2829
      %v2831 = vadd.f32 %v2663, %v2665
      %v2832 = vadd.f32 %v2831, %v2667
      %v2833 = vadd.f32 %v2832, %v2669
      %2834 = vadd.xlane.f32.xlu0 %v2833
      %v2835 = vpop.xlane.xlu0 %2834
      %v2836 = vadd.f32 %v2671, %v2673
      %v2837 = vadd.f32 %v2836, %v2675
      %v2838 = vadd.f32 %v2837, %v2677
      %2839 = vadd.xlane.f32.xlu0 %v2838
      %v2840 = vpop.xlane.xlu0 %2839
      %v2841 = vadd.f32 %v2679, %v2681
      %v2842 = vadd.f32 %v2841, %v2683
      %v2843 = vadd.f32 %v2842, %v2685
      %2844 = vadd.xlane.f32.xlu0 %v2843
      %v2845 = vpop.xlane.xlu0 %2844
      %v2846 = vadd.f32 %v2110, %v2690
      %v2847 = vadd.f32 %v2111, %v2695
      %v2848 = vadd.f32 %v2112, %v2700
      %v2849 = vadd.f32 %v2113, %v2705
      %v2850 = vadd.f32 %v2114, %v2710
      %v2851 = vadd.f32 %v2115, %v2715
      %v2852 = vadd.f32 %v2116, %v2720
      %v2853 = vadd.f32 %v2117, %v2725
      %v2854 = vadd.f32 %v2118, %v2730
      %v2855 = vadd.f32 %v2119, %v2735
      %v2856 = vadd.f32 %v2120, %v2740
      %v2857 = vadd.f32 %v2121, %v2745
      %v2858 = vadd.f32 %v2122, %v2750
      %v2859 = vadd.f32 %v2123, %v2755
      %v2860 = vadd.f32 %v2124, %v2760
      %v2861 = vadd.f32 %v2125, %v2765
      %v2862 = vadd.f32 %v2126, %v2770
      %v2863 = vadd.f32 %v2127, %v2775
      %v2864 = vadd.f32 %v2128, %v2780
      %v2865 = vadd.f32 %v2129, %v2785
      %v2866 = vadd.f32 %v2130, %v2790
      %v2867 = vadd.f32 %v2131, %v2795
      %v2868 = vadd.f32 %v2132, %v2800
      %v2869 = vadd.f32 %v2133, %v2805
      %v2870 = vadd.f32 %v2134, %v2810
      %v2871 = vadd.f32 %v2135, %v2815
      %v2872 = vadd.f32 %v2136, %v2820
      %v2873 = vadd.f32 %v2137, %v2825
      %v2874 = vadd.f32 %v2138, %v2830
      %v2875 = vadd.f32 %v2139, %v2835
      %v2876 = vadd.f32 %v2140, %v2840
      %v2877 = vadd.f32 %v2141, %v2845
      %2878 = vst.msk [vmem:[#allocation3] sm:$0xff] %vm1725, %v2846
      %2879 = vst.msk [vmem:[#allocation3 + $0x8] sm:$0xff] %vm1725, %v2847
      %2880 = vst.msk [vmem:[#allocation3 + $0x10] sm:$0xff] %vm1725, %v2848
      %2881 = vst.msk [vmem:[#allocation3 + $0x18] sm:$0xff] %vm1725, %v2849
      %2882 = vst.msk [vmem:[#allocation3 + $0x20] sm:$0xff] %vm1725, %v2850
      %2883 = vst.msk [vmem:[#allocation3 + $0x28] sm:$0xff] %vm1725, %v2851
      %2884 = vst.msk [vmem:[#allocation3 + $0x30] sm:$0xff] %vm1725, %v2852
      %2885 = vst.msk [vmem:[#allocation3 + $0x38] sm:$0xff] %vm1725, %v2853
      %2886 = vst.msk [vmem:[#allocation3 + $0x40] sm:$0xff] %vm1725, %v2854
      %2887 = vst.msk [vmem:[#allocation3 + $0x48] sm:$0xff] %vm1725, %v2855
      %2888 = vst.msk [vmem:[#allocation3 + $0x50] sm:$0xff] %vm1725, %v2856
      %2889 = vst.msk [vmem:[#allocation3 + $0x58] sm:$0xff] %vm1725, %v2857
      %2890 = vst.msk [vmem:[#allocation3 + $0x60] sm:$0xff] %vm1725, %v2858
      %2891 = vst.msk [vmem:[#allocation3 + $0x68] sm:$0xff] %vm1725, %v2859
      %2892 = vst.msk [vmem:[#allocation3 + $0x70] sm:$0xff] %vm1725, %v2860
      %2893 = vst.msk [vmem:[#allocation3 + $0x78] sm:$0xff] %vm1725, %v2861
      %2894 = vst.msk [vmem:[#allocation3 + $0x80] sm:$0xff] %vm1725, %v2862
      %2895 = vst.msk [vmem:[#allocation3 + $0x88] sm:$0xff] %vm1725, %v2863
      %2896 = vst.msk [vmem:[#allocation3 + $0x90] sm:$0xff] %vm1725, %v2864
      %2897 = vst.msk [vmem:[#allocation3 + $0x98] sm:$0xff] %vm1725, %v2865
      %2898 = vst.msk [vmem:[#allocation3 + $0xa0] sm:$0xff] %vm1725, %v2866
      %2899 = vst.msk [vmem:[#allocation3 + $0xa8] sm:$0xff] %vm1725, %v2867
      %2900 = vst.msk [vmem:[#allocation3 + $0xb0] sm:$0xff] %vm1725, %v2868
      %2901 = vst.msk [vmem:[#allocation3 + $0xb8] sm:$0xff] %vm1725, %v2869
      %2902 = vst.msk [vmem:[#allocation3 + $0xc0] sm:$0xff] %vm1725, %v2870
      %2903 = vst.msk [vmem:[#allocation3 + $0xc8] sm:$0xff] %vm1725, %v2871
      %2904 = vst.msk [vmem:[#allocation3 + $0xd0] sm:$0xff] %vm1725, %v2872
      %2905 = vst.msk [vmem:[#allocation3 + $0xd8] sm:$0xff] %vm1725, %v2873
      %2906 = vst.msk [vmem:[#allocation3 + $0xe0] sm:$0xff] %vm1725, %v2874
      %2907 = vst.msk [vmem:[#allocation3 + $0xe8] sm:$0xff] %vm1725, %v2875
      %2908 = vst.msk [vmem:[#allocation3 + $0xf0] sm:$0xff] %vm1725, %v2876
      %2909 = vst.msk [vmem:[#allocation3 + $0xf8] sm:$0xff] %vm1725, %v2877
      %2910 = vst.msk [vmem:[#allocation2] sm:$0xff] %vm1725, %v1950
      %2911 = vst.msk [vmem:[#allocation2 + $0x8] sm:$0xff] %vm1725, %v1951
      %2912 = vst.msk [vmem:[#allocation2 + $0x10] sm:$0xff] %vm1725, %v1952
      %2913 = vst.msk [vmem:[#allocation2 + $0x18] sm:$0xff] %vm1725, %v1953
      %2914 = vst.msk [vmem:[#allocation2 + $0x20] sm:$0xff] %vm1725, %v1954
      %2915 = vst.msk [vmem:[#allocation2 + $0x28] sm:$0xff] %vm1725, %v1955
      %2916 = vst.msk [vmem:[#allocation2 + $0x30] sm:$0xff] %vm1725, %v1956
      %2917 = vst.msk [vmem:[#allocation2 + $0x38] sm:$0xff] %vm1725, %v1957
      %2918 = vst.msk [vmem:[#allocation2 + $0x40] sm:$0xff] %vm1725, %v1958
      %2919 = vst.msk [vmem:[#allocation2 + $0x48] sm:$0xff] %vm1725, %v1959
      %2920 = vst.msk [vmem:[#allocation2 + $0x50] sm:$0xff] %vm1725, %v1960
      %2921 = vst.msk [vmem:[#allocation2 + $0x58] sm:$0xff] %vm1725, %v1961
      %2922 = vst.msk [vmem:[#allocation2 + $0x60] sm:$0xff] %vm1725, %v1962
      %2923 = vst.msk [vmem:[#allocation2 + $0x68] sm:$0xff] %vm1725, %v1963
      %2924 = vst.msk [vmem:[#allocation2 + $0x70] sm:$0xff] %vm1725, %v1964
      %2925 = vst.msk [vmem:[#allocation2 + $0x78] sm:$0xff] %vm1725, %v1965
      %2926 = vst.msk [vmem:[#allocation2 + $0x80] sm:$0xff] %vm1725, %v1966
      %2927 = vst.msk [vmem:[#allocation2 + $0x88] sm:$0xff] %vm1725, %v1967
      %2928 = vst.msk [vmem:[#allocation2 + $0x90] sm:$0xff] %vm1725, %v1968
      %2929 = vst.msk [vmem:[#allocation2 + $0x98] sm:$0xff] %vm1725, %v1969
      %2930 = vst.msk [vmem:[#allocation2 + $0xa0] sm:$0xff] %vm1725, %v1970
      %2931 = vst.msk [vmem:[#allocation2 + $0xa8] sm:$0xff] %vm1725, %v1971
      %2932 = vst.msk [vmem:[#allocation2 + $0xb0] sm:$0xff] %vm1725, %v1972
      %2933 = vst.msk [vmem:[#allocation2 + $0xb8] sm:$0xff] %vm1725, %v1973
      %2934 = vst.msk [vmem:[#allocation2 + $0xc0] sm:$0xff] %vm1725, %v1974
      %2935 = vst.msk [vmem:[#allocation2 + $0xc8] sm:$0xff] %vm1725, %v1975
      %2936 = vst.msk [vmem:[#allocation2 + $0xd0] sm:$0xff] %vm1725, %v1976
      %2937 = vst.msk [vmem:[#allocation2 + $0xd8] sm:$0xff] %vm1725, %v1977
      %2938 = vst.msk [vmem:[#allocation2 + $0xe0] sm:$0xff] %vm1725, %v1978
      %2939 = vst.msk [vmem:[#allocation2 + $0xe8] sm:$0xff] %vm1725, %v1979
      %2940 = vst.msk [vmem:[#allocation2 + $0xf0] sm:$0xff] %vm1725, %v1980
      %2941 = vst.msk [vmem:[#allocation2 + $0xf8] sm:$0xff] %vm1725, %v1981
      // Predicated region
      $region41: #{cp_forward.4} parent=35 // pred_check
        %p2942 = pneg %p277
      $region42: #{cp_forward.4} parent=35 // pred_check_branch
        %2944 = sbr.rel (%p2942) target = $region44
      $region43: #{cp_forward.4} parent=35 // pred_region
        %v2945 = vld [vmem:[#allocation2] sm:$0xff]
        %v2946 = vld [vmem:[#allocation2 + $0x8] sm:$0xff]
        %v2947 = vld [vmem:[#allocation2 + $0x10] sm:$0xff]
        %v2948 = vld [vmem:[#allocation2 + $0x18] sm:$0xff]
        %v2949 = vld [vmem:[#allocation2 + $0x20] sm:$0xff]
        %v2950 = vld [vmem:[#allocation2 + $0x28] sm:$0xff]
        %v2951 = vld [vmem:[#allocation2 + $0x30] sm:$0xff]
        %v2952 = vld [vmem:[#allocation2 + $0x38] sm:$0xff]
        %v2953 = vld [vmem:[#allocation2 + $0x40] sm:$0xff]
        %v2954 = vld [vmem:[#allocation2 + $0x48] sm:$0xff]
        %v2955 = vld [vmem:[#allocation2 + $0x50] sm:$0xff]
        %v2956 = vld [vmem:[#allocation2 + $0x58] sm:$0xff]
        %v2957 = vld [vmem:[#allocation2 + $0x60] sm:$0xff]
        %v2958 = vld [vmem:[#allocation2 + $0x68] sm:$0xff]
        %v2959 = vld [vmem:[#allocation2 + $0x70] sm:$0xff]
        %v2960 = vld [vmem:[#allocation2 + $0x78] sm:$0xff]
        %v2961 = vld [vmem:[#allocation2 + $0x80] sm:$0xff]
        %v2962 = vld [vmem:[#allocation2 + $0x88] sm:$0xff]
        %v2963 = vld [vmem:[#allocation2 + $0x90] sm:$0xff]
        %v2964 = vld [vmem:[#allocation2 + $0x98] sm:$0xff]
        %v2965 = vld [vmem:[#allocation2 + $0xa0] sm:$0xff]
        %v2966 = vld [vmem:[#allocation2 + $0xa8] sm:$0xff]
        %v2967 = vld [vmem:[#allocation2 + $0xb0] sm:$0xff]
        %v2968 = vld [vmem:[#allocation2 + $0xb8] sm:$0xff]
        %v2969 = vld [vmem:[#allocation2 + $0xc0] sm:$0xff]
        %v2970 = vld [vmem:[#allocation2 + $0xc8] sm:$0xff]
        %v2971 = vld [vmem:[#allocation2 + $0xd0] sm:$0xff]
        %v2972 = vld [vmem:[#allocation2 + $0xd8] sm:$0xff]
        %v2973 = vld [vmem:[#allocation2 + $0xe0] sm:$0xff]
        %v2974 = vld [vmem:[#allocation2 + $0xe8] sm:$0xff]
        %v2975 = vld [vmem:[#allocation2 + $0xf0] sm:$0xff]
        %v2976 = vld [vmem:[#allocation2 + $0xf8] sm:$0xff]
        %v2977 = vld [vmem:[#allocation3] sm:$0xff]
        %v2978 = vld [vmem:[#allocation3 + $0x8] sm:$0xff]
        %v2979 = vld [vmem:[#allocation3 + $0x10] sm:$0xff]
        %v2980 = vld [vmem:[#allocation3 + $0x18] sm:$0xff]
        %v2981 = vld [vmem:[#allocation3 + $0x20] sm:$0xff]
        %v2982 = vld [vmem:[#allocation3 + $0x28] sm:$0xff]
        %v2983 = vld [vmem:[#allocation3 + $0x30] sm:$0xff]
        %v2984 = vld [vmem:[#allocation3 + $0x38] sm:$0xff]
        %v2985 = vld [vmem:[#allocation3 + $0x40] sm:$0xff]
        %v2986 = vld [vmem:[#allocation3 + $0x48] sm:$0xff]
        %v2987 = vld [vmem:[#allocation3 + $0x50] sm:$0xff]
        %v2988 = vld [vmem:[#allocation3 + $0x58] sm:$0xff]
        %v2989 = vld [vmem:[#allocation3 + $0x60] sm:$0xff]
        %v2990 = vld [vmem:[#allocation3 + $0x68] sm:$0xff]
        %v2991 = vld [vmem:[#allocation3 + $0x70] sm:$0xff]
        %v2992 = vld [vmem:[#allocation3 + $0x78] sm:$0xff]
        %v2993 = vld [vmem:[#allocation3 + $0x80] sm:$0xff]
        %v2994 = vld [vmem:[#allocation3 + $0x88] sm:$0xff]
        %v2995 = vld [vmem:[#allocation3 + $0x90] sm:$0xff]
        %v2996 = vld [vmem:[#allocation3 + $0x98] sm:$0xff]
        %v2997 = vld [vmem:[#allocation3 + $0xa0] sm:$0xff]
        %v2998 = vld [vmem:[#allocation3 + $0xa8] sm:$0xff]
        %v2999 = vld [vmem:[#allocation3 + $0xb0] sm:$0xff]
        %v3000 = vld [vmem:[#allocation3 + $0xb8] sm:$0xff]
        %v3001 = vld [vmem:[#allocation3 + $0xc0] sm:$0xff]
        %v3002 = vld [vmem:[#allocation3 + $0xc8] sm:$0xff]
        %v3003 = vld [vmem:[#allocation3 + $0xd0] sm:$0xff]
        %v3004 = vld [vmem:[#allocation3 + $0xd8] sm:$0xff]
        %v3005 = vld [vmem:[#allocation3 + $0xe0] sm:$0xff]
        %v3006 = vld [vmem:[#allocation3 + $0xe8] sm:$0xff]
        %v3007 = vld [vmem:[#allocation3 + $0xf0] sm:$0xff]
        %v3008 = vld [vmem:[#allocation3 + $0xf8] sm:$0xff]
        %v3009 = vlog2.pop %v2977
        %v3010 = vmul.f32 %v3009, 0.6931472
        %v3011 = vlog2.pop %v2978
        %v3012 = vmul.f32 %v3011, 0.6931472
        %v3013 = vlog2.pop %v2979
        %v3014 = vmul.f32 %v3013, 0.6931472
        %v3015 = vlog2.pop %v2980
        %v3016 = vmul.f32 %v3015, 0.6931472
        %v3017 = vlog2.pop %v2981
        %v3018 = vmul.f32 %v3017, 0.6931472
        %v3019 = vlog2.pop %v2982
        %v3020 = vmul.f32 %v3019, 0.6931472
        %v3021 = vlog2.pop %v2983
        %v3022 = vmul.f32 %v3021, 0.6931472
        %v3023 = vlog2.pop %v2984
        %v3024 = vmul.f32 %v3023, 0.6931472
        %v3025 = vlog2.pop %v2985
        %v3026 = vmul.f32 %v3025, 0.6931472
        %v3027 = vlog2.pop %v2986
        %v3028 = vmul.f32 %v3027, 0.6931472
        %v3029 = vlog2.pop %v2987
        %v3030 = vmul.f32 %v3029, 0.6931472
        %v3031 = vlog2.pop %v2988
        %v3032 = vmul.f32 %v3031, 0.6931472
        %v3033 = vlog2.pop %v2989
        %v3034 = vmul.f32 %v3033, 0.6931472
        %v3035 = vlog2.pop %v2990
        %v3036 = vmul.f32 %v3035, 0.6931472
        %v3037 = vlog2.pop %v2991
        %v3038 = vmul.f32 %v3037, 0.6931472
        %v3039 = vlog2.pop %v2992
        %v3040 = vmul.f32 %v3039, 0.6931472
        %v3041 = vlog2.pop %v2993
        %v3042 = vmul.f32 %v3041, 0.6931472
        %v3043 = vlog2.pop %v2994
        %v3044 = vmul.f32 %v3043, 0.6931472
        %v3045 = vlog2.pop %v2995
        %v3046 = vmul.f32 %v3045, 0.6931472
        %v3047 = vlog2.pop %v2996
        %v3048 = vmul.f32 %v3047, 0.6931472
        %v3049 = vlog2.pop %v2997
        %v3050 = vmul.f32 %v3049, 0.6931472
        %v3051 = vlog2.pop %v2998
        %v3052 = vmul.f32 %v3051, 0.6931472
        %v3053 = vlog2.pop %v2999
        %v3054 = vmul.f32 %v3053, 0.6931472
        %v3055 = vlog2.pop %v3000
        %v3056 = vmul.f32 %v3055, 0.6931472
        %v3057 = vlog2.pop %v3001
        %v3058 = vmul.f32 %v3057, 0.6931472
        %v3059 = vlog2.pop %v3002
        %v3060 = vmul.f32 %v3059, 0.6931472
        %v3061 = vlog2.pop %v3003
        %v3062 = vmul.f32 %v3061, 0.6931472
        %v3063 = vlog2.pop %v3004
        %v3064 = vmul.f32 %v3063, 0.6931472
        %v3065 = vlog2.pop %v3005
        %v3066 = vmul.f32 %v3065, 0.6931472
        %v3067 = vlog2.pop %v3006
        %v3068 = vmul.f32 %v3067, 0.6931472
        %v3069 = vlog2.pop %v3007
        %v3070 = vmul.f32 %v3069, 0.6931472
        %v3071 = vlog2.pop %v3008
        %v3072 = vmul.f32 %v3071, 0.6931472
        %v3073 = vadd.f32 %v2945, %v3010
        %v3074 = vadd.f32 %v2946, %v3012
        %v3075 = vadd.f32 %v2947, %v3014
        %v3076 = vadd.f32 %v2948, %v3016
        %v3077 = vadd.f32 %v2949, %v3018
        %v3078 = vadd.f32 %v2950, %v3020
        %v3079 = vadd.f32 %v2951, %v3022
        %v3080 = vadd.f32 %v2952, %v3024
        %v3081 = vadd.f32 %v2953, %v3026
        %v3082 = vadd.f32 %v2954, %v3028
        %v3083 = vadd.f32 %v2955, %v3030
        %v3084 = vadd.f32 %v2956, %v3032
        %v3085 = vadd.f32 %v2957, %v3034
        %v3086 = vadd.f32 %v2958, %v3036
        %v3087 = vadd.f32 %v2959, %v3038
        %v3088 = vadd.f32 %v2960, %v3040
        %v3089 = vadd.f32 %v2961, %v3042
        %v3090 = vadd.f32 %v2962, %v3044
        %v3091 = vadd.f32 %v2963, %v3046
        %v3092 = vadd.f32 %v2964, %v3048
        %v3093 = vadd.f32 %v2965, %v3050
        %v3094 = vadd.f32 %v2966, %v3052
        %v3095 = vadd.f32 %v2967, %v3054
        %v3096 = vadd.f32 %v2968, %v3056
        %v3097 = vadd.f32 %v2969, %v3058
        %v3098 = vadd.f32 %v2970, %v3060
        %v3099 = vadd.f32 %v2971, %v3062
        %v3100 = vadd.f32 %v2972, %v3064
        %v3101 = vadd.f32 %v2973, %v3066
        %v3102 = vadd.f32 %v2974, %v3068
        %v3103 = vadd.f32 %v2975, %v3070
        %v3104 = vadd.f32 %v2976, %v3072
        %vm3105 = vcmp.ne.s32.totalorder %v1106, 4294967196
        %vm3106 = vcmp.ne.s32.totalorder %v1107, 4294967196
        %vm3107 = vcmp.ne.s32.totalorder %v1108, 4294967196
        %vm3108 = vcmp.ne.s32.totalorder %v1109, 4294967196
        %vm3109 = vcmp.ne.s32.totalorder %v1110, 4294967196
        %vm3110 = vcmp.ne.s32.totalorder %v1111, 4294967196
        %vm3111 = vcmp.ne.s32.totalorder %v1112, 4294967196
        %vm3112 = vcmp.ne.s32.totalorder %v1113, 4294967196
        %vm3113 = vcmp.ne.s32.totalorder %v1114, 4294967196
        %vm3114 = vcmp.ne.s32.totalorder %v1115, 4294967196
        %vm3115 = vcmp.ne.s32.totalorder %v1116, 4294967196
        %vm3116 = vcmp.ne.s32.totalorder %v1117, 4294967196
        %vm3117 = vcmp.ne.s32.totalorder %v1118, 4294967196
        %vm3118 = vcmp.ne.s32.totalorder %v1119, 4294967196
        %vm3119 = vcmp.ne.s32.totalorder %v1120, 4294967196
        %vm3120 = vcmp.ne.s32.totalorder %v1121, 4294967196
        %vm3121 = vcmp.ne.s32.totalorder %v1122, 4294967196
        %vm3122 = vcmp.ne.s32.totalorder %v1123, 4294967196
        %vm3123 = vcmp.ne.s32.totalorder %v1124, 4294967196
        %vm3124 = vcmp.ne.s32.totalorder %v1125, 4294967196
        %vm3125 = vcmp.ne.s32.totalorder %v1126, 4294967196
        %vm3126 = vcmp.ne.s32.totalorder %v1127, 4294967196
        %vm3127 = vcmp.ne.s32.totalorder %v1128, 4294967196
        %vm3128 = vcmp.ne.s32.totalorder %v1129, 4294967196
        %vm3129 = vcmp.ne.s32.totalorder %v1130, 4294967196
        %vm3130 = vcmp.ne.s32.totalorder %v1131, 4294967196
        %vm3131 = vcmp.ne.s32.totalorder %v1132, 4294967196
        %vm3132 = vcmp.ne.s32.totalorder %v1133, 4294967196
        %vm3133 = vcmp.ne.s32.totalorder %v1134, 4294967196
        %vm3134 = vcmp.ne.s32.totalorder %v1135, 4294967196
        %vm3135 = vcmp.ne.s32.totalorder %v1136, 4294967196
        %vm3136 = vcmp.ne.s32.totalorder %v1137, 4294967196
        %v3137 = vsel %vm3105, 1, 0
        %v3138 = vsel %vm3106, 1, 0
        %v3139 = vsel %vm3107, 1, 0
        %v3140 = vsel %vm3108, 1, 0
        %v3141 = vsel %vm3109, 1, 0
        %v3142 = vsel %vm3110, 1, 0
        %v3143 = vsel %vm3111, 1, 0
        %v3144 = vsel %vm3112, 1, 0
        %v3145 = vsel %vm3113, 1, 0
        %v3146 = vsel %vm3114, 1, 0
        %v3147 = vsel %vm3115, 1, 0
        %v3148 = vsel %vm3116, 1, 0
        %v3149 = vsel %vm3117, 1, 0
        %v3150 = vsel %vm3118, 1, 0
        %v3151 = vsel %vm3119, 1, 0
        %v3152 = vsel %vm3120, 1, 0
        %v3153 = vsel %vm3121, 1, 0
        %v3154 = vsel %vm3122, 1, 0
        %v3155 = vsel %vm3123, 1, 0
        %v3156 = vsel %vm3124, 1, 0
        %v3157 = vsel %vm3125, 1, 0
        %v3158 = vsel %vm3126, 1, 0
        %v3159 = vsel %vm3127, 1, 0
        %v3160 = vsel %vm3128, 1, 0
        %v3161 = vsel %vm3129, 1, 0
        %v3162 = vsel %vm3130, 1, 0
        %v3163 = vsel %vm3131, 1, 0
        %v3164 = vsel %vm3132, 1, 0
        %v3165 = vsel %vm3133, 1, 0
        %v3166 = vsel %vm3134, 1, 0
        %v3167 = vsel %vm3135, 1, 0
        %v3168 = vsel %vm3136, 1, 0
        %v3169 = vcvt.s32.f32 %v3137
        %v3170 = vcvt.s32.f32 %v3138
        %v3171 = vcvt.s32.f32 %v3139
        %v3172 = vcvt.s32.f32 %v3140
        %v3173 = vcvt.s32.f32 %v3141
        %v3174 = vcvt.s32.f32 %v3142
        %v3175 = vcvt.s32.f32 %v3143
        %v3176 = vcvt.s32.f32 %v3144
        %v3177 = vcvt.s32.f32 %v3145
        %v3178 = vcvt.s32.f32 %v3146
        %v3179 = vcvt.s32.f32 %v3147
        %v3180 = vcvt.s32.f32 %v3148
        %v3181 = vcvt.s32.f32 %v3149
        %v3182 = vcvt.s32.f32 %v3150
        %v3183 = vcvt.s32.f32 %v3151
        %v3184 = vcvt.s32.f32 %v3152
        %v3185 = vcvt.s32.f32 %v3153
        %v3186 = vcvt.s32.f32 %v3154
        %v3187 = vcvt.s32.f32 %v3155
        %v3188 = vcvt.s32.f32 %v3156
        %v3189 = vcvt.s32.f32 %v3157
        %v3190 = vcvt.s32.f32 %v3158
        %v3191 = vcvt.s32.f32 %v3159
        %v3192 = vcvt.s32.f32 %v3160
        %v3193 = vcvt.s32.f32 %v3161
        %v3194 = vcvt.s32.f32 %v3162
        %v3195 = vcvt.s32.f32 %v3163
        %v3196 = vcvt.s32.f32 %v3164
        %v3197 = vcvt.s32.f32 %v3165
        %v3198 = vcvt.s32.f32 %v3166
        %v3199 = vcvt.s32.f32 %v3167
        %v3200 = vcvt.s32.f32 %v3168
        %v3201 = vld [vmem:[#allocation4] sm:$0xff]
        %v3202 = vld [vmem:[#allocation4 + $0x8] sm:$0xff]
        %v3203 = vld [vmem:[#allocation4 + $0x10] sm:$0xff]
        %v3204 = vld [vmem:[#allocation4 + $0x18] sm:$0xff]
        %v3205 = vld [vmem:[#allocation4 + $0x20] sm:$0xff]
        %v3206 = vld [vmem:[#allocation4 + $0x28] sm:$0xff]
        %v3207 = vld [vmem:[#allocation4 + $0x30] sm:$0xff]
        %v3208 = vld [vmem:[#allocation4 + $0x38] sm:$0xff]
        %v3209 = vld [vmem:[#allocation4 + $0x40] sm:$0xff]
        %v3210 = vld [vmem:[#allocation4 + $0x48] sm:$0xff]
        %v3211 = vld [vmem:[#allocation4 + $0x50] sm:$0xff]
        %v3212 = vld [vmem:[#allocation4 + $0x58] sm:$0xff]
        %v3213 = vld [vmem:[#allocation4 + $0x60] sm:$0xff]
        %v3214 = vld [vmem:[#allocation4 + $0x68] sm:$0xff]
        %v3215 = vld [vmem:[#allocation4 + $0x70] sm:$0xff]
        %v3216 = vld [vmem:[#allocation4 + $0x78] sm:$0xff]
        %v3217 = vld [vmem:[#allocation4 + $0x80] sm:$0xff]
        %v3218 = vld [vmem:[#allocation4 + $0x88] sm:$0xff]
        %v3219 = vld [vmem:[#allocation4 + $0x90] sm:$0xff]
        %v3220 = vld [vmem:[#allocation4 + $0x98] sm:$0xff]
        %v3221 = vld [vmem:[#allocation4 + $0xa0] sm:$0xff]
        %v3222 = vld [vmem:[#allocation4 + $0xa8] sm:$0xff]
        %v3223 = vld [vmem:[#allocation4 + $0xb0] sm:$0xff]
        %v3224 = vld [vmem:[#allocation4 + $0xb8] sm:$0xff]
        %v3225 = vld [vmem:[#allocation4 + $0xc0] sm:$0xff]
        %v3226 = vld [vmem:[#allocation4 + $0xc8] sm:$0xff]
        %v3227 = vld [vmem:[#allocation4 + $0xd0] sm:$0xff]
        %v3228 = vld [vmem:[#allocation4 + $0xd8] sm:$0xff]
        %v3229 = vld [vmem:[#allocation4 + $0xe0] sm:$0xff]
        %v3230 = vld [vmem:[#allocation4 + $0xe8] sm:$0xff]
        %v3231 = vld [vmem:[#allocation4 + $0xf0] sm:$0xff]
        %v3232 = vld [vmem:[#allocation4 + $0xf8] sm:$0xff]
        %v3233 = vsub.f32 %v3073, %v3201
        %v3234 = vsub.f32 %v3074, %v3202
        %v3235 = vsub.f32 %v3075, %v3203
        %v3236 = vsub.f32 %v3076, %v3204
        %v3237 = vsub.f32 %v3077, %v3205
        %v3238 = vsub.f32 %v3078, %v3206
        %v3239 = vsub.f32 %v3079, %v3207
        %v3240 = vsub.f32 %v3080, %v3208
        %v3241 = vsub.f32 %v3081, %v3209
        %v3242 = vsub.f32 %v3082, %v3210
        %v3243 = vsub.f32 %v3083, %v3211
        %v3244 = vsub.f32 %v3084, %v3212
        %v3245 = vsub.f32 %v3085, %v3213
        %v3246 = vsub.f32 %v3086, %v3214
        %v3247 = vsub.f32 %v3087, %v3215
        %v3248 = vsub.f32 %v3088, %v3216
        %v3249 = vsub.f32 %v3089, %v3217
        %v3250 = vsub.f32 %v3090, %v3218
        %v3251 = vsub.f32 %v3091, %v3219
        %v3252 = vsub.f32 %v3092, %v3220
        %v3253 = vsub.f32 %v3093, %v3221
        %v3254 = vsub.f32 %v3094, %v3222
        %v3255 = vsub.f32 %v3095, %v3223
        %v3256 = vsub.f32 %v3096, %v3224
        %v3257 = vsub.f32 %v3097, %v3225
        %v3258 = vsub.f32 %v3098, %v3226
        %v3259 = vsub.f32 %v3099, %v3227
        %v3260 = vsub.f32 %v3100, %v3228
        %v3261 = vsub.f32 %v3101, %v3229
        %v3262 = vsub.f32 %v3102, %v3230
        %v3263 = vsub.f32 %v3103, %v3231
        %v3264 = vsub.f32 %v3104, %v3232
        %v3265 = vmul.f32 %v3233, %v3169
        %v3266 = vmul.f32 %v3234, %v3170
        %v3267 = vmul.f32 %v3235, %v3171
        %v3268 = vmul.f32 %v3236, %v3172
        %v3269 = vmul.f32 %v3237, %v3173
        %v3270 = vmul.f32 %v3238, %v3174
        %v3271 = vmul.f32 %v3239, %v3175
        %v3272 = vmul.f32 %v3240, %v3176
        %v3273 = vmul.f32 %v3241, %v3177
        %v3274 = vmul.f32 %v3242, %v3178
        %v3275 = vmul.f32 %v3243, %v3179
        %v3276 = vmul.f32 %v3244, %v3180
        %v3277 = vmul.f32 %v3245, %v3181
        %v3278 = vmul.f32 %v3246, %v3182
        %v3279 = vmul.f32 %v3247, %v3183
        %v3280 = vmul.f32 %v3248, %v3184
        %v3281 = vmul.f32 %v3249, %v3185
        %v3282 = vmul.f32 %v3250, %v3186
        %v3283 = vmul.f32 %v3251, %v3187
        %v3284 = vmul.f32 %v3252, %v3188
        %v3285 = vmul.f32 %v3253, %v3189
        %v3286 = vmul.f32 %v3254, %v3190
        %v3287 = vmul.f32 %v3255, %v3191
        %v3288 = vmul.f32 %v3256, %v3192
        %v3289 = vmul.f32 %v3257, %v3193
        %v3290 = vmul.f32 %v3258, %v3194
        %v3291 = vmul.f32 %v3259, %v3195
        %v3292 = vmul.f32 %v3260, %v3196
        %v3293 = vmul.f32 %v3261, %v3197
        %v3294 = vmul.f32 %v3262, %v3198
        %v3295 = vmul.f32 %v3263, %v3199
        %v3296 = vmul.f32 %v3264, %v3200
        %3297 = vst.msk [vmem:[%s274] sm:$0xff] %vm1725, %v3265
        %3298 = vst.msk [vmem:[%s274 + $0x8] sm:$0xff] %vm1725, %v3266
        %3299 = vst.msk [vmem:[%s274 + $0x10] sm:$0xff] %vm1725, %v3267
        %3300 = vst.msk [vmem:[%s274 + $0x18] sm:$0xff] %vm1725, %v3268
        %3301 = vst.msk [vmem:[%s274 + $0x20] sm:$0xff] %vm1725, %v3269
        %3302 = vst.msk [vmem:[%s274 + $0x28] sm:$0xff] %vm1725, %v3270
        %3303 = vst.msk [vmem:[%s274 + $0x30] sm:$0xff] %vm1725, %v3271
        %3304 = vst.msk [vmem:[%s274 + $0x38] sm:$0xff] %vm1725, %v3272
        %3305 = vst.msk [vmem:[%s274 + $0x40] sm:$0xff] %vm1725, %v3273
        %3306 = vst.msk [vmem:[%s274 + $0x48] sm:$0xff] %vm1725, %v3274
        %3307 = vst.msk [vmem:[%s274 + $0x50] sm:$0xff] %vm1725, %v3275
        %3308 = vst.msk [vmem:[%s274 + $0x58] sm:$0xff] %vm1725, %v3276
        %3309 = vst.msk [vmem:[%s274 + $0x60] sm:$0xff] %vm1725, %v3277
        %3310 = vst.msk [vmem:[%s274 + $0x68] sm:$0xff] %vm1725, %v3278
        %3311 = vst.msk [vmem:[%s274 + $0x70] sm:$0xff] %vm1725, %v3279
        %3312 = vst.msk [vmem:[%s274 + $0x78] sm:$0xff] %vm1725, %v3280
        %3313 = vst.msk [vmem:[%s274 + $0x80] sm:$0xff] %vm1725, %v3281
        %3314 = vst.msk [vmem:[%s274 + $0x88] sm:$0xff] %vm1725, %v3282
        %3315 = vst.msk [vmem:[%s274 + $0x90] sm:$0xff] %vm1725, %v3283
        %3316 = vst.msk [vmem:[%s274 + $0x98] sm:$0xff] %vm1725, %v3284
        %3317 = vst.msk [vmem:[%s274 + $0xa0] sm:$0xff] %vm1725, %v3285
        %3318 = vst.msk [vmem:[%s274 + $0xa8] sm:$0xff] %vm1725, %v3286
        %3319 = vst.msk [vmem:[%s274 + $0xb0] sm:$0xff] %vm1725, %v3287
        %3320 = vst.msk [vmem:[%s274 + $0xb8] sm:$0xff] %vm1725, %v3288
        %3321 = vst.msk [vmem:[%s274 + $0xc0] sm:$0xff] %vm1725, %v3289
        %3322 = vst.msk [vmem:[%s274 + $0xc8] sm:$0xff] %vm1725, %v3290
        %3323 = vst.msk [vmem:[%s274 + $0xd0] sm:$0xff] %vm1725, %v3291
        %3324 = vst.msk [vmem:[%s274 + $0xd8] sm:$0xff] %vm1725, %v3292
        %3325 = vst.msk [vmem:[%s274 + $0xe0] sm:$0xff] %vm1725, %v3293
        %3326 = vst.msk [vmem:[%s274 + $0xe8] sm:$0xff] %vm1725, %v3294
        %3327 = vst.msk [vmem:[%s274 + $0xf0] sm:$0xff] %vm1725, %v3295
        %3328 = vst.msk [vmem:[%s274 + $0xf8] sm:$0xff] %vm1725, %v3296
      $region44: #{cp_forward.4} parent=35 // pred_fallthru
        _
      %s3329 = smul.u32 32, %s19
      %p3330 = scmp.lt.s32.totalorder %s3329, 127
      %s3331 = scalar_select %p3330, %s3329, 127
      %s3332 = smul.addr %s3331, 8
      %s3333 = scalar_lea.vmem %s4, %s3332
      // Predicated region
      $region45: #{cp_forward.4} parent=35 // pred_check
        %p3334 = pneg %p149
      $region46: #{cp_forward.4} parent=35 // pred_check_branch
        %3336 = sbr.rel (%p3334) target = $region48
      $region47: #{cp_forward.4} parent=35 // pred_region
        %s3337 = smul.u32 32, %s19
      $region48: #{cp_forward.4} parent=35 // pred_fallthru
        _
    $region36: #{cp_forward.4} parent=5 // pred_fallthru
      _
    %p3338 = scmp.le.s32.totalorder 2, %s10
    // Predicated region
    $region49: #{cp_forward.4} parent=5 // pred_check
      %p3339 = pneg %p3338
    $region50: #{cp_forward.4} parent=5 // pred_check_branch
      %3341 = sbr.rel (%p3339) target = $region52
    $region51: #{cp_forward.4} parent=5 // pred_region
      %s3342 = ssub.s32 %s10, 2
      // Predicated region
      $region53: #{cp_forward.4} parent=51 // pred_check
        %p3343 = pneg %p155
      $region54: #{cp_forward.4} parent=51 // pred_check_branch
        %3345 = sbr.rel (%p3343) target = $region56
      $region55: #{cp_forward.4} parent=51 // pred_region
        %s3346 = smul.u32 32, %s21
        %p3347 = scmp.lt.s32.totalorder %s3346, 127
        %s3348 = scalar_select %p3347, %s3346, 127
        %s3349 = smul.addr %s3348, 8
        %s3350 = scalar_lea.vmem %s4, %s3349
      $region56: #{cp_forward.4} parent=51 // pred_fallthru
        _
    $region52: #{cp_forward.4} parent=5 // pred_fallthru
      _
  $region6: #{cp_forward.4} parent=0 // loop_footer
    %s14 = sadd.s32 1, %s10
  $region7: #{cp_forward.4} parent=0 // loop_footer_branch
    %9 = sbr.rel target = $region3
  $region8: #{cp_forward.4} parent=0 // loop_exit
    _

</llo_original>
